<compile_context>
chip_gen: v7x
topology: tpu7x:2x2x1
jax: 0.10.0
libtpu: 0.0.40
codegen_flags: <defaults>
</compile_context>

<pallas_src>
import functools

import jax
import jax.numpy as jnp
from jax import lax
from jax.experimental import pallas as pl
from jax.experimental.pallas import tpu as pltpu

BN_EPS = 1e-5


# ----------------------------------------------------------------------------
# Static layer configuration (mirrors Encoder.__init__'s nn.Sequential).
# ----------------------------------------------------------------------------
def build_encoder_config(isize, nz, nc, ndf, n_extra_layers=0, add_final_conv=True):
    assert isize % 16 == 0, "isize has to be a multiple of 16"
    cfg = []
    # initial conv + LeakyReLU (no BN)
    cfg.append(dict(k=4, stride=2, pad=1, cin=nc, cout=ndf,
                    hin=isize, hout=isize // 2, has_bn=False, act=True))
    csize, cndf = isize // 2, ndf
    # extra layers: conv(k3 s1 p1) + BN + LeakyReLU
    for _ in range(n_extra_layers):
        cfg.append(dict(k=3, stride=1, pad=1, cin=cndf, cout=cndf,
                        hin=csize, hout=csize, has_bn=True, act=True))
    # pyramid: conv(k4 s2 p1) + BN + LeakyReLU
    while csize > 4:
        cfg.append(dict(k=4, stride=2, pad=1, cin=cndf, cout=cndf * 2,
                        hin=csize, hout=csize // 2, has_bn=True, act=True))
        cndf, csize = cndf * 2, csize // 2
    # final conv (no BN, no activation)
    if add_final_conv:
        cfg.append(dict(k=4, stride=1, pad=0, cin=cndf, cout=nz,
                        hin=4, hout=1, has_bn=False, act=False))
    for layer in cfg:
        if layer["stride"] == 2:
            assert (layer["hin"] + 2 * layer["pad"]) % 2 == 0
    return tuple(cfg)


# ----------------------------------------------------------------------------
# The fused Pallas kernel: whole encoder forward in one invocation.
# ref order: x_nhwc, w_packed, [shift_packed], out
# ----------------------------------------------------------------------------
def _pad_hw(x, pad):
    """Value-level zero pad of the two spatial dims of a (N, H, W, C) value."""
    n, h, w, c = x.shape
    zr = jnp.zeros((n, pad, w, c), x.dtype)
    x = jnp.concatenate([zr, x, zr], axis=1)               # leading-dim concat: cheap
    zc = jnp.zeros((n, h + 2 * pad, pad, c), x.dtype)
    return jnp.concatenate([zc, x, zc], axis=2)             # sublane-dim concat


def _make_encoder_kernel(cfg, batch, row_offsets, bn_indices, has_shift):
    n_layers = len(cfg)

    def kernel(*refs):
        if has_shift:
            x_ref, w_ref, s_ref, out_ref = refs
        else:
            x_ref, w_ref, out_ref = refs
            s_ref = None

        act = x_ref[...]                       # (N, isize, isize, nc) channels-last
        for li, layer in enumerate(cfg):
            k, stride, pad = layer["k"], layer["stride"], layer["pad"]
            hin, hout = layer["hin"], layer["hout"]
            cin, cout = layer["cin"], layer["cout"]
            hp = hin + 2 * pad
            kk = k * k
            m = batch * hout * hout

            # zero-pad this layer's input at the value level (no scratch round trip)
            P = _pad_hw(act, pad) if pad > 0 else act

            # ---- in-VMEM im2col: build (M, k*k*Cin) column operand ----------
            patches = []
            if stride == 2:
                # parity split:  2*ho + i == 2*(ho + i//2) + (i % 2)
                P6 = P.reshape(batch, hp // 2, 2, hp // 2, 2, cin)
                # de-interleave ONCE into 4 parity planes, then contiguous slices
                planes = {(b, d): P6[:, :, b, :, d, :] for b in (0, 1) for d in (0, 1)}
                for i in range(k):
                    for j in range(k):
                        a, b = i // 2, i % 2
                        c2, d = j // 2, j % 2
                        patches.append(planes[(b, d)][:, a:a + hout, c2:c2 + hout, :])
            else:
                for i in range(k):
                    for j in range(k):
                        patches.append(P[:, i:i + hout, j:j + hout, :])

            col = jnp.concatenate(patches, axis=-1).reshape(m, kk * cin)

            # ---- ONE MXU dot per layer against the packed weight slab --------
            off = row_offsets[li]
            w_l = w_ref[off:off + kk * cin, :]                   # (kk*cin, CMAX)
            acc = jnp.dot(col, w_l, preferred_element_type=jnp.float32)   # (m, CMAX)

            # ---- epilogue: folded-BN shift + LeakyReLU(0.2), f32 -------------
            if bn_indices[li] >= 0:
                bi = bn_indices[li]
                acc = acc + s_ref[bi:bi + 1, :]                  # (1, CMAX) broadcast
            if layer["act"]:
                acc = jnp.where(acc >= 0.0, acc, 0.2 * acc)

            if li == n_layers - 1:
                out_ref[...] = acc[:, :cout].astype(out_ref.dtype)
            else:
                act = acc[:, :cout].reshape(batch, hout, hout, cout)

    return kernel


# ----------------------------------------------------------------------------
# Parameters (PyTorch layout) and one-time packing into dense kernel operands.
# ----------------------------------------------------------------------------
def init_encoder_params(key, cfg):
    params = []
    for layer in cfg:
        key, kw, kg = jax.random.split(key, 3)
        p = dict(w=0.02 * jax.random.normal(
            kw, (layer["cout"], layer["cin"], layer["k"], layer["k"]), jnp.float32))
        if layer["has_bn"]:
            p["gamma"] = 1.0 + 0.02 * jax.random.normal(kg, (layer["cout"],), jnp.float32)
            p["beta"] = jnp.zeros((layer["cout"],), jnp.float32)
            p["running_mean"] = jnp.zeros((layer["cout"],), jnp.float32)
            p["running_var"] = jnp.ones((layer["cout"],), jnp.float32)
        params.append(p)
    return params


def _fold_layer(layer, p):
    """(Cout,Cin,k,k) torch weight (+ eval-mode BN) -> (k*k*Cin, Cout) and (1, Cout)."""
    w = p["w"]
    shift = None
    if layer["has_bn"]:
        scale = p["gamma"] / jnp.sqrt(p["running_var"] + BN_EPS)
        shift = (p["beta"] - p["running_mean"] * scale).reshape(1, layer["cout"])
        w = w * scale[:, None, None, None]
    wk = jnp.transpose(w, (2, 3, 1, 0)).reshape(
        layer["k"] * layer["k"] * layer["cin"], layer["cout"])
    return wk, shift


def pack_encoder_operands(params, cfg):
    """One-time (outside jit) packing of all folded weights / BN shifts."""
    cmax = max(layer["cout"] for layer in cfg)
    w_rows, shifts = [], []
    for layer, p in zip(cfg, params):
        wk, shift = _fold_layer(layer, p)
        w_rows.append(jnp.pad(wk, ((0, 0), (0, cmax - layer["cout"]))))
        if shift is not None:
            shifts.append(jnp.pad(shift, ((0, 0), (0, cmax - layer["cout"]))))
    w_packed = jnp.concatenate(w_rows, axis=0)               # (sum_K, CMAX)
    shift_packed = jnp.concatenate(shifts, axis=0) if shifts else None
    return w_packed, shift_packed


def encoder_forward(x_nchw, w_packed, shift_packed, *, cfg):
    """x_nchw: (N, nc, isize, isize) f32 -> (N, nz, 1, 1) f32 (eval-mode BN)."""
    n = x_nchw.shape[0]
    last = cfg[-1]

    # static per-layer metadata for the packed operands
    row_offsets, bn_indices = [], []
    off, nbn = 0, 0
    for layer in cfg:
        row_offsets.append(off)
        off += layer["k"] * layer["k"] * layer["cin"]
        if layer["has_bn"]:
            bn_indices.append(nbn)
            nbn += 1
        else:
            bn_indices.append(-1)
    assert w_packed.shape[0] == off

    # Only boundary layout op: NCHW -> channels-last (padding happens in-kernel).
    x = jnp.transpose(x_nchw, (0, 2, 3, 1))

    inputs = [x, w_packed]
    has_shift = shift_packed is not None
    if has_shift:
        inputs.append(shift_packed)

    m_out = n * last["hout"] * last["hout"]
    out = pl.pallas_call(
        _make_encoder_kernel(cfg, n, tuple(row_offsets), tuple(bn_indices), has_shift),
        out_shape=jax.ShapeDtypeStruct((m_out, last["cout"]), jnp.float32),
        in_specs=[pl.BlockSpec(memory_space=pltpu.MemorySpace.VMEM)] * len(inputs),
        out_specs=pl.BlockSpec(memory_space=pltpu.MemorySpace.VMEM),
    )(*inputs)

    if last["hout"] == 1:
        # (N*1*1, nz) -> (N, nz, 1, 1): pure reshape, no transpose HLO needed.
        return out.reshape(n, last["cout"], 1, 1)
    out = out.reshape(n, last["hout"], last["hout"], last["cout"])
    return jnp.transpose(out, (0, 3, 1, 2))


# ----------------------------------------------------------------------------
# Pure-XLA reference replicating the PyTorch module (eval-mode BN).
# ----------------------------------------------------------------------------
def encoder_reference(x_nchw, params, cfg):
    y = x_nchw
    for layer, p in zip(cfg, params):
        y = lax.conv_general_dilated(
            y, p["w"],
            window_strides=(layer["stride"], layer["stride"]),
            padding=[(layer["pad"], layer["pad"]), (layer["pad"], layer["pad"])],
            dimension_numbers=("NCHW", "OIHW", "NCHW"),
            precision=lax.Precision.HIGHEST)
        if layer["has_bn"]:
            scale = p["gamma"] / jnp.sqrt(p["running_var"] + BN_EPS)
            shift = p["beta"] - p["running_mean"] * scale
            y = y * scale[None, :, None, None] + shift[None, :, None, None]
        if layer["act"]:
            y = jnp.where(y >= 0.0, y, 0.2 * y)
    return y


if __name__ == "__main__":
    key = jax.random.PRNGKey(0)
    k_in, k_par = jax.random.split(key)

    isize, nz, nc, ndf, batch = 16, 8, 3, 8, 2
    cfg = build_encoder_config(isize, nz, nc, ndf, n_extra_layers=0, add_final_conv=True)
    params = init_encoder_params(k_par, cfg)
    x = jax.random.normal(k_in, (batch, nc, isize, isize), jnp.float32)   # NCHW (PyTorch)

    # one-time fold + pack (outside the jitted forward)
    w_packed, shift_packed = pack_encoder_operands(params, cfg)

    fwd = jax.jit(functools.partial(encoder_forward, cfg=cfg))
    out = jax.block_until_ready(fwd(x, w_packed, shift_packed))

    assert out.shape == (batch, nz, 1, 1), out.shape
    assert bool(jnp.all(jnp.isfinite(out)))

    ref = encoder_reference(x, params, cfg)
    max_err = float(jnp.max(jnp.abs(out - ref)))
    assert bool(jnp.allclose(out, ref, atol=3e-4, rtol=1e-3)), max_err

    print("KERNEL_OK")
</pallas_src>

<mosaic_0001>
module attributes {stable_mosaic.version = 11 : i64} {
  func.func @kernel(%arg0: memref<2x16x16x3xf32, #tpu.memory_space<vmem>>, %arg1: memref<432x16xf32, #tpu.memory_space<vmem>>, %arg2: memref<1x16xf32, #tpu.memory_space<vmem>>, %arg3: memref<2x8xf32, #tpu.memory_space<vmem>>) attributes {dimension_semantics = [], scalar_prefetch = 0 : i64, scratch_operands = 0 : i64, tpu.core_type = #tpu.core_type<tc>} {
    %c0 = arith.constant 0 : index
    %c0_0 = arith.constant 0 : index
    %c0_1 = arith.constant 0 : index
    %c0_2 = arith.constant 0 : index
    %0 = vector.load %arg0[%c0, %c0_0, %c0_1, %c0_2] : memref<2x16x16x3xf32, #tpu.memory_space<vmem>>, vector<2x16x16x3xf32>
    %cst = arith.constant 0.000000e+00 : f32
    %1 = vector.broadcast %cst : f32 to vector<2x1x16x3xf32>
    %2 = tpu.concatenate %1, %0, %1 in 1 : vector<2x1x16x3xf32>, vector<2x16x16x3xf32>, vector<2x1x16x3xf32> -> vector<2x18x16x3xf32>
    %cst_3 = arith.constant 0.000000e+00 : f32
    %3 = vector.broadcast %cst_3 : f32 to vector<2x18x1x3xf32>
    %4 = tpu.concatenate %3, %2, %3 in 2 : vector<2x18x1x3xf32>, vector<2x18x16x3xf32>, vector<2x18x1x3xf32> -> vector<2x18x18x3xf32>
    %5 = vector.shape_cast %4 : vector<2x18x18x3xf32> to vector<2x9x2x9x2x3xf32>
    %6 = vector.extract_strided_slice %5 {offsets = [0, 0, 0, 0, 0, 0], sizes = [2, 9, 1, 9, 1, 3], strides = [1, 1, 1, 1, 1, 1]} : vector<2x9x2x9x2x3xf32> to vector<2x9x1x9x1x3xf32>
    %7 = vector.shape_cast %6 : vector<2x9x1x9x1x3xf32> to vector<2x9x9x3xf32>
    %8 = vector.extract_strided_slice %5 {offsets = [0, 0, 0, 0, 1, 0], sizes = [2, 9, 1, 9, 1, 3], strides = [1, 1, 1, 1, 1, 1]} : vector<2x9x2x9x2x3xf32> to vector<2x9x1x9x1x3xf32>
    %9 = vector.shape_cast %8 : vector<2x9x1x9x1x3xf32> to vector<2x9x9x3xf32>
    %10 = vector.extract_strided_slice %5 {offsets = [0, 0, 1, 0, 0, 0], sizes = [2, 9, 1, 9, 1, 3], strides = [1, 1, 1, 1, 1, 1]} : vector<2x9x2x9x2x3xf32> to vector<2x9x1x9x1x3xf32>
    %11 = vector.shape_cast %10 : vector<2x9x1x9x1x3xf32> to vector<2x9x9x3xf32>
    %12 = vector.extract_strided_slice %5 {offsets = [0, 0, 1, 0, 1, 0], sizes = [2, 9, 1, 9, 1, 3], strides = [1, 1, 1, 1, 1, 1]} : vector<2x9x2x9x2x3xf32> to vector<2x9x1x9x1x3xf32>
    %13 = vector.shape_cast %12 : vector<2x9x1x9x1x3xf32> to vector<2x9x9x3xf32>
    %14 = vector.extract_strided_slice %7 {offsets = [0, 0, 0, 0], sizes = [2, 8, 8, 3], strides = [1, 1, 1, 1]} : vector<2x9x9x3xf32> to vector<2x8x8x3xf32>
    %15 = vector.extract_strided_slice %9 {offsets = [0, 0, 0, 0], sizes = [2, 8, 8, 3], strides = [1, 1, 1, 1]} : vector<2x9x9x3xf32> to vector<2x8x8x3xf32>
    %16 = vector.extract_strided_slice %7 {offsets = [0, 0, 1, 0], sizes = [2, 8, 8, 3], strides = [1, 1, 1, 1]} : vector<2x9x9x3xf32> to vector<2x8x8x3xf32>
    %17 = vector.extract_strided_slice %9 {offsets = [0, 0, 1, 0], sizes = [2, 8, 8, 3], strides = [1, 1, 1, 1]} : vector<2x9x9x3xf32> to vector<2x8x8x3xf32>
    %18 = vector.extract_strided_slice %11 {offsets = [0, 0, 0, 0], sizes = [2, 8, 8, 3], strides = [1, 1, 1, 1]} : vector<2x9x9x3xf32> to vector<2x8x8x3xf32>
    %19 = vector.extract_strided_slice %13 {offsets = [0, 0, 0, 0], sizes = [2, 8, 8, 3], strides = [1, 1, 1, 1]} : vector<2x9x9x3xf32> to vector<2x8x8x3xf32>
    %20 = vector.extract_strided_slice %11 {offsets = [0, 0, 1, 0], sizes = [2, 8, 8, 3], strides = [1, 1, 1, 1]} : vector<2x9x9x3xf32> to vector<2x8x8x3xf32>
    %21 = vector.extract_strided_slice %13 {offsets = [0, 0, 1, 0], sizes = [2, 8, 8, 3], strides = [1, 1, 1, 1]} : vector<2x9x9x3xf32> to vector<2x8x8x3xf32>
    %22 = vector.extract_strided_slice %7 {offsets = [0, 1, 0, 0], sizes = [2, 8, 8, 3], strides = [1, 1, 1, 1]} : vector<2x9x9x3xf32> to vector<2x8x8x3xf32>
    %23 = vector.extract_strided_slice %9 {offsets = [0, 1, 0, 0], sizes = [2, 8, 8, 3], strides = [1, 1, 1, 1]} : vector<2x9x9x3xf32> to vector<2x8x8x3xf32>
    %24 = vector.extract_strided_slice %7 {offsets = [0, 1, 1, 0], sizes = [2, 8, 8, 3], strides = [1, 1, 1, 1]} : vector<2x9x9x3xf32> to vector<2x8x8x3xf32>
    %25 = vector.extract_strided_slice %9 {offsets = [0, 1, 1, 0], sizes = [2, 8, 8, 3], strides = [1, 1, 1, 1]} : vector<2x9x9x3xf32> to vector<2x8x8x3xf32>
    %26 = vector.extract_strided_slice %11 {offsets = [0, 1, 0, 0], sizes = [2, 8, 8, 3], strides = [1, 1, 1, 1]} : vector<2x9x9x3xf32> to vector<2x8x8x3xf32>
    %27 = vector.extract_strided_slice %13 {offsets = [0, 1, 0, 0], sizes = [2, 8, 8, 3], strides = [1, 1, 1, 1]} : vector<2x9x9x3xf32> to vector<2x8x8x3xf32>
    %28 = vector.extract_strided_slice %11 {offsets = [0, 1, 1, 0], sizes = [2, 8, 8, 3], strides = [1, 1, 1, 1]} : vector<2x9x9x3xf32> to vector<2x8x8x3xf32>
    %29 = vector.extract_strided_slice %13 {offsets = [0, 1, 1, 0], sizes = [2, 8, 8, 3], strides = [1, 1, 1, 1]} : vector<2x9x9x3xf32> to vector<2x8x8x3xf32>
    %30 = tpu.concatenate %14, %15, %16, %17, %18, %19, %20, %21, %22, %23, %24, %25, %26, %27, %28, %29 in 3 : vector<2x8x8x3xf32>, vector<2x8x8x3xf32>, vector<2x8x8x3xf32>, vector<2x8x8x3xf32>, vector<2x8x8x3xf32>, vector<2x8x8x3xf32>, vector<2x8x8x3xf32>, vector<2x8x8x3xf32>, vector<2x8x8x3xf32>, vector<2x8x8x3xf32>, vector<2x8x8x3xf32>, vector<2x8x8x3xf32>, vector<2x8x8x3xf32>, vector<2x8x8x3xf32>, vector<2x8x8x3xf32>, vector<2x8x8x3xf32> -> vector<2x8x8x48xf32>
    %31 = vector.shape_cast %30 : vector<2x8x8x48xf32> to vector<128x48xf32>
    %c0_4 = arith.constant 0 : index
    %c0_5 = arith.constant 0 : index
    %32 = vector.load %arg1[%c0_4, %c0_5] : memref<432x16xf32, #tpu.memory_space<vmem>>, vector<48x16xf32>
    %cst_6 = arith.constant dense<0.000000e+00> : vector<128x16xf32>
    %33 = tpu.matmul %31, %32, %cst_6 {dimension_numbers = #tpu.dot_dimension_numbers<[1], [0], [0], [1], [0, 0, 1, 1], [], []>} : vector<128x48xf32>, vector<48x16xf32>, vector<128x16xf32> -> vector<128x16xf32>
    %cst_7 = arith.constant 0.000000e+00 : f32
    %34 = vector.broadcast %cst_7 : f32 to vector<128x16xf32>
    %35 = arith.cmpf oge, %33, %34 : vector<128x16xf32>
    %cst_8 = arith.constant 2.000000e-01 : f32
    %36 = vector.broadcast %cst_8 : f32 to vector<128x16xf32>
    %37 = arith.mulf %36, %33 : vector<128x16xf32>
    %38 = arith.select %35, %33, %37 : vector<128x16xi1>, vector<128x16xf32>
    %39 = vector.extract_strided_slice %38 {offsets = [0, 0], sizes = [128, 8], strides = [1, 1]} : vector<128x16xf32> to vector<128x8xf32>
    %40 = vector.shape_cast %39 : vector<128x8xf32> to vector<2x8x8x8xf32>
    %cst_9 = arith.constant 0.000000e+00 : f32
    %41 = vector.broadcast %cst_9 : f32 to vector<2x1x8x8xf32>
    %42 = tpu.concatenate %41, %40, %41 in 1 : vector<2x1x8x8xf32>, vector<2x8x8x8xf32>, vector<2x1x8x8xf32> -> vector<2x10x8x8xf32>
    %cst_10 = arith.constant 0.000000e+00 : f32
    %43 = vector.broadcast %cst_10 : f32 to vector<2x10x1x8xf32>
    %44 = tpu.concatenate %43, %42, %43 in 2 : vector<2x10x1x8xf32>, vector<2x10x8x8xf32>, vector<2x10x1x8xf32> -> vector<2x10x10x8xf32>
    %45 = vector.shape_cast %44 : vector<2x10x10x8xf32> to vector<2x5x2x5x2x8xf32>
    %46 = vector.extract_strided_slice %45 {offsets = [0, 0, 0, 0, 0, 0], sizes = [2, 5, 1, 5, 1, 8], strides = [1, 1, 1, 1, 1, 1]} : vector<2x5x2x5x2x8xf32> to vector<2x5x1x5x1x8xf32>
    %47 = vector.shape_cast %46 : vector<2x5x1x5x1x8xf32> to vector<2x5x5x8xf32>
    %48 = vector.extract_strided_slice %45 {offsets = [0, 0, 0, 0, 1, 0], sizes = [2, 5, 1, 5, 1, 8], strides = [1, 1, 1, 1, 1, 1]} : vector<2x5x2x5x2x8xf32> to vector<2x5x1x5x1x8xf32>
    %49 = vector.shape_cast %48 : vector<2x5x1x5x1x8xf32> to vector<2x5x5x8xf32>
    %50 = vector.extract_strided_slice %45 {offsets = [0, 0, 1, 0, 0, 0], sizes = [2, 5, 1, 5, 1, 8], strides = [1, 1, 1, 1, 1, 1]} : vector<2x5x2x5x2x8xf32> to vector<2x5x1x5x1x8xf32>
    %51 = vector.shape_cast %50 : vector<2x5x1x5x1x8xf32> to vector<2x5x5x8xf32>
    %52 = vector.extract_strided_slice %45 {offsets = [0, 0, 1, 0, 1, 0], sizes = [2, 5, 1, 5, 1, 8], strides = [1, 1, 1, 1, 1, 1]} : vector<2x5x2x5x2x8xf32> to vector<2x5x1x5x1x8xf32>
    %53 = vector.shape_cast %52 : vector<2x5x1x5x1x8xf32> to vector<2x5x5x8xf32>
    %54 = vector.extract_strided_slice %47 {offsets = [0, 0, 0, 0], sizes = [2, 4, 4, 8], strides = [1, 1, 1, 1]} : vector<2x5x5x8xf32> to vector<2x4x4x8xf32>
    %55 = vector.extract_strided_slice %49 {offsets = [0, 0, 0, 0], sizes = [2, 4, 4, 8], strides = [1, 1, 1, 1]} : vector<2x5x5x8xf32> to vector<2x4x4x8xf32>
    %56 = vector.extract_strided_slice %47 {offsets = [0, 0, 1, 0], sizes = [2, 4, 4, 8], strides = [1, 1, 1, 1]} : vector<2x5x5x8xf32> to vector<2x4x4x8xf32>
    %57 = vector.extract_strided_slice %49 {offsets = [0, 0, 1, 0], sizes = [2, 4, 4, 8], strides = [1, 1, 1, 1]} : vector<2x5x5x8xf32> to vector<2x4x4x8xf32>
    %58 = vector.extract_strided_slice %51 {offsets = [0, 0, 0, 0], sizes = [2, 4, 4, 8], strides = [1, 1, 1, 1]} : vector<2x5x5x8xf32> to vector<2x4x4x8xf32>
    %59 = vector.extract_strided_slice %53 {offsets = [0, 0, 0, 0], sizes = [2, 4, 4, 8], strides = [1, 1, 1, 1]} : vector<2x5x5x8xf32> to vector<2x4x4x8xf32>
    %60 = vector.extract_strided_slice %51 {offsets = [0, 0, 1, 0], sizes = [2, 4, 4, 8], strides = [1, 1, 1, 1]} : vector<2x5x5x8xf32> to vector<2x4x4x8xf32>
    %61 = vector.extract_strided_slice %53 {offsets = [0, 0, 1, 0], sizes = [2, 4, 4, 8], strides = [1, 1, 1, 1]} : vector<2x5x5x8xf32> to vector<2x4x4x8xf32>
    %62 = vector.extract_strided_slice %47 {offsets = [0, 1, 0, 0], sizes = [2, 4, 4, 8], strides = [1, 1, 1, 1]} : vector<2x5x5x8xf32> to vector<2x4x4x8xf32>
    %63 = vector.extract_strided_slice %49 {offsets = [0, 1, 0, 0], sizes = [2, 4, 4, 8], strides = [1, 1, 1, 1]} : vector<2x5x5x8xf32> to vector<2x4x4x8xf32>
    %64 = vector.extract_strided_slice %47 {offsets = [0, 1, 1, 0], sizes = [2, 4, 4, 8], strides = [1, 1, 1, 1]} : vector<2x5x5x8xf32> to vector<2x4x4x8xf32>
    %65 = vector.extract_strided_slice %49 {offsets = [0, 1, 1, 0], sizes = [2, 4, 4, 8], strides = [1, 1, 1, 1]} : vector<2x5x5x8xf32> to vector<2x4x4x8xf32>
    %66 = vector.extract_strided_slice %51 {offsets = [0, 1, 0, 0], sizes = [2, 4, 4, 8], strides = [1, 1, 1, 1]} : vector<2x5x5x8xf32> to vector<2x4x4x8xf32>
    %67 = vector.extract_strided_slice %53 {offsets = [0, 1, 0, 0], sizes = [2, 4, 4, 8], strides = [1, 1, 1, 1]} : vector<2x5x5x8xf32> to vector<2x4x4x8xf32>
    %68 = vector.extract_strided_slice %51 {offsets = [0, 1, 1, 0], sizes = [2, 4, 4, 8], strides = [1, 1, 1, 1]} : vector<2x5x5x8xf32> to vector<2x4x4x8xf32>
    %69 = vector.extract_strided_slice %53 {offsets = [0, 1, 1, 0], sizes = [2, 4, 4, 8], strides = [1, 1, 1, 1]} : vector<2x5x5x8xf32> to vector<2x4x4x8xf32>
    %70 = tpu.concatenate %54, %55, %56, %57, %58, %59, %60, %61, %62, %63, %64, %65, %66, %67, %68, %69 in 3 : vector<2x4x4x8xf32>, vector<2x4x4x8xf32>, vector<2x4x4x8xf32>, vector<2x4x4x8xf32>, vector<2x4x4x8xf32>, vector<2x4x4x8xf32>, vector<2x4x4x8xf32>, vector<2x4x4x8xf32>, vector<2x4x4x8xf32>, vector<2x4x4x8xf32>, vector<2x4x4x8xf32>, vector<2x4x4x8xf32>, vector<2x4x4x8xf32>, vector<2x4x4x8xf32>, vector<2x4x4x8xf32>, vector<2x4x4x8xf32> -> vector<2x4x4x128xf32>
    %71 = vector.shape_cast %70 : vector<2x4x4x128xf32> to vector<32x128xf32>
    %c48 = arith.constant 48 : index
    %c0_11 = arith.constant 0 : index
    %72 = vector.load %arg1[%c48, %c0_11] : memref<432x16xf32, #tpu.memory_space<vmem>>, vector<128x16xf32>
    %cst_12 = arith.constant dense<0.000000e+00> : vector<32x16xf32>
    %73 = tpu.matmul %71, %72, %cst_12 {dimension_numbers = #tpu.dot_dimension_numbers<[1], [0], [0], [1], [0, 0, 1, 1], [], []>} : vector<32x128xf32>, vector<128x16xf32>, vector<32x16xf32> -> vector<32x16xf32>
    %c0_13 = arith.constant 0 : index
    %c0_14 = arith.constant 0 : index
    %74 = vector.load %arg2[%c0_13, %c0_14] : memref<1x16xf32, #tpu.memory_space<vmem>>, vector<1x16xf32>
    %75 = vector.broadcast %74 : vector<1x16xf32> to vector<32x16xf32>
    %76 = arith.addf %73, %75 : vector<32x16xf32>
    %cst_15 = arith.constant 0.000000e+00 : f32
    %77 = vector.broadcast %cst_15 : f32 to vector<32x16xf32>
    %78 = arith.cmpf oge, %76, %77 : vector<32x16xf32>
    %cst_16 = arith.constant 2.000000e-01 : f32
    %79 = vector.broadcast %cst_16 : f32 to vector<32x16xf32>
    %80 = arith.mulf %79, %76 : vector<32x16xf32>
    %81 = arith.select %78, %76, %80 : vector<32x16xi1>, vector<32x16xf32>
    %82 = vector.shape_cast %81 : vector<32x16xf32> to vector<2x4x4x16xf32>
    %83 = vector.extract_strided_slice %82 {offsets = [0, 0, 0, 0], sizes = [2, 1, 1, 16], strides = [1, 1, 1, 1]} : vector<2x4x4x16xf32> to vector<2x1x1x16xf32>
    %84 = vector.extract_strided_slice %82 {offsets = [0, 0, 1, 0], sizes = [2, 1, 1, 16], strides = [1, 1, 1, 1]} : vector<2x4x4x16xf32> to vector<2x1x1x16xf32>
    %85 = vector.extract_strided_slice %82 {offsets = [0, 0, 2, 0], sizes = [2, 1, 1, 16], strides = [1, 1, 1, 1]} : vector<2x4x4x16xf32> to vector<2x1x1x16xf32>
    %86 = vector.extract_strided_slice %82 {offsets = [0, 0, 3, 0], sizes = [2, 1, 1, 16], strides = [1, 1, 1, 1]} : vector<2x4x4x16xf32> to vector<2x1x1x16xf32>
    %87 = vector.extract_strided_slice %82 {offsets = [0, 1, 0, 0], sizes = [2, 1, 1, 16], strides = [1, 1, 1, 1]} : vector<2x4x4x16xf32> to vector<2x1x1x16xf32>
    %88 = vector.extract_strided_slice %82 {offsets = [0, 1, 1, 0], sizes = [2, 1, 1, 16], strides = [1, 1, 1, 1]} : vector<2x4x4x16xf32> to vector<2x1x1x16xf32>
    %89 = vector.extract_strided_slice %82 {offsets = [0, 1, 2, 0], sizes = [2, 1, 1, 16], strides = [1, 1, 1, 1]} : vector<2x4x4x16xf32> to vector<2x1x1x16xf32>
    %90 = vector.extract_strided_slice %82 {offsets = [0, 1, 3, 0], sizes = [2, 1, 1, 16], strides = [1, 1, 1, 1]} : vector<2x4x4x16xf32> to vector<2x1x1x16xf32>
    %91 = vector.extract_strided_slice %82 {offsets = [0, 2, 0, 0], sizes = [2, 1, 1, 16], strides = [1, 1, 1, 1]} : vector<2x4x4x16xf32> to vector<2x1x1x16xf32>
    %92 = vector.extract_strided_slice %82 {offsets = [0, 2, 1, 0], sizes = [2, 1, 1, 16], strides = [1, 1, 1, 1]} : vector<2x4x4x16xf32> to vector<2x1x1x16xf32>
    %93 = vector.extract_strided_slice %82 {offsets = [0, 2, 2, 0], sizes = [2, 1, 1, 16], strides = [1, 1, 1, 1]} : vector<2x4x4x16xf32> to vector<2x1x1x16xf32>
    %94 = vector.extract_strided_slice %82 {offsets = [0, 2, 3, 0], sizes = [2, 1, 1, 16], strides = [1, 1, 1, 1]} : vector<2x4x4x16xf32> to vector<2x1x1x16xf32>
    %95 = vector.extract_strided_slice %82 {offsets = [0, 3, 0, 0], sizes = [2, 1, 1, 16], strides = [1, 1, 1, 1]} : vector<2x4x4x16xf32> to vector<2x1x1x16xf32>
    %96 = vector.extract_strided_slice %82 {offsets = [0, 3, 1, 0], sizes = [2, 1, 1, 16], strides = [1, 1, 1, 1]} : vector<2x4x4x16xf32> to vector<2x1x1x16xf32>
    %97 = vector.extract_strided_slice %82 {offsets = [0, 3, 2, 0], sizes = [2, 1, 1, 16], strides = [1, 1, 1, 1]} : vector<2x4x4x16xf32> to vector<2x1x1x16xf32>
    %98 = vector.extract_strided_slice %82 {offsets = [0, 3, 3, 0], sizes = [2, 1, 1, 16], strides = [1, 1, 1, 1]} : vector<2x4x4x16xf32> to vector<2x1x1x16xf32>
    %99 = tpu.concatenate %83, %84, %85, %86, %87, %88, %89, %90, %91, %92, %93, %94, %95, %96, %97, %98 in 3 : vector<2x1x1x16xf32>, vector<2x1x1x16xf32>, vector<2x1x1x16xf32>, vector<2x1x1x16xf32>, vector<2x1x1x16xf32>, vector<2x1x1x16xf32>, vector<2x1x1x16xf32>, vector<2x1x1x16xf32>, vector<2x1x1x16xf32>, vector<2x1x1x16xf32>, vector<2x1x1x16xf32>, vector<2x1x1x16xf32>, vector<2x1x1x16xf32>, vector<2x1x1x16xf32>, vector<2x1x1x16xf32>, vector<2x1x1x16xf32> -> vector<2x1x1x256xf32>
    %100 = vector.shape_cast %99 : vector<2x1x1x256xf32> to vector<2x256xf32>
    %c176 = arith.constant 176 : index
    %c0_17 = arith.constant 0 : index
    %101 = vector.load %arg1[%c176, %c0_17] : memref<432x16xf32, #tpu.memory_space<vmem>>, vector<256x16xf32>
    %cst_18 = arith.constant dense<0.000000e+00> : vector<2x16xf32>
    %102 = tpu.matmul %100, %101, %cst_18 {dimension_numbers = #tpu.dot_dimension_numbers<[1], [0], [0], [1], [0, 0, 1, 1], [], []>} : vector<2x256xf32>, vector<256x16xf32>, vector<2x16xf32> -> vector<2x16xf32>
    %103 = vector.extract_strided_slice %102 {offsets = [0, 0], sizes = [2, 8], strides = [1, 1]} : vector<2x16xf32> to vector<2x8xf32>
    %c0_19 = arith.constant 0 : index
    %c0_20 = arith.constant 0 : index
    %104 = vector.load %arg3[%c0_19, %c0_20] : memref<2x8xf32, #tpu.memory_space<vmem>>, vector<2x8xf32>
    tpu.vector_store %arg3[%c0_19, %c0_20], %103 {strides = array<i32>} : memref<2x8xf32, #tpu.memory_space<vmem>>, vector<2x8xf32>,
    return
  }
}

</mosaic_0001>

<llo_original>
// kernel: encoder_forward.1
$region0: #{encoder_forward.1}
  #allocation0 [shape = 'u32[]', space=smem, size = 0x4, offset = 0x4, fixed_abs, tag = 'smem constant byte address 0x4 - core index']
  #allocation1 [shape = 'u32[144,128]{1,0:T(1,128)}', space=vmem, size = 0x12000, scoped, tag = 'internal scratch']
  %s0 = inlined_call_operand.vmem [shape: f32[2,16,16,3], index: 0, kind: input, shape index: {}]
  %s1 = inlined_call_operand.vmem [shape: f32[432,16], index: 1, kind: input, shape index: {}]
  %s2 = inlined_call_operand.vmem [shape: f32[1,16], index: 2, kind: input, shape index: {}]
  %s3 = inlined_call_operand.hbm [shape: f32[2,8], index: 3, kind: output, shape index: {}]
  %s4 = sld [smem:[#allocation0]]
  $region22: #{encoder_forward.1} parent=0
    _
  %s6 = ssub.s32 1, %s4
  %s7 = scalar_select 0, %s6, %s4
  $region1: #{encoder_forward.1} parent=0
    #allocation2 [shape = 'u8[1024]{0}', space=vmem, size = 0x400, scoped, tag = 'output window, operand 0, single buffered']
    #allocation3 [shape = 's32[1]{0}', space=sflag, size = 0x4, scoped, tag = 'scoped memory for encoder_forward.1']
    %8 = vsyncpa [#allocation3], 0
    // Predicated region
    $region2: #{encoder_forward.1} parent=1 // pred_check
      _
    $region3: #{encoder_forward.1} parent=1 // pred_check_branch
      %10 = sbr.rel (0) target = $region5
    $region4: #{encoder_forward.1} parent=1 // pred_region
      _
    $region5: #{encoder_forward.1} parent=1 // pred_fallthru
      _
    // Predicated region
    $region6: #{encoder_forward.1} parent=1 // pred_check
      _
    $region7: #{encoder_forward.1} parent=1 // pred_check_branch
      %12 = sbr.rel (0) target = $region9
    $region8: #{encoder_forward.1} parent=1 // pred_region
      _
    $region9: #{encoder_forward.1} parent=1 // pred_fallthru
      _
    // Predicated region
    $region10: #{encoder_forward.1} parent=1 // pred_check
      _
    $region11: #{encoder_forward.1} parent=1 // pred_check_branch
      %14 = sbr.rel (0) target = $region13
    $region12: #{encoder_forward.1} parent=1 // pred_region
      _
    $region13: #{encoder_forward.1} parent=1 // pred_fallthru
      _
    %v15 = vld [vmem:[%s0] sm:$0xff]
    %v16 = vld [vmem:[%s0 + $0x8] sm:$0xff]
    %v17 = vld [vmem:[%s0 + $0x10] sm:$0xff]
    %v18 = vld [vmem:[%s0 + $0x18] sm:$0xff]
    %v19 = vld [vmem:[%s0 + $0x20] sm:$0xff]
    %v20 = vld [vmem:[%s0 + $0x28] sm:$0xff]
    %v21 = vld [vmem:[%s0 + $0x30] sm:$0xff]
    %v22 = vld [vmem:[%s0 + $0x38] sm:$0xff]
    %v23 = vld [vmem:[%s0 + $0x40] sm:$0xff]
    %v24 = vld [vmem:[%s0 + $0x48] sm:$0xff]
    %v25 = vld [vmem:[%s0 + $0x50] sm:$0xff]
    %v26 = vld [vmem:[%s0 + $0x58] sm:$0xff]
    %v27 = vld [vmem:[%s0 + $0x60] sm:$0xff]
    %v28 = vld [vmem:[%s0 + $0x68] sm:$0xff]
    %v29 = vld [vmem:[%s0 + $0x70] sm:$0xff]
    %v30 = vld [vmem:[%s0 + $0x78] sm:$0xff]
    %v31 = vld [vmem:[%s0 + $0x80] sm:$0xff]
    %v32 = vld [vmem:[%s0 + $0x88] sm:$0xff]
    %v33 = vld [vmem:[%s0 + $0x90] sm:$0xff]
    %v34 = vld [vmem:[%s0 + $0x98] sm:$0xff]
    %v35 = vld [vmem:[%s0 + $0xa0] sm:$0xff]
    %v36 = vld [vmem:[%s0 + $0xa8] sm:$0xff]
    %v37 = vld [vmem:[%s0 + $0xb0] sm:$0xff]
    %v38 = vld [vmem:[%s0 + $0xb8] sm:$0xff]
    %v39 = vld [vmem:[%s0 + $0xc0] sm:$0xff]
    %v40 = vld [vmem:[%s0 + $0xc8] sm:$0xff]
    %v41 = vld [vmem:[%s0 + $0xd0] sm:$0xff]
    %v42 = vld [vmem:[%s0 + $0xd8] sm:$0xff]
    %v43 = vld [vmem:[%s0 + $0xe0] sm:$0xff]
    %v44 = vld [vmem:[%s0 + $0xe8] sm:$0xff]
    %v45 = vld [vmem:[%s0 + $0xf0] sm:$0xff]
    %v46 = vld [vmem:[%s0 + $0xf8] sm:$0xff]
    %v47 = vld [vmem:[%s0 + $0x100] sm:$0xff]
    %v48 = vld [vmem:[%s0 + $0x108] sm:$0xff]
    %v49 = vld [vmem:[%s0 + $0x110] sm:$0xff]
    %v50 = vld [vmem:[%s0 + $0x118] sm:$0xff]
    %v51 = vld [vmem:[%s0 + $0x120] sm:$0xff]
    %v52 = vld [vmem:[%s0 + $0x128] sm:$0xff]
    %v53 = vld [vmem:[%s0 + $0x130] sm:$0xff]
    %v54 = vld [vmem:[%s0 + $0x138] sm:$0xff]
    %v55 = vld [vmem:[%s0 + $0x140] sm:$0xff]
    %v56 = vld [vmem:[%s0 + $0x148] sm:$0xff]
    %v57 = vld [vmem:[%s0 + $0x150] sm:$0xff]
    %v58 = vld [vmem:[%s0 + $0x158] sm:$0xff]
    %v59 = vld [vmem:[%s0 + $0x160] sm:$0xff]
    %v60 = vld [vmem:[%s0 + $0x168] sm:$0xff]
    %v61 = vld [vmem:[%s0 + $0x170] sm:$0xff]
    %v62 = vld [vmem:[%s0 + $0x178] sm:$0xff]
    %v63 = vld [vmem:[%s0 + $0x180] sm:$0xff]
    %v64 = vld [vmem:[%s0 + $0x188] sm:$0xff]
    %v65 = vld [vmem:[%s0 + $0x190] sm:$0xff]
    %v66 = vld [vmem:[%s0 + $0x198] sm:$0xff]
    %v67 = vld [vmem:[%s0 + $0x1a0] sm:$0xff]
    %v68 = vld [vmem:[%s0 + $0x1a8] sm:$0xff]
    %v69 = vld [vmem:[%s0 + $0x1b0] sm:$0xff]
    %v70 = vld [vmem:[%s0 + $0x1b8] sm:$0xff]
    %v71 = vld [vmem:[%s0 + $0x1c0] sm:$0xff]
    %v72 = vld [vmem:[%s0 + $0x1c8] sm:$0xff]
    %v73 = vld [vmem:[%s0 + $0x1d0] sm:$0xff]
    %v74 = vld [vmem:[%s0 + $0x1d8] sm:$0xff]
    %v75 = vld [vmem:[%s0 + $0x1e0] sm:$0xff]
    %v76 = vld [vmem:[%s0 + $0x1e8] sm:$0xff]
    %v77 = vld [vmem:[%s0 + $0x1f0] sm:$0xff]
    %v78 = vld [vmem:[%s0 + $0x1f8] sm:$0xff]
    %vm144 = vcmask 1040384
    %v145 = vrot.slane 0.0, 7
    %v146 = vsel %vm144, %v145, %v145
    %v147 = vrot.slane %v15, 7
    %v148 = vrot.slane %v16, 7
    %v149 = vsel %vm144, %v147, %v148
    %v150 = vrot.slane %v17, 7
    %v151 = vrot.slane %v18, 7
    %v152 = vsel %vm144, %v150, %v151
    %v153 = vrot.slane %v19, 7
    %v154 = vrot.slane %v20, 7
    %v155 = vsel %vm144, %v153, %v154
    %v156 = vrot.slane %v21, 7
    %v157 = vrot.slane %v22, 7
    %v158 = vsel %vm144, %v156, %v157
    %v159 = vrot.slane %v23, 7
    %v160 = vrot.slane %v24, 7
    %v161 = vsel %vm144, %v159, %v160
    %v162 = vrot.slane %v25, 7
    %v163 = vrot.slane %v26, 7
    %v164 = vsel %vm144, %v162, %v163
    %v165 = vrot.slane %v27, 7
    %v166 = vrot.slane %v28, 7
    %v167 = vsel %vm144, %v165, %v166
    %v168 = vrot.slane %v29, 7
    %v169 = vrot.slane %v30, 7
    %v170 = vsel %vm144, %v168, %v169
    %v171 = vrot.slane %v31, 7
    %v172 = vrot.slane %v32, 7
    %v173 = vsel %vm144, %v171, %v172
    %v174 = vrot.slane %v33, 7
    %v175 = vrot.slane %v34, 7
    %v176 = vsel %vm144, %v174, %v175
    %v177 = vrot.slane %v35, 7
    %v178 = vrot.slane %v36, 7
    %v179 = vsel %vm144, %v177, %v178
    %v180 = vrot.slane %v37, 7
    %v181 = vrot.slane %v38, 7
    %v182 = vsel %vm144, %v180, %v181
    %v183 = vrot.slane %v39, 7
    %v184 = vrot.slane %v40, 7
    %v185 = vsel %vm144, %v183, %v184
    %v186 = vrot.slane %v41, 7
    %v187 = vrot.slane %v42, 7
    %v188 = vsel %vm144, %v186, %v187
    %v189 = vrot.slane %v43, 7
    %v190 = vrot.slane %v44, 7
    %v191 = vsel %vm144, %v189, %v190
    %v192 = vrot.slane %v45, 7
    %v193 = vrot.slane %v46, 7
    %v194 = vsel %vm144, %v192, %v193
    %v195 = vrot.slane %v47, 7
    %v196 = vrot.slane %v48, 7
    %v197 = vsel %vm144, %v195, %v196
    %v198 = vrot.slane %v49, 7
    %v199 = vrot.slane %v50, 7
    %v200 = vsel %vm144, %v198, %v199
    %v201 = vrot.slane %v51, 7
    %v202 = vrot.slane %v52, 7
    %v203 = vsel %vm144, %v201, %v202
    %v204 = vrot.slane %v53, 7
    %v205 = vrot.slane %v54, 7
    %v206 = vsel %vm144, %v204, %v205
    %v207 = vrot.slane %v55, 7
    %v208 = vrot.slane %v56, 7
    %v209 = vsel %vm144, %v207, %v208
    %v210 = vrot.slane %v57, 7
    %v211 = vrot.slane %v58, 7
    %v212 = vsel %vm144, %v210, %v211
    %v213 = vrot.slane %v59, 7
    %v214 = vrot.slane %v60, 7
    %v215 = vsel %vm144, %v213, %v214
    %v216 = vrot.slane %v61, 7
    %v217 = vrot.slane %v62, 7
    %v218 = vsel %vm144, %v216, %v217
    %v219 = vrot.slane %v63, 7
    %v220 = vrot.slane %v64, 7
    %v221 = vsel %vm144, %v219, %v220
    %v222 = vrot.slane %v65, 7
    %v223 = vrot.slane %v66, 7
    %v224 = vsel %vm144, %v222, %v223
    %v225 = vrot.slane %v67, 7
    %v226 = vrot.slane %v68, 7
    %v227 = vsel %vm144, %v225, %v226
    %v228 = vrot.slane %v69, 7
    %v229 = vrot.slane %v70, 7
    %v230 = vsel %vm144, %v228, %v229
    %v231 = vrot.slane %v71, 7
    %v232 = vrot.slane %v72, 7
    %v233 = vsel %vm144, %v231, %v232
    %v234 = vrot.slane %v73, 7
    %v235 = vrot.slane %v74, 7
    %v236 = vsel %vm144, %v234, %v235
    %v237 = vrot.slane %v75, 7
    %v238 = vrot.slane %v76, 7
    %v239 = vsel %vm144, %v237, %v238
    %v240 = vrot.slane %v77, 7
    %v241 = vrot.slane %v78, 7
    %v242 = vsel %vm144, %v240, %v241
    %v308 = vsel %vm144, 0.0, %v145
    %v309 = vsel %vm144, 0.0, %v147
    %v310 = vsel %vm144, 0.0, %v150
    %v311 = vsel %vm144, 0.0, %v153
    %v312 = vsel %vm144, 0.0, %v156
    %v313 = vsel %vm144, 0.0, %v159
    %v314 = vsel %vm144, 0.0, %v162
    %v315 = vsel %vm144, 0.0, %v165
    %v316 = vsel %vm144, 0.0, %v168
    %v317 = vsel %vm144, 0.0, %v171
    %v318 = vsel %vm144, 0.0, %v174
    %v319 = vsel %vm144, 0.0, %v177
    %v320 = vsel %vm144, 0.0, %v180
    %v321 = vsel %vm144, 0.0, %v183
    %v322 = vsel %vm144, 0.0, %v186
    %v323 = vsel %vm144, 0.0, %v189
    %v324 = vsel %vm144, 0.0, %v192
    %v325 = vsel %vm144, 0.0, %v195
    %v326 = vsel %vm144, 0.0, %v198
    %v327 = vsel %vm144, 0.0, %v201
    %v328 = vsel %vm144, 0.0, %v204
    %v329 = vsel %vm144, 0.0, %v207
    %v330 = vsel %vm144, 0.0, %v210
    %v331 = vsel %vm144, 0.0, %v213
    %v332 = vsel %vm144, 0.0, %v216
    %v333 = vsel %vm144, 0.0, %v219
    %v334 = vsel %vm144, 0.0, %v222
    %v335 = vsel %vm144, 0.0, %v225
    %v336 = vsel %vm144, 0.0, %v228
    %v337 = vsel %vm144, 0.0, %v231
    %v338 = vsel %vm144, 0.0, %v234
    %v339 = vsel %vm144, 0.0, %v237
    %v340 = vsel %vm144, 0.0, %v240
    %v341 = vsel %vm144, %v145, 0.0
    %v342 = vsel %vm144, %v148, 0.0
    %v343 = vsel %vm144, %v151, 0.0
    %v344 = vsel %vm144, %v154, 0.0
    %v345 = vsel %vm144, %v157, 0.0
    %v346 = vsel %vm144, %v160, 0.0
    %v347 = vsel %vm144, %v163, 0.0
    %v348 = vsel %vm144, %v166, 0.0
    %v349 = vsel %vm144, %v169, 0.0
    %v350 = vsel %vm144, %v172, 0.0
    %v351 = vsel %vm144, %v175, 0.0
    %v352 = vsel %vm144, %v178, 0.0
    %v353 = vsel %vm144, %v181, 0.0
    %v354 = vsel %vm144, %v184, 0.0
    %v355 = vsel %vm144, %v187, 0.0
    %v356 = vsel %vm144, %v190, 0.0
    %v357 = vsel %vm144, %v193, 0.0
    %v358 = vsel %vm144, %v196, 0.0
    %v359 = vsel %vm144, %v199, 0.0
    %v360 = vsel %vm144, %v202, 0.0
    %v361 = vsel %vm144, %v205, 0.0
    %v362 = vsel %vm144, %v208, 0.0
    %v363 = vsel %vm144, %v211, 0.0
    %v364 = vsel %vm144, %v214, 0.0
    %v365 = vsel %vm144, %v217, 0.0
    %v366 = vsel %vm144, %v220, 0.0
    %v367 = vsel %vm144, %v223, 0.0
    %v368 = vsel %vm144, %v226, 0.0
    %v369 = vsel %vm144, %v229, 0.0
    %v370 = vsel %vm144, %v232, 0.0
    %v371 = vsel %vm144, %v235, 0.0
    %v372 = vsel %vm144, %v238, 0.0
    %v373 = vsel %vm144, %v241, 0.0
    %v440 = vcombine.high %v308, %v308
    %v442 = vunpack.c.l.s4 1983009808
    %v443 = vunpack.c.0.s8 %v442
    %v444 = vlaneseq
    %v445 = vshrl.u32 %v444, 7
    %v446 = vsub.s32 %v443, %v445
    %v447 = vrot.slane %v308, %v446
    %v449 = vunpack.c.l.s4 1983009808
    %v450 = vunpack.c.0.s8 %v449
    %v451 = vlaneseq
    %v452 = vshrl.u32 %v451, 7
    %v453 = vsub.s32 %v450, %v452
    %v454 = vrot.slane %v440, %v453
    %v455 = vcombine.high %v447, %v447
    %v456 = vcombine.high %v454, %v454
    %v457 = vcombine.high %v146, %v146
    %v459 = vunpack.c.l.s4 1983009808
    %v460 = vunpack.c.0.s8 %v459
    %v461 = vlaneseq
    %v462 = vshrl.u32 %v461, 7
    %v463 = vsub.s32 %v460, %v462
    %v464 = vrot.slane %v146, %v463
    %v466 = vunpack.c.l.s4 1983009808
    %v467 = vunpack.c.0.s8 %v466
    %v468 = vlaneseq
    %v469 = vshrl.u32 %v468, 7
    %v470 = vsub.s32 %v467, %v469
    %v471 = vrot.slane %v457, %v470
    %v472 = vcombine.high %v464, %v464
    %v473 = vcombine.high %v471, %v471
    %v475 = vunpack.c.l.s4 1983009808
    %v476 = vunpack.c.0.s8 %v475
    %v477 = vlaneseq
    %v478 = vshrl.u32 %v477, 7
    %v479 = vsub.s32 %v476, %v478
    %v480 = vrot.slane %v341, %v479
    %v481 = vcombine.high %v309, %v309
    %v483 = vunpack.c.l.s4 1983009808
    %v484 = vunpack.c.0.s8 %v483
    %v485 = vlaneseq
    %v486 = vshrl.u32 %v485, 7
    %v487 = vsub.s32 %v484, %v486
    %v488 = vrot.slane %v309, %v487
    %v490 = vunpack.c.l.s4 1983009808
    %v491 = vunpack.c.0.s8 %v490
    %v492 = vlaneseq
    %v493 = vshrl.u32 %v492, 7
    %v494 = vsub.s32 %v491, %v493
    %v495 = vrot.slane %v481, %v494
    %v496 = vcombine.high %v488, %v488
    %v497 = vcombine.high %v495, %v495
    %v498 = vcombine.high %v149, %v149
    %v500 = vunpack.c.l.s4 1983009808
    %v501 = vunpack.c.0.s8 %v500
    %v502 = vlaneseq
    %v503 = vshrl.u32 %v502, 7
    %v504 = vsub.s32 %v501, %v503
    %v505 = vrot.slane %v149, %v504
    %v507 = vunpack.c.l.s4 1983009808
    %v508 = vunpack.c.0.s8 %v507
    %v509 = vlaneseq
    %v510 = vshrl.u32 %v509, 7
    %v511 = vsub.s32 %v508, %v510
    %v512 = vrot.slane %v498, %v511
    %v513 = vcombine.high %v505, %v505
    %v514 = vcombine.high %v512, %v512
    %v516 = vunpack.c.l.s4 1983009808
    %v517 = vunpack.c.0.s8 %v516
    %v518 = vlaneseq
    %v519 = vshrl.u32 %v518, 7
    %v520 = vsub.s32 %v517, %v519
    %v521 = vrot.slane %v342, %v520
    %v522 = vcombine.high %v310, %v310
    %v524 = vunpack.c.l.s4 1983009808
    %v525 = vunpack.c.0.s8 %v524
    %v526 = vlaneseq
    %v527 = vshrl.u32 %v526, 7
    %v528 = vsub.s32 %v525, %v527
    %v529 = vrot.slane %v310, %v528
    %v531 = vunpack.c.l.s4 1983009808
    %v532 = vunpack.c.0.s8 %v531
    %v533 = vlaneseq
    %v534 = vshrl.u32 %v533, 7
    %v535 = vsub.s32 %v532, %v534
    %v536 = vrot.slane %v522, %v535
    %v537 = vcombine.high %v529, %v529
    %v538 = vcombine.high %v536, %v536
    %v539 = vcombine.high %v152, %v152
    %v541 = vunpack.c.l.s4 1983009808
    %v542 = vunpack.c.0.s8 %v541
    %v543 = vlaneseq
    %v544 = vshrl.u32 %v543, 7
    %v545 = vsub.s32 %v542, %v544
    %v546 = vrot.slane %v152, %v545
    %v548 = vunpack.c.l.s4 1983009808
    %v549 = vunpack.c.0.s8 %v548
    %v550 = vlaneseq
    %v551 = vshrl.u32 %v550, 7
    %v552 = vsub.s32 %v549, %v551
    %v553 = vrot.slane %v539, %v552
    %v554 = vcombine.high %v546, %v546
    %v555 = vcombine.high %v553, %v553
    %v557 = vunpack.c.l.s4 1983009808
    %v558 = vunpack.c.0.s8 %v557
    %v559 = vlaneseq
    %v560 = vshrl.u32 %v559, 7
    %v561 = vsub.s32 %v558, %v560
    %v562 = vrot.slane %v343, %v561
    %v563 = vcombine.high %v311, %v311
    %v565 = vunpack.c.l.s4 1983009808
    %v566 = vunpack.c.0.s8 %v565
    %v567 = vlaneseq
    %v568 = vshrl.u32 %v567, 7
    %v569 = vsub.s32 %v566, %v568
    %v570 = vrot.slane %v311, %v569
    %v572 = vunpack.c.l.s4 1983009808
    %v573 = vunpack.c.0.s8 %v572
    %v574 = vlaneseq
    %v575 = vshrl.u32 %v574, 7
    %v576 = vsub.s32 %v573, %v575
    %v577 = vrot.slane %v563, %v576
    %v578 = vcombine.high %v570, %v570
    %v579 = vcombine.high %v577, %v577
    %v580 = vcombine.high %v155, %v155
    %v582 = vunpack.c.l.s4 1983009808
    %v583 = vunpack.c.0.s8 %v582
    %v584 = vlaneseq
    %v585 = vshrl.u32 %v584, 7
    %v586 = vsub.s32 %v583, %v585
    %v587 = vrot.slane %v155, %v586
    %v589 = vunpack.c.l.s4 1983009808
    %v590 = vunpack.c.0.s8 %v589
    %v591 = vlaneseq
    %v592 = vshrl.u32 %v591, 7
    %v593 = vsub.s32 %v590, %v592
    %v594 = vrot.slane %v580, %v593
    %v595 = vcombine.high %v587, %v587
    %v596 = vcombine.high %v594, %v594
    %v598 = vunpack.c.l.s4 1983009808
    %v599 = vunpack.c.0.s8 %v598
    %v600 = vlaneseq
    %v601 = vshrl.u32 %v600, 7
    %v602 = vsub.s32 %v599, %v601
    %v603 = vrot.slane %v344, %v602
    %v604 = vcombine.high %v312, %v312
    %v606 = vunpack.c.l.s4 1983009808
    %v607 = vunpack.c.0.s8 %v606
    %v608 = vlaneseq
    %v609 = vshrl.u32 %v608, 7
    %v610 = vsub.s32 %v607, %v609
    %v611 = vrot.slane %v312, %v610
    %v613 = vunpack.c.l.s4 1983009808
    %v614 = vunpack.c.0.s8 %v613
    %v615 = vlaneseq
    %v616 = vshrl.u32 %v615, 7
    %v617 = vsub.s32 %v614, %v616
    %v618 = vrot.slane %v604, %v617
    %v619 = vcombine.high %v611, %v611
    %v620 = vcombine.high %v618, %v618
    %v621 = vcombine.high %v158, %v158
    %v623 = vunpack.c.l.s4 1983009808
    %v624 = vunpack.c.0.s8 %v623
    %v625 = vlaneseq
    %v626 = vshrl.u32 %v625, 7
    %v627 = vsub.s32 %v624, %v626
    %v628 = vrot.slane %v158, %v627
    %v630 = vunpack.c.l.s4 1983009808
    %v631 = vunpack.c.0.s8 %v630
    %v632 = vlaneseq
    %v633 = vshrl.u32 %v632, 7
    %v634 = vsub.s32 %v631, %v633
    %v635 = vrot.slane %v621, %v634
    %v636 = vcombine.high %v628, %v628
    %v637 = vcombine.high %v635, %v635
    %v639 = vunpack.c.l.s4 1983009808
    %v640 = vunpack.c.0.s8 %v639
    %v641 = vlaneseq
    %v642 = vshrl.u32 %v641, 7
    %v643 = vsub.s32 %v640, %v642
    %v644 = vrot.slane %v345, %v643
    %v645 = vcombine.high %v313, %v313
    %v647 = vunpack.c.l.s4 1983009808
    %v648 = vunpack.c.0.s8 %v647
    %v649 = vlaneseq
    %v650 = vshrl.u32 %v649, 7
    %v651 = vsub.s32 %v648, %v650
    %v652 = vrot.slane %v313, %v651
    %v654 = vunpack.c.l.s4 1983009808
    %v655 = vunpack.c.0.s8 %v654
    %v656 = vlaneseq
    %v657 = vshrl.u32 %v656, 7
    %v658 = vsub.s32 %v655, %v657
    %v659 = vrot.slane %v645, %v658
    %v660 = vcombine.high %v652, %v652
    %v661 = vcombine.high %v659, %v659
    %v662 = vcombine.high %v161, %v161
    %v664 = vunpack.c.l.s4 1983009808
    %v665 = vunpack.c.0.s8 %v664
    %v666 = vlaneseq
    %v667 = vshrl.u32 %v666, 7
    %v668 = vsub.s32 %v665, %v667
    %v669 = vrot.slane %v161, %v668
    %v671 = vunpack.c.l.s4 1983009808
    %v672 = vunpack.c.0.s8 %v671
    %v673 = vlaneseq
    %v674 = vshrl.u32 %v673, 7
    %v675 = vsub.s32 %v672, %v674
    %v676 = vrot.slane %v662, %v675
    %v677 = vcombine.high %v669, %v669
    %v678 = vcombine.high %v676, %v676
    %v680 = vunpack.c.l.s4 1983009808
    %v681 = vunpack.c.0.s8 %v680
    %v682 = vlaneseq
    %v683 = vshrl.u32 %v682, 7
    %v684 = vsub.s32 %v681, %v683
    %v685 = vrot.slane %v346, %v684
    %v686 = vcombine.high %v314, %v314
    %v688 = vunpack.c.l.s4 1983009808
    %v689 = vunpack.c.0.s8 %v688
    %v690 = vlaneseq
    %v691 = vshrl.u32 %v690, 7
    %v692 = vsub.s32 %v689, %v691
    %v693 = vrot.slane %v314, %v692
    %v695 = vunpack.c.l.s4 1983009808
    %v696 = vunpack.c.0.s8 %v695
    %v697 = vlaneseq
    %v698 = vshrl.u32 %v697, 7
    %v699 = vsub.s32 %v696, %v698
    %v700 = vrot.slane %v686, %v699
    %v701 = vcombine.high %v693, %v693
    %v702 = vcombine.high %v700, %v700
    %v703 = vcombine.high %v164, %v164
    %v705 = vunpack.c.l.s4 1983009808
    %v706 = vunpack.c.0.s8 %v705
    %v707 = vlaneseq
    %v708 = vshrl.u32 %v707, 7
    %v709 = vsub.s32 %v706, %v708
    %v710 = vrot.slane %v164, %v709
    %v712 = vunpack.c.l.s4 1983009808
    %v713 = vunpack.c.0.s8 %v712
    %v714 = vlaneseq
    %v715 = vshrl.u32 %v714, 7
    %v716 = vsub.s32 %v713, %v715
    %v717 = vrot.slane %v703, %v716
    %v718 = vcombine.high %v710, %v710
    %v719 = vcombine.high %v717, %v717
    %v721 = vunpack.c.l.s4 1983009808
    %v722 = vunpack.c.0.s8 %v721
    %v723 = vlaneseq
    %v724 = vshrl.u32 %v723, 7
    %v725 = vsub.s32 %v722, %v724
    %v726 = vrot.slane %v347, %v725
    %v727 = vcombine.high %v315, %v315
    %v729 = vunpack.c.l.s4 1983009808
    %v730 = vunpack.c.0.s8 %v729
    %v731 = vlaneseq
    %v732 = vshrl.u32 %v731, 7
    %v733 = vsub.s32 %v730, %v732
    %v734 = vrot.slane %v315, %v733
    %v736 = vunpack.c.l.s4 1983009808
    %v737 = vunpack.c.0.s8 %v736
    %v738 = vlaneseq
    %v739 = vshrl.u32 %v738, 7
    %v740 = vsub.s32 %v737, %v739
    %v741 = vrot.slane %v727, %v740
    %v742 = vcombine.high %v734, %v734
    %v743 = vcombine.high %v741, %v741
    %v744 = vcombine.high %v167, %v167
    %v746 = vunpack.c.l.s4 1983009808
    %v747 = vunpack.c.0.s8 %v746
    %v748 = vlaneseq
    %v749 = vshrl.u32 %v748, 7
    %v750 = vsub.s32 %v747, %v749
    %v751 = vrot.slane %v167, %v750
    %v753 = vunpack.c.l.s4 1983009808
    %v754 = vunpack.c.0.s8 %v753
    %v755 = vlaneseq
    %v756 = vshrl.u32 %v755, 7
    %v757 = vsub.s32 %v754, %v756
    %v758 = vrot.slane %v744, %v757
    %v759 = vcombine.high %v751, %v751
    %v760 = vcombine.high %v758, %v758
    %v762 = vunpack.c.l.s4 1983009808
    %v763 = vunpack.c.0.s8 %v762
    %v764 = vlaneseq
    %v765 = vshrl.u32 %v764, 7
    %v766 = vsub.s32 %v763, %v765
    %v767 = vrot.slane %v348, %v766
    %v768 = vcombine.high %v316, %v316
    %v770 = vunpack.c.l.s4 1983009808
    %v771 = vunpack.c.0.s8 %v770
    %v772 = vlaneseq
    %v773 = vshrl.u32 %v772, 7
    %v774 = vsub.s32 %v771, %v773
    %v775 = vrot.slane %v316, %v774
    %v777 = vunpack.c.l.s4 1983009808
    %v778 = vunpack.c.0.s8 %v777
    %v779 = vlaneseq
    %v780 = vshrl.u32 %v779, 7
    %v781 = vsub.s32 %v778, %v780
    %v782 = vrot.slane %v768, %v781
    %v783 = vcombine.high %v775, %v775
    %v784 = vcombine.high %v782, %v782
    %v785 = vcombine.high %v170, %v170
    %v787 = vunpack.c.l.s4 1983009808
    %v788 = vunpack.c.0.s8 %v787
    %v789 = vlaneseq
    %v790 = vshrl.u32 %v789, 7
    %v791 = vsub.s32 %v788, %v790
    %v792 = vrot.slane %v170, %v791
    %v794 = vunpack.c.l.s4 1983009808
    %v795 = vunpack.c.0.s8 %v794
    %v796 = vlaneseq
    %v797 = vshrl.u32 %v796, 7
    %v798 = vsub.s32 %v795, %v797
    %v799 = vrot.slane %v785, %v798
    %v800 = vcombine.high %v792, %v792
    %v801 = vcombine.high %v799, %v799
    %v803 = vunpack.c.l.s4 1983009808
    %v804 = vunpack.c.0.s8 %v803
    %v805 = vlaneseq
    %v806 = vshrl.u32 %v805, 7
    %v807 = vsub.s32 %v804, %v806
    %v808 = vrot.slane %v349, %v807
    %v809 = vcombine.high %v317, %v317
    %v811 = vunpack.c.l.s4 1983009808
    %v812 = vunpack.c.0.s8 %v811
    %v813 = vlaneseq
    %v814 = vshrl.u32 %v813, 7
    %v815 = vsub.s32 %v812, %v814
    %v816 = vrot.slane %v317, %v815
    %v818 = vunpack.c.l.s4 1983009808
    %v819 = vunpack.c.0.s8 %v818
    %v820 = vlaneseq
    %v821 = vshrl.u32 %v820, 7
    %v822 = vsub.s32 %v819, %v821
    %v823 = vrot.slane %v809, %v822
    %v824 = vcombine.high %v816, %v816
    %v825 = vcombine.high %v823, %v823
    %v826 = vcombine.high %v173, %v173
    %v828 = vunpack.c.l.s4 1983009808
    %v829 = vunpack.c.0.s8 %v828
    %v830 = vlaneseq
    %v831 = vshrl.u32 %v830, 7
    %v832 = vsub.s32 %v829, %v831
    %v833 = vrot.slane %v173, %v832
    %v835 = vunpack.c.l.s4 1983009808
    %v836 = vunpack.c.0.s8 %v835
    %v837 = vlaneseq
    %v838 = vshrl.u32 %v837, 7
    %v839 = vsub.s32 %v836, %v838
    %v840 = vrot.slane %v826, %v839
    %v841 = vcombine.high %v833, %v833
    %v842 = vcombine.high %v840, %v840
    %v844 = vunpack.c.l.s4 1983009808
    %v845 = vunpack.c.0.s8 %v844
    %v846 = vlaneseq
    %v847 = vshrl.u32 %v846, 7
    %v848 = vsub.s32 %v845, %v847
    %v849 = vrot.slane %v350, %v848
    %v850 = vcombine.high %v318, %v318
    %v852 = vunpack.c.l.s4 1983009808
    %v853 = vunpack.c.0.s8 %v852
    %v854 = vlaneseq
    %v855 = vshrl.u32 %v854, 7
    %v856 = vsub.s32 %v853, %v855
    %v857 = vrot.slane %v318, %v856
    %v859 = vunpack.c.l.s4 1983009808
    %v860 = vunpack.c.0.s8 %v859
    %v861 = vlaneseq
    %v862 = vshrl.u32 %v861, 7
    %v863 = vsub.s32 %v860, %v862
    %v864 = vrot.slane %v850, %v863
    %v865 = vcombine.high %v857, %v857
    %v866 = vcombine.high %v864, %v864
    %v867 = vcombine.high %v176, %v176
    %v869 = vunpack.c.l.s4 1983009808
    %v870 = vunpack.c.0.s8 %v869
    %v871 = vlaneseq
    %v872 = vshrl.u32 %v871, 7
    %v873 = vsub.s32 %v870, %v872
    %v874 = vrot.slane %v176, %v873
    %v876 = vunpack.c.l.s4 1983009808
    %v877 = vunpack.c.0.s8 %v876
    %v878 = vlaneseq
    %v879 = vshrl.u32 %v878, 7
    %v880 = vsub.s32 %v877, %v879
    %v881 = vrot.slane %v867, %v880
    %v882 = vcombine.high %v874, %v874
    %v883 = vcombine.high %v881, %v881
    %v885 = vunpack.c.l.s4 1983009808
    %v886 = vunpack.c.0.s8 %v885
    %v887 = vlaneseq
    %v888 = vshrl.u32 %v887, 7
    %v889 = vsub.s32 %v886, %v888
    %v890 = vrot.slane %v351, %v889
    %v891 = vcombine.high %v319, %v319
    %v893 = vunpack.c.l.s4 1983009808
    %v894 = vunpack.c.0.s8 %v893
    %v895 = vlaneseq
    %v896 = vshrl.u32 %v895, 7
    %v897 = vsub.s32 %v894, %v896
    %v898 = vrot.slane %v319, %v897
    %v900 = vunpack.c.l.s4 1983009808
    %v901 = vunpack.c.0.s8 %v900
    %v902 = vlaneseq
    %v903 = vshrl.u32 %v902, 7
    %v904 = vsub.s32 %v901, %v903
    %v905 = vrot.slane %v891, %v904
    %v906 = vcombine.high %v898, %v898
    %v907 = vcombine.high %v905, %v905
    %v908 = vcombine.high %v179, %v179
    %v910 = vunpack.c.l.s4 1983009808
    %v911 = vunpack.c.0.s8 %v910
    %v912 = vlaneseq
    %v913 = vshrl.u32 %v912, 7
    %v914 = vsub.s32 %v911, %v913
    %v915 = vrot.slane %v179, %v914
    %v917 = vunpack.c.l.s4 1983009808
    %v918 = vunpack.c.0.s8 %v917
    %v919 = vlaneseq
    %v920 = vshrl.u32 %v919, 7
    %v921 = vsub.s32 %v918, %v920
    %v922 = vrot.slane %v908, %v921
    %v923 = vcombine.high %v915, %v915
    %v924 = vcombine.high %v922, %v922
    %v926 = vunpack.c.l.s4 1983009808
    %v927 = vunpack.c.0.s8 %v926
    %v928 = vlaneseq
    %v929 = vshrl.u32 %v928, 7
    %v930 = vsub.s32 %v927, %v929
    %v931 = vrot.slane %v352, %v930
    %v932 = vcombine.high %v320, %v320
    %v934 = vunpack.c.l.s4 1983009808
    %v935 = vunpack.c.0.s8 %v934
    %v936 = vlaneseq
    %v937 = vshrl.u32 %v936, 7
    %v938 = vsub.s32 %v935, %v937
    %v939 = vrot.slane %v320, %v938
    %v941 = vunpack.c.l.s4 1983009808
    %v942 = vunpack.c.0.s8 %v941
    %v943 = vlaneseq
    %v944 = vshrl.u32 %v943, 7
    %v945 = vsub.s32 %v942, %v944
    %v946 = vrot.slane %v932, %v945
    %v947 = vcombine.high %v939, %v939
    %v948 = vcombine.high %v946, %v946
    %v949 = vcombine.high %v182, %v182
    %v951 = vunpack.c.l.s4 1983009808
    %v952 = vunpack.c.0.s8 %v951
    %v953 = vlaneseq
    %v954 = vshrl.u32 %v953, 7
    %v955 = vsub.s32 %v952, %v954
    %v956 = vrot.slane %v182, %v955
    %v958 = vunpack.c.l.s4 1983009808
    %v959 = vunpack.c.0.s8 %v958
    %v960 = vlaneseq
    %v961 = vshrl.u32 %v960, 7
    %v962 = vsub.s32 %v959, %v961
    %v963 = vrot.slane %v949, %v962
    %v964 = vcombine.high %v956, %v956
    %v965 = vcombine.high %v963, %v963
    %v967 = vunpack.c.l.s4 1983009808
    %v968 = vunpack.c.0.s8 %v967
    %v969 = vlaneseq
    %v970 = vshrl.u32 %v969, 7
    %v971 = vsub.s32 %v968, %v970
    %v972 = vrot.slane %v353, %v971
    %v973 = vcombine.high %v321, %v321
    %v975 = vunpack.c.l.s4 1983009808
    %v976 = vunpack.c.0.s8 %v975
    %v977 = vlaneseq
    %v978 = vshrl.u32 %v977, 7
    %v979 = vsub.s32 %v976, %v978
    %v980 = vrot.slane %v321, %v979
    %v982 = vunpack.c.l.s4 1983009808
    %v983 = vunpack.c.0.s8 %v982
    %v984 = vlaneseq
    %v985 = vshrl.u32 %v984, 7
    %v986 = vsub.s32 %v983, %v985
    %v987 = vrot.slane %v973, %v986
    %v988 = vcombine.high %v980, %v980
    %v989 = vcombine.high %v987, %v987
    %v990 = vcombine.high %v185, %v185
    %v992 = vunpack.c.l.s4 1983009808
    %v993 = vunpack.c.0.s8 %v992
    %v994 = vlaneseq
    %v995 = vshrl.u32 %v994, 7
    %v996 = vsub.s32 %v993, %v995
    %v997 = vrot.slane %v185, %v996
    %v999 = vunpack.c.l.s4 1983009808
    %v1000 = vunpack.c.0.s8 %v999
    %v1001 = vlaneseq
    %v1002 = vshrl.u32 %v1001, 7
    %v1003 = vsub.s32 %v1000, %v1002
    %v1004 = vrot.slane %v990, %v1003
    %v1005 = vcombine.high %v997, %v997
    %v1006 = vcombine.high %v1004, %v1004
    %v1008 = vunpack.c.l.s4 1983009808
    %v1009 = vunpack.c.0.s8 %v1008
    %v1010 = vlaneseq
    %v1011 = vshrl.u32 %v1010, 7
    %v1012 = vsub.s32 %v1009, %v1011
    %v1013 = vrot.slane %v354, %v1012
    %v1014 = vcombine.high %v322, %v322
    %v1016 = vunpack.c.l.s4 1983009808
    %v1017 = vunpack.c.0.s8 %v1016
    %v1018 = vlaneseq
    %v1019 = vshrl.u32 %v1018, 7
    %v1020 = vsub.s32 %v1017, %v1019
    %v1021 = vrot.slane %v322, %v1020
    %v1023 = vunpack.c.l.s4 1983009808
    %v1024 = vunpack.c.0.s8 %v1023
    %v1025 = vlaneseq
    %v1026 = vshrl.u32 %v1025, 7
    %v1027 = vsub.s32 %v1024, %v1026
    %v1028 = vrot.slane %v1014, %v1027
    %v1029 = vcombine.high %v1021, %v1021
    %v1030 = vcombine.high %v1028, %v1028
    %v1031 = vcombine.high %v188, %v188
    %v1033 = vunpack.c.l.s4 1983009808
    %v1034 = vunpack.c.0.s8 %v1033
    %v1035 = vlaneseq
    %v1036 = vshrl.u32 %v1035, 7
    %v1037 = vsub.s32 %v1034, %v1036
    %v1038 = vrot.slane %v188, %v1037
    %v1040 = vunpack.c.l.s4 1983009808
    %v1041 = vunpack.c.0.s8 %v1040
    %v1042 = vlaneseq
    %v1043 = vshrl.u32 %v1042, 7
    %v1044 = vsub.s32 %v1041, %v1043
    %v1045 = vrot.slane %v1031, %v1044
    %v1046 = vcombine.high %v1038, %v1038
    %v1047 = vcombine.high %v1045, %v1045
    %v1049 = vunpack.c.l.s4 1983009808
    %v1050 = vunpack.c.0.s8 %v1049
    %v1051 = vlaneseq
    %v1052 = vshrl.u32 %v1051, 7
    %v1053 = vsub.s32 %v1050, %v1052
    %v1054 = vrot.slane %v355, %v1053
    %v1055 = vcombine.high %v323, %v323
    %v1057 = vunpack.c.l.s4 1983009808
    %v1058 = vunpack.c.0.s8 %v1057
    %v1059 = vlaneseq
    %v1060 = vshrl.u32 %v1059, 7
    %v1061 = vsub.s32 %v1058, %v1060
    %v1062 = vrot.slane %v323, %v1061
    %v1064 = vunpack.c.l.s4 1983009808
    %v1065 = vunpack.c.0.s8 %v1064
    %v1066 = vlaneseq
    %v1067 = vshrl.u32 %v1066, 7
    %v1068 = vsub.s32 %v1065, %v1067
    %v1069 = vrot.slane %v1055, %v1068
    %v1070 = vcombine.high %v1062, %v1062
    %v1071 = vcombine.high %v1069, %v1069
    %v1072 = vcombine.high %v191, %v191
    %v1074 = vunpack.c.l.s4 1983009808
    %v1075 = vunpack.c.0.s8 %v1074
    %v1076 = vlaneseq
    %v1077 = vshrl.u32 %v1076, 7
    %v1078 = vsub.s32 %v1075, %v1077
    %v1079 = vrot.slane %v191, %v1078
    %v1081 = vunpack.c.l.s4 1983009808
    %v1082 = vunpack.c.0.s8 %v1081
    %v1083 = vlaneseq
    %v1084 = vshrl.u32 %v1083, 7
    %v1085 = vsub.s32 %v1082, %v1084
    %v1086 = vrot.slane %v1072, %v1085
    %v1087 = vcombine.high %v1079, %v1079
    %v1088 = vcombine.high %v1086, %v1086
    %v1090 = vunpack.c.l.s4 1983009808
    %v1091 = vunpack.c.0.s8 %v1090
    %v1092 = vlaneseq
    %v1093 = vshrl.u32 %v1092, 7
    %v1094 = vsub.s32 %v1091, %v1093
    %v1095 = vrot.slane %v356, %v1094
    %v1096 = vcombine.high %v324, %v324
    %v1098 = vunpack.c.l.s4 1983009808
    %v1099 = vunpack.c.0.s8 %v1098
    %v1100 = vlaneseq
    %v1101 = vshrl.u32 %v1100, 7
    %v1102 = vsub.s32 %v1099, %v1101
    %v1103 = vrot.slane %v324, %v1102
    %v1105 = vunpack.c.l.s4 1983009808
    %v1106 = vunpack.c.0.s8 %v1105
    %v1107 = vlaneseq
    %v1108 = vshrl.u32 %v1107, 7
    %v1109 = vsub.s32 %v1106, %v1108
    %v1110 = vrot.slane %v1096, %v1109
    %v1111 = vcombine.high %v1103, %v1103
    %v1112 = vcombine.high %v1110, %v1110
    %v1113 = vcombine.high %v194, %v194
    %v1115 = vunpack.c.l.s4 1983009808
    %v1116 = vunpack.c.0.s8 %v1115
    %v1117 = vlaneseq
    %v1118 = vshrl.u32 %v1117, 7
    %v1119 = vsub.s32 %v1116, %v1118
    %v1120 = vrot.slane %v194, %v1119
    %v1122 = vunpack.c.l.s4 1983009808
    %v1123 = vunpack.c.0.s8 %v1122
    %v1124 = vlaneseq
    %v1125 = vshrl.u32 %v1124, 7
    %v1126 = vsub.s32 %v1123, %v1125
    %v1127 = vrot.slane %v1113, %v1126
    %v1128 = vcombine.high %v1120, %v1120
    %v1129 = vcombine.high %v1127, %v1127
    %v1131 = vunpack.c.l.s4 1983009808
    %v1132 = vunpack.c.0.s8 %v1131
    %v1133 = vlaneseq
    %v1134 = vshrl.u32 %v1133, 7
    %v1135 = vsub.s32 %v1132, %v1134
    %v1136 = vrot.slane %v357, %v1135
    %v1137 = vcombine.high %v325, %v325
    %v1139 = vunpack.c.l.s4 1983009808
    %v1140 = vunpack.c.0.s8 %v1139
    %v1141 = vlaneseq
    %v1142 = vshrl.u32 %v1141, 7
    %v1143 = vsub.s32 %v1140, %v1142
    %v1144 = vrot.slane %v325, %v1143
    %v1146 = vunpack.c.l.s4 1983009808
    %v1147 = vunpack.c.0.s8 %v1146
    %v1148 = vlaneseq
    %v1149 = vshrl.u32 %v1148, 7
    %v1150 = vsub.s32 %v1147, %v1149
    %v1151 = vrot.slane %v1137, %v1150
    %v1152 = vcombine.high %v1144, %v1144
    %v1153 = vcombine.high %v1151, %v1151
    %v1154 = vcombine.high %v197, %v197
    %v1156 = vunpack.c.l.s4 1983009808
    %v1157 = vunpack.c.0.s8 %v1156
    %v1158 = vlaneseq
    %v1159 = vshrl.u32 %v1158, 7
    %v1160 = vsub.s32 %v1157, %v1159
    %v1161 = vrot.slane %v197, %v1160
    %v1163 = vunpack.c.l.s4 1983009808
    %v1164 = vunpack.c.0.s8 %v1163
    %v1165 = vlaneseq
    %v1166 = vshrl.u32 %v1165, 7
    %v1167 = vsub.s32 %v1164, %v1166
    %v1168 = vrot.slane %v1154, %v1167
    %v1169 = vcombine.high %v1161, %v1161
    %v1170 = vcombine.high %v1168, %v1168
    %v1172 = vunpack.c.l.s4 1983009808
    %v1173 = vunpack.c.0.s8 %v1172
    %v1174 = vlaneseq
    %v1175 = vshrl.u32 %v1174, 7
    %v1176 = vsub.s32 %v1173, %v1175
    %v1177 = vrot.slane %v358, %v1176
    %v1178 = vcombine.high %v326, %v326
    %v1180 = vunpack.c.l.s4 1983009808
    %v1181 = vunpack.c.0.s8 %v1180
    %v1182 = vlaneseq
    %v1183 = vshrl.u32 %v1182, 7
    %v1184 = vsub.s32 %v1181, %v1183
    %v1185 = vrot.slane %v326, %v1184
    %v1187 = vunpack.c.l.s4 1983009808
    %v1188 = vunpack.c.0.s8 %v1187
    %v1189 = vlaneseq
    %v1190 = vshrl.u32 %v1189, 7
    %v1191 = vsub.s32 %v1188, %v1190
    %v1192 = vrot.slane %v1178, %v1191
    %v1193 = vcombine.high %v1185, %v1185
    %v1194 = vcombine.high %v1192, %v1192
    %v1195 = vcombine.high %v200, %v200
    %v1197 = vunpack.c.l.s4 1983009808
    %v1198 = vunpack.c.0.s8 %v1197
    %v1199 = vlaneseq
    %v1200 = vshrl.u32 %v1199, 7
    %v1201 = vsub.s32 %v1198, %v1200
    %v1202 = vrot.slane %v200, %v1201
    %v1204 = vunpack.c.l.s4 1983009808
    %v1205 = vunpack.c.0.s8 %v1204
    %v1206 = vlaneseq
    %v1207 = vshrl.u32 %v1206, 7
    %v1208 = vsub.s32 %v1205, %v1207
    %v1209 = vrot.slane %v1195, %v1208
    %v1210 = vcombine.high %v1202, %v1202
    %v1211 = vcombine.high %v1209, %v1209
    %v1213 = vunpack.c.l.s4 1983009808
    %v1214 = vunpack.c.0.s8 %v1213
    %v1215 = vlaneseq
    %v1216 = vshrl.u32 %v1215, 7
    %v1217 = vsub.s32 %v1214, %v1216
    %v1218 = vrot.slane %v359, %v1217
    %v1219 = vcombine.high %v327, %v327
    %v1221 = vunpack.c.l.s4 1983009808
    %v1222 = vunpack.c.0.s8 %v1221
    %v1223 = vlaneseq
    %v1224 = vshrl.u32 %v1223, 7
    %v1225 = vsub.s32 %v1222, %v1224
    %v1226 = vrot.slane %v327, %v1225
    %v1228 = vunpack.c.l.s4 1983009808
    %v1229 = vunpack.c.0.s8 %v1228
    %v1230 = vlaneseq
    %v1231 = vshrl.u32 %v1230, 7
    %v1232 = vsub.s32 %v1229, %v1231
    %v1233 = vrot.slane %v1219, %v1232
    %v1234 = vcombine.high %v1226, %v1226
    %v1235 = vcombine.high %v1233, %v1233
    %v1236 = vcombine.high %v203, %v203
    %v1238 = vunpack.c.l.s4 1983009808
    %v1239 = vunpack.c.0.s8 %v1238
    %v1240 = vlaneseq
    %v1241 = vshrl.u32 %v1240, 7
    %v1242 = vsub.s32 %v1239, %v1241
    %v1243 = vrot.slane %v203, %v1242
    %v1245 = vunpack.c.l.s4 1983009808
    %v1246 = vunpack.c.0.s8 %v1245
    %v1247 = vlaneseq
    %v1248 = vshrl.u32 %v1247, 7
    %v1249 = vsub.s32 %v1246, %v1248
    %v1250 = vrot.slane %v1236, %v1249
    %v1251 = vcombine.high %v1243, %v1243
    %v1252 = vcombine.high %v1250, %v1250
    %v1254 = vunpack.c.l.s4 1983009808
    %v1255 = vunpack.c.0.s8 %v1254
    %v1256 = vlaneseq
    %v1257 = vshrl.u32 %v1256, 7
    %v1258 = vsub.s32 %v1255, %v1257
    %v1259 = vrot.slane %v360, %v1258
    %v1260 = vcombine.high %v328, %v328
    %v1262 = vunpack.c.l.s4 1983009808
    %v1263 = vunpack.c.0.s8 %v1262
    %v1264 = vlaneseq
    %v1265 = vshrl.u32 %v1264, 7
    %v1266 = vsub.s32 %v1263, %v1265
    %v1267 = vrot.slane %v328, %v1266
    %v1269 = vunpack.c.l.s4 1983009808
    %v1270 = vunpack.c.0.s8 %v1269
    %v1271 = vlaneseq
    %v1272 = vshrl.u32 %v1271, 7
    %v1273 = vsub.s32 %v1270, %v1272
    %v1274 = vrot.slane %v1260, %v1273
    %v1275 = vcombine.high %v1267, %v1267
    %v1276 = vcombine.high %v1274, %v1274
    %v1277 = vcombine.high %v206, %v206
    %v1279 = vunpack.c.l.s4 1983009808
    %v1280 = vunpack.c.0.s8 %v1279
    %v1281 = vlaneseq
    %v1282 = vshrl.u32 %v1281, 7
    %v1283 = vsub.s32 %v1280, %v1282
    %v1284 = vrot.slane %v206, %v1283
    %v1286 = vunpack.c.l.s4 1983009808
    %v1287 = vunpack.c.0.s8 %v1286
    %v1288 = vlaneseq
    %v1289 = vshrl.u32 %v1288, 7
    %v1290 = vsub.s32 %v1287, %v1289
    %v1291 = vrot.slane %v1277, %v1290
    %v1292 = vcombine.high %v1284, %v1284
    %v1293 = vcombine.high %v1291, %v1291
    %v1295 = vunpack.c.l.s4 1983009808
    %v1296 = vunpack.c.0.s8 %v1295
    %v1297 = vlaneseq
    %v1298 = vshrl.u32 %v1297, 7
    %v1299 = vsub.s32 %v1296, %v1298
    %v1300 = vrot.slane %v361, %v1299
    %v1301 = vcombine.high %v329, %v329
    %v1303 = vunpack.c.l.s4 1983009808
    %v1304 = vunpack.c.0.s8 %v1303
    %v1305 = vlaneseq
    %v1306 = vshrl.u32 %v1305, 7
    %v1307 = vsub.s32 %v1304, %v1306
    %v1308 = vrot.slane %v329, %v1307
    %v1310 = vunpack.c.l.s4 1983009808
    %v1311 = vunpack.c.0.s8 %v1310
    %v1312 = vlaneseq
    %v1313 = vshrl.u32 %v1312, 7
    %v1314 = vsub.s32 %v1311, %v1313
    %v1315 = vrot.slane %v1301, %v1314
    %v1316 = vcombine.high %v1308, %v1308
    %v1317 = vcombine.high %v1315, %v1315
    %v1318 = vcombine.high %v209, %v209
    %v1320 = vunpack.c.l.s4 1983009808
    %v1321 = vunpack.c.0.s8 %v1320
    %v1322 = vlaneseq
    %v1323 = vshrl.u32 %v1322, 7
    %v1324 = vsub.s32 %v1321, %v1323
    %v1325 = vrot.slane %v209, %v1324
    %v1327 = vunpack.c.l.s4 1983009808
    %v1328 = vunpack.c.0.s8 %v1327
    %v1329 = vlaneseq
    %v1330 = vshrl.u32 %v1329, 7
    %v1331 = vsub.s32 %v1328, %v1330
    %v1332 = vrot.slane %v1318, %v1331
    %v1333 = vcombine.high %v1325, %v1325
    %v1334 = vcombine.high %v1332, %v1332
    %v1336 = vunpack.c.l.s4 1983009808
    %v1337 = vunpack.c.0.s8 %v1336
    %v1338 = vlaneseq
    %v1339 = vshrl.u32 %v1338, 7
    %v1340 = vsub.s32 %v1337, %v1339
    %v1341 = vrot.slane %v362, %v1340
    %v1342 = vcombine.high %v330, %v330
    %v1344 = vunpack.c.l.s4 1983009808
    %v1345 = vunpack.c.0.s8 %v1344
    %v1346 = vlaneseq
    %v1347 = vshrl.u32 %v1346, 7
    %v1348 = vsub.s32 %v1345, %v1347
    %v1349 = vrot.slane %v330, %v1348
    %v1351 = vunpack.c.l.s4 1983009808
    %v1352 = vunpack.c.0.s8 %v1351
    %v1353 = vlaneseq
    %v1354 = vshrl.u32 %v1353, 7
    %v1355 = vsub.s32 %v1352, %v1354
    %v1356 = vrot.slane %v1342, %v1355
    %v1357 = vcombine.high %v1349, %v1349
    %v1358 = vcombine.high %v1356, %v1356
    %v1359 = vcombine.high %v212, %v212
    %v1361 = vunpack.c.l.s4 1983009808
    %v1362 = vunpack.c.0.s8 %v1361
    %v1363 = vlaneseq
    %v1364 = vshrl.u32 %v1363, 7
    %v1365 = vsub.s32 %v1362, %v1364
    %v1366 = vrot.slane %v212, %v1365
    %v1368 = vunpack.c.l.s4 1983009808
    %v1369 = vunpack.c.0.s8 %v1368
    %v1370 = vlaneseq
    %v1371 = vshrl.u32 %v1370, 7
    %v1372 = vsub.s32 %v1369, %v1371
    %v1373 = vrot.slane %v1359, %v1372
    %v1374 = vcombine.high %v1366, %v1366
    %v1375 = vcombine.high %v1373, %v1373
    %v1377 = vunpack.c.l.s4 1983009808
    %v1378 = vunpack.c.0.s8 %v1377
    %v1379 = vlaneseq
    %v1380 = vshrl.u32 %v1379, 7
    %v1381 = vsub.s32 %v1378, %v1380
    %v1382 = vrot.slane %v363, %v1381
    %v1383 = vcombine.high %v331, %v331
    %v1385 = vunpack.c.l.s4 1983009808
    %v1386 = vunpack.c.0.s8 %v1385
    %v1387 = vlaneseq
    %v1388 = vshrl.u32 %v1387, 7
    %v1389 = vsub.s32 %v1386, %v1388
    %v1390 = vrot.slane %v331, %v1389
    %v1392 = vunpack.c.l.s4 1983009808
    %v1393 = vunpack.c.0.s8 %v1392
    %v1394 = vlaneseq
    %v1395 = vshrl.u32 %v1394, 7
    %v1396 = vsub.s32 %v1393, %v1395
    %v1397 = vrot.slane %v1383, %v1396
    %v1398 = vcombine.high %v1390, %v1390
    %v1399 = vcombine.high %v1397, %v1397
    %v1400 = vcombine.high %v215, %v215
    %v1402 = vunpack.c.l.s4 1983009808
    %v1403 = vunpack.c.0.s8 %v1402
    %v1404 = vlaneseq
    %v1405 = vshrl.u32 %v1404, 7
    %v1406 = vsub.s32 %v1403, %v1405
    %v1407 = vrot.slane %v215, %v1406
    %v1409 = vunpack.c.l.s4 1983009808
    %v1410 = vunpack.c.0.s8 %v1409
    %v1411 = vlaneseq
    %v1412 = vshrl.u32 %v1411, 7
    %v1413 = vsub.s32 %v1410, %v1412
    %v1414 = vrot.slane %v1400, %v1413
    %v1415 = vcombine.high %v1407, %v1407
    %v1416 = vcombine.high %v1414, %v1414
    %v1418 = vunpack.c.l.s4 1983009808
    %v1419 = vunpack.c.0.s8 %v1418
    %v1420 = vlaneseq
    %v1421 = vshrl.u32 %v1420, 7
    %v1422 = vsub.s32 %v1419, %v1421
    %v1423 = vrot.slane %v364, %v1422
    %v1424 = vcombine.high %v332, %v332
    %v1426 = vunpack.c.l.s4 1983009808
    %v1427 = vunpack.c.0.s8 %v1426
    %v1428 = vlaneseq
    %v1429 = vshrl.u32 %v1428, 7
    %v1430 = vsub.s32 %v1427, %v1429
    %v1431 = vrot.slane %v332, %v1430
    %v1433 = vunpack.c.l.s4 1983009808
    %v1434 = vunpack.c.0.s8 %v1433
    %v1435 = vlaneseq
    %v1436 = vshrl.u32 %v1435, 7
    %v1437 = vsub.s32 %v1434, %v1436
    %v1438 = vrot.slane %v1424, %v1437
    %v1439 = vcombine.high %v1431, %v1431
    %v1440 = vcombine.high %v1438, %v1438
    %v1441 = vcombine.high %v218, %v218
    %v1443 = vunpack.c.l.s4 1983009808
    %v1444 = vunpack.c.0.s8 %v1443
    %v1445 = vlaneseq
    %v1446 = vshrl.u32 %v1445, 7
    %v1447 = vsub.s32 %v1444, %v1446
    %v1448 = vrot.slane %v218, %v1447
    %v1450 = vunpack.c.l.s4 1983009808
    %v1451 = vunpack.c.0.s8 %v1450
    %v1452 = vlaneseq
    %v1453 = vshrl.u32 %v1452, 7
    %v1454 = vsub.s32 %v1451, %v1453
    %v1455 = vrot.slane %v1441, %v1454
    %v1456 = vcombine.high %v1448, %v1448
    %v1457 = vcombine.high %v1455, %v1455
    %v1459 = vunpack.c.l.s4 1983009808
    %v1460 = vunpack.c.0.s8 %v1459
    %v1461 = vlaneseq
    %v1462 = vshrl.u32 %v1461, 7
    %v1463 = vsub.s32 %v1460, %v1462
    %v1464 = vrot.slane %v365, %v1463
    %v1465 = vcombine.high %v333, %v333
    %v1467 = vunpack.c.l.s4 1983009808
    %v1468 = vunpack.c.0.s8 %v1467
    %v1469 = vlaneseq
    %v1470 = vshrl.u32 %v1469, 7
    %v1471 = vsub.s32 %v1468, %v1470
    %v1472 = vrot.slane %v333, %v1471
    %v1474 = vunpack.c.l.s4 1983009808
    %v1475 = vunpack.c.0.s8 %v1474
    %v1476 = vlaneseq
    %v1477 = vshrl.u32 %v1476, 7
    %v1478 = vsub.s32 %v1475, %v1477
    %v1479 = vrot.slane %v1465, %v1478
    %v1480 = vcombine.high %v1472, %v1472
    %v1481 = vcombine.high %v1479, %v1479
    %v1482 = vcombine.high %v221, %v221
    %v1484 = vunpack.c.l.s4 1983009808
    %v1485 = vunpack.c.0.s8 %v1484
    %v1486 = vlaneseq
    %v1487 = vshrl.u32 %v1486, 7
    %v1488 = vsub.s32 %v1485, %v1487
    %v1489 = vrot.slane %v221, %v1488
    %v1491 = vunpack.c.l.s4 1983009808
    %v1492 = vunpack.c.0.s8 %v1491
    %v1493 = vlaneseq
    %v1494 = vshrl.u32 %v1493, 7
    %v1495 = vsub.s32 %v1492, %v1494
    %v1496 = vrot.slane %v1482, %v1495
    %v1497 = vcombine.high %v1489, %v1489
    %v1498 = vcombine.high %v1496, %v1496
    %v1500 = vunpack.c.l.s4 1983009808
    %v1501 = vunpack.c.0.s8 %v1500
    %v1502 = vlaneseq
    %v1503 = vshrl.u32 %v1502, 7
    %v1504 = vsub.s32 %v1501, %v1503
    %v1505 = vrot.slane %v366, %v1504
    %v1506 = vcombine.high %v334, %v334
    %v1508 = vunpack.c.l.s4 1983009808
    %v1509 = vunpack.c.0.s8 %v1508
    %v1510 = vlaneseq
    %v1511 = vshrl.u32 %v1510, 7
    %v1512 = vsub.s32 %v1509, %v1511
    %v1513 = vrot.slane %v334, %v1512
    %v1515 = vunpack.c.l.s4 1983009808
    %v1516 = vunpack.c.0.s8 %v1515
    %v1517 = vlaneseq
    %v1518 = vshrl.u32 %v1517, 7
    %v1519 = vsub.s32 %v1516, %v1518
    %v1520 = vrot.slane %v1506, %v1519
    %v1521 = vcombine.high %v1513, %v1513
    %v1522 = vcombine.high %v1520, %v1520
    %v1523 = vcombine.high %v224, %v224
    %v1525 = vunpack.c.l.s4 1983009808
    %v1526 = vunpack.c.0.s8 %v1525
    %v1527 = vlaneseq
    %v1528 = vshrl.u32 %v1527, 7
    %v1529 = vsub.s32 %v1526, %v1528
    %v1530 = vrot.slane %v224, %v1529
    %v1532 = vunpack.c.l.s4 1983009808
    %v1533 = vunpack.c.0.s8 %v1532
    %v1534 = vlaneseq
    %v1535 = vshrl.u32 %v1534, 7
    %v1536 = vsub.s32 %v1533, %v1535
    %v1537 = vrot.slane %v1523, %v1536
    %v1538 = vcombine.high %v1530, %v1530
    %v1539 = vcombine.high %v1537, %v1537
    %v1541 = vunpack.c.l.s4 1983009808
    %v1542 = vunpack.c.0.s8 %v1541
    %v1543 = vlaneseq
    %v1544 = vshrl.u32 %v1543, 7
    %v1545 = vsub.s32 %v1542, %v1544
    %v1546 = vrot.slane %v367, %v1545
    %v1547 = vcombine.high %v335, %v335
    %v1549 = vunpack.c.l.s4 1983009808
    %v1550 = vunpack.c.0.s8 %v1549
    %v1551 = vlaneseq
    %v1552 = vshrl.u32 %v1551, 7
    %v1553 = vsub.s32 %v1550, %v1552
    %v1554 = vrot.slane %v335, %v1553
    %v1556 = vunpack.c.l.s4 1983009808
    %v1557 = vunpack.c.0.s8 %v1556
    %v1558 = vlaneseq
    %v1559 = vshrl.u32 %v1558, 7
    %v1560 = vsub.s32 %v1557, %v1559
    %v1561 = vrot.slane %v1547, %v1560
    %v1562 = vcombine.high %v1554, %v1554
    %v1563 = vcombine.high %v1561, %v1561
    %v1564 = vcombine.high %v227, %v227
    %v1566 = vunpack.c.l.s4 1983009808
    %v1567 = vunpack.c.0.s8 %v1566
    %v1568 = vlaneseq
    %v1569 = vshrl.u32 %v1568, 7
    %v1570 = vsub.s32 %v1567, %v1569
    %v1571 = vrot.slane %v227, %v1570
    %v1573 = vunpack.c.l.s4 1983009808
    %v1574 = vunpack.c.0.s8 %v1573
    %v1575 = vlaneseq
    %v1576 = vshrl.u32 %v1575, 7
    %v1577 = vsub.s32 %v1574, %v1576
    %v1578 = vrot.slane %v1564, %v1577
    %v1579 = vcombine.high %v1571, %v1571
    %v1580 = vcombine.high %v1578, %v1578
    %v1582 = vunpack.c.l.s4 1983009808
    %v1583 = vunpack.c.0.s8 %v1582
    %v1584 = vlaneseq
    %v1585 = vshrl.u32 %v1584, 7
    %v1586 = vsub.s32 %v1583, %v1585
    %v1587 = vrot.slane %v368, %v1586
    %v1588 = vcombine.high %v336, %v336
    %v1590 = vunpack.c.l.s4 1983009808
    %v1591 = vunpack.c.0.s8 %v1590
    %v1592 = vlaneseq
    %v1593 = vshrl.u32 %v1592, 7
    %v1594 = vsub.s32 %v1591, %v1593
    %v1595 = vrot.slane %v336, %v1594
    %v1597 = vunpack.c.l.s4 1983009808
    %v1598 = vunpack.c.0.s8 %v1597
    %v1599 = vlaneseq
    %v1600 = vshrl.u32 %v1599, 7
    %v1601 = vsub.s32 %v1598, %v1600
    %v1602 = vrot.slane %v1588, %v1601
    %v1603 = vcombine.high %v1595, %v1595
    %v1604 = vcombine.high %v1602, %v1602
    %v1605 = vcombine.high %v230, %v230
    %v1607 = vunpack.c.l.s4 1983009808
    %v1608 = vunpack.c.0.s8 %v1607
    %v1609 = vlaneseq
    %v1610 = vshrl.u32 %v1609, 7
    %v1611 = vsub.s32 %v1608, %v1610
    %v1612 = vrot.slane %v230, %v1611
    %v1614 = vunpack.c.l.s4 1983009808
    %v1615 = vunpack.c.0.s8 %v1614
    %v1616 = vlaneseq
    %v1617 = vshrl.u32 %v1616, 7
    %v1618 = vsub.s32 %v1615, %v1617
    %v1619 = vrot.slane %v1605, %v1618
    %v1620 = vcombine.high %v1612, %v1612
    %v1621 = vcombine.high %v1619, %v1619
    %v1623 = vunpack.c.l.s4 1983009808
    %v1624 = vunpack.c.0.s8 %v1623
    %v1625 = vlaneseq
    %v1626 = vshrl.u32 %v1625, 7
    %v1627 = vsub.s32 %v1624, %v1626
    %v1628 = vrot.slane %v369, %v1627
    %v1629 = vcombine.high %v337, %v337
    %v1631 = vunpack.c.l.s4 1983009808
    %v1632 = vunpack.c.0.s8 %v1631
    %v1633 = vlaneseq
    %v1634 = vshrl.u32 %v1633, 7
    %v1635 = vsub.s32 %v1632, %v1634
    %v1636 = vrot.slane %v337, %v1635
    %v1638 = vunpack.c.l.s4 1983009808
    %v1639 = vunpack.c.0.s8 %v1638
    %v1640 = vlaneseq
    %v1641 = vshrl.u32 %v1640, 7
    %v1642 = vsub.s32 %v1639, %v1641
    %v1643 = vrot.slane %v1629, %v1642
    %v1644 = vcombine.high %v1636, %v1636
    %v1645 = vcombine.high %v1643, %v1643
    %v1646 = vcombine.high %v233, %v233
    %v1648 = vunpack.c.l.s4 1983009808
    %v1649 = vunpack.c.0.s8 %v1648
    %v1650 = vlaneseq
    %v1651 = vshrl.u32 %v1650, 7
    %v1652 = vsub.s32 %v1649, %v1651
    %v1653 = vrot.slane %v233, %v1652
    %v1655 = vunpack.c.l.s4 1983009808
    %v1656 = vunpack.c.0.s8 %v1655
    %v1657 = vlaneseq
    %v1658 = vshrl.u32 %v1657, 7
    %v1659 = vsub.s32 %v1656, %v1658
    %v1660 = vrot.slane %v1646, %v1659
    %v1661 = vcombine.high %v1653, %v1653
    %v1662 = vcombine.high %v1660, %v1660
    %v1664 = vunpack.c.l.s4 1983009808
    %v1665 = vunpack.c.0.s8 %v1664
    %v1666 = vlaneseq
    %v1667 = vshrl.u32 %v1666, 7
    %v1668 = vsub.s32 %v1665, %v1667
    %v1669 = vrot.slane %v370, %v1668
    %v1670 = vcombine.high %v338, %v338
    %v1672 = vunpack.c.l.s4 1983009808
    %v1673 = vunpack.c.0.s8 %v1672
    %v1674 = vlaneseq
    %v1675 = vshrl.u32 %v1674, 7
    %v1676 = vsub.s32 %v1673, %v1675
    %v1677 = vrot.slane %v338, %v1676
    %v1679 = vunpack.c.l.s4 1983009808
    %v1680 = vunpack.c.0.s8 %v1679
    %v1681 = vlaneseq
    %v1682 = vshrl.u32 %v1681, 7
    %v1683 = vsub.s32 %v1680, %v1682
    %v1684 = vrot.slane %v1670, %v1683
    %v1685 = vcombine.high %v1677, %v1677
    %v1686 = vcombine.high %v1684, %v1684
    %v1687 = vcombine.high %v236, %v236
    %v1689 = vunpack.c.l.s4 1983009808
    %v1690 = vunpack.c.0.s8 %v1689
    %v1691 = vlaneseq
    %v1692 = vshrl.u32 %v1691, 7
    %v1693 = vsub.s32 %v1690, %v1692
    %v1694 = vrot.slane %v236, %v1693
    %v1696 = vunpack.c.l.s4 1983009808
    %v1697 = vunpack.c.0.s8 %v1696
    %v1698 = vlaneseq
    %v1699 = vshrl.u32 %v1698, 7
    %v1700 = vsub.s32 %v1697, %v1699
    %v1701 = vrot.slane %v1687, %v1700
    %v1702 = vcombine.high %v1694, %v1694
    %v1703 = vcombine.high %v1701, %v1701
    %v1705 = vunpack.c.l.s4 1983009808
    %v1706 = vunpack.c.0.s8 %v1705
    %v1707 = vlaneseq
    %v1708 = vshrl.u32 %v1707, 7
    %v1709 = vsub.s32 %v1706, %v1708
    %v1710 = vrot.slane %v371, %v1709
    %v1711 = vcombine.high %v339, %v339
    %v1713 = vunpack.c.l.s4 1983009808
    %v1714 = vunpack.c.0.s8 %v1713
    %v1715 = vlaneseq
    %v1716 = vshrl.u32 %v1715, 7
    %v1717 = vsub.s32 %v1714, %v1716
    %v1718 = vrot.slane %v339, %v1717
    %v1720 = vunpack.c.l.s4 1983009808
    %v1721 = vunpack.c.0.s8 %v1720
    %v1722 = vlaneseq
    %v1723 = vshrl.u32 %v1722, 7
    %v1724 = vsub.s32 %v1721, %v1723
    %v1725 = vrot.slane %v1711, %v1724
    %v1726 = vcombine.high %v1718, %v1718
    %v1727 = vcombine.high %v1725, %v1725
    %v1728 = vcombine.high %v239, %v239
    %v1730 = vunpack.c.l.s4 1983009808
    %v1731 = vunpack.c.0.s8 %v1730
    %v1732 = vlaneseq
    %v1733 = vshrl.u32 %v1732, 7
    %v1734 = vsub.s32 %v1731, %v1733
    %v1735 = vrot.slane %v239, %v1734
    %v1737 = vunpack.c.l.s4 1983009808
    %v1738 = vunpack.c.0.s8 %v1737
    %v1739 = vlaneseq
    %v1740 = vshrl.u32 %v1739, 7
    %v1741 = vsub.s32 %v1738, %v1740
    %v1742 = vrot.slane %v1728, %v1741
    %v1743 = vcombine.high %v1735, %v1735
    %v1744 = vcombine.high %v1742, %v1742
    %v1746 = vunpack.c.l.s4 1983009808
    %v1747 = vunpack.c.0.s8 %v1746
    %v1748 = vlaneseq
    %v1749 = vshrl.u32 %v1748, 7
    %v1750 = vsub.s32 %v1747, %v1749
    %v1751 = vrot.slane %v372, %v1750
    %v1752 = vcombine.high %v340, %v340
    %v1754 = vunpack.c.l.s4 1983009808
    %v1755 = vunpack.c.0.s8 %v1754
    %v1756 = vlaneseq
    %v1757 = vshrl.u32 %v1756, 7
    %v1758 = vsub.s32 %v1755, %v1757
    %v1759 = vrot.slane %v340, %v1758
    %v1761 = vunpack.c.l.s4 1983009808
    %v1762 = vunpack.c.0.s8 %v1761
    %v1763 = vlaneseq
    %v1764 = vshrl.u32 %v1763, 7
    %v1765 = vsub.s32 %v1762, %v1764
    %v1766 = vrot.slane %v1752, %v1765
    %v1767 = vcombine.high %v1759, %v1759
    %v1768 = vcombine.high %v1766, %v1766
    %v1769 = vcombine.high %v242, %v242
    %v1771 = vunpack.c.l.s4 1983009808
    %v1772 = vunpack.c.0.s8 %v1771
    %v1773 = vlaneseq
    %v1774 = vshrl.u32 %v1773, 7
    %v1775 = vsub.s32 %v1772, %v1774
    %v1776 = vrot.slane %v242, %v1775
    %v1778 = vunpack.c.l.s4 1983009808
    %v1779 = vunpack.c.0.s8 %v1778
    %v1780 = vlaneseq
    %v1781 = vshrl.u32 %v1780, 7
    %v1782 = vsub.s32 %v1779, %v1781
    %v1783 = vrot.slane %v1769, %v1782
    %v1784 = vcombine.high %v1776, %v1776
    %v1785 = vcombine.high %v1783, %v1783
    %v1787 = vunpack.c.l.s4 1983009808
    %v1788 = vunpack.c.0.s8 %v1787
    %v1789 = vlaneseq
    %v1790 = vshrl.u32 %v1789, 7
    %v1791 = vsub.s32 %v1788, %v1790
    %v1792 = vrot.slane %v373, %v1791
    %v1793 = vlaneseq
    %v1794 = vshrl.u32 %v1793, 7
    %v1795 = vsub.s32 0, %v1794
    %v1796 = vrot.slane %v447, %v1795
    %v1797 = vlaneseq
    %v1798 = vshrl.u32 %v1797, 7
    %v1799 = vsub.s32 0, %v1798
    %v1800 = vrot.slane %v455, %v1799
    %v1801 = vlaneseq
    %v1802 = vshrl.u32 %v1801, 7
    %v1803 = vsub.s32 0, %v1802
    %v1804 = vrot.slane %v454, %v1803
    %v1805 = vlaneseq
    %v1806 = vshrl.u32 %v1805, 7
    %v1807 = vsub.s32 0, %v1806
    %v1808 = vrot.slane %v456, %v1807
    %v1809 = vlaneseq
    %v1810 = vshrl.u32 %v1809, 7
    %v1811 = vsub.s32 0, %v1810
    %v1812 = vrot.slane %v464, %v1811
    %v1813 = vlaneseq
    %v1814 = vshrl.u32 %v1813, 7
    %v1815 = vsub.s32 0, %v1814
    %v1816 = vrot.slane %v472, %v1815
    %v1817 = vlaneseq
    %v1818 = vshrl.u32 %v1817, 7
    %v1819 = vsub.s32 0, %v1818
    %v1820 = vrot.slane %v471, %v1819
    %v1821 = vlaneseq
    %v1822 = vshrl.u32 %v1821, 7
    %v1823 = vsub.s32 0, %v1822
    %v1824 = vrot.slane %v473, %v1823
    %v1825 = vlaneseq
    %v1826 = vshrl.u32 %v1825, 7
    %v1827 = vsub.s32 0, %v1826
    %v1828 = vrot.slane %v529, %v1827
    %v1829 = vlaneseq
    %v1830 = vshrl.u32 %v1829, 7
    %v1831 = vsub.s32 0, %v1830
    %v1832 = vrot.slane %v537, %v1831
    %v1833 = vlaneseq
    %v1834 = vshrl.u32 %v1833, 7
    %v1835 = vsub.s32 0, %v1834
    %v1836 = vrot.slane %v536, %v1835
    %v1837 = vlaneseq
    %v1838 = vshrl.u32 %v1837, 7
    %v1839 = vsub.s32 0, %v1838
    %v1840 = vrot.slane %v538, %v1839
    %v1841 = vlaneseq
    %v1842 = vshrl.u32 %v1841, 7
    %v1843 = vsub.s32 0, %v1842
    %v1844 = vrot.slane %v546, %v1843
    %v1845 = vlaneseq
    %v1846 = vshrl.u32 %v1845, 7
    %v1847 = vsub.s32 0, %v1846
    %v1848 = vrot.slane %v554, %v1847
    %v1849 = vlaneseq
    %v1850 = vshrl.u32 %v1849, 7
    %v1851 = vsub.s32 0, %v1850
    %v1852 = vrot.slane %v553, %v1851
    %v1853 = vlaneseq
    %v1854 = vshrl.u32 %v1853, 7
    %v1855 = vsub.s32 0, %v1854
    %v1856 = vrot.slane %v555, %v1855
    %v1857 = vlaneseq
    %v1858 = vshrl.u32 %v1857, 7
    %v1859 = vsub.s32 0, %v1858
    %v1860 = vrot.slane %v611, %v1859
    %v1861 = vlaneseq
    %v1862 = vshrl.u32 %v1861, 7
    %v1863 = vsub.s32 0, %v1862
    %v1864 = vrot.slane %v619, %v1863
    %v1865 = vlaneseq
    %v1866 = vshrl.u32 %v1865, 7
    %v1867 = vsub.s32 0, %v1866
    %v1868 = vrot.slane %v618, %v1867
    %v1869 = vlaneseq
    %v1870 = vshrl.u32 %v1869, 7
    %v1871 = vsub.s32 0, %v1870
    %v1872 = vrot.slane %v620, %v1871
    %v1873 = vlaneseq
    %v1874 = vshrl.u32 %v1873, 7
    %v1875 = vsub.s32 0, %v1874
    %v1876 = vrot.slane %v628, %v1875
    %v1877 = vlaneseq
    %v1878 = vshrl.u32 %v1877, 7
    %v1879 = vsub.s32 0, %v1878
    %v1880 = vrot.slane %v636, %v1879
    %v1881 = vlaneseq
    %v1882 = vshrl.u32 %v1881, 7
    %v1883 = vsub.s32 0, %v1882
    %v1884 = vrot.slane %v635, %v1883
    %v1885 = vlaneseq
    %v1886 = vshrl.u32 %v1885, 7
    %v1887 = vsub.s32 0, %v1886
    %v1888 = vrot.slane %v637, %v1887
    %v1889 = vlaneseq
    %v1890 = vshrl.u32 %v1889, 7
    %v1891 = vsub.s32 0, %v1890
    %v1892 = vrot.slane %v693, %v1891
    %v1893 = vlaneseq
    %v1894 = vshrl.u32 %v1893, 7
    %v1895 = vsub.s32 0, %v1894
    %v1896 = vrot.slane %v701, %v1895
    %v1897 = vlaneseq
    %v1898 = vshrl.u32 %v1897, 7
    %v1899 = vsub.s32 0, %v1898
    %v1900 = vrot.slane %v700, %v1899
    %v1901 = vlaneseq
    %v1902 = vshrl.u32 %v1901, 7
    %v1903 = vsub.s32 0, %v1902
    %v1904 = vrot.slane %v702, %v1903
    %v1905 = vlaneseq
    %v1906 = vshrl.u32 %v1905, 7
    %v1907 = vsub.s32 0, %v1906
    %v1908 = vrot.slane %v710, %v1907
    %v1909 = vlaneseq
    %v1910 = vshrl.u32 %v1909, 7
    %v1911 = vsub.s32 0, %v1910
    %v1912 = vrot.slane %v718, %v1911
    %v1913 = vlaneseq
    %v1914 = vshrl.u32 %v1913, 7
    %v1915 = vsub.s32 0, %v1914
    %v1916 = vrot.slane %v717, %v1915
    %v1917 = vlaneseq
    %v1918 = vshrl.u32 %v1917, 7
    %v1919 = vsub.s32 0, %v1918
    %v1920 = vrot.slane %v719, %v1919
    %v1921 = vlaneseq
    %v1922 = vshrl.u32 %v1921, 7
    %v1923 = vsub.s32 0, %v1922
    %v1924 = vrot.slane %v775, %v1923
    %v1925 = vlaneseq
    %v1926 = vshrl.u32 %v1925, 7
    %v1927 = vsub.s32 0, %v1926
    %v1928 = vrot.slane %v783, %v1927
    %v1929 = vlaneseq
    %v1930 = vshrl.u32 %v1929, 7
    %v1931 = vsub.s32 0, %v1930
    %v1932 = vrot.slane %v782, %v1931
    %v1933 = vlaneseq
    %v1934 = vshrl.u32 %v1933, 7
    %v1935 = vsub.s32 0, %v1934
    %v1936 = vrot.slane %v784, %v1935
    %v1937 = vlaneseq
    %v1938 = vshrl.u32 %v1937, 7
    %v1939 = vsub.s32 0, %v1938
    %v1940 = vrot.slane %v792, %v1939
    %v1941 = vlaneseq
    %v1942 = vshrl.u32 %v1941, 7
    %v1943 = vsub.s32 0, %v1942
    %v1944 = vrot.slane %v800, %v1943
    %v1945 = vlaneseq
    %v1946 = vshrl.u32 %v1945, 7
    %v1947 = vsub.s32 0, %v1946
    %v1948 = vrot.slane %v799, %v1947
    %v1949 = vlaneseq
    %v1950 = vshrl.u32 %v1949, 7
    %v1951 = vsub.s32 0, %v1950
    %v1952 = vrot.slane %v801, %v1951
    %v1953 = vlaneseq
    %v1954 = vshrl.u32 %v1953, 7
    %v1955 = vsub.s32 0, %v1954
    %v1956 = vrot.slane %v857, %v1955
    %v1957 = vlaneseq
    %v1958 = vshrl.u32 %v1957, 7
    %v1959 = vsub.s32 0, %v1958
    %v1960 = vrot.slane %v865, %v1959
    %v1961 = vlaneseq
    %v1962 = vshrl.u32 %v1961, 7
    %v1963 = vsub.s32 0, %v1962
    %v1964 = vrot.slane %v864, %v1963
    %v1965 = vlaneseq
    %v1966 = vshrl.u32 %v1965, 7
    %v1967 = vsub.s32 0, %v1966
    %v1968 = vrot.slane %v866, %v1967
    %v1969 = vlaneseq
    %v1970 = vshrl.u32 %v1969, 7
    %v1971 = vsub.s32 0, %v1970
    %v1972 = vrot.slane %v874, %v1971
    %v1973 = vlaneseq
    %v1974 = vshrl.u32 %v1973, 7
    %v1975 = vsub.s32 0, %v1974
    %v1976 = vrot.slane %v882, %v1975
    %v1977 = vlaneseq
    %v1978 = vshrl.u32 %v1977, 7
    %v1979 = vsub.s32 0, %v1978
    %v1980 = vrot.slane %v881, %v1979
    %v1981 = vlaneseq
    %v1982 = vshrl.u32 %v1981, 7
    %v1983 = vsub.s32 0, %v1982
    %v1984 = vrot.slane %v883, %v1983
    %v1985 = vlaneseq
    %v1986 = vshrl.u32 %v1985, 7
    %v1987 = vsub.s32 0, %v1986
    %v1988 = vrot.slane %v939, %v1987
    %v1989 = vlaneseq
    %v1990 = vshrl.u32 %v1989, 7
    %v1991 = vsub.s32 0, %v1990
    %v1992 = vrot.slane %v947, %v1991
    %v1993 = vlaneseq
    %v1994 = vshrl.u32 %v1993, 7
    %v1995 = vsub.s32 0, %v1994
    %v1996 = vrot.slane %v946, %v1995
    %v1997 = vlaneseq
    %v1998 = vshrl.u32 %v1997, 7
    %v1999 = vsub.s32 0, %v1998
    %v2000 = vrot.slane %v948, %v1999
    %v2001 = vlaneseq
    %v2002 = vshrl.u32 %v2001, 7
    %v2003 = vsub.s32 0, %v2002
    %v2004 = vrot.slane %v956, %v2003
    %v2005 = vlaneseq
    %v2006 = vshrl.u32 %v2005, 7
    %v2007 = vsub.s32 0, %v2006
    %v2008 = vrot.slane %v964, %v2007
    %v2009 = vlaneseq
    %v2010 = vshrl.u32 %v2009, 7
    %v2011 = vsub.s32 0, %v2010
    %v2012 = vrot.slane %v963, %v2011
    %v2013 = vlaneseq
    %v2014 = vshrl.u32 %v2013, 7
    %v2015 = vsub.s32 0, %v2014
    %v2016 = vrot.slane %v965, %v2015
    %v2017 = vlaneseq
    %v2018 = vshrl.u32 %v2017, 7
    %v2019 = vsub.s32 0, %v2018
    %v2020 = vrot.slane %v1021, %v2019
    %v2021 = vlaneseq
    %v2022 = vshrl.u32 %v2021, 7
    %v2023 = vsub.s32 0, %v2022
    %v2024 = vrot.slane %v1029, %v2023
    %v2025 = vlaneseq
    %v2026 = vshrl.u32 %v2025, 7
    %v2027 = vsub.s32 0, %v2026
    %v2028 = vrot.slane %v1028, %v2027
    %v2029 = vlaneseq
    %v2030 = vshrl.u32 %v2029, 7
    %v2031 = vsub.s32 0, %v2030
    %v2032 = vrot.slane %v1030, %v2031
    %v2033 = vlaneseq
    %v2034 = vshrl.u32 %v2033, 7
    %v2035 = vsub.s32 0, %v2034
    %v2036 = vrot.slane %v1038, %v2035
    %v2037 = vlaneseq
    %v2038 = vshrl.u32 %v2037, 7
    %v2039 = vsub.s32 0, %v2038
    %v2040 = vrot.slane %v1046, %v2039
    %v2041 = vlaneseq
    %v2042 = vshrl.u32 %v2041, 7
    %v2043 = vsub.s32 0, %v2042
    %v2044 = vrot.slane %v1045, %v2043
    %v2045 = vlaneseq
    %v2046 = vshrl.u32 %v2045, 7
    %v2047 = vsub.s32 0, %v2046
    %v2048 = vrot.slane %v1047, %v2047
    %v2049 = vlaneseq
    %v2050 = vshrl.u32 %v2049, 7
    %v2051 = vsub.s32 0, %v2050
    %v2052 = vrot.slane %v1185, %v2051
    %v2053 = vlaneseq
    %v2054 = vshrl.u32 %v2053, 7
    %v2055 = vsub.s32 0, %v2054
    %v2056 = vrot.slane %v1193, %v2055
    %v2057 = vlaneseq
    %v2058 = vshrl.u32 %v2057, 7
    %v2059 = vsub.s32 0, %v2058
    %v2060 = vrot.slane %v1192, %v2059
    %v2061 = vlaneseq
    %v2062 = vshrl.u32 %v2061, 7
    %v2063 = vsub.s32 0, %v2062
    %v2064 = vrot.slane %v1194, %v2063
    %v2065 = vlaneseq
    %v2066 = vshrl.u32 %v2065, 7
    %v2067 = vsub.s32 0, %v2066
    %v2068 = vrot.slane %v1202, %v2067
    %v2069 = vlaneseq
    %v2070 = vshrl.u32 %v2069, 7
    %v2071 = vsub.s32 0, %v2070
    %v2072 = vrot.slane %v1210, %v2071
    %v2073 = vlaneseq
    %v2074 = vshrl.u32 %v2073, 7
    %v2075 = vsub.s32 0, %v2074
    %v2076 = vrot.slane %v1209, %v2075
    %v2077 = vlaneseq
    %v2078 = vshrl.u32 %v2077, 7
    %v2079 = vsub.s32 0, %v2078
    %v2080 = vrot.slane %v1211, %v2079
    %v2081 = vlaneseq
    %v2082 = vshrl.u32 %v2081, 7
    %v2083 = vsub.s32 0, %v2082
    %v2084 = vrot.slane %v1267, %v2083
    %v2085 = vlaneseq
    %v2086 = vshrl.u32 %v2085, 7
    %v2087 = vsub.s32 0, %v2086
    %v2088 = vrot.slane %v1275, %v2087
    %v2089 = vlaneseq
    %v2090 = vshrl.u32 %v2089, 7
    %v2091 = vsub.s32 0, %v2090
    %v2092 = vrot.slane %v1274, %v2091
    %v2093 = vlaneseq
    %v2094 = vshrl.u32 %v2093, 7
    %v2095 = vsub.s32 0, %v2094
    %v2096 = vrot.slane %v1276, %v2095
    %v2097 = vlaneseq
    %v2098 = vshrl.u32 %v2097, 7
    %v2099 = vsub.s32 0, %v2098
    %v2100 = vrot.slane %v1284, %v2099
    %v2101 = vlaneseq
    %v2102 = vshrl.u32 %v2101, 7
    %v2103 = vsub.s32 0, %v2102
    %v2104 = vrot.slane %v1292, %v2103
    %v2105 = vlaneseq
    %v2106 = vshrl.u32 %v2105, 7
    %v2107 = vsub.s32 0, %v2106
    %v2108 = vrot.slane %v1291, %v2107
    %v2109 = vlaneseq
    %v2110 = vshrl.u32 %v2109, 7
    %v2111 = vsub.s32 0, %v2110
    %v2112 = vrot.slane %v1293, %v2111
    %v2113 = vlaneseq
    %v2114 = vshrl.u32 %v2113, 7
    %v2115 = vsub.s32 0, %v2114
    %v2116 = vrot.slane %v1349, %v2115
    %v2117 = vlaneseq
    %v2118 = vshrl.u32 %v2117, 7
    %v2119 = vsub.s32 0, %v2118
    %v2120 = vrot.slane %v1357, %v2119
    %v2121 = vlaneseq
    %v2122 = vshrl.u32 %v2121, 7
    %v2123 = vsub.s32 0, %v2122
    %v2124 = vrot.slane %v1356, %v2123
    %v2125 = vlaneseq
    %v2126 = vshrl.u32 %v2125, 7
    %v2127 = vsub.s32 0, %v2126
    %v2128 = vrot.slane %v1358, %v2127
    %v2129 = vlaneseq
    %v2130 = vshrl.u32 %v2129, 7
    %v2131 = vsub.s32 0, %v2130
    %v2132 = vrot.slane %v1366, %v2131
    %v2133 = vlaneseq
    %v2134 = vshrl.u32 %v2133, 7
    %v2135 = vsub.s32 0, %v2134
    %v2136 = vrot.slane %v1374, %v2135
    %v2137 = vlaneseq
    %v2138 = vshrl.u32 %v2137, 7
    %v2139 = vsub.s32 0, %v2138
    %v2140 = vrot.slane %v1373, %v2139
    %v2141 = vlaneseq
    %v2142 = vshrl.u32 %v2141, 7
    %v2143 = vsub.s32 0, %v2142
    %v2144 = vrot.slane %v1375, %v2143
    %v2145 = vlaneseq
    %v2146 = vshrl.u32 %v2145, 7
    %v2147 = vsub.s32 0, %v2146
    %v2148 = vrot.slane %v1431, %v2147
    %v2149 = vlaneseq
    %v2150 = vshrl.u32 %v2149, 7
    %v2151 = vsub.s32 0, %v2150
    %v2152 = vrot.slane %v1439, %v2151
    %v2153 = vlaneseq
    %v2154 = vshrl.u32 %v2153, 7
    %v2155 = vsub.s32 0, %v2154
    %v2156 = vrot.slane %v1438, %v2155
    %v2157 = vlaneseq
    %v2158 = vshrl.u32 %v2157, 7
    %v2159 = vsub.s32 0, %v2158
    %v2160 = vrot.slane %v1440, %v2159
    %v2161 = vlaneseq
    %v2162 = vshrl.u32 %v2161, 7
    %v2163 = vsub.s32 0, %v2162
    %v2164 = vrot.slane %v1448, %v2163
    %v2165 = vlaneseq
    %v2166 = vshrl.u32 %v2165, 7
    %v2167 = vsub.s32 0, %v2166
    %v2168 = vrot.slane %v1456, %v2167
    %v2169 = vlaneseq
    %v2170 = vshrl.u32 %v2169, 7
    %v2171 = vsub.s32 0, %v2170
    %v2172 = vrot.slane %v1455, %v2171
    %v2173 = vlaneseq
    %v2174 = vshrl.u32 %v2173, 7
    %v2175 = vsub.s32 0, %v2174
    %v2176 = vrot.slane %v1457, %v2175
    %v2177 = vlaneseq
    %v2178 = vshrl.u32 %v2177, 7
    %v2179 = vsub.s32 0, %v2178
    %v2180 = vrot.slane %v1513, %v2179
    %v2181 = vlaneseq
    %v2182 = vshrl.u32 %v2181, 7
    %v2183 = vsub.s32 0, %v2182
    %v2184 = vrot.slane %v1521, %v2183
    %v2185 = vlaneseq
    %v2186 = vshrl.u32 %v2185, 7
    %v2187 = vsub.s32 0, %v2186
    %v2188 = vrot.slane %v1520, %v2187
    %v2189 = vlaneseq
    %v2190 = vshrl.u32 %v2189, 7
    %v2191 = vsub.s32 0, %v2190
    %v2192 = vrot.slane %v1522, %v2191
    %v2193 = vlaneseq
    %v2194 = vshrl.u32 %v2193, 7
    %v2195 = vsub.s32 0, %v2194
    %v2196 = vrot.slane %v1530, %v2195
    %v2197 = vlaneseq
    %v2198 = vshrl.u32 %v2197, 7
    %v2199 = vsub.s32 0, %v2198
    %v2200 = vrot.slane %v1538, %v2199
    %v2201 = vlaneseq
    %v2202 = vshrl.u32 %v2201, 7
    %v2203 = vsub.s32 0, %v2202
    %v2204 = vrot.slane %v1537, %v2203
    %v2205 = vlaneseq
    %v2206 = vshrl.u32 %v2205, 7
    %v2207 = vsub.s32 0, %v2206
    %v2208 = vrot.slane %v1539, %v2207
    %v2209 = vlaneseq
    %v2210 = vshrl.u32 %v2209, 7
    %v2211 = vsub.s32 0, %v2210
    %v2212 = vrot.slane %v1595, %v2211
    %v2213 = vlaneseq
    %v2214 = vshrl.u32 %v2213, 7
    %v2215 = vsub.s32 0, %v2214
    %v2216 = vrot.slane %v1603, %v2215
    %v2217 = vlaneseq
    %v2218 = vshrl.u32 %v2217, 7
    %v2219 = vsub.s32 0, %v2218
    %v2220 = vrot.slane %v1602, %v2219
    %v2221 = vlaneseq
    %v2222 = vshrl.u32 %v2221, 7
    %v2223 = vsub.s32 0, %v2222
    %v2224 = vrot.slane %v1604, %v2223
    %v2225 = vlaneseq
    %v2226 = vshrl.u32 %v2225, 7
    %v2227 = vsub.s32 0, %v2226
    %v2228 = vrot.slane %v1612, %v2227
    %v2229 = vlaneseq
    %v2230 = vshrl.u32 %v2229, 7
    %v2231 = vsub.s32 0, %v2230
    %v2232 = vrot.slane %v1620, %v2231
    %v2233 = vlaneseq
    %v2234 = vshrl.u32 %v2233, 7
    %v2235 = vsub.s32 0, %v2234
    %v2236 = vrot.slane %v1619, %v2235
    %v2237 = vlaneseq
    %v2238 = vshrl.u32 %v2237, 7
    %v2239 = vsub.s32 0, %v2238
    %v2240 = vrot.slane %v1621, %v2239
    %v2241 = vlaneseq
    %v2242 = vshrl.u32 %v2241, 7
    %v2243 = vsub.s32 0, %v2242
    %v2244 = vrot.slane %v1677, %v2243
    %v2245 = vlaneseq
    %v2246 = vshrl.u32 %v2245, 7
    %v2247 = vsub.s32 0, %v2246
    %v2248 = vrot.slane %v1685, %v2247
    %v2249 = vlaneseq
    %v2250 = vshrl.u32 %v2249, 7
    %v2251 = vsub.s32 0, %v2250
    %v2252 = vrot.slane %v1684, %v2251
    %v2253 = vlaneseq
    %v2254 = vshrl.u32 %v2253, 7
    %v2255 = vsub.s32 0, %v2254
    %v2256 = vrot.slane %v1686, %v2255
    %v2257 = vlaneseq
    %v2258 = vshrl.u32 %v2257, 7
    %v2259 = vsub.s32 0, %v2258
    %v2260 = vrot.slane %v1694, %v2259
    %v2261 = vlaneseq
    %v2262 = vshrl.u32 %v2261, 7
    %v2263 = vsub.s32 0, %v2262
    %v2264 = vrot.slane %v1702, %v2263
    %v2265 = vlaneseq
    %v2266 = vshrl.u32 %v2265, 7
    %v2267 = vsub.s32 0, %v2266
    %v2268 = vrot.slane %v1701, %v2267
    %v2269 = vlaneseq
    %v2270 = vshrl.u32 %v2269, 7
    %v2271 = vsub.s32 0, %v2270
    %v2272 = vrot.slane %v1703, %v2271
    %vm2273 = vcmask 1041409
    %v2274 = vsel %vm2273, %v1800, %v1796
    %vm2275 = vcmask 1042434
    %v2276 = vsel %vm2275, %v1804, %v2274
    %vm2277 = vcmask 1043459
    %v2278 = vsel %vm2277, %v1808, %v2276
    %vm2279 = vcmask 1044484
    %v2280 = vsel %vm2279, %v1812, %v2278
    %vm2281 = vcmask 1045509
    %v2282 = vsel %vm2281, %v1816, %v2280
    %vm2283 = vcmask 1046534
    %v2284 = vsel %vm2283, %v1820, %v2282
    %vm2285 = vcmask 1047559
    %v2286 = vsel %vm2285, %v1824, %v2284
    %v2287 = vsel %vm2273, %v1832, %v1828
    %v2288 = vsel %vm2275, %v1836, %v2287
    %v2289 = vsel %vm2277, %v1840, %v2288
    %v2290 = vsel %vm2279, %v1844, %v2289
    %v2291 = vsel %vm2281, %v1848, %v2290
    %v2292 = vsel %vm2283, %v1852, %v2291
    %v2293 = vsel %vm2285, %v1856, %v2292
    %v2294 = vsel %vm2273, %v1864, %v1860
    %v2295 = vsel %vm2275, %v1868, %v2294
    %v2296 = vsel %vm2277, %v1872, %v2295
    %v2297 = vsel %vm2279, %v1876, %v2296
    %v2298 = vsel %vm2281, %v1880, %v2297
    %v2299 = vsel %vm2283, %v1884, %v2298
    %v2300 = vsel %vm2285, %v1888, %v2299
    %v2301 = vsel %vm2273, %v1896, %v1892
    %v2302 = vsel %vm2275, %v1900, %v2301
    %v2303 = vsel %vm2277, %v1904, %v2302
    %v2304 = vsel %vm2279, %v1908, %v2303
    %v2305 = vsel %vm2281, %v1912, %v2304
    %v2306 = vsel %vm2283, %v1916, %v2305
    %v2307 = vsel %vm2285, %v1920, %v2306
    %v2308 = vsel %vm2273, %v1928, %v1924
    %v2309 = vsel %vm2275, %v1932, %v2308
    %v2310 = vsel %vm2277, %v1936, %v2309
    %v2311 = vsel %vm2279, %v1940, %v2310
    %v2312 = vsel %vm2281, %v1944, %v2311
    %v2313 = vsel %vm2283, %v1948, %v2312
    %v2314 = vsel %vm2285, %v1952, %v2313
    %v2315 = vsel %vm2273, %v1960, %v1956
    %v2316 = vsel %vm2275, %v1964, %v2315
    %v2317 = vsel %vm2277, %v1968, %v2316
    %v2318 = vsel %vm2279, %v1972, %v2317
    %v2319 = vsel %vm2281, %v1976, %v2318
    %v2320 = vsel %vm2283, %v1980, %v2319
    %v2321 = vsel %vm2285, %v1984, %v2320
    %v2322 = vsel %vm2273, %v1992, %v1988
    %v2323 = vsel %vm2275, %v1996, %v2322
    %v2324 = vsel %vm2277, %v2000, %v2323
    %v2325 = vsel %vm2279, %v2004, %v2324
    %v2326 = vsel %vm2281, %v2008, %v2325
    %v2327 = vsel %vm2283, %v2012, %v2326
    %v2328 = vsel %vm2285, %v2016, %v2327
    %v2329 = vsel %vm2273, %v2024, %v2020
    %v2330 = vsel %vm2275, %v2028, %v2329
    %v2331 = vsel %vm2277, %v2032, %v2330
    %v2332 = vsel %vm2279, %v2036, %v2331
    %v2333 = vsel %vm2281, %v2040, %v2332
    %v2334 = vsel %vm2283, %v2044, %v2333
    %v2335 = vsel %vm2285, %v2048, %v2334
    %v2336 = vsel %vm2273, %v2056, %v2052
    %v2337 = vsel %vm2275, %v2060, %v2336
    %v2338 = vsel %vm2277, %v2064, %v2337
    %v2339 = vsel %vm2279, %v2068, %v2338
    %v2340 = vsel %vm2281, %v2072, %v2339
    %v2341 = vsel %vm2283, %v2076, %v2340
    %v2342 = vsel %vm2285, %v2080, %v2341
    %v2343 = vsel %vm2273, %v2088, %v2084
    %v2344 = vsel %vm2275, %v2092, %v2343
    %v2345 = vsel %vm2277, %v2096, %v2344
    %v2346 = vsel %vm2279, %v2100, %v2345
    %v2347 = vsel %vm2281, %v2104, %v2346
    %v2348 = vsel %vm2283, %v2108, %v2347
    %v2349 = vsel %vm2285, %v2112, %v2348
    %v2350 = vsel %vm2273, %v2120, %v2116
    %v2351 = vsel %vm2275, %v2124, %v2350
    %v2352 = vsel %vm2277, %v2128, %v2351
    %v2353 = vsel %vm2279, %v2132, %v2352
    %v2354 = vsel %vm2281, %v2136, %v2353
    %v2355 = vsel %vm2283, %v2140, %v2354
    %v2356 = vsel %vm2285, %v2144, %v2355
    %v2357 = vsel %vm2273, %v2152, %v2148
    %v2358 = vsel %vm2275, %v2156, %v2357
    %v2359 = vsel %vm2277, %v2160, %v2358
    %v2360 = vsel %vm2279, %v2164, %v2359
    %v2361 = vsel %vm2281, %v2168, %v2360
    %v2362 = vsel %vm2283, %v2172, %v2361
    %v2363 = vsel %vm2285, %v2176, %v2362
    %v2364 = vsel %vm2273, %v2184, %v2180
    %v2365 = vsel %vm2275, %v2188, %v2364
    %v2366 = vsel %vm2277, %v2192, %v2365
    %v2367 = vsel %vm2279, %v2196, %v2366
    %v2368 = vsel %vm2281, %v2200, %v2367
    %v2369 = vsel %vm2283, %v2204, %v2368
    %v2370 = vsel %vm2285, %v2208, %v2369
    %v2371 = vsel %vm2273, %v2216, %v2212
    %v2372 = vsel %vm2275, %v2220, %v2371
    %v2373 = vsel %vm2277, %v2224, %v2372
    %v2374 = vsel %vm2279, %v2228, %v2373
    %v2375 = vsel %vm2281, %v2232, %v2374
    %v2376 = vsel %vm2283, %v2236, %v2375
    %v2377 = vsel %vm2285, %v2240, %v2376
    %v2378 = vsel %vm2273, %v2248, %v2244
    %v2379 = vsel %vm2275, %v2252, %v2378
    %v2380 = vsel %vm2277, %v2256, %v2379
    %v2381 = vsel %vm2279, %v2260, %v2380
    %v2382 = vsel %vm2281, %v2264, %v2381
    %v2383 = vsel %vm2283, %v2268, %v2382
    %v2384 = vsel %vm2285, %v2272, %v2383
    %v2400 = vlaneseq
    %v2401 = vshrl.u32 %v2400, 7
    %v2402 = vsub.s32 1, %v2401
    %v2403 = vrot.slane %v447, %v2402
    %v2404 = vlaneseq
    %v2405 = vshrl.u32 %v2404, 7
    %v2406 = vsub.s32 1, %v2405
    %v2407 = vrot.slane %v455, %v2406
    %v2408 = vlaneseq
    %v2409 = vshrl.u32 %v2408, 7
    %v2410 = vsub.s32 1, %v2409
    %v2411 = vrot.slane %v454, %v2410
    %v2412 = vlaneseq
    %v2413 = vshrl.u32 %v2412, 7
    %v2414 = vsub.s32 1, %v2413
    %v2415 = vrot.slane %v456, %v2414
    %v2416 = vlaneseq
    %v2417 = vshrl.u32 %v2416, 7
    %v2418 = vsub.s32 1, %v2417
    %v2419 = vrot.slane %v464, %v2418
    %v2420 = vlaneseq
    %v2421 = vshrl.u32 %v2420, 7
    %v2422 = vsub.s32 1, %v2421
    %v2423 = vrot.slane %v472, %v2422
    %v2424 = vlaneseq
    %v2425 = vshrl.u32 %v2424, 7
    %v2426 = vsub.s32 1, %v2425
    %v2427 = vrot.slane %v471, %v2426
    %v2428 = vlaneseq
    %v2429 = vshrl.u32 %v2428, 7
    %v2430 = vsub.s32 1, %v2429
    %v2431 = vrot.slane %v473, %v2430
    %v2432 = vlaneseq
    %v2433 = vshrl.u32 %v2432, 7
    %v2434 = vsub.s32 1, %v2433
    %v2435 = vrot.slane %v529, %v2434
    %v2436 = vlaneseq
    %v2437 = vshrl.u32 %v2436, 7
    %v2438 = vsub.s32 1, %v2437
    %v2439 = vrot.slane %v537, %v2438
    %v2440 = vlaneseq
    %v2441 = vshrl.u32 %v2440, 7
    %v2442 = vsub.s32 1, %v2441
    %v2443 = vrot.slane %v536, %v2442
    %v2444 = vlaneseq
    %v2445 = vshrl.u32 %v2444, 7
    %v2446 = vsub.s32 1, %v2445
    %v2447 = vrot.slane %v538, %v2446
    %v2448 = vlaneseq
    %v2449 = vshrl.u32 %v2448, 7
    %v2450 = vsub.s32 1, %v2449
    %v2451 = vrot.slane %v546, %v2450
    %v2452 = vlaneseq
    %v2453 = vshrl.u32 %v2452, 7
    %v2454 = vsub.s32 1, %v2453
    %v2455 = vrot.slane %v554, %v2454
    %v2456 = vlaneseq
    %v2457 = vshrl.u32 %v2456, 7
    %v2458 = vsub.s32 1, %v2457
    %v2459 = vrot.slane %v553, %v2458
    %v2460 = vlaneseq
    %v2461 = vshrl.u32 %v2460, 7
    %v2462 = vsub.s32 1, %v2461
    %v2463 = vrot.slane %v555, %v2462
    %v2464 = vlaneseq
    %v2465 = vshrl.u32 %v2464, 7
    %v2466 = vsub.s32 1, %v2465
    %v2467 = vrot.slane %v611, %v2466
    %v2468 = vlaneseq
    %v2469 = vshrl.u32 %v2468, 7
    %v2470 = vsub.s32 1, %v2469
    %v2471 = vrot.slane %v619, %v2470
    %v2472 = vlaneseq
    %v2473 = vshrl.u32 %v2472, 7
    %v2474 = vsub.s32 1, %v2473
    %v2475 = vrot.slane %v618, %v2474
    %v2476 = vlaneseq
    %v2477 = vshrl.u32 %v2476, 7
    %v2478 = vsub.s32 1, %v2477
    %v2479 = vrot.slane %v620, %v2478
    %v2480 = vlaneseq
    %v2481 = vshrl.u32 %v2480, 7
    %v2482 = vsub.s32 1, %v2481
    %v2483 = vrot.slane %v628, %v2482
    %v2484 = vlaneseq
    %v2485 = vshrl.u32 %v2484, 7
    %v2486 = vsub.s32 1, %v2485
    %v2487 = vrot.slane %v636, %v2486
    %v2488 = vlaneseq
    %v2489 = vshrl.u32 %v2488, 7
    %v2490 = vsub.s32 1, %v2489
    %v2491 = vrot.slane %v635, %v2490
    %v2492 = vlaneseq
    %v2493 = vshrl.u32 %v2492, 7
    %v2494 = vsub.s32 1, %v2493
    %v2495 = vrot.slane %v637, %v2494
    %v2496 = vlaneseq
    %v2497 = vshrl.u32 %v2496, 7
    %v2498 = vsub.s32 1, %v2497
    %v2499 = vrot.slane %v693, %v2498
    %v2500 = vlaneseq
    %v2501 = vshrl.u32 %v2500, 7
    %v2502 = vsub.s32 1, %v2501
    %v2503 = vrot.slane %v701, %v2502
    %v2504 = vlaneseq
    %v2505 = vshrl.u32 %v2504, 7
    %v2506 = vsub.s32 1, %v2505
    %v2507 = vrot.slane %v700, %v2506
    %v2508 = vlaneseq
    %v2509 = vshrl.u32 %v2508, 7
    %v2510 = vsub.s32 1, %v2509
    %v2511 = vrot.slane %v702, %v2510
    %v2512 = vlaneseq
    %v2513 = vshrl.u32 %v2512, 7
    %v2514 = vsub.s32 1, %v2513
    %v2515 = vrot.slane %v710, %v2514
    %v2516 = vlaneseq
    %v2517 = vshrl.u32 %v2516, 7
    %v2518 = vsub.s32 1, %v2517
    %v2519 = vrot.slane %v718, %v2518
    %v2520 = vlaneseq
    %v2521 = vshrl.u32 %v2520, 7
    %v2522 = vsub.s32 1, %v2521
    %v2523 = vrot.slane %v717, %v2522
    %v2524 = vlaneseq
    %v2525 = vshrl.u32 %v2524, 7
    %v2526 = vsub.s32 1, %v2525
    %v2527 = vrot.slane %v719, %v2526
    %v2528 = vlaneseq
    %v2529 = vshrl.u32 %v2528, 7
    %v2530 = vsub.s32 1, %v2529
    %v2531 = vrot.slane %v775, %v2530
    %v2532 = vlaneseq
    %v2533 = vshrl.u32 %v2532, 7
    %v2534 = vsub.s32 1, %v2533
    %v2535 = vrot.slane %v783, %v2534
    %v2536 = vlaneseq
    %v2537 = vshrl.u32 %v2536, 7
    %v2538 = vsub.s32 1, %v2537
    %v2539 = vrot.slane %v782, %v2538
    %v2540 = vlaneseq
    %v2541 = vshrl.u32 %v2540, 7
    %v2542 = vsub.s32 1, %v2541
    %v2543 = vrot.slane %v784, %v2542
    %v2544 = vlaneseq
    %v2545 = vshrl.u32 %v2544, 7
    %v2546 = vsub.s32 1, %v2545
    %v2547 = vrot.slane %v792, %v2546
    %v2548 = vlaneseq
    %v2549 = vshrl.u32 %v2548, 7
    %v2550 = vsub.s32 1, %v2549
    %v2551 = vrot.slane %v800, %v2550
    %v2552 = vlaneseq
    %v2553 = vshrl.u32 %v2552, 7
    %v2554 = vsub.s32 1, %v2553
    %v2555 = vrot.slane %v799, %v2554
    %v2556 = vlaneseq
    %v2557 = vshrl.u32 %v2556, 7
    %v2558 = vsub.s32 1, %v2557
    %v2559 = vrot.slane %v801, %v2558
    %v2560 = vlaneseq
    %v2561 = vshrl.u32 %v2560, 7
    %v2562 = vsub.s32 1, %v2561
    %v2563 = vrot.slane %v857, %v2562
    %v2564 = vlaneseq
    %v2565 = vshrl.u32 %v2564, 7
    %v2566 = vsub.s32 1, %v2565
    %v2567 = vrot.slane %v865, %v2566
    %v2568 = vlaneseq
    %v2569 = vshrl.u32 %v2568, 7
    %v2570 = vsub.s32 1, %v2569
    %v2571 = vrot.slane %v864, %v2570
    %v2572 = vlaneseq
    %v2573 = vshrl.u32 %v2572, 7
    %v2574 = vsub.s32 1, %v2573
    %v2575 = vrot.slane %v866, %v2574
    %v2576 = vlaneseq
    %v2577 = vshrl.u32 %v2576, 7
    %v2578 = vsub.s32 1, %v2577
    %v2579 = vrot.slane %v874, %v2578
    %v2580 = vlaneseq
    %v2581 = vshrl.u32 %v2580, 7
    %v2582 = vsub.s32 1, %v2581
    %v2583 = vrot.slane %v882, %v2582
    %v2584 = vlaneseq
    %v2585 = vshrl.u32 %v2584, 7
    %v2586 = vsub.s32 1, %v2585
    %v2587 = vrot.slane %v881, %v2586
    %v2588 = vlaneseq
    %v2589 = vshrl.u32 %v2588, 7
    %v2590 = vsub.s32 1, %v2589
    %v2591 = vrot.slane %v883, %v2590
    %v2592 = vlaneseq
    %v2593 = vshrl.u32 %v2592, 7
    %v2594 = vsub.s32 1, %v2593
    %v2595 = vrot.slane %v939, %v2594
    %v2596 = vlaneseq
    %v2597 = vshrl.u32 %v2596, 7
    %v2598 = vsub.s32 1, %v2597
    %v2599 = vrot.slane %v947, %v2598
    %v2600 = vlaneseq
    %v2601 = vshrl.u32 %v2600, 7
    %v2602 = vsub.s32 1, %v2601
    %v2603 = vrot.slane %v946, %v2602
    %v2604 = vlaneseq
    %v2605 = vshrl.u32 %v2604, 7
    %v2606 = vsub.s32 1, %v2605
    %v2607 = vrot.slane %v948, %v2606
    %v2608 = vlaneseq
    %v2609 = vshrl.u32 %v2608, 7
    %v2610 = vsub.s32 1, %v2609
    %v2611 = vrot.slane %v956, %v2610
    %v2612 = vlaneseq
    %v2613 = vshrl.u32 %v2612, 7
    %v2614 = vsub.s32 1, %v2613
    %v2615 = vrot.slane %v964, %v2614
    %v2616 = vlaneseq
    %v2617 = vshrl.u32 %v2616, 7
    %v2618 = vsub.s32 1, %v2617
    %v2619 = vrot.slane %v963, %v2618
    %v2620 = vlaneseq
    %v2621 = vshrl.u32 %v2620, 7
    %v2622 = vsub.s32 1, %v2621
    %v2623 = vrot.slane %v965, %v2622
    %v2624 = vlaneseq
    %v2625 = vshrl.u32 %v2624, 7
    %v2626 = vsub.s32 1, %v2625
    %v2627 = vrot.slane %v1021, %v2626
    %v2628 = vlaneseq
    %v2629 = vshrl.u32 %v2628, 7
    %v2630 = vsub.s32 1, %v2629
    %v2631 = vrot.slane %v1029, %v2630
    %v2632 = vlaneseq
    %v2633 = vshrl.u32 %v2632, 7
    %v2634 = vsub.s32 1, %v2633
    %v2635 = vrot.slane %v1028, %v2634
    %v2636 = vlaneseq
    %v2637 = vshrl.u32 %v2636, 7
    %v2638 = vsub.s32 1, %v2637
    %v2639 = vrot.slane %v1030, %v2638
    %v2640 = vlaneseq
    %v2641 = vshrl.u32 %v2640, 7
    %v2642 = vsub.s32 1, %v2641
    %v2643 = vrot.slane %v1038, %v2642
    %v2644 = vlaneseq
    %v2645 = vshrl.u32 %v2644, 7
    %v2646 = vsub.s32 1, %v2645
    %v2647 = vrot.slane %v1046, %v2646
    %v2648 = vlaneseq
    %v2649 = vshrl.u32 %v2648, 7
    %v2650 = vsub.s32 1, %v2649
    %v2651 = vrot.slane %v1045, %v2650
    %v2652 = vlaneseq
    %v2653 = vshrl.u32 %v2652, 7
    %v2654 = vsub.s32 1, %v2653
    %v2655 = vrot.slane %v1047, %v2654
    %v2656 = vlaneseq
    %v2657 = vshrl.u32 %v2656, 7
    %v2658 = vsub.s32 1, %v2657
    %v2659 = vrot.slane %v1185, %v2658
    %v2660 = vlaneseq
    %v2661 = vshrl.u32 %v2660, 7
    %v2662 = vsub.s32 1, %v2661
    %v2663 = vrot.slane %v1193, %v2662
    %v2664 = vlaneseq
    %v2665 = vshrl.u32 %v2664, 7
    %v2666 = vsub.s32 1, %v2665
    %v2667 = vrot.slane %v1192, %v2666
    %v2668 = vlaneseq
    %v2669 = vshrl.u32 %v2668, 7
    %v2670 = vsub.s32 1, %v2669
    %v2671 = vrot.slane %v1194, %v2670
    %v2672 = vlaneseq
    %v2673 = vshrl.u32 %v2672, 7
    %v2674 = vsub.s32 1, %v2673
    %v2675 = vrot.slane %v1202, %v2674
    %v2676 = vlaneseq
    %v2677 = vshrl.u32 %v2676, 7
    %v2678 = vsub.s32 1, %v2677
    %v2679 = vrot.slane %v1210, %v2678
    %v2680 = vlaneseq
    %v2681 = vshrl.u32 %v2680, 7
    %v2682 = vsub.s32 1, %v2681
    %v2683 = vrot.slane %v1209, %v2682
    %v2684 = vlaneseq
    %v2685 = vshrl.u32 %v2684, 7
    %v2686 = vsub.s32 1, %v2685
    %v2687 = vrot.slane %v1211, %v2686
    %v2688 = vlaneseq
    %v2689 = vshrl.u32 %v2688, 7
    %v2690 = vsub.s32 1, %v2689
    %v2691 = vrot.slane %v1267, %v2690
    %v2692 = vlaneseq
    %v2693 = vshrl.u32 %v2692, 7
    %v2694 = vsub.s32 1, %v2693
    %v2695 = vrot.slane %v1275, %v2694
    %v2696 = vlaneseq
    %v2697 = vshrl.u32 %v2696, 7
    %v2698 = vsub.s32 1, %v2697
    %v2699 = vrot.slane %v1274, %v2698
    %v2700 = vlaneseq
    %v2701 = vshrl.u32 %v2700, 7
    %v2702 = vsub.s32 1, %v2701
    %v2703 = vrot.slane %v1276, %v2702
    %v2704 = vlaneseq
    %v2705 = vshrl.u32 %v2704, 7
    %v2706 = vsub.s32 1, %v2705
    %v2707 = vrot.slane %v1284, %v2706
    %v2708 = vlaneseq
    %v2709 = vshrl.u32 %v2708, 7
    %v2710 = vsub.s32 1, %v2709
    %v2711 = vrot.slane %v1292, %v2710
    %v2712 = vlaneseq
    %v2713 = vshrl.u32 %v2712, 7
    %v2714 = vsub.s32 1, %v2713
    %v2715 = vrot.slane %v1291, %v2714
    %v2716 = vlaneseq
    %v2717 = vshrl.u32 %v2716, 7
    %v2718 = vsub.s32 1, %v2717
    %v2719 = vrot.slane %v1293, %v2718
    %v2720 = vlaneseq
    %v2721 = vshrl.u32 %v2720, 7
    %v2722 = vsub.s32 1, %v2721
    %v2723 = vrot.slane %v1349, %v2722
    %v2724 = vlaneseq
    %v2725 = vshrl.u32 %v2724, 7
    %v2726 = vsub.s32 1, %v2725
    %v2727 = vrot.slane %v1357, %v2726
    %v2728 = vlaneseq
    %v2729 = vshrl.u32 %v2728, 7
    %v2730 = vsub.s32 1, %v2729
    %v2731 = vrot.slane %v1356, %v2730
    %v2732 = vlaneseq
    %v2733 = vshrl.u32 %v2732, 7
    %v2734 = vsub.s32 1, %v2733
    %v2735 = vrot.slane %v1358, %v2734
    %v2736 = vlaneseq
    %v2737 = vshrl.u32 %v2736, 7
    %v2738 = vsub.s32 1, %v2737
    %v2739 = vrot.slane %v1366, %v2738
    %v2740 = vlaneseq
    %v2741 = vshrl.u32 %v2740, 7
    %v2742 = vsub.s32 1, %v2741
    %v2743 = vrot.slane %v1374, %v2742
    %v2744 = vlaneseq
    %v2745 = vshrl.u32 %v2744, 7
    %v2746 = vsub.s32 1, %v2745
    %v2747 = vrot.slane %v1373, %v2746
    %v2748 = vlaneseq
    %v2749 = vshrl.u32 %v2748, 7
    %v2750 = vsub.s32 1, %v2749
    %v2751 = vrot.slane %v1375, %v2750
    %v2752 = vlaneseq
    %v2753 = vshrl.u32 %v2752, 7
    %v2754 = vsub.s32 1, %v2753
    %v2755 = vrot.slane %v1431, %v2754
    %v2756 = vlaneseq
    %v2757 = vshrl.u32 %v2756, 7
    %v2758 = vsub.s32 1, %v2757
    %v2759 = vrot.slane %v1439, %v2758
    %v2760 = vlaneseq
    %v2761 = vshrl.u32 %v2760, 7
    %v2762 = vsub.s32 1, %v2761
    %v2763 = vrot.slane %v1438, %v2762
    %v2764 = vlaneseq
    %v2765 = vshrl.u32 %v2764, 7
    %v2766 = vsub.s32 1, %v2765
    %v2767 = vrot.slane %v1440, %v2766
    %v2768 = vlaneseq
    %v2769 = vshrl.u32 %v2768, 7
    %v2770 = vsub.s32 1, %v2769
    %v2771 = vrot.slane %v1448, %v2770
    %v2772 = vlaneseq
    %v2773 = vshrl.u32 %v2772, 7
    %v2774 = vsub.s32 1, %v2773
    %v2775 = vrot.slane %v1456, %v2774
    %v2776 = vlaneseq
    %v2777 = vshrl.u32 %v2776, 7
    %v2778 = vsub.s32 1, %v2777
    %v2779 = vrot.slane %v1455, %v2778
    %v2780 = vlaneseq
    %v2781 = vshrl.u32 %v2780, 7
    %v2782 = vsub.s32 1, %v2781
    %v2783 = vrot.slane %v1457, %v2782
    %v2784 = vlaneseq
    %v2785 = vshrl.u32 %v2784, 7
    %v2786 = vsub.s32 1, %v2785
    %v2787 = vrot.slane %v1513, %v2786
    %v2788 = vlaneseq
    %v2789 = vshrl.u32 %v2788, 7
    %v2790 = vsub.s32 1, %v2789
    %v2791 = vrot.slane %v1521, %v2790
    %v2792 = vlaneseq
    %v2793 = vshrl.u32 %v2792, 7
    %v2794 = vsub.s32 1, %v2793
    %v2795 = vrot.slane %v1520, %v2794
    %v2796 = vlaneseq
    %v2797 = vshrl.u32 %v2796, 7
    %v2798 = vsub.s32 1, %v2797
    %v2799 = vrot.slane %v1522, %v2798
    %v2800 = vlaneseq
    %v2801 = vshrl.u32 %v2800, 7
    %v2802 = vsub.s32 1, %v2801
    %v2803 = vrot.slane %v1530, %v2802
    %v2804 = vlaneseq
    %v2805 = vshrl.u32 %v2804, 7
    %v2806 = vsub.s32 1, %v2805
    %v2807 = vrot.slane %v1538, %v2806
    %v2808 = vlaneseq
    %v2809 = vshrl.u32 %v2808, 7
    %v2810 = vsub.s32 1, %v2809
    %v2811 = vrot.slane %v1537, %v2810
    %v2812 = vlaneseq
    %v2813 = vshrl.u32 %v2812, 7
    %v2814 = vsub.s32 1, %v2813
    %v2815 = vrot.slane %v1539, %v2814
    %v2816 = vlaneseq
    %v2817 = vshrl.u32 %v2816, 7
    %v2818 = vsub.s32 1, %v2817
    %v2819 = vrot.slane %v1595, %v2818
    %v2820 = vlaneseq
    %v2821 = vshrl.u32 %v2820, 7
    %v2822 = vsub.s32 1, %v2821
    %v2823 = vrot.slane %v1603, %v2822
    %v2824 = vlaneseq
    %v2825 = vshrl.u32 %v2824, 7
    %v2826 = vsub.s32 1, %v2825
    %v2827 = vrot.slane %v1602, %v2826
    %v2828 = vlaneseq
    %v2829 = vshrl.u32 %v2828, 7
    %v2830 = vsub.s32 1, %v2829
    %v2831 = vrot.slane %v1604, %v2830
    %v2832 = vlaneseq
    %v2833 = vshrl.u32 %v2832, 7
    %v2834 = vsub.s32 1, %v2833
    %v2835 = vrot.slane %v1612, %v2834
    %v2836 = vlaneseq
    %v2837 = vshrl.u32 %v2836, 7
    %v2838 = vsub.s32 1, %v2837
    %v2839 = vrot.slane %v1620, %v2838
    %v2840 = vlaneseq
    %v2841 = vshrl.u32 %v2840, 7
    %v2842 = vsub.s32 1, %v2841
    %v2843 = vrot.slane %v1619, %v2842
    %v2844 = vlaneseq
    %v2845 = vshrl.u32 %v2844, 7
    %v2846 = vsub.s32 1, %v2845
    %v2847 = vrot.slane %v1621, %v2846
    %v2848 = vlaneseq
    %v2849 = vshrl.u32 %v2848, 7
    %v2850 = vsub.s32 1, %v2849
    %v2851 = vrot.slane %v1677, %v2850
    %v2852 = vlaneseq
    %v2853 = vshrl.u32 %v2852, 7
    %v2854 = vsub.s32 1, %v2853
    %v2855 = vrot.slane %v1685, %v2854
    %v2856 = vlaneseq
    %v2857 = vshrl.u32 %v2856, 7
    %v2858 = vsub.s32 1, %v2857
    %v2859 = vrot.slane %v1684, %v2858
    %v2860 = vlaneseq
    %v2861 = vshrl.u32 %v2860, 7
    %v2862 = vsub.s32 1, %v2861
    %v2863 = vrot.slane %v1686, %v2862
    %v2864 = vlaneseq
    %v2865 = vshrl.u32 %v2864, 7
    %v2866 = vsub.s32 1, %v2865
    %v2867 = vrot.slane %v1694, %v2866
    %v2868 = vlaneseq
    %v2869 = vshrl.u32 %v2868, 7
    %v2870 = vsub.s32 1, %v2869
    %v2871 = vrot.slane %v1702, %v2870
    %v2872 = vlaneseq
    %v2873 = vshrl.u32 %v2872, 7
    %v2874 = vsub.s32 1, %v2873
    %v2875 = vrot.slane %v1701, %v2874
    %v2876 = vlaneseq
    %v2877 = vshrl.u32 %v2876, 7
    %v2878 = vsub.s32 1, %v2877
    %v2879 = vrot.slane %v1703, %v2878
    %v2880 = vsel %vm2273, %v2407, %v2403
    %v2881 = vsel %vm2275, %v2411, %v2880
    %v2882 = vsel %vm2277, %v2415, %v2881
    %v2883 = vsel %vm2279, %v2419, %v2882
    %v2884 = vsel %vm2281, %v2423, %v2883
    %v2885 = vsel %vm2283, %v2427, %v2884
    %v2886 = vsel %vm2285, %v2431, %v2885
    %v2887 = vsel %vm2273, %v2439, %v2435
    %v2888 = vsel %vm2275, %v2443, %v2887
    %v2889 = vsel %vm2277, %v2447, %v2888
    %v2890 = vsel %vm2279, %v2451, %v2889
    %v2891 = vsel %vm2281, %v2455, %v2890
    %v2892 = vsel %vm2283, %v2459, %v2891
    %v2893 = vsel %vm2285, %v2463, %v2892
    %v2894 = vsel %vm2273, %v2471, %v2467
    %v2895 = vsel %vm2275, %v2475, %v2894
    %v2896 = vsel %vm2277, %v2479, %v2895
    %v2897 = vsel %vm2279, %v2483, %v2896
    %v2898 = vsel %vm2281, %v2487, %v2897
    %v2899 = vsel %vm2283, %v2491, %v2898
    %v2900 = vsel %vm2285, %v2495, %v2899
    %v2901 = vsel %vm2273, %v2503, %v2499
    %v2902 = vsel %vm2275, %v2507, %v2901
    %v2903 = vsel %vm2277, %v2511, %v2902
    %v2904 = vsel %vm2279, %v2515, %v2903
    %v2905 = vsel %vm2281, %v2519, %v2904
    %v2906 = vsel %vm2283, %v2523, %v2905
    %v2907 = vsel %vm2285, %v2527, %v2906
    %v2908 = vsel %vm2273, %v2535, %v2531
    %v2909 = vsel %vm2275, %v2539, %v2908
    %v2910 = vsel %vm2277, %v2543, %v2909
    %v2911 = vsel %vm2279, %v2547, %v2910
    %v2912 = vsel %vm2281, %v2551, %v2911
    %v2913 = vsel %vm2283, %v2555, %v2912
    %v2914 = vsel %vm2285, %v2559, %v2913
    %v2915 = vsel %vm2273, %v2567, %v2563
    %v2916 = vsel %vm2275, %v2571, %v2915
    %v2917 = vsel %vm2277, %v2575, %v2916
    %v2918 = vsel %vm2279, %v2579, %v2917
    %v2919 = vsel %vm2281, %v2583, %v2918
    %v2920 = vsel %vm2283, %v2587, %v2919
    %v2921 = vsel %vm2285, %v2591, %v2920
    %v2922 = vsel %vm2273, %v2599, %v2595
    %v2923 = vsel %vm2275, %v2603, %v2922
    %v2924 = vsel %vm2277, %v2607, %v2923
    %v2925 = vsel %vm2279, %v2611, %v2924
    %v2926 = vsel %vm2281, %v2615, %v2925
    %v2927 = vsel %vm2283, %v2619, %v2926
    %v2928 = vsel %vm2285, %v2623, %v2927
    %v2929 = vsel %vm2273, %v2631, %v2627
    %v2930 = vsel %vm2275, %v2635, %v2929
    %v2931 = vsel %vm2277, %v2639, %v2930
    %v2932 = vsel %vm2279, %v2643, %v2931
    %v2933 = vsel %vm2281, %v2647, %v2932
    %v2934 = vsel %vm2283, %v2651, %v2933
    %v2935 = vsel %vm2285, %v2655, %v2934
    %v2936 = vsel %vm2273, %v2663, %v2659
    %v2937 = vsel %vm2275, %v2667, %v2936
    %v2938 = vsel %vm2277, %v2671, %v2937
    %v2939 = vsel %vm2279, %v2675, %v2938
    %v2940 = vsel %vm2281, %v2679, %v2939
    %v2941 = vsel %vm2283, %v2683, %v2940
    %v2942 = vsel %vm2285, %v2687, %v2941
    %v2943 = vsel %vm2273, %v2695, %v2691
    %v2944 = vsel %vm2275, %v2699, %v2943
    %v2945 = vsel %vm2277, %v2703, %v2944
    %v2946 = vsel %vm2279, %v2707, %v2945
    %v2947 = vsel %vm2281, %v2711, %v2946
    %v2948 = vsel %vm2283, %v2715, %v2947
    %v2949 = vsel %vm2285, %v2719, %v2948
    %v2950 = vsel %vm2273, %v2727, %v2723
    %v2951 = vsel %vm2275, %v2731, %v2950
    %v2952 = vsel %vm2277, %v2735, %v2951
    %v2953 = vsel %vm2279, %v2739, %v2952
    %v2954 = vsel %vm2281, %v2743, %v2953
    %v2955 = vsel %vm2283, %v2747, %v2954
    %v2956 = vsel %vm2285, %v2751, %v2955
    %v2957 = vsel %vm2273, %v2759, %v2755
    %v2958 = vsel %vm2275, %v2763, %v2957
    %v2959 = vsel %vm2277, %v2767, %v2958
    %v2960 = vsel %vm2279, %v2771, %v2959
    %v2961 = vsel %vm2281, %v2775, %v2960
    %v2962 = vsel %vm2283, %v2779, %v2961
    %v2963 = vsel %vm2285, %v2783, %v2962
    %v2964 = vsel %vm2273, %v2791, %v2787
    %v2965 = vsel %vm2275, %v2795, %v2964
    %v2966 = vsel %vm2277, %v2799, %v2965
    %v2967 = vsel %vm2279, %v2803, %v2966
    %v2968 = vsel %vm2281, %v2807, %v2967
    %v2969 = vsel %vm2283, %v2811, %v2968
    %v2970 = vsel %vm2285, %v2815, %v2969
    %v2971 = vsel %vm2273, %v2823, %v2819
    %v2972 = vsel %vm2275, %v2827, %v2971
    %v2973 = vsel %vm2277, %v2831, %v2972
    %v2974 = vsel %vm2279, %v2835, %v2973
    %v2975 = vsel %vm2281, %v2839, %v2974
    %v2976 = vsel %vm2283, %v2843, %v2975
    %v2977 = vsel %vm2285, %v2847, %v2976
    %v2978 = vsel %vm2273, %v2855, %v2851
    %v2979 = vsel %vm2275, %v2859, %v2978
    %v2980 = vsel %vm2277, %v2863, %v2979
    %v2981 = vsel %vm2279, %v2867, %v2980
    %v2982 = vsel %vm2281, %v2871, %v2981
    %v2983 = vsel %vm2283, %v2875, %v2982
    %v2984 = vsel %vm2285, %v2879, %v2983
    %2985 = vrot.lane.b32.xlu0 %v2886, 3
    %v2986 = vpop.permute.xlu0 %2985
    %2987 = vrot.lane.b32.xlu0 %v2893, 3
    %v2988 = vpop.permute.xlu0 %2987
    %2989 = vrot.lane.b32.xlu0 %v2900, 3
    %v2990 = vpop.permute.xlu0 %2989
    %2991 = vrot.lane.b32.xlu0 %v2907, 3
    %v2992 = vpop.permute.xlu0 %2991
    %2993 = vrot.lane.b32.xlu0 %v2914, 3
    %v2994 = vpop.permute.xlu0 %2993
    %2995 = vrot.lane.b32.xlu0 %v2921, 3
    %v2996 = vpop.permute.xlu0 %2995
    %2997 = vrot.lane.b32.xlu0 %v2928, 3
    %v2998 = vpop.permute.xlu0 %2997
    %2999 = vrot.lane.b32.xlu0 %v2935, 3
    %v3000 = vpop.permute.xlu0 %2999
    %3001 = vrot.lane.b32.xlu0 %v2942, 3
    %v3002 = vpop.permute.xlu0 %3001
    %3003 = vrot.lane.b32.xlu0 %v2949, 3
    %v3004 = vpop.permute.xlu0 %3003
    %3005 = vrot.lane.b32.xlu0 %v2956, 3
    %v3006 = vpop.permute.xlu0 %3005
    %3007 = vrot.lane.b32.xlu0 %v2963, 3
    %v3008 = vpop.permute.xlu0 %3007
    %3009 = vrot.lane.b32.xlu0 %v2970, 3
    %v3010 = vpop.permute.xlu0 %3009
    %3011 = vrot.lane.b32.xlu0 %v2977, 3
    %v3012 = vpop.permute.xlu0 %3011
    %3013 = vrot.lane.b32.xlu0 %v2984, 3
    %v3014 = vpop.permute.xlu0 %3013
    %v3030 = vlaneseq
    %v3031 = vshrl.u32 %v3030, 7
    %v3032 = vsub.s32 0, %v3031
    %v3033 = vrot.slane %v480, %v3032
    %v3034 = vlaneseq
    %v3035 = vshrl.u32 %v3034, 7
    %v3036 = vsub.s32 0, %v3035
    %v3037 = vrot.slane %v562, %v3036
    %v3038 = vlaneseq
    %v3039 = vshrl.u32 %v3038, 7
    %v3040 = vsub.s32 0, %v3039
    %v3041 = vrot.slane %v644, %v3040
    %v3042 = vlaneseq
    %v3043 = vshrl.u32 %v3042, 7
    %v3044 = vsub.s32 0, %v3043
    %v3045 = vrot.slane %v726, %v3044
    %v3046 = vlaneseq
    %v3047 = vshrl.u32 %v3046, 7
    %v3048 = vsub.s32 0, %v3047
    %v3049 = vrot.slane %v808, %v3048
    %v3050 = vlaneseq
    %v3051 = vshrl.u32 %v3050, 7
    %v3052 = vsub.s32 0, %v3051
    %v3053 = vrot.slane %v890, %v3052
    %v3054 = vlaneseq
    %v3055 = vshrl.u32 %v3054, 7
    %v3056 = vsub.s32 0, %v3055
    %v3057 = vrot.slane %v972, %v3056
    %v3058 = vlaneseq
    %v3059 = vshrl.u32 %v3058, 7
    %v3060 = vsub.s32 0, %v3059
    %v3061 = vrot.slane %v1054, %v3060
    %v3062 = vlaneseq
    %v3063 = vshrl.u32 %v3062, 7
    %v3064 = vsub.s32 0, %v3063
    %v3065 = vrot.slane %v1218, %v3064
    %v3066 = vlaneseq
    %v3067 = vshrl.u32 %v3066, 7
    %v3068 = vsub.s32 0, %v3067
    %v3069 = vrot.slane %v1300, %v3068
    %v3070 = vlaneseq
    %v3071 = vshrl.u32 %v3070, 7
    %v3072 = vsub.s32 0, %v3071
    %v3073 = vrot.slane %v1382, %v3072
    %v3074 = vlaneseq
    %v3075 = vshrl.u32 %v3074, 7
    %v3076 = vsub.s32 0, %v3075
    %v3077 = vrot.slane %v1464, %v3076
    %v3078 = vlaneseq
    %v3079 = vshrl.u32 %v3078, 7
    %v3080 = vsub.s32 0, %v3079
    %v3081 = vrot.slane %v1546, %v3080
    %v3082 = vlaneseq
    %v3083 = vshrl.u32 %v3082, 7
    %v3084 = vsub.s32 0, %v3083
    %v3085 = vrot.slane %v1628, %v3084
    %v3086 = vlaneseq
    %v3087 = vshrl.u32 %v3086, 7
    %v3088 = vsub.s32 0, %v3087
    %v3089 = vrot.slane %v1710, %v3088
    %v3090 = vsel %vm2273, %v1804, %v1800
    %v3091 = vsel %vm2275, %v1808, %v3090
    %v3092 = vsel %vm2277, %v1812, %v3091
    %v3093 = vsel %vm2279, %v1816, %v3092
    %v3094 = vsel %vm2281, %v1820, %v3093
    %v3095 = vsel %vm2283, %v1824, %v3094
    %v3096 = vsel %vm2285, %v3033, %v3095
    %v3097 = vsel %vm2273, %v1836, %v1832
    %v3098 = vsel %vm2275, %v1840, %v3097
    %v3099 = vsel %vm2277, %v1844, %v3098
    %v3100 = vsel %vm2279, %v1848, %v3099
    %v3101 = vsel %vm2281, %v1852, %v3100
    %v3102 = vsel %vm2283, %v1856, %v3101
    %v3103 = vsel %vm2285, %v3037, %v3102
    %v3104 = vsel %vm2273, %v1868, %v1864
    %v3105 = vsel %vm2275, %v1872, %v3104
    %v3106 = vsel %vm2277, %v1876, %v3105
    %v3107 = vsel %vm2279, %v1880, %v3106
    %v3108 = vsel %vm2281, %v1884, %v3107
    %v3109 = vsel %vm2283, %v1888, %v3108
    %v3110 = vsel %vm2285, %v3041, %v3109
    %v3111 = vsel %vm2273, %v1900, %v1896
    %v3112 = vsel %vm2275, %v1904, %v3111
    %v3113 = vsel %vm2277, %v1908, %v3112
    %v3114 = vsel %vm2279, %v1912, %v3113
    %v3115 = vsel %vm2281, %v1916, %v3114
    %v3116 = vsel %vm2283, %v1920, %v3115
    %v3117 = vsel %vm2285, %v3045, %v3116
    %v3118 = vsel %vm2273, %v1932, %v1928
    %v3119 = vsel %vm2275, %v1936, %v3118
    %v3120 = vsel %vm2277, %v1940, %v3119
    %v3121 = vsel %vm2279, %v1944, %v3120
    %v3122 = vsel %vm2281, %v1948, %v3121
    %v3123 = vsel %vm2283, %v1952, %v3122
    %v3124 = vsel %vm2285, %v3049, %v3123
    %v3125 = vsel %vm2273, %v1964, %v1960
    %v3126 = vsel %vm2275, %v1968, %v3125
    %v3127 = vsel %vm2277, %v1972, %v3126
    %v3128 = vsel %vm2279, %v1976, %v3127
    %v3129 = vsel %vm2281, %v1980, %v3128
    %v3130 = vsel %vm2283, %v1984, %v3129
    %v3131 = vsel %vm2285, %v3053, %v3130
    %v3132 = vsel %vm2273, %v1996, %v1992
    %v3133 = vsel %vm2275, %v2000, %v3132
    %v3134 = vsel %vm2277, %v2004, %v3133
    %v3135 = vsel %vm2279, %v2008, %v3134
    %v3136 = vsel %vm2281, %v2012, %v3135
    %v3137 = vsel %vm2283, %v2016, %v3136
    %v3138 = vsel %vm2285, %v3057, %v3137
    %v3139 = vsel %vm2273, %v2028, %v2024
    %v3140 = vsel %vm2275, %v2032, %v3139
    %v3141 = vsel %vm2277, %v2036, %v3140
    %v3142 = vsel %vm2279, %v2040, %v3141
    %v3143 = vsel %vm2281, %v2044, %v3142
    %v3144 = vsel %vm2283, %v2048, %v3143
    %v3145 = vsel %vm2285, %v3061, %v3144
    %v3146 = vsel %vm2273, %v2060, %v2056
    %v3147 = vsel %vm2275, %v2064, %v3146
    %v3148 = vsel %vm2277, %v2068, %v3147
    %v3149 = vsel %vm2279, %v2072, %v3148
    %v3150 = vsel %vm2281, %v2076, %v3149
    %v3151 = vsel %vm2283, %v2080, %v3150
    %v3152 = vsel %vm2285, %v3065, %v3151
    %v3153 = vsel %vm2273, %v2092, %v2088
    %v3154 = vsel %vm2275, %v2096, %v3153
    %v3155 = vsel %vm2277, %v2100, %v3154
    %v3156 = vsel %vm2279, %v2104, %v3155
    %v3157 = vsel %vm2281, %v2108, %v3156
    %v3158 = vsel %vm2283, %v2112, %v3157
    %v3159 = vsel %vm2285, %v3069, %v3158
    %v3160 = vsel %vm2273, %v2124, %v2120
    %v3161 = vsel %vm2275, %v2128, %v3160
    %v3162 = vsel %vm2277, %v2132, %v3161
    %v3163 = vsel %vm2279, %v2136, %v3162
    %v3164 = vsel %vm2281, %v2140, %v3163
    %v3165 = vsel %vm2283, %v2144, %v3164
    %v3166 = vsel %vm2285, %v3073, %v3165
    %v3167 = vsel %vm2273, %v2156, %v2152
    %v3168 = vsel %vm2275, %v2160, %v3167
    %v3169 = vsel %vm2277, %v2164, %v3168
    %v3170 = vsel %vm2279, %v2168, %v3169
    %v3171 = vsel %vm2281, %v2172, %v3170
    %v3172 = vsel %vm2283, %v2176, %v3171
    %v3173 = vsel %vm2285, %v3077, %v3172
    %v3174 = vsel %vm2273, %v2188, %v2184
    %v3175 = vsel %vm2275, %v2192, %v3174
    %v3176 = vsel %vm2277, %v2196, %v3175
    %v3177 = vsel %vm2279, %v2200, %v3176
    %v3178 = vsel %vm2281, %v2204, %v3177
    %v3179 = vsel %vm2283, %v2208, %v3178
    %v3180 = vsel %vm2285, %v3081, %v3179
    %v3181 = vsel %vm2273, %v2220, %v2216
    %v3182 = vsel %vm2275, %v2224, %v3181
    %v3183 = vsel %vm2277, %v2228, %v3182
    %v3184 = vsel %vm2279, %v2232, %v3183
    %v3185 = vsel %vm2281, %v2236, %v3184
    %v3186 = vsel %vm2283, %v2240, %v3185
    %v3187 = vsel %vm2285, %v3085, %v3186
    %v3188 = vsel %vm2273, %v2252, %v2248
    %v3189 = vsel %vm2275, %v2256, %v3188
    %v3190 = vsel %vm2277, %v2260, %v3189
    %v3191 = vsel %vm2279, %v2264, %v3190
    %v3192 = vsel %vm2281, %v2268, %v3191
    %v3193 = vsel %vm2283, %v2272, %v3192
    %v3194 = vsel %vm2285, %v3089, %v3193
    %3195 = vrot.lane.b32.xlu0 %v3096, 6
    %v3196 = vpop.permute.xlu0 %3195
    %3197 = vrot.lane.b32.xlu0 %v3103, 6
    %v3198 = vpop.permute.xlu0 %3197
    %3199 = vrot.lane.b32.xlu0 %v3110, 6
    %v3200 = vpop.permute.xlu0 %3199
    %3201 = vrot.lane.b32.xlu0 %v3117, 6
    %v3202 = vpop.permute.xlu0 %3201
    %3203 = vrot.lane.b32.xlu0 %v3124, 6
    %v3204 = vpop.permute.xlu0 %3203
    %3205 = vrot.lane.b32.xlu0 %v3131, 6
    %v3206 = vpop.permute.xlu0 %3205
    %3207 = vrot.lane.b32.xlu0 %v3138, 6
    %v3208 = vpop.permute.xlu0 %3207
    %3209 = vrot.lane.b32.xlu0 %v3145, 6
    %v3210 = vpop.permute.xlu0 %3209
    %3211 = vrot.lane.b32.xlu0 %v3152, 6
    %v3212 = vpop.permute.xlu0 %3211
    %3213 = vrot.lane.b32.xlu0 %v3159, 6
    %v3214 = vpop.permute.xlu0 %3213
    %3215 = vrot.lane.b32.xlu0 %v3166, 6
    %v3216 = vpop.permute.xlu0 %3215
    %3217 = vrot.lane.b32.xlu0 %v3173, 6
    %v3218 = vpop.permute.xlu0 %3217
    %3219 = vrot.lane.b32.xlu0 %v3180, 6
    %v3220 = vpop.permute.xlu0 %3219
    %3221 = vrot.lane.b32.xlu0 %v3187, 6
    %v3222 = vpop.permute.xlu0 %3221
    %3223 = vrot.lane.b32.xlu0 %v3194, 6
    %v3224 = vpop.permute.xlu0 %3223
    %v3240 = vlaneseq
    %v3241 = vshrl.u32 %v3240, 7
    %v3242 = vsub.s32 1, %v3241
    %v3243 = vrot.slane %v480, %v3242
    %v3244 = vlaneseq
    %v3245 = vshrl.u32 %v3244, 7
    %v3246 = vsub.s32 1, %v3245
    %v3247 = vrot.slane %v562, %v3246
    %v3248 = vlaneseq
    %v3249 = vshrl.u32 %v3248, 7
    %v3250 = vsub.s32 1, %v3249
    %v3251 = vrot.slane %v644, %v3250
    %v3252 = vlaneseq
    %v3253 = vshrl.u32 %v3252, 7
    %v3254 = vsub.s32 1, %v3253
    %v3255 = vrot.slane %v726, %v3254
    %v3256 = vlaneseq
    %v3257 = vshrl.u32 %v3256, 7
    %v3258 = vsub.s32 1, %v3257
    %v3259 = vrot.slane %v808, %v3258
    %v3260 = vlaneseq
    %v3261 = vshrl.u32 %v3260, 7
    %v3262 = vsub.s32 1, %v3261
    %v3263 = vrot.slane %v890, %v3262
    %v3264 = vlaneseq
    %v3265 = vshrl.u32 %v3264, 7
    %v3266 = vsub.s32 1, %v3265
    %v3267 = vrot.slane %v972, %v3266
    %v3268 = vlaneseq
    %v3269 = vshrl.u32 %v3268, 7
    %v3270 = vsub.s32 1, %v3269
    %v3271 = vrot.slane %v1054, %v3270
    %v3272 = vlaneseq
    %v3273 = vshrl.u32 %v3272, 7
    %v3274 = vsub.s32 1, %v3273
    %v3275 = vrot.slane %v1218, %v3274
    %v3276 = vlaneseq
    %v3277 = vshrl.u32 %v3276, 7
    %v3278 = vsub.s32 1, %v3277
    %v3279 = vrot.slane %v1300, %v3278
    %v3280 = vlaneseq
    %v3281 = vshrl.u32 %v3280, 7
    %v3282 = vsub.s32 1, %v3281
    %v3283 = vrot.slane %v1382, %v3282
    %v3284 = vlaneseq
    %v3285 = vshrl.u32 %v3284, 7
    %v3286 = vsub.s32 1, %v3285
    %v3287 = vrot.slane %v1464, %v3286
    %v3288 = vlaneseq
    %v3289 = vshrl.u32 %v3288, 7
    %v3290 = vsub.s32 1, %v3289
    %v3291 = vrot.slane %v1546, %v3290
    %v3292 = vlaneseq
    %v3293 = vshrl.u32 %v3292, 7
    %v3294 = vsub.s32 1, %v3293
    %v3295 = vrot.slane %v1628, %v3294
    %v3296 = vlaneseq
    %v3297 = vshrl.u32 %v3296, 7
    %v3298 = vsub.s32 1, %v3297
    %v3299 = vrot.slane %v1710, %v3298
    %v3300 = vsel %vm2273, %v2411, %v2407
    %v3301 = vsel %vm2275, %v2415, %v3300
    %v3302 = vsel %vm2277, %v2419, %v3301
    %v3303 = vsel %vm2279, %v2423, %v3302
    %v3304 = vsel %vm2281, %v2427, %v3303
    %v3305 = vsel %vm2283, %v2431, %v3304
    %v3306 = vsel %vm2285, %v3243, %v3305
    %v3307 = vsel %vm2273, %v2443, %v2439
    %v3308 = vsel %vm2275, %v2447, %v3307
    %v3309 = vsel %vm2277, %v2451, %v3308
    %v3310 = vsel %vm2279, %v2455, %v3309
    %v3311 = vsel %vm2281, %v2459, %v3310
    %v3312 = vsel %vm2283, %v2463, %v3311
    %v3313 = vsel %vm2285, %v3247, %v3312
    %v3314 = vsel %vm2273, %v2475, %v2471
    %v3315 = vsel %vm2275, %v2479, %v3314
    %v3316 = vsel %vm2277, %v2483, %v3315
    %v3317 = vsel %vm2279, %v2487, %v3316
    %v3318 = vsel %vm2281, %v2491, %v3317
    %v3319 = vsel %vm2283, %v2495, %v3318
    %v3320 = vsel %vm2285, %v3251, %v3319
    %v3321 = vsel %vm2273, %v2507, %v2503
    %v3322 = vsel %vm2275, %v2511, %v3321
    %v3323 = vsel %vm2277, %v2515, %v3322
    %v3324 = vsel %vm2279, %v2519, %v3323
    %v3325 = vsel %vm2281, %v2523, %v3324
    %v3326 = vsel %vm2283, %v2527, %v3325
    %v3327 = vsel %vm2285, %v3255, %v3326
    %v3328 = vsel %vm2273, %v2539, %v2535
    %v3329 = vsel %vm2275, %v2543, %v3328
    %v3330 = vsel %vm2277, %v2547, %v3329
    %v3331 = vsel %vm2279, %v2551, %v3330
    %v3332 = vsel %vm2281, %v2555, %v3331
    %v3333 = vsel %vm2283, %v2559, %v3332
    %v3334 = vsel %vm2285, %v3259, %v3333
    %v3335 = vsel %vm2273, %v2571, %v2567
    %v3336 = vsel %vm2275, %v2575, %v3335
    %v3337 = vsel %vm2277, %v2579, %v3336
    %v3338 = vsel %vm2279, %v2583, %v3337
    %v3339 = vsel %vm2281, %v2587, %v3338
    %v3340 = vsel %vm2283, %v2591, %v3339
    %v3341 = vsel %vm2285, %v3263, %v3340
    %v3342 = vsel %vm2273, %v2603, %v2599
    %v3343 = vsel %vm2275, %v2607, %v3342
    %v3344 = vsel %vm2277, %v2611, %v3343
    %v3345 = vsel %vm2279, %v2615, %v3344
    %v3346 = vsel %vm2281, %v2619, %v3345
    %v3347 = vsel %vm2283, %v2623, %v3346
    %v3348 = vsel %vm2285, %v3267, %v3347
    %v3349 = vsel %vm2273, %v2635, %v2631
    %v3350 = vsel %vm2275, %v2639, %v3349
    %v3351 = vsel %vm2277, %v2643, %v3350
    %v3352 = vsel %vm2279, %v2647, %v3351
    %v3353 = vsel %vm2281, %v2651, %v3352
    %v3354 = vsel %vm2283, %v2655, %v3353
    %v3355 = vsel %vm2285, %v3271, %v3354
    %v3356 = vsel %vm2273, %v2667, %v2663
    %v3357 = vsel %vm2275, %v2671, %v3356
    %v3358 = vsel %vm2277, %v2675, %v3357
    %v3359 = vsel %vm2279, %v2679, %v3358
    %v3360 = vsel %vm2281, %v2683, %v3359
    %v3361 = vsel %vm2283, %v2687, %v3360
    %v3362 = vsel %vm2285, %v3275, %v3361
    %v3363 = vsel %vm2273, %v2699, %v2695
    %v3364 = vsel %vm2275, %v2703, %v3363
    %v3365 = vsel %vm2277, %v2707, %v3364
    %v3366 = vsel %vm2279, %v2711, %v3365
    %v3367 = vsel %vm2281, %v2715, %v3366
    %v3368 = vsel %vm2283, %v2719, %v3367
    %v3369 = vsel %vm2285, %v3279, %v3368
    %v3370 = vsel %vm2273, %v2731, %v2727
    %v3371 = vsel %vm2275, %v2735, %v3370
    %v3372 = vsel %vm2277, %v2739, %v3371
    %v3373 = vsel %vm2279, %v2743, %v3372
    %v3374 = vsel %vm2281, %v2747, %v3373
    %v3375 = vsel %vm2283, %v2751, %v3374
    %v3376 = vsel %vm2285, %v3283, %v3375
    %v3377 = vsel %vm2273, %v2763, %v2759
    %v3378 = vsel %vm2275, %v2767, %v3377
    %v3379 = vsel %vm2277, %v2771, %v3378
    %v3380 = vsel %vm2279, %v2775, %v3379
    %v3381 = vsel %vm2281, %v2779, %v3380
    %v3382 = vsel %vm2283, %v2783, %v3381
    %v3383 = vsel %vm2285, %v3287, %v3382
    %v3384 = vsel %vm2273, %v2795, %v2791
    %v3385 = vsel %vm2275, %v2799, %v3384
    %v3386 = vsel %vm2277, %v2803, %v3385
    %v3387 = vsel %vm2279, %v2807, %v3386
    %v3388 = vsel %vm2281, %v2811, %v3387
    %v3389 = vsel %vm2283, %v2815, %v3388
    %v3390 = vsel %vm2285, %v3291, %v3389
    %v3391 = vsel %vm2273, %v2827, %v2823
    %v3392 = vsel %vm2275, %v2831, %v3391
    %v3393 = vsel %vm2277, %v2835, %v3392
    %v3394 = vsel %vm2279, %v2839, %v3393
    %v3395 = vsel %vm2281, %v2843, %v3394
    %v3396 = vsel %vm2283, %v2847, %v3395
    %v3397 = vsel %vm2285, %v3295, %v3396
    %v3398 = vsel %vm2273, %v2859, %v2855
    %v3399 = vsel %vm2275, %v2863, %v3398
    %v3400 = vsel %vm2277, %v2867, %v3399
    %v3401 = vsel %vm2279, %v2871, %v3400
    %v3402 = vsel %vm2281, %v2875, %v3401
    %v3403 = vsel %vm2283, %v2879, %v3402
    %v3404 = vsel %vm2285, %v3299, %v3403
    %3405 = vrot.lane.b32.xlu0 %v3306, 9
    %v3406 = vpop.permute.xlu0 %3405
    %3407 = vrot.lane.b32.xlu0 %v3313, 9
    %v3408 = vpop.permute.xlu0 %3407
    %3409 = vrot.lane.b32.xlu0 %v3320, 9
    %v3410 = vpop.permute.xlu0 %3409
    %3411 = vrot.lane.b32.xlu0 %v3327, 9
    %v3412 = vpop.permute.xlu0 %3411
    %3413 = vrot.lane.b32.xlu0 %v3334, 9
    %v3414 = vpop.permute.xlu0 %3413
    %3415 = vrot.lane.b32.xlu0 %v3341, 9
    %v3416 = vpop.permute.xlu0 %3415
    %3417 = vrot.lane.b32.xlu0 %v3348, 9
    %v3418 = vpop.permute.xlu0 %3417
    %3419 = vrot.lane.b32.xlu0 %v3355, 9
    %v3420 = vpop.permute.xlu0 %3419
    %3421 = vrot.lane.b32.xlu0 %v3362, 9
    %v3422 = vpop.permute.xlu0 %3421
    %3423 = vrot.lane.b32.xlu0 %v3369, 9
    %v3424 = vpop.permute.xlu0 %3423
    %3425 = vrot.lane.b32.xlu0 %v3376, 9
    %v3426 = vpop.permute.xlu0 %3425
    %3427 = vrot.lane.b32.xlu0 %v3383, 9
    %v3428 = vpop.permute.xlu0 %3427
    %3429 = vrot.lane.b32.xlu0 %v3390, 9
    %v3430 = vpop.permute.xlu0 %3429
    %3431 = vrot.lane.b32.xlu0 %v3397, 9
    %v3432 = vpop.permute.xlu0 %3431
    %3433 = vrot.lane.b32.xlu0 %v3404, 9
    %v3434 = vpop.permute.xlu0 %3433
    %v3450 = vlaneseq
    %v3451 = vshrl.u32 %v3450, 7
    %v3452 = vsub.s32 0, %v3451
    %v3453 = vrot.slane %v488, %v3452
    %v3454 = vlaneseq
    %v3455 = vshrl.u32 %v3454, 7
    %v3456 = vsub.s32 0, %v3455
    %v3457 = vrot.slane %v496, %v3456
    %v3458 = vlaneseq
    %v3459 = vshrl.u32 %v3458, 7
    %v3460 = vsub.s32 0, %v3459
    %v3461 = vrot.slane %v495, %v3460
    %v3462 = vlaneseq
    %v3463 = vshrl.u32 %v3462, 7
    %v3464 = vsub.s32 0, %v3463
    %v3465 = vrot.slane %v497, %v3464
    %v3466 = vlaneseq
    %v3467 = vshrl.u32 %v3466, 7
    %v3468 = vsub.s32 0, %v3467
    %v3469 = vrot.slane %v505, %v3468
    %v3470 = vlaneseq
    %v3471 = vshrl.u32 %v3470, 7
    %v3472 = vsub.s32 0, %v3471
    %v3473 = vrot.slane %v513, %v3472
    %v3474 = vlaneseq
    %v3475 = vshrl.u32 %v3474, 7
    %v3476 = vsub.s32 0, %v3475
    %v3477 = vrot.slane %v512, %v3476
    %v3478 = vlaneseq
    %v3479 = vshrl.u32 %v3478, 7
    %v3480 = vsub.s32 0, %v3479
    %v3481 = vrot.slane %v514, %v3480
    %v3482 = vlaneseq
    %v3483 = vshrl.u32 %v3482, 7
    %v3484 = vsub.s32 0, %v3483
    %v3485 = vrot.slane %v570, %v3484
    %v3486 = vlaneseq
    %v3487 = vshrl.u32 %v3486, 7
    %v3488 = vsub.s32 0, %v3487
    %v3489 = vrot.slane %v578, %v3488
    %v3490 = vlaneseq
    %v3491 = vshrl.u32 %v3490, 7
    %v3492 = vsub.s32 0, %v3491
    %v3493 = vrot.slane %v577, %v3492
    %v3494 = vlaneseq
    %v3495 = vshrl.u32 %v3494, 7
    %v3496 = vsub.s32 0, %v3495
    %v3497 = vrot.slane %v579, %v3496
    %v3498 = vlaneseq
    %v3499 = vshrl.u32 %v3498, 7
    %v3500 = vsub.s32 0, %v3499
    %v3501 = vrot.slane %v587, %v3500
    %v3502 = vlaneseq
    %v3503 = vshrl.u32 %v3502, 7
    %v3504 = vsub.s32 0, %v3503
    %v3505 = vrot.slane %v595, %v3504
    %v3506 = vlaneseq
    %v3507 = vshrl.u32 %v3506, 7
    %v3508 = vsub.s32 0, %v3507
    %v3509 = vrot.slane %v594, %v3508
    %v3510 = vlaneseq
    %v3511 = vshrl.u32 %v3510, 7
    %v3512 = vsub.s32 0, %v3511
    %v3513 = vrot.slane %v596, %v3512
    %v3514 = vlaneseq
    %v3515 = vshrl.u32 %v3514, 7
    %v3516 = vsub.s32 0, %v3515
    %v3517 = vrot.slane %v652, %v3516
    %v3518 = vlaneseq
    %v3519 = vshrl.u32 %v3518, 7
    %v3520 = vsub.s32 0, %v3519
    %v3521 = vrot.slane %v660, %v3520
    %v3522 = vlaneseq
    %v3523 = vshrl.u32 %v3522, 7
    %v3524 = vsub.s32 0, %v3523
    %v3525 = vrot.slane %v659, %v3524
    %v3526 = vlaneseq
    %v3527 = vshrl.u32 %v3526, 7
    %v3528 = vsub.s32 0, %v3527
    %v3529 = vrot.slane %v661, %v3528
    %v3530 = vlaneseq
    %v3531 = vshrl.u32 %v3530, 7
    %v3532 = vsub.s32 0, %v3531
    %v3533 = vrot.slane %v669, %v3532
    %v3534 = vlaneseq
    %v3535 = vshrl.u32 %v3534, 7
    %v3536 = vsub.s32 0, %v3535
    %v3537 = vrot.slane %v677, %v3536
    %v3538 = vlaneseq
    %v3539 = vshrl.u32 %v3538, 7
    %v3540 = vsub.s32 0, %v3539
    %v3541 = vrot.slane %v676, %v3540
    %v3542 = vlaneseq
    %v3543 = vshrl.u32 %v3542, 7
    %v3544 = vsub.s32 0, %v3543
    %v3545 = vrot.slane %v678, %v3544
    %v3546 = vlaneseq
    %v3547 = vshrl.u32 %v3546, 7
    %v3548 = vsub.s32 0, %v3547
    %v3549 = vrot.slane %v734, %v3548
    %v3550 = vlaneseq
    %v3551 = vshrl.u32 %v3550, 7
    %v3552 = vsub.s32 0, %v3551
    %v3553 = vrot.slane %v742, %v3552
    %v3554 = vlaneseq
    %v3555 = vshrl.u32 %v3554, 7
    %v3556 = vsub.s32 0, %v3555
    %v3557 = vrot.slane %v741, %v3556
    %v3558 = vlaneseq
    %v3559 = vshrl.u32 %v3558, 7
    %v3560 = vsub.s32 0, %v3559
    %v3561 = vrot.slane %v743, %v3560
    %v3562 = vlaneseq
    %v3563 = vshrl.u32 %v3562, 7
    %v3564 = vsub.s32 0, %v3563
    %v3565 = vrot.slane %v751, %v3564
    %v3566 = vlaneseq
    %v3567 = vshrl.u32 %v3566, 7
    %v3568 = vsub.s32 0, %v3567
    %v3569 = vrot.slane %v759, %v3568
    %v3570 = vlaneseq
    %v3571 = vshrl.u32 %v3570, 7
    %v3572 = vsub.s32 0, %v3571
    %v3573 = vrot.slane %v758, %v3572
    %v3574 = vlaneseq
    %v3575 = vshrl.u32 %v3574, 7
    %v3576 = vsub.s32 0, %v3575
    %v3577 = vrot.slane %v760, %v3576
    %v3578 = vlaneseq
    %v3579 = vshrl.u32 %v3578, 7
    %v3580 = vsub.s32 0, %v3579
    %v3581 = vrot.slane %v816, %v3580
    %v3582 = vlaneseq
    %v3583 = vshrl.u32 %v3582, 7
    %v3584 = vsub.s32 0, %v3583
    %v3585 = vrot.slane %v824, %v3584
    %v3586 = vlaneseq
    %v3587 = vshrl.u32 %v3586, 7
    %v3588 = vsub.s32 0, %v3587
    %v3589 = vrot.slane %v823, %v3588
    %v3590 = vlaneseq
    %v3591 = vshrl.u32 %v3590, 7
    %v3592 = vsub.s32 0, %v3591
    %v3593 = vrot.slane %v825, %v3592
    %v3594 = vlaneseq
    %v3595 = vshrl.u32 %v3594, 7
    %v3596 = vsub.s32 0, %v3595
    %v3597 = vrot.slane %v833, %v3596
    %v3598 = vlaneseq
    %v3599 = vshrl.u32 %v3598, 7
    %v3600 = vsub.s32 0, %v3599
    %v3601 = vrot.slane %v841, %v3600
    %v3602 = vlaneseq
    %v3603 = vshrl.u32 %v3602, 7
    %v3604 = vsub.s32 0, %v3603
    %v3605 = vrot.slane %v840, %v3604
    %v3606 = vlaneseq
    %v3607 = vshrl.u32 %v3606, 7
    %v3608 = vsub.s32 0, %v3607
    %v3609 = vrot.slane %v842, %v3608
    %v3610 = vlaneseq
    %v3611 = vshrl.u32 %v3610, 7
    %v3612 = vsub.s32 0, %v3611
    %v3613 = vrot.slane %v898, %v3612
    %v3614 = vlaneseq
    %v3615 = vshrl.u32 %v3614, 7
    %v3616 = vsub.s32 0, %v3615
    %v3617 = vrot.slane %v906, %v3616
    %v3618 = vlaneseq
    %v3619 = vshrl.u32 %v3618, 7
    %v3620 = vsub.s32 0, %v3619
    %v3621 = vrot.slane %v905, %v3620
    %v3622 = vlaneseq
    %v3623 = vshrl.u32 %v3622, 7
    %v3624 = vsub.s32 0, %v3623
    %v3625 = vrot.slane %v907, %v3624
    %v3626 = vlaneseq
    %v3627 = vshrl.u32 %v3626, 7
    %v3628 = vsub.s32 0, %v3627
    %v3629 = vrot.slane %v915, %v3628
    %v3630 = vlaneseq
    %v3631 = vshrl.u32 %v3630, 7
    %v3632 = vsub.s32 0, %v3631
    %v3633 = vrot.slane %v923, %v3632
    %v3634 = vlaneseq
    %v3635 = vshrl.u32 %v3634, 7
    %v3636 = vsub.s32 0, %v3635
    %v3637 = vrot.slane %v922, %v3636
    %v3638 = vlaneseq
    %v3639 = vshrl.u32 %v3638, 7
    %v3640 = vsub.s32 0, %v3639
    %v3641 = vrot.slane %v924, %v3640
    %v3642 = vlaneseq
    %v3643 = vshrl.u32 %v3642, 7
    %v3644 = vsub.s32 0, %v3643
    %v3645 = vrot.slane %v980, %v3644
    %v3646 = vlaneseq
    %v3647 = vshrl.u32 %v3646, 7
    %v3648 = vsub.s32 0, %v3647
    %v3649 = vrot.slane %v988, %v3648
    %v3650 = vlaneseq
    %v3651 = vshrl.u32 %v3650, 7
    %v3652 = vsub.s32 0, %v3651
    %v3653 = vrot.slane %v987, %v3652
    %v3654 = vlaneseq
    %v3655 = vshrl.u32 %v3654, 7
    %v3656 = vsub.s32 0, %v3655
    %v3657 = vrot.slane %v989, %v3656
    %v3658 = vlaneseq
    %v3659 = vshrl.u32 %v3658, 7
    %v3660 = vsub.s32 0, %v3659
    %v3661 = vrot.slane %v997, %v3660
    %v3662 = vlaneseq
    %v3663 = vshrl.u32 %v3662, 7
    %v3664 = vsub.s32 0, %v3663
    %v3665 = vrot.slane %v1005, %v3664
    %v3666 = vlaneseq
    %v3667 = vshrl.u32 %v3666, 7
    %v3668 = vsub.s32 0, %v3667
    %v3669 = vrot.slane %v1004, %v3668
    %v3670 = vlaneseq
    %v3671 = vshrl.u32 %v3670, 7
    %v3672 = vsub.s32 0, %v3671
    %v3673 = vrot.slane %v1006, %v3672
    %v3674 = vlaneseq
    %v3675 = vshrl.u32 %v3674, 7
    %v3676 = vsub.s32 0, %v3675
    %v3677 = vrot.slane %v1062, %v3676
    %v3678 = vlaneseq
    %v3679 = vshrl.u32 %v3678, 7
    %v3680 = vsub.s32 0, %v3679
    %v3681 = vrot.slane %v1070, %v3680
    %v3682 = vlaneseq
    %v3683 = vshrl.u32 %v3682, 7
    %v3684 = vsub.s32 0, %v3683
    %v3685 = vrot.slane %v1069, %v3684
    %v3686 = vlaneseq
    %v3687 = vshrl.u32 %v3686, 7
    %v3688 = vsub.s32 0, %v3687
    %v3689 = vrot.slane %v1071, %v3688
    %v3690 = vlaneseq
    %v3691 = vshrl.u32 %v3690, 7
    %v3692 = vsub.s32 0, %v3691
    %v3693 = vrot.slane %v1079, %v3692
    %v3694 = vlaneseq
    %v3695 = vshrl.u32 %v3694, 7
    %v3696 = vsub.s32 0, %v3695
    %v3697 = vrot.slane %v1087, %v3696
    %v3698 = vlaneseq
    %v3699 = vshrl.u32 %v3698, 7
    %v3700 = vsub.s32 0, %v3699
    %v3701 = vrot.slane %v1086, %v3700
    %v3702 = vlaneseq
    %v3703 = vshrl.u32 %v3702, 7
    %v3704 = vsub.s32 0, %v3703
    %v3705 = vrot.slane %v1088, %v3704
    %v3706 = vlaneseq
    %v3707 = vshrl.u32 %v3706, 7
    %v3708 = vsub.s32 0, %v3707
    %v3709 = vrot.slane %v1144, %v3708
    %v3710 = vlaneseq
    %v3711 = vshrl.u32 %v3710, 7
    %v3712 = vsub.s32 0, %v3711
    %v3713 = vrot.slane %v1152, %v3712
    %v3714 = vlaneseq
    %v3715 = vshrl.u32 %v3714, 7
    %v3716 = vsub.s32 0, %v3715
    %v3717 = vrot.slane %v1151, %v3716
    %v3718 = vlaneseq
    %v3719 = vshrl.u32 %v3718, 7
    %v3720 = vsub.s32 0, %v3719
    %v3721 = vrot.slane %v1153, %v3720
    %v3722 = vlaneseq
    %v3723 = vshrl.u32 %v3722, 7
    %v3724 = vsub.s32 0, %v3723
    %v3725 = vrot.slane %v1161, %v3724
    %v3726 = vlaneseq
    %v3727 = vshrl.u32 %v3726, 7
    %v3728 = vsub.s32 0, %v3727
    %v3729 = vrot.slane %v1169, %v3728
    %v3730 = vlaneseq
    %v3731 = vshrl.u32 %v3730, 7
    %v3732 = vsub.s32 0, %v3731
    %v3733 = vrot.slane %v1168, %v3732
    %v3734 = vlaneseq
    %v3735 = vshrl.u32 %v3734, 7
    %v3736 = vsub.s32 0, %v3735
    %v3737 = vrot.slane %v1170, %v3736
    %v3738 = vlaneseq
    %v3739 = vshrl.u32 %v3738, 7
    %v3740 = vsub.s32 0, %v3739
    %v3741 = vrot.slane %v1226, %v3740
    %v3742 = vlaneseq
    %v3743 = vshrl.u32 %v3742, 7
    %v3744 = vsub.s32 0, %v3743
    %v3745 = vrot.slane %v1234, %v3744
    %v3746 = vlaneseq
    %v3747 = vshrl.u32 %v3746, 7
    %v3748 = vsub.s32 0, %v3747
    %v3749 = vrot.slane %v1233, %v3748
    %v3750 = vlaneseq
    %v3751 = vshrl.u32 %v3750, 7
    %v3752 = vsub.s32 0, %v3751
    %v3753 = vrot.slane %v1235, %v3752
    %v3754 = vlaneseq
    %v3755 = vshrl.u32 %v3754, 7
    %v3756 = vsub.s32 0, %v3755
    %v3757 = vrot.slane %v1243, %v3756
    %v3758 = vlaneseq
    %v3759 = vshrl.u32 %v3758, 7
    %v3760 = vsub.s32 0, %v3759
    %v3761 = vrot.slane %v1251, %v3760
    %v3762 = vlaneseq
    %v3763 = vshrl.u32 %v3762, 7
    %v3764 = vsub.s32 0, %v3763
    %v3765 = vrot.slane %v1250, %v3764
    %v3766 = vlaneseq
    %v3767 = vshrl.u32 %v3766, 7
    %v3768 = vsub.s32 0, %v3767
    %v3769 = vrot.slane %v1252, %v3768
    %v3770 = vlaneseq
    %v3771 = vshrl.u32 %v3770, 7
    %v3772 = vsub.s32 0, %v3771
    %v3773 = vrot.slane %v1308, %v3772
    %v3774 = vlaneseq
    %v3775 = vshrl.u32 %v3774, 7
    %v3776 = vsub.s32 0, %v3775
    %v3777 = vrot.slane %v1316, %v3776
    %v3778 = vlaneseq
    %v3779 = vshrl.u32 %v3778, 7
    %v3780 = vsub.s32 0, %v3779
    %v3781 = vrot.slane %v1315, %v3780
    %v3782 = vlaneseq
    %v3783 = vshrl.u32 %v3782, 7
    %v3784 = vsub.s32 0, %v3783
    %v3785 = vrot.slane %v1317, %v3784
    %v3786 = vlaneseq
    %v3787 = vshrl.u32 %v3786, 7
    %v3788 = vsub.s32 0, %v3787
    %v3789 = vrot.slane %v1325, %v3788
    %v3790 = vlaneseq
    %v3791 = vshrl.u32 %v3790, 7
    %v3792 = vsub.s32 0, %v3791
    %v3793 = vrot.slane %v1333, %v3792
    %v3794 = vlaneseq
    %v3795 = vshrl.u32 %v3794, 7
    %v3796 = vsub.s32 0, %v3795
    %v3797 = vrot.slane %v1332, %v3796
    %v3798 = vlaneseq
    %v3799 = vshrl.u32 %v3798, 7
    %v3800 = vsub.s32 0, %v3799
    %v3801 = vrot.slane %v1334, %v3800
    %v3802 = vlaneseq
    %v3803 = vshrl.u32 %v3802, 7
    %v3804 = vsub.s32 0, %v3803
    %v3805 = vrot.slane %v1390, %v3804
    %v3806 = vlaneseq
    %v3807 = vshrl.u32 %v3806, 7
    %v3808 = vsub.s32 0, %v3807
    %v3809 = vrot.slane %v1398, %v3808
    %v3810 = vlaneseq
    %v3811 = vshrl.u32 %v3810, 7
    %v3812 = vsub.s32 0, %v3811
    %v3813 = vrot.slane %v1397, %v3812
    %v3814 = vlaneseq
    %v3815 = vshrl.u32 %v3814, 7
    %v3816 = vsub.s32 0, %v3815
    %v3817 = vrot.slane %v1399, %v3816
    %v3818 = vlaneseq
    %v3819 = vshrl.u32 %v3818, 7
    %v3820 = vsub.s32 0, %v3819
    %v3821 = vrot.slane %v1407, %v3820
    %v3822 = vlaneseq
    %v3823 = vshrl.u32 %v3822, 7
    %v3824 = vsub.s32 0, %v3823
    %v3825 = vrot.slane %v1415, %v3824
    %v3826 = vlaneseq
    %v3827 = vshrl.u32 %v3826, 7
    %v3828 = vsub.s32 0, %v3827
    %v3829 = vrot.slane %v1414, %v3828
    %v3830 = vlaneseq
    %v3831 = vshrl.u32 %v3830, 7
    %v3832 = vsub.s32 0, %v3831
    %v3833 = vrot.slane %v1416, %v3832
    %v3834 = vlaneseq
    %v3835 = vshrl.u32 %v3834, 7
    %v3836 = vsub.s32 0, %v3835
    %v3837 = vrot.slane %v1472, %v3836
    %v3838 = vlaneseq
    %v3839 = vshrl.u32 %v3838, 7
    %v3840 = vsub.s32 0, %v3839
    %v3841 = vrot.slane %v1480, %v3840
    %v3842 = vlaneseq
    %v3843 = vshrl.u32 %v3842, 7
    %v3844 = vsub.s32 0, %v3843
    %v3845 = vrot.slane %v1479, %v3844
    %v3846 = vlaneseq
    %v3847 = vshrl.u32 %v3846, 7
    %v3848 = vsub.s32 0, %v3847
    %v3849 = vrot.slane %v1481, %v3848
    %v3850 = vlaneseq
    %v3851 = vshrl.u32 %v3850, 7
    %v3852 = vsub.s32 0, %v3851
    %v3853 = vrot.slane %v1489, %v3852
    %v3854 = vlaneseq
    %v3855 = vshrl.u32 %v3854, 7
    %v3856 = vsub.s32 0, %v3855
    %v3857 = vrot.slane %v1497, %v3856
    %v3858 = vlaneseq
    %v3859 = vshrl.u32 %v3858, 7
    %v3860 = vsub.s32 0, %v3859
    %v3861 = vrot.slane %v1496, %v3860
    %v3862 = vlaneseq
    %v3863 = vshrl.u32 %v3862, 7
    %v3864 = vsub.s32 0, %v3863
    %v3865 = vrot.slane %v1498, %v3864
    %v3866 = vlaneseq
    %v3867 = vshrl.u32 %v3866, 7
    %v3868 = vsub.s32 0, %v3867
    %v3869 = vrot.slane %v1554, %v3868
    %v3870 = vlaneseq
    %v3871 = vshrl.u32 %v3870, 7
    %v3872 = vsub.s32 0, %v3871
    %v3873 = vrot.slane %v1562, %v3872
    %v3874 = vlaneseq
    %v3875 = vshrl.u32 %v3874, 7
    %v3876 = vsub.s32 0, %v3875
    %v3877 = vrot.slane %v1561, %v3876
    %v3878 = vlaneseq
    %v3879 = vshrl.u32 %v3878, 7
    %v3880 = vsub.s32 0, %v3879
    %v3881 = vrot.slane %v1563, %v3880
    %v3882 = vlaneseq
    %v3883 = vshrl.u32 %v3882, 7
    %v3884 = vsub.s32 0, %v3883
    %v3885 = vrot.slane %v1571, %v3884
    %v3886 = vlaneseq
    %v3887 = vshrl.u32 %v3886, 7
    %v3888 = vsub.s32 0, %v3887
    %v3889 = vrot.slane %v1579, %v3888
    %v3890 = vlaneseq
    %v3891 = vshrl.u32 %v3890, 7
    %v3892 = vsub.s32 0, %v3891
    %v3893 = vrot.slane %v1578, %v3892
    %v3894 = vlaneseq
    %v3895 = vshrl.u32 %v3894, 7
    %v3896 = vsub.s32 0, %v3895
    %v3897 = vrot.slane %v1580, %v3896
    %v3898 = vlaneseq
    %v3899 = vshrl.u32 %v3898, 7
    %v3900 = vsub.s32 0, %v3899
    %v3901 = vrot.slane %v1636, %v3900
    %v3902 = vlaneseq
    %v3903 = vshrl.u32 %v3902, 7
    %v3904 = vsub.s32 0, %v3903
    %v3905 = vrot.slane %v1644, %v3904
    %v3906 = vlaneseq
    %v3907 = vshrl.u32 %v3906, 7
    %v3908 = vsub.s32 0, %v3907
    %v3909 = vrot.slane %v1643, %v3908
    %v3910 = vlaneseq
    %v3911 = vshrl.u32 %v3910, 7
    %v3912 = vsub.s32 0, %v3911
    %v3913 = vrot.slane %v1645, %v3912
    %v3914 = vlaneseq
    %v3915 = vshrl.u32 %v3914, 7
    %v3916 = vsub.s32 0, %v3915
    %v3917 = vrot.slane %v1653, %v3916
    %v3918 = vlaneseq
    %v3919 = vshrl.u32 %v3918, 7
    %v3920 = vsub.s32 0, %v3919
    %v3921 = vrot.slane %v1661, %v3920
    %v3922 = vlaneseq
    %v3923 = vshrl.u32 %v3922, 7
    %v3924 = vsub.s32 0, %v3923
    %v3925 = vrot.slane %v1660, %v3924
    %v3926 = vlaneseq
    %v3927 = vshrl.u32 %v3926, 7
    %v3928 = vsub.s32 0, %v3927
    %v3929 = vrot.slane %v1662, %v3928
    %v3930 = vlaneseq
    %v3931 = vshrl.u32 %v3930, 7
    %v3932 = vsub.s32 0, %v3931
    %v3933 = vrot.slane %v1718, %v3932
    %v3934 = vlaneseq
    %v3935 = vshrl.u32 %v3934, 7
    %v3936 = vsub.s32 0, %v3935
    %v3937 = vrot.slane %v1726, %v3936
    %v3938 = vlaneseq
    %v3939 = vshrl.u32 %v3938, 7
    %v3940 = vsub.s32 0, %v3939
    %v3941 = vrot.slane %v1725, %v3940
    %v3942 = vlaneseq
    %v3943 = vshrl.u32 %v3942, 7
    %v3944 = vsub.s32 0, %v3943
    %v3945 = vrot.slane %v1727, %v3944
    %v3946 = vlaneseq
    %v3947 = vshrl.u32 %v3946, 7
    %v3948 = vsub.s32 0, %v3947
    %v3949 = vrot.slane %v1735, %v3948
    %v3950 = vlaneseq
    %v3951 = vshrl.u32 %v3950, 7
    %v3952 = vsub.s32 0, %v3951
    %v3953 = vrot.slane %v1743, %v3952
    %v3954 = vlaneseq
    %v3955 = vshrl.u32 %v3954, 7
    %v3956 = vsub.s32 0, %v3955
    %v3957 = vrot.slane %v1742, %v3956
    %v3958 = vlaneseq
    %v3959 = vshrl.u32 %v3958, 7
    %v3960 = vsub.s32 0, %v3959
    %v3961 = vrot.slane %v1744, %v3960
    %v3962 = vsel %vm2273, %v3457, %v3453
    %v3963 = vsel %vm2275, %v3461, %v3962
    %v3964 = vsel %vm2277, %v3465, %v3963
    %v3965 = vsel %vm2279, %v3469, %v3964
    %v3966 = vsel %vm2281, %v3473, %v3965
    %v3967 = vsel %vm2283, %v3477, %v3966
    %v3968 = vsel %vm2285, %v3481, %v3967
    %v3969 = vsel %vm2273, %v3489, %v3485
    %v3970 = vsel %vm2275, %v3493, %v3969
    %v3971 = vsel %vm2277, %v3497, %v3970
    %v3972 = vsel %vm2279, %v3501, %v3971
    %v3973 = vsel %vm2281, %v3505, %v3972
    %v3974 = vsel %vm2283, %v3509, %v3973
    %v3975 = vsel %vm2285, %v3513, %v3974
    %v3976 = vsel %vm2273, %v3521, %v3517
    %v3977 = vsel %vm2275, %v3525, %v3976
    %v3978 = vsel %vm2277, %v3529, %v3977
    %v3979 = vsel %vm2279, %v3533, %v3978
    %v3980 = vsel %vm2281, %v3537, %v3979
    %v3981 = vsel %vm2283, %v3541, %v3980
    %v3982 = vsel %vm2285, %v3545, %v3981
    %v3983 = vsel %vm2273, %v3553, %v3549
    %v3984 = vsel %vm2275, %v3557, %v3983
    %v3985 = vsel %vm2277, %v3561, %v3984
    %v3986 = vsel %vm2279, %v3565, %v3985
    %v3987 = vsel %vm2281, %v3569, %v3986
    %v3988 = vsel %vm2283, %v3573, %v3987
    %v3989 = vsel %vm2285, %v3577, %v3988
    %v3990 = vsel %vm2273, %v3585, %v3581
    %v3991 = vsel %vm2275, %v3589, %v3990
    %v3992 = vsel %vm2277, %v3593, %v3991
    %v3993 = vsel %vm2279, %v3597, %v3992
    %v3994 = vsel %vm2281, %v3601, %v3993
    %v3995 = vsel %vm2283, %v3605, %v3994
    %v3996 = vsel %vm2285, %v3609, %v3995
    %v3997 = vsel %vm2273, %v3617, %v3613
    %v3998 = vsel %vm2275, %v3621, %v3997
    %v3999 = vsel %vm2277, %v3625, %v3998
    %v4000 = vsel %vm2279, %v3629, %v3999
    %v4001 = vsel %vm2281, %v3633, %v4000
    %v4002 = vsel %vm2283, %v3637, %v4001
    %v4003 = vsel %vm2285, %v3641, %v4002
    %v4004 = vsel %vm2273, %v3649, %v3645
    %v4005 = vsel %vm2275, %v3653, %v4004
    %v4006 = vsel %vm2277, %v3657, %v4005
    %v4007 = vsel %vm2279, %v3661, %v4006
    %v4008 = vsel %vm2281, %v3665, %v4007
    %v4009 = vsel %vm2283, %v3669, %v4008
    %v4010 = vsel %vm2285, %v3673, %v4009
    %v4011 = vsel %vm2273, %v3681, %v3677
    %v4012 = vsel %vm2275, %v3685, %v4011
    %v4013 = vsel %vm2277, %v3689, %v4012
    %v4014 = vsel %vm2279, %v3693, %v4013
    %v4015 = vsel %vm2281, %v3697, %v4014
    %v4016 = vsel %vm2283, %v3701, %v4015
    %v4017 = vsel %vm2285, %v3705, %v4016
    %v4018 = vsel %vm2273, %v3713, %v3709
    %v4019 = vsel %vm2275, %v3717, %v4018
    %v4020 = vsel %vm2277, %v3721, %v4019
    %v4021 = vsel %vm2279, %v3725, %v4020
    %v4022 = vsel %vm2281, %v3729, %v4021
    %v4023 = vsel %vm2283, %v3733, %v4022
    %v4024 = vsel %vm2285, %v3737, %v4023
    %v4025 = vsel %vm2273, %v3745, %v3741
    %v4026 = vsel %vm2275, %v3749, %v4025
    %v4027 = vsel %vm2277, %v3753, %v4026
    %v4028 = vsel %vm2279, %v3757, %v4027
    %v4029 = vsel %vm2281, %v3761, %v4028
    %v4030 = vsel %vm2283, %v3765, %v4029
    %v4031 = vsel %vm2285, %v3769, %v4030
    %v4032 = vsel %vm2273, %v3777, %v3773
    %v4033 = vsel %vm2275, %v3781, %v4032
    %v4034 = vsel %vm2277, %v3785, %v4033
    %v4035 = vsel %vm2279, %v3789, %v4034
    %v4036 = vsel %vm2281, %v3793, %v4035
    %v4037 = vsel %vm2283, %v3797, %v4036
    %v4038 = vsel %vm2285, %v3801, %v4037
    %v4039 = vsel %vm2273, %v3809, %v3805
    %v4040 = vsel %vm2275, %v3813, %v4039
    %v4041 = vsel %vm2277, %v3817, %v4040
    %v4042 = vsel %vm2279, %v3821, %v4041
    %v4043 = vsel %vm2281, %v3825, %v4042
    %v4044 = vsel %vm2283, %v3829, %v4043
    %v4045 = vsel %vm2285, %v3833, %v4044
    %v4046 = vsel %vm2273, %v3841, %v3837
    %v4047 = vsel %vm2275, %v3845, %v4046
    %v4048 = vsel %vm2277, %v3849, %v4047
    %v4049 = vsel %vm2279, %v3853, %v4048
    %v4050 = vsel %vm2281, %v3857, %v4049
    %v4051 = vsel %vm2283, %v3861, %v4050
    %v4052 = vsel %vm2285, %v3865, %v4051
    %v4053 = vsel %vm2273, %v3873, %v3869
    %v4054 = vsel %vm2275, %v3877, %v4053
    %v4055 = vsel %vm2277, %v3881, %v4054
    %v4056 = vsel %vm2279, %v3885, %v4055
    %v4057 = vsel %vm2281, %v3889, %v4056
    %v4058 = vsel %vm2283, %v3893, %v4057
    %v4059 = vsel %vm2285, %v3897, %v4058
    %v4060 = vsel %vm2273, %v3905, %v3901
    %v4061 = vsel %vm2275, %v3909, %v4060
    %v4062 = vsel %vm2277, %v3913, %v4061
    %v4063 = vsel %vm2279, %v3917, %v4062
    %v4064 = vsel %vm2281, %v3921, %v4063
    %v4065 = vsel %vm2283, %v3925, %v4064
    %v4066 = vsel %vm2285, %v3929, %v4065
    %v4067 = vsel %vm2273, %v3937, %v3933
    %v4068 = vsel %vm2275, %v3941, %v4067
    %v4069 = vsel %vm2277, %v3945, %v4068
    %v4070 = vsel %vm2279, %v3949, %v4069
    %v4071 = vsel %vm2281, %v3953, %v4070
    %v4072 = vsel %vm2283, %v3957, %v4071
    %v4073 = vsel %vm2285, %v3961, %v4072
    %4074 = vrot.lane.b32.xlu0 %v3968, 12
    %v4075 = vpop.permute.xlu0 %4074
    %4076 = vrot.lane.b32.xlu0 %v3975, 12
    %v4077 = vpop.permute.xlu0 %4076
    %4078 = vrot.lane.b32.xlu0 %v3982, 12
    %v4079 = vpop.permute.xlu0 %4078
    %4080 = vrot.lane.b32.xlu0 %v3989, 12
    %v4081 = vpop.permute.xlu0 %4080
    %4082 = vrot.lane.b32.xlu0 %v3996, 12
    %v4083 = vpop.permute.xlu0 %4082
    %4084 = vrot.lane.b32.xlu0 %v4003, 12
    %v4085 = vpop.permute.xlu0 %4084
    %4086 = vrot.lane.b32.xlu0 %v4010, 12
    %v4087 = vpop.permute.xlu0 %4086
    %4088 = vrot.lane.b32.xlu0 %v4017, 12
    %v4089 = vpop.permute.xlu0 %4088
    %4090 = vrot.lane.b32.xlu0 %v4024, 12
    %v4091 = vpop.permute.xlu0 %4090
    %4092 = vrot.lane.b32.xlu0 %v4031, 12
    %v4093 = vpop.permute.xlu0 %4092
    %4094 = vrot.lane.b32.xlu0 %v4038, 12
    %v4095 = vpop.permute.xlu0 %4094
    %4096 = vrot.lane.b32.xlu0 %v4045, 12
    %v4097 = vpop.permute.xlu0 %4096
    %4098 = vrot.lane.b32.xlu0 %v4052, 12
    %v4099 = vpop.permute.xlu0 %4098
    %4100 = vrot.lane.b32.xlu0 %v4059, 12
    %v4101 = vpop.permute.xlu0 %4100
    %4102 = vrot.lane.b32.xlu0 %v4066, 12
    %v4103 = vpop.permute.xlu0 %4102
    %4104 = vrot.lane.b32.xlu0 %v4073, 12
    %v4105 = vpop.permute.xlu0 %4104
    %v4122 = vlaneseq
    %v4123 = vshrl.u32 %v4122, 7
    %v4124 = vsub.s32 1, %v4123
    %v4125 = vrot.slane %v488, %v4124
    %v4126 = vlaneseq
    %v4127 = vshrl.u32 %v4126, 7
    %v4128 = vsub.s32 1, %v4127
    %v4129 = vrot.slane %v496, %v4128
    %v4130 = vlaneseq
    %v4131 = vshrl.u32 %v4130, 7
    %v4132 = vsub.s32 1, %v4131
    %v4133 = vrot.slane %v495, %v4132
    %v4134 = vlaneseq
    %v4135 = vshrl.u32 %v4134, 7
    %v4136 = vsub.s32 1, %v4135
    %v4137 = vrot.slane %v497, %v4136
    %v4138 = vlaneseq
    %v4139 = vshrl.u32 %v4138, 7
    %v4140 = vsub.s32 1, %v4139
    %v4141 = vrot.slane %v505, %v4140
    %v4142 = vlaneseq
    %v4143 = vshrl.u32 %v4142, 7
    %v4144 = vsub.s32 1, %v4143
    %v4145 = vrot.slane %v513, %v4144
    %v4146 = vlaneseq
    %v4147 = vshrl.u32 %v4146, 7
    %v4148 = vsub.s32 1, %v4147
    %v4149 = vrot.slane %v512, %v4148
    %v4150 = vlaneseq
    %v4151 = vshrl.u32 %v4150, 7
    %v4152 = vsub.s32 1, %v4151
    %v4153 = vrot.slane %v514, %v4152
    %v4154 = vlaneseq
    %v4155 = vshrl.u32 %v4154, 7
    %v4156 = vsub.s32 1, %v4155
    %v4157 = vrot.slane %v570, %v4156
    %v4158 = vlaneseq
    %v4159 = vshrl.u32 %v4158, 7
    %v4160 = vsub.s32 1, %v4159
    %v4161 = vrot.slane %v578, %v4160
    %v4162 = vlaneseq
    %v4163 = vshrl.u32 %v4162, 7
    %v4164 = vsub.s32 1, %v4163
    %v4165 = vrot.slane %v577, %v4164
    %v4166 = vlaneseq
    %v4167 = vshrl.u32 %v4166, 7
    %v4168 = vsub.s32 1, %v4167
    %v4169 = vrot.slane %v579, %v4168
    %v4170 = vlaneseq
    %v4171 = vshrl.u32 %v4170, 7
    %v4172 = vsub.s32 1, %v4171
    %v4173 = vrot.slane %v587, %v4172
    %v4174 = vlaneseq
    %v4175 = vshrl.u32 %v4174, 7
    %v4176 = vsub.s32 1, %v4175
    %v4177 = vrot.slane %v595, %v4176
    %v4178 = vlaneseq
    %v4179 = vshrl.u32 %v4178, 7
    %v4180 = vsub.s32 1, %v4179
    %v4181 = vrot.slane %v594, %v4180
    %v4182 = vlaneseq
    %v4183 = vshrl.u32 %v4182, 7
    %v4184 = vsub.s32 1, %v4183
    %v4185 = vrot.slane %v596, %v4184
    %v4186 = vlaneseq
    %v4187 = vshrl.u32 %v4186, 7
    %v4188 = vsub.s32 1, %v4187
    %v4189 = vrot.slane %v652, %v4188
    %v4190 = vlaneseq
    %v4191 = vshrl.u32 %v4190, 7
    %v4192 = vsub.s32 1, %v4191
    %v4193 = vrot.slane %v660, %v4192
    %v4194 = vlaneseq
    %v4195 = vshrl.u32 %v4194, 7
    %v4196 = vsub.s32 1, %v4195
    %v4197 = vrot.slane %v659, %v4196
    %v4198 = vlaneseq
    %v4199 = vshrl.u32 %v4198, 7
    %v4200 = vsub.s32 1, %v4199
    %v4201 = vrot.slane %v661, %v4200
    %v4202 = vlaneseq
    %v4203 = vshrl.u32 %v4202, 7
    %v4204 = vsub.s32 1, %v4203
    %v4205 = vrot.slane %v669, %v4204
    %v4206 = vlaneseq
    %v4207 = vshrl.u32 %v4206, 7
    %v4208 = vsub.s32 1, %v4207
    %v4209 = vrot.slane %v677, %v4208
    %v4210 = vlaneseq
    %v4211 = vshrl.u32 %v4210, 7
    %v4212 = vsub.s32 1, %v4211
    %v4213 = vrot.slane %v676, %v4212
    %v4214 = vlaneseq
    %v4215 = vshrl.u32 %v4214, 7
    %v4216 = vsub.s32 1, %v4215
    %v4217 = vrot.slane %v678, %v4216
    %v4218 = vlaneseq
    %v4219 = vshrl.u32 %v4218, 7
    %v4220 = vsub.s32 1, %v4219
    %v4221 = vrot.slane %v734, %v4220
    %v4222 = vlaneseq
    %v4223 = vshrl.u32 %v4222, 7
    %v4224 = vsub.s32 1, %v4223
    %v4225 = vrot.slane %v742, %v4224
    %v4226 = vlaneseq
    %v4227 = vshrl.u32 %v4226, 7
    %v4228 = vsub.s32 1, %v4227
    %v4229 = vrot.slane %v741, %v4228
    %v4230 = vlaneseq
    %v4231 = vshrl.u32 %v4230, 7
    %v4232 = vsub.s32 1, %v4231
    %v4233 = vrot.slane %v743, %v4232
    %v4234 = vlaneseq
    %v4235 = vshrl.u32 %v4234, 7
    %v4236 = vsub.s32 1, %v4235
    %v4237 = vrot.slane %v751, %v4236
    %v4238 = vlaneseq
    %v4239 = vshrl.u32 %v4238, 7
    %v4240 = vsub.s32 1, %v4239
    %v4241 = vrot.slane %v759, %v4240
    %v4242 = vlaneseq
    %v4243 = vshrl.u32 %v4242, 7
    %v4244 = vsub.s32 1, %v4243
    %v4245 = vrot.slane %v758, %v4244
    %v4246 = vlaneseq
    %v4247 = vshrl.u32 %v4246, 7
    %v4248 = vsub.s32 1, %v4247
    %v4249 = vrot.slane %v760, %v4248
    %v4250 = vlaneseq
    %v4251 = vshrl.u32 %v4250, 7
    %v4252 = vsub.s32 1, %v4251
    %v4253 = vrot.slane %v816, %v4252
    %v4254 = vlaneseq
    %v4255 = vshrl.u32 %v4254, 7
    %v4256 = vsub.s32 1, %v4255
    %v4257 = vrot.slane %v824, %v4256
    %v4258 = vlaneseq
    %v4259 = vshrl.u32 %v4258, 7
    %v4260 = vsub.s32 1, %v4259
    %v4261 = vrot.slane %v823, %v4260
    %v4262 = vlaneseq
    %v4263 = vshrl.u32 %v4262, 7
    %v4264 = vsub.s32 1, %v4263
    %v4265 = vrot.slane %v825, %v4264
    %v4266 = vlaneseq
    %v4267 = vshrl.u32 %v4266, 7
    %v4268 = vsub.s32 1, %v4267
    %v4269 = vrot.slane %v833, %v4268
    %v4270 = vlaneseq
    %v4271 = vshrl.u32 %v4270, 7
    %v4272 = vsub.s32 1, %v4271
    %v4273 = vrot.slane %v841, %v4272
    %v4274 = vlaneseq
    %v4275 = vshrl.u32 %v4274, 7
    %v4276 = vsub.s32 1, %v4275
    %v4277 = vrot.slane %v840, %v4276
    %v4278 = vlaneseq
    %v4279 = vshrl.u32 %v4278, 7
    %v4280 = vsub.s32 1, %v4279
    %v4281 = vrot.slane %v842, %v4280
    %v4282 = vlaneseq
    %v4283 = vshrl.u32 %v4282, 7
    %v4284 = vsub.s32 1, %v4283
    %v4285 = vrot.slane %v898, %v4284
    %v4286 = vlaneseq
    %v4287 = vshrl.u32 %v4286, 7
    %v4288 = vsub.s32 1, %v4287
    %v4289 = vrot.slane %v906, %v4288
    %v4290 = vlaneseq
    %v4291 = vshrl.u32 %v4290, 7
    %v4292 = vsub.s32 1, %v4291
    %v4293 = vrot.slane %v905, %v4292
    %v4294 = vlaneseq
    %v4295 = vshrl.u32 %v4294, 7
    %v4296 = vsub.s32 1, %v4295
    %v4297 = vrot.slane %v907, %v4296
    %v4298 = vlaneseq
    %v4299 = vshrl.u32 %v4298, 7
    %v4300 = vsub.s32 1, %v4299
    %v4301 = vrot.slane %v915, %v4300
    %v4302 = vlaneseq
    %v4303 = vshrl.u32 %v4302, 7
    %v4304 = vsub.s32 1, %v4303
    %v4305 = vrot.slane %v923, %v4304
    %v4306 = vlaneseq
    %v4307 = vshrl.u32 %v4306, 7
    %v4308 = vsub.s32 1, %v4307
    %v4309 = vrot.slane %v922, %v4308
    %v4310 = vlaneseq
    %v4311 = vshrl.u32 %v4310, 7
    %v4312 = vsub.s32 1, %v4311
    %v4313 = vrot.slane %v924, %v4312
    %v4314 = vlaneseq
    %v4315 = vshrl.u32 %v4314, 7
    %v4316 = vsub.s32 1, %v4315
    %v4317 = vrot.slane %v980, %v4316
    %v4318 = vlaneseq
    %v4319 = vshrl.u32 %v4318, 7
    %v4320 = vsub.s32 1, %v4319
    %v4321 = vrot.slane %v988, %v4320
    %v4322 = vlaneseq
    %v4323 = vshrl.u32 %v4322, 7
    %v4324 = vsub.s32 1, %v4323
    %v4325 = vrot.slane %v987, %v4324
    %v4326 = vlaneseq
    %v4327 = vshrl.u32 %v4326, 7
    %v4328 = vsub.s32 1, %v4327
    %v4329 = vrot.slane %v989, %v4328
    %v4330 = vlaneseq
    %v4331 = vshrl.u32 %v4330, 7
    %v4332 = vsub.s32 1, %v4331
    %v4333 = vrot.slane %v997, %v4332
    %v4334 = vlaneseq
    %v4335 = vshrl.u32 %v4334, 7
    %v4336 = vsub.s32 1, %v4335
    %v4337 = vrot.slane %v1005, %v4336
    %v4338 = vlaneseq
    %v4339 = vshrl.u32 %v4338, 7
    %v4340 = vsub.s32 1, %v4339
    %v4341 = vrot.slane %v1004, %v4340
    %v4342 = vlaneseq
    %v4343 = vshrl.u32 %v4342, 7
    %v4344 = vsub.s32 1, %v4343
    %v4345 = vrot.slane %v1006, %v4344
    %v4346 = vlaneseq
    %v4347 = vshrl.u32 %v4346, 7
    %v4348 = vsub.s32 1, %v4347
    %v4349 = vrot.slane %v1062, %v4348
    %v4350 = vlaneseq
    %v4351 = vshrl.u32 %v4350, 7
    %v4352 = vsub.s32 1, %v4351
    %v4353 = vrot.slane %v1070, %v4352
    %v4354 = vlaneseq
    %v4355 = vshrl.u32 %v4354, 7
    %v4356 = vsub.s32 1, %v4355
    %v4357 = vrot.slane %v1069, %v4356
    %v4358 = vlaneseq
    %v4359 = vshrl.u32 %v4358, 7
    %v4360 = vsub.s32 1, %v4359
    %v4361 = vrot.slane %v1071, %v4360
    %v4362 = vlaneseq
    %v4363 = vshrl.u32 %v4362, 7
    %v4364 = vsub.s32 1, %v4363
    %v4365 = vrot.slane %v1079, %v4364
    %v4366 = vlaneseq
    %v4367 = vshrl.u32 %v4366, 7
    %v4368 = vsub.s32 1, %v4367
    %v4369 = vrot.slane %v1087, %v4368
    %v4370 = vlaneseq
    %v4371 = vshrl.u32 %v4370, 7
    %v4372 = vsub.s32 1, %v4371
    %v4373 = vrot.slane %v1086, %v4372
    %v4374 = vlaneseq
    %v4375 = vshrl.u32 %v4374, 7
    %v4376 = vsub.s32 1, %v4375
    %v4377 = vrot.slane %v1088, %v4376
    %v4378 = vlaneseq
    %v4379 = vshrl.u32 %v4378, 7
    %v4380 = vsub.s32 1, %v4379
    %v4381 = vrot.slane %v1144, %v4380
    %v4382 = vlaneseq
    %v4383 = vshrl.u32 %v4382, 7
    %v4384 = vsub.s32 1, %v4383
    %v4385 = vrot.slane %v1152, %v4384
    %v4386 = vlaneseq
    %v4387 = vshrl.u32 %v4386, 7
    %v4388 = vsub.s32 1, %v4387
    %v4389 = vrot.slane %v1151, %v4388
    %v4390 = vlaneseq
    %v4391 = vshrl.u32 %v4390, 7
    %v4392 = vsub.s32 1, %v4391
    %v4393 = vrot.slane %v1153, %v4392
    %v4394 = vlaneseq
    %v4395 = vshrl.u32 %v4394, 7
    %v4396 = vsub.s32 1, %v4395
    %v4397 = vrot.slane %v1161, %v4396
    %v4398 = vlaneseq
    %v4399 = vshrl.u32 %v4398, 7
    %v4400 = vsub.s32 1, %v4399
    %v4401 = vrot.slane %v1169, %v4400
    %v4402 = vlaneseq
    %v4403 = vshrl.u32 %v4402, 7
    %v4404 = vsub.s32 1, %v4403
    %v4405 = vrot.slane %v1168, %v4404
    %v4406 = vlaneseq
    %v4407 = vshrl.u32 %v4406, 7
    %v4408 = vsub.s32 1, %v4407
    %v4409 = vrot.slane %v1170, %v4408
    %v4410 = vlaneseq
    %v4411 = vshrl.u32 %v4410, 7
    %v4412 = vsub.s32 1, %v4411
    %v4413 = vrot.slane %v1226, %v4412
    %v4414 = vlaneseq
    %v4415 = vshrl.u32 %v4414, 7
    %v4416 = vsub.s32 1, %v4415
    %v4417 = vrot.slane %v1234, %v4416
    %v4418 = vlaneseq
    %v4419 = vshrl.u32 %v4418, 7
    %v4420 = vsub.s32 1, %v4419
    %v4421 = vrot.slane %v1233, %v4420
    %v4422 = vlaneseq
    %v4423 = vshrl.u32 %v4422, 7
    %v4424 = vsub.s32 1, %v4423
    %v4425 = vrot.slane %v1235, %v4424
    %v4426 = vlaneseq
    %v4427 = vshrl.u32 %v4426, 7
    %v4428 = vsub.s32 1, %v4427
    %v4429 = vrot.slane %v1243, %v4428
    %v4430 = vlaneseq
    %v4431 = vshrl.u32 %v4430, 7
    %v4432 = vsub.s32 1, %v4431
    %v4433 = vrot.slane %v1251, %v4432
    %v4434 = vlaneseq
    %v4435 = vshrl.u32 %v4434, 7
    %v4436 = vsub.s32 1, %v4435
    %v4437 = vrot.slane %v1250, %v4436
    %v4438 = vlaneseq
    %v4439 = vshrl.u32 %v4438, 7
    %v4440 = vsub.s32 1, %v4439
    %v4441 = vrot.slane %v1252, %v4440
    %v4442 = vlaneseq
    %v4443 = vshrl.u32 %v4442, 7
    %v4444 = vsub.s32 1, %v4443
    %v4445 = vrot.slane %v1308, %v4444
    %v4446 = vlaneseq
    %v4447 = vshrl.u32 %v4446, 7
    %v4448 = vsub.s32 1, %v4447
    %v4449 = vrot.slane %v1316, %v4448
    %v4450 = vlaneseq
    %v4451 = vshrl.u32 %v4450, 7
    %v4452 = vsub.s32 1, %v4451
    %v4453 = vrot.slane %v1315, %v4452
    %v4454 = vlaneseq
    %v4455 = vshrl.u32 %v4454, 7
    %v4456 = vsub.s32 1, %v4455
    %v4457 = vrot.slane %v1317, %v4456
    %v4458 = vlaneseq
    %v4459 = vshrl.u32 %v4458, 7
    %v4460 = vsub.s32 1, %v4459
    %v4461 = vrot.slane %v1325, %v4460
    %v4462 = vlaneseq
    %v4463 = vshrl.u32 %v4462, 7
    %v4464 = vsub.s32 1, %v4463
    %v4465 = vrot.slane %v1333, %v4464
    %v4466 = vlaneseq
    %v4467 = vshrl.u32 %v4466, 7
    %v4468 = vsub.s32 1, %v4467
    %v4469 = vrot.slane %v1332, %v4468
    %v4470 = vlaneseq
    %v4471 = vshrl.u32 %v4470, 7
    %v4472 = vsub.s32 1, %v4471
    %v4473 = vrot.slane %v1334, %v4472
    %v4474 = vlaneseq
    %v4475 = vshrl.u32 %v4474, 7
    %v4476 = vsub.s32 1, %v4475
    %v4477 = vrot.slane %v1390, %v4476
    %v4478 = vlaneseq
    %v4479 = vshrl.u32 %v4478, 7
    %v4480 = vsub.s32 1, %v4479
    %v4481 = vrot.slane %v1398, %v4480
    %v4482 = vlaneseq
    %v4483 = vshrl.u32 %v4482, 7
    %v4484 = vsub.s32 1, %v4483
    %v4485 = vrot.slane %v1397, %v4484
    %v4486 = vlaneseq
    %v4487 = vshrl.u32 %v4486, 7
    %v4488 = vsub.s32 1, %v4487
    %v4489 = vrot.slane %v1399, %v4488
    %v4490 = vlaneseq
    %v4491 = vshrl.u32 %v4490, 7
    %v4492 = vsub.s32 1, %v4491
    %v4493 = vrot.slane %v1407, %v4492
    %v4494 = vlaneseq
    %v4495 = vshrl.u32 %v4494, 7
    %v4496 = vsub.s32 1, %v4495
    %v4497 = vrot.slane %v1415, %v4496
    %v4498 = vlaneseq
    %v4499 = vshrl.u32 %v4498, 7
    %v4500 = vsub.s32 1, %v4499
    %v4501 = vrot.slane %v1414, %v4500
    %v4502 = vlaneseq
    %v4503 = vshrl.u32 %v4502, 7
    %v4504 = vsub.s32 1, %v4503
    %v4505 = vrot.slane %v1416, %v4504
    %v4506 = vlaneseq
    %v4507 = vshrl.u32 %v4506, 7
    %v4508 = vsub.s32 1, %v4507
    %v4509 = vrot.slane %v1472, %v4508
    %v4510 = vlaneseq
    %v4511 = vshrl.u32 %v4510, 7
    %v4512 = vsub.s32 1, %v4511
    %v4513 = vrot.slane %v1480, %v4512
    %v4514 = vlaneseq
    %v4515 = vshrl.u32 %v4514, 7
    %v4516 = vsub.s32 1, %v4515
    %v4517 = vrot.slane %v1479, %v4516
    %v4518 = vlaneseq
    %v4519 = vshrl.u32 %v4518, 7
    %v4520 = vsub.s32 1, %v4519
    %v4521 = vrot.slane %v1481, %v4520
    %v4522 = vlaneseq
    %v4523 = vshrl.u32 %v4522, 7
    %v4524 = vsub.s32 1, %v4523
    %v4525 = vrot.slane %v1489, %v4524
    %v4526 = vlaneseq
    %v4527 = vshrl.u32 %v4526, 7
    %v4528 = vsub.s32 1, %v4527
    %v4529 = vrot.slane %v1497, %v4528
    %v4530 = vlaneseq
    %v4531 = vshrl.u32 %v4530, 7
    %v4532 = vsub.s32 1, %v4531
    %v4533 = vrot.slane %v1496, %v4532
    %v4534 = vlaneseq
    %v4535 = vshrl.u32 %v4534, 7
    %v4536 = vsub.s32 1, %v4535
    %v4537 = vrot.slane %v1498, %v4536
    %v4538 = vlaneseq
    %v4539 = vshrl.u32 %v4538, 7
    %v4540 = vsub.s32 1, %v4539
    %v4541 = vrot.slane %v1554, %v4540
    %v4542 = vlaneseq
    %v4543 = vshrl.u32 %v4542, 7
    %v4544 = vsub.s32 1, %v4543
    %v4545 = vrot.slane %v1562, %v4544
    %v4546 = vlaneseq
    %v4547 = vshrl.u32 %v4546, 7
    %v4548 = vsub.s32 1, %v4547
    %v4549 = vrot.slane %v1561, %v4548
    %v4550 = vlaneseq
    %v4551 = vshrl.u32 %v4550, 7
    %v4552 = vsub.s32 1, %v4551
    %v4553 = vrot.slane %v1563, %v4552
    %v4554 = vlaneseq
    %v4555 = vshrl.u32 %v4554, 7
    %v4556 = vsub.s32 1, %v4555
    %v4557 = vrot.slane %v1571, %v4556
    %v4558 = vlaneseq
    %v4559 = vshrl.u32 %v4558, 7
    %v4560 = vsub.s32 1, %v4559
    %v4561 = vrot.slane %v1579, %v4560
    %v4562 = vlaneseq
    %v4563 = vshrl.u32 %v4562, 7
    %v4564 = vsub.s32 1, %v4563
    %v4565 = vrot.slane %v1578, %v4564
    %v4566 = vlaneseq
    %v4567 = vshrl.u32 %v4566, 7
    %v4568 = vsub.s32 1, %v4567
    %v4569 = vrot.slane %v1580, %v4568
    %v4570 = vlaneseq
    %v4571 = vshrl.u32 %v4570, 7
    %v4572 = vsub.s32 1, %v4571
    %v4573 = vrot.slane %v1636, %v4572
    %v4574 = vlaneseq
    %v4575 = vshrl.u32 %v4574, 7
    %v4576 = vsub.s32 1, %v4575
    %v4577 = vrot.slane %v1644, %v4576
    %v4578 = vlaneseq
    %v4579 = vshrl.u32 %v4578, 7
    %v4580 = vsub.s32 1, %v4579
    %v4581 = vrot.slane %v1643, %v4580
    %v4582 = vlaneseq
    %v4583 = vshrl.u32 %v4582, 7
    %v4584 = vsub.s32 1, %v4583
    %v4585 = vrot.slane %v1645, %v4584
    %v4586 = vlaneseq
    %v4587 = vshrl.u32 %v4586, 7
    %v4588 = vsub.s32 1, %v4587
    %v4589 = vrot.slane %v1653, %v4588
    %v4590 = vlaneseq
    %v4591 = vshrl.u32 %v4590, 7
    %v4592 = vsub.s32 1, %v4591
    %v4593 = vrot.slane %v1661, %v4592
    %v4594 = vlaneseq
    %v4595 = vshrl.u32 %v4594, 7
    %v4596 = vsub.s32 1, %v4595
    %v4597 = vrot.slane %v1660, %v4596
    %v4598 = vlaneseq
    %v4599 = vshrl.u32 %v4598, 7
    %v4600 = vsub.s32 1, %v4599
    %v4601 = vrot.slane %v1662, %v4600
    %v4602 = vlaneseq
    %v4603 = vshrl.u32 %v4602, 7
    %v4604 = vsub.s32 1, %v4603
    %v4605 = vrot.slane %v1718, %v4604
    %v4606 = vlaneseq
    %v4607 = vshrl.u32 %v4606, 7
    %v4608 = vsub.s32 1, %v4607
    %v4609 = vrot.slane %v1726, %v4608
    %v4610 = vlaneseq
    %v4611 = vshrl.u32 %v4610, 7
    %v4612 = vsub.s32 1, %v4611
    %v4613 = vrot.slane %v1725, %v4612
    %v4614 = vlaneseq
    %v4615 = vshrl.u32 %v4614, 7
    %v4616 = vsub.s32 1, %v4615
    %v4617 = vrot.slane %v1727, %v4616
    %v4618 = vlaneseq
    %v4619 = vshrl.u32 %v4618, 7
    %v4620 = vsub.s32 1, %v4619
    %v4621 = vrot.slane %v1735, %v4620
    %v4622 = vlaneseq
    %v4623 = vshrl.u32 %v4622, 7
    %v4624 = vsub.s32 1, %v4623
    %v4625 = vrot.slane %v1743, %v4624
    %v4626 = vlaneseq
    %v4627 = vshrl.u32 %v4626, 7
    %v4628 = vsub.s32 1, %v4627
    %v4629 = vrot.slane %v1742, %v4628
    %v4630 = vlaneseq
    %v4631 = vshrl.u32 %v4630, 7
    %v4632 = vsub.s32 1, %v4631
    %v4633 = vrot.slane %v1744, %v4632
    %v4634 = vsel %vm2273, %v4129, %v4125
    %v4635 = vsel %vm2275, %v4133, %v4634
    %v4636 = vsel %vm2277, %v4137, %v4635
    %v4637 = vsel %vm2279, %v4141, %v4636
    %v4638 = vsel %vm2281, %v4145, %v4637
    %v4639 = vsel %vm2283, %v4149, %v4638
    %v4640 = vsel %vm2285, %v4153, %v4639
    %v4641 = vsel %vm2273, %v4161, %v4157
    %v4642 = vsel %vm2275, %v4165, %v4641
    %v4643 = vsel %vm2277, %v4169, %v4642
    %v4644 = vsel %vm2279, %v4173, %v4643
    %v4645 = vsel %vm2281, %v4177, %v4644
    %v4646 = vsel %vm2283, %v4181, %v4645
    %v4647 = vsel %vm2285, %v4185, %v4646
    %v4648 = vsel %vm2273, %v4193, %v4189
    %v4649 = vsel %vm2275, %v4197, %v4648
    %v4650 = vsel %vm2277, %v4201, %v4649
    %v4651 = vsel %vm2279, %v4205, %v4650
    %v4652 = vsel %vm2281, %v4209, %v4651
    %v4653 = vsel %vm2283, %v4213, %v4652
    %v4654 = vsel %vm2285, %v4217, %v4653
    %v4655 = vsel %vm2273, %v4225, %v4221
    %v4656 = vsel %vm2275, %v4229, %v4655
    %v4657 = vsel %vm2277, %v4233, %v4656
    %v4658 = vsel %vm2279, %v4237, %v4657
    %v4659 = vsel %vm2281, %v4241, %v4658
    %v4660 = vsel %vm2283, %v4245, %v4659
    %v4661 = vsel %vm2285, %v4249, %v4660
    %v4662 = vsel %vm2273, %v4257, %v4253
    %v4663 = vsel %vm2275, %v4261, %v4662
    %v4664 = vsel %vm2277, %v4265, %v4663
    %v4665 = vsel %vm2279, %v4269, %v4664
    %v4666 = vsel %vm2281, %v4273, %v4665
    %v4667 = vsel %vm2283, %v4277, %v4666
    %v4668 = vsel %vm2285, %v4281, %v4667
    %v4669 = vsel %vm2273, %v4289, %v4285
    %v4670 = vsel %vm2275, %v4293, %v4669
    %v4671 = vsel %vm2277, %v4297, %v4670
    %v4672 = vsel %vm2279, %v4301, %v4671
    %v4673 = vsel %vm2281, %v4305, %v4672
    %v4674 = vsel %vm2283, %v4309, %v4673
    %v4675 = vsel %vm2285, %v4313, %v4674
    %v4676 = vsel %vm2273, %v4321, %v4317
    %v4677 = vsel %vm2275, %v4325, %v4676
    %v4678 = vsel %vm2277, %v4329, %v4677
    %v4679 = vsel %vm2279, %v4333, %v4678
    %v4680 = vsel %vm2281, %v4337, %v4679
    %v4681 = vsel %vm2283, %v4341, %v4680
    %v4682 = vsel %vm2285, %v4345, %v4681
    %v4683 = vsel %vm2273, %v4353, %v4349
    %v4684 = vsel %vm2275, %v4357, %v4683
    %v4685 = vsel %vm2277, %v4361, %v4684
    %v4686 = vsel %vm2279, %v4365, %v4685
    %v4687 = vsel %vm2281, %v4369, %v4686
    %v4688 = vsel %vm2283, %v4373, %v4687
    %v4689 = vsel %vm2285, %v4377, %v4688
    %v4690 = vsel %vm2273, %v4385, %v4381
    %v4691 = vsel %vm2275, %v4389, %v4690
    %v4692 = vsel %vm2277, %v4393, %v4691
    %v4693 = vsel %vm2279, %v4397, %v4692
    %v4694 = vsel %vm2281, %v4401, %v4693
    %v4695 = vsel %vm2283, %v4405, %v4694
    %v4696 = vsel %vm2285, %v4409, %v4695
    %v4697 = vsel %vm2273, %v4417, %v4413
    %v4698 = vsel %vm2275, %v4421, %v4697
    %v4699 = vsel %vm2277, %v4425, %v4698
    %v4700 = vsel %vm2279, %v4429, %v4699
    %v4701 = vsel %vm2281, %v4433, %v4700
    %v4702 = vsel %vm2283, %v4437, %v4701
    %v4703 = vsel %vm2285, %v4441, %v4702
    %v4704 = vsel %vm2273, %v4449, %v4445
    %v4705 = vsel %vm2275, %v4453, %v4704
    %v4706 = vsel %vm2277, %v4457, %v4705
    %v4707 = vsel %vm2279, %v4461, %v4706
    %v4708 = vsel %vm2281, %v4465, %v4707
    %v4709 = vsel %vm2283, %v4469, %v4708
    %v4710 = vsel %vm2285, %v4473, %v4709
    %v4711 = vsel %vm2273, %v4481, %v4477
    %v4712 = vsel %vm2275, %v4485, %v4711
    %v4713 = vsel %vm2277, %v4489, %v4712
    %v4714 = vsel %vm2279, %v4493, %v4713
    %v4715 = vsel %vm2281, %v4497, %v4714
    %v4716 = vsel %vm2283, %v4501, %v4715
    %v4717 = vsel %vm2285, %v4505, %v4716
    %v4718 = vsel %vm2273, %v4513, %v4509
    %v4719 = vsel %vm2275, %v4517, %v4718
    %v4720 = vsel %vm2277, %v4521, %v4719
    %v4721 = vsel %vm2279, %v4525, %v4720
    %v4722 = vsel %vm2281, %v4529, %v4721
    %v4723 = vsel %vm2283, %v4533, %v4722
    %v4724 = vsel %vm2285, %v4537, %v4723
    %v4725 = vsel %vm2273, %v4545, %v4541
    %v4726 = vsel %vm2275, %v4549, %v4725
    %v4727 = vsel %vm2277, %v4553, %v4726
    %v4728 = vsel %vm2279, %v4557, %v4727
    %v4729 = vsel %vm2281, %v4561, %v4728
    %v4730 = vsel %vm2283, %v4565, %v4729
    %v4731 = vsel %vm2285, %v4569, %v4730
    %v4732 = vsel %vm2273, %v4577, %v4573
    %v4733 = vsel %vm2275, %v4581, %v4732
    %v4734 = vsel %vm2277, %v4585, %v4733
    %v4735 = vsel %vm2279, %v4589, %v4734
    %v4736 = vsel %vm2281, %v4593, %v4735
    %v4737 = vsel %vm2283, %v4597, %v4736
    %v4738 = vsel %vm2285, %v4601, %v4737
    %v4739 = vsel %vm2273, %v4609, %v4605
    %v4740 = vsel %vm2275, %v4613, %v4739
    %v4741 = vsel %vm2277, %v4617, %v4740
    %v4742 = vsel %vm2279, %v4621, %v4741
    %v4743 = vsel %vm2281, %v4625, %v4742
    %v4744 = vsel %vm2283, %v4629, %v4743
    %v4745 = vsel %vm2285, %v4633, %v4744
    %4746 = vrot.lane.b32.xlu0 %v4640, 15
    %v4747 = vpop.permute.xlu0 %4746
    %4748 = vrot.lane.b32.xlu0 %v4647, 15
    %v4749 = vpop.permute.xlu0 %4748
    %4750 = vrot.lane.b32.xlu0 %v4654, 15
    %v4751 = vpop.permute.xlu0 %4750
    %4752 = vrot.lane.b32.xlu0 %v4661, 15
    %v4753 = vpop.permute.xlu0 %4752
    %4754 = vrot.lane.b32.xlu0 %v4668, 15
    %v4755 = vpop.permute.xlu0 %4754
    %4756 = vrot.lane.b32.xlu0 %v4675, 15
    %v4757 = vpop.permute.xlu0 %4756
    %4758 = vrot.lane.b32.xlu0 %v4682, 15
    %v4759 = vpop.permute.xlu0 %4758
    %4760 = vrot.lane.b32.xlu0 %v4689, 15
    %v4761 = vpop.permute.xlu0 %4760
    %4762 = vrot.lane.b32.xlu0 %v4696, 15
    %v4763 = vpop.permute.xlu0 %4762
    %4764 = vrot.lane.b32.xlu0 %v4703, 15
    %v4765 = vpop.permute.xlu0 %4764
    %4766 = vrot.lane.b32.xlu0 %v4710, 15
    %v4767 = vpop.permute.xlu0 %4766
    %4768 = vrot.lane.b32.xlu0 %v4717, 15
    %v4769 = vpop.permute.xlu0 %4768
    %4770 = vrot.lane.b32.xlu0 %v4724, 15
    %v4771 = vpop.permute.xlu0 %4770
    %4772 = vrot.lane.b32.xlu0 %v4731, 15
    %v4773 = vpop.permute.xlu0 %4772
    %4774 = vrot.lane.b32.xlu0 %v4738, 15
    %v4775 = vpop.permute.xlu0 %4774
    %4776 = vrot.lane.b32.xlu0 %v4745, 15
    %v4777 = vpop.permute.xlu0 %4776
    %v4794 = vlaneseq
    %v4795 = vshrl.u32 %v4794, 7
    %v4796 = vsub.s32 0, %v4795
    %v4797 = vrot.slane %v521, %v4796
    %v4798 = vlaneseq
    %v4799 = vshrl.u32 %v4798, 7
    %v4800 = vsub.s32 0, %v4799
    %v4801 = vrot.slane %v603, %v4800
    %v4802 = vlaneseq
    %v4803 = vshrl.u32 %v4802, 7
    %v4804 = vsub.s32 0, %v4803
    %v4805 = vrot.slane %v685, %v4804
    %v4806 = vlaneseq
    %v4807 = vshrl.u32 %v4806, 7
    %v4808 = vsub.s32 0, %v4807
    %v4809 = vrot.slane %v767, %v4808
    %v4810 = vlaneseq
    %v4811 = vshrl.u32 %v4810, 7
    %v4812 = vsub.s32 0, %v4811
    %v4813 = vrot.slane %v849, %v4812
    %v4814 = vlaneseq
    %v4815 = vshrl.u32 %v4814, 7
    %v4816 = vsub.s32 0, %v4815
    %v4817 = vrot.slane %v931, %v4816
    %v4818 = vlaneseq
    %v4819 = vshrl.u32 %v4818, 7
    %v4820 = vsub.s32 0, %v4819
    %v4821 = vrot.slane %v1013, %v4820
    %v4822 = vlaneseq
    %v4823 = vshrl.u32 %v4822, 7
    %v4824 = vsub.s32 0, %v4823
    %v4825 = vrot.slane %v1095, %v4824
    %v4826 = vlaneseq
    %v4827 = vshrl.u32 %v4826, 7
    %v4828 = vsub.s32 0, %v4827
    %v4829 = vrot.slane %v1177, %v4828
    %v4830 = vlaneseq
    %v4831 = vshrl.u32 %v4830, 7
    %v4832 = vsub.s32 0, %v4831
    %v4833 = vrot.slane %v1259, %v4832
    %v4834 = vlaneseq
    %v4835 = vshrl.u32 %v4834, 7
    %v4836 = vsub.s32 0, %v4835
    %v4837 = vrot.slane %v1341, %v4836
    %v4838 = vlaneseq
    %v4839 = vshrl.u32 %v4838, 7
    %v4840 = vsub.s32 0, %v4839
    %v4841 = vrot.slane %v1423, %v4840
    %v4842 = vlaneseq
    %v4843 = vshrl.u32 %v4842, 7
    %v4844 = vsub.s32 0, %v4843
    %v4845 = vrot.slane %v1505, %v4844
    %v4846 = vlaneseq
    %v4847 = vshrl.u32 %v4846, 7
    %v4848 = vsub.s32 0, %v4847
    %v4849 = vrot.slane %v1587, %v4848
    %v4850 = vlaneseq
    %v4851 = vshrl.u32 %v4850, 7
    %v4852 = vsub.s32 0, %v4851
    %v4853 = vrot.slane %v1669, %v4852
    %v4854 = vlaneseq
    %v4855 = vshrl.u32 %v4854, 7
    %v4856 = vsub.s32 0, %v4855
    %v4857 = vrot.slane %v1751, %v4856
    %v4858 = vsel %vm2273, %v3461, %v3457
    %v4859 = vsel %vm2275, %v3465, %v4858
    %v4860 = vsel %vm2277, %v3469, %v4859
    %v4861 = vsel %vm2279, %v3473, %v4860
    %v4862 = vsel %vm2281, %v3477, %v4861
    %v4863 = vsel %vm2283, %v3481, %v4862
    %v4864 = vsel %vm2285, %v4797, %v4863
    %v4865 = vsel %vm2273, %v3493, %v3489
    %v4866 = vsel %vm2275, %v3497, %v4865
    %v4867 = vsel %vm2277, %v3501, %v4866
    %v4868 = vsel %vm2279, %v3505, %v4867
    %v4869 = vsel %vm2281, %v3509, %v4868
    %v4870 = vsel %vm2283, %v3513, %v4869
    %v4871 = vsel %vm2285, %v4801, %v4870
    %v4872 = vsel %vm2273, %v3525, %v3521
    %v4873 = vsel %vm2275, %v3529, %v4872
    %v4874 = vsel %vm2277, %v3533, %v4873
    %v4875 = vsel %vm2279, %v3537, %v4874
    %v4876 = vsel %vm2281, %v3541, %v4875
    %v4877 = vsel %vm2283, %v3545, %v4876
    %v4878 = vsel %vm2285, %v4805, %v4877
    %v4879 = vsel %vm2273, %v3557, %v3553
    %v4880 = vsel %vm2275, %v3561, %v4879
    %v4881 = vsel %vm2277, %v3565, %v4880
    %v4882 = vsel %vm2279, %v3569, %v4881
    %v4883 = vsel %vm2281, %v3573, %v4882
    %v4884 = vsel %vm2283, %v3577, %v4883
    %v4885 = vsel %vm2285, %v4809, %v4884
    %v4886 = vsel %vm2273, %v3589, %v3585
    %v4887 = vsel %vm2275, %v3593, %v4886
    %v4888 = vsel %vm2277, %v3597, %v4887
    %v4889 = vsel %vm2279, %v3601, %v4888
    %v4890 = vsel %vm2281, %v3605, %v4889
    %v4891 = vsel %vm2283, %v3609, %v4890
    %v4892 = vsel %vm2285, %v4813, %v4891
    %v4893 = vsel %vm2273, %v3621, %v3617
    %v4894 = vsel %vm2275, %v3625, %v4893
    %v4895 = vsel %vm2277, %v3629, %v4894
    %v4896 = vsel %vm2279, %v3633, %v4895
    %v4897 = vsel %vm2281, %v3637, %v4896
    %v4898 = vsel %vm2283, %v3641, %v4897
    %v4899 = vsel %vm2285, %v4817, %v4898
    %v4900 = vsel %vm2273, %v3653, %v3649
    %v4901 = vsel %vm2275, %v3657, %v4900
    %v4902 = vsel %vm2277, %v3661, %v4901
    %v4903 = vsel %vm2279, %v3665, %v4902
    %v4904 = vsel %vm2281, %v3669, %v4903
    %v4905 = vsel %vm2283, %v3673, %v4904
    %v4906 = vsel %vm2285, %v4821, %v4905
    %v4907 = vsel %vm2273, %v3685, %v3681
    %v4908 = vsel %vm2275, %v3689, %v4907
    %v4909 = vsel %vm2277, %v3693, %v4908
    %v4910 = vsel %vm2279, %v3697, %v4909
    %v4911 = vsel %vm2281, %v3701, %v4910
    %v4912 = vsel %vm2283, %v3705, %v4911
    %v4913 = vsel %vm2285, %v4825, %v4912
    %v4914 = vsel %vm2273, %v3717, %v3713
    %v4915 = vsel %vm2275, %v3721, %v4914
    %v4916 = vsel %vm2277, %v3725, %v4915
    %v4917 = vsel %vm2279, %v3729, %v4916
    %v4918 = vsel %vm2281, %v3733, %v4917
    %v4919 = vsel %vm2283, %v3737, %v4918
    %v4920 = vsel %vm2285, %v4829, %v4919
    %v4921 = vsel %vm2273, %v3749, %v3745
    %v4922 = vsel %vm2275, %v3753, %v4921
    %v4923 = vsel %vm2277, %v3757, %v4922
    %v4924 = vsel %vm2279, %v3761, %v4923
    %v4925 = vsel %vm2281, %v3765, %v4924
    %v4926 = vsel %vm2283, %v3769, %v4925
    %v4927 = vsel %vm2285, %v4833, %v4926
    %v4928 = vsel %vm2273, %v3781, %v3777
    %v4929 = vsel %vm2275, %v3785, %v4928
    %v4930 = vsel %vm2277, %v3789, %v4929
    %v4931 = vsel %vm2279, %v3793, %v4930
    %v4932 = vsel %vm2281, %v3797, %v4931
    %v4933 = vsel %vm2283, %v3801, %v4932
    %v4934 = vsel %vm2285, %v4837, %v4933
    %v4935 = vsel %vm2273, %v3813, %v3809
    %v4936 = vsel %vm2275, %v3817, %v4935
    %v4937 = vsel %vm2277, %v3821, %v4936
    %v4938 = vsel %vm2279, %v3825, %v4937
    %v4939 = vsel %vm2281, %v3829, %v4938
    %v4940 = vsel %vm2283, %v3833, %v4939
    %v4941 = vsel %vm2285, %v4841, %v4940
    %v4942 = vsel %vm2273, %v3845, %v3841
    %v4943 = vsel %vm2275, %v3849, %v4942
    %v4944 = vsel %vm2277, %v3853, %v4943
    %v4945 = vsel %vm2279, %v3857, %v4944
    %v4946 = vsel %vm2281, %v3861, %v4945
    %v4947 = vsel %vm2283, %v3865, %v4946
    %v4948 = vsel %vm2285, %v4845, %v4947
    %v4949 = vsel %vm2273, %v3877, %v3873
    %v4950 = vsel %vm2275, %v3881, %v4949
    %v4951 = vsel %vm2277, %v3885, %v4950
    %v4952 = vsel %vm2279, %v3889, %v4951
    %v4953 = vsel %vm2281, %v3893, %v4952
    %v4954 = vsel %vm2283, %v3897, %v4953
    %v4955 = vsel %vm2285, %v4849, %v4954
    %v4956 = vsel %vm2273, %v3909, %v3905
    %v4957 = vsel %vm2275, %v3913, %v4956
    %v4958 = vsel %vm2277, %v3917, %v4957
    %v4959 = vsel %vm2279, %v3921, %v4958
    %v4960 = vsel %vm2281, %v3925, %v4959
    %v4961 = vsel %vm2283, %v3929, %v4960
    %v4962 = vsel %vm2285, %v4853, %v4961
    %v4963 = vsel %vm2273, %v3941, %v3937
    %v4964 = vsel %vm2275, %v3945, %v4963
    %v4965 = vsel %vm2277, %v3949, %v4964
    %v4966 = vsel %vm2279, %v3953, %v4965
    %v4967 = vsel %vm2281, %v3957, %v4966
    %v4968 = vsel %vm2283, %v3961, %v4967
    %v4969 = vsel %vm2285, %v4857, %v4968
    %4970 = vrot.lane.b32.xlu0 %v4864, 18
    %v4971 = vpop.permute.xlu0 %4970
    %4972 = vrot.lane.b32.xlu0 %v4871, 18
    %v4973 = vpop.permute.xlu0 %4972
    %4974 = vrot.lane.b32.xlu0 %v4878, 18
    %v4975 = vpop.permute.xlu0 %4974
    %4976 = vrot.lane.b32.xlu0 %v4885, 18
    %v4977 = vpop.permute.xlu0 %4976
    %4978 = vrot.lane.b32.xlu0 %v4892, 18
    %v4979 = vpop.permute.xlu0 %4978
    %4980 = vrot.lane.b32.xlu0 %v4899, 18
    %v4981 = vpop.permute.xlu0 %4980
    %4982 = vrot.lane.b32.xlu0 %v4906, 18
    %v4983 = vpop.permute.xlu0 %4982
    %4984 = vrot.lane.b32.xlu0 %v4913, 18
    %v4985 = vpop.permute.xlu0 %4984
    %4986 = vrot.lane.b32.xlu0 %v4920, 18
    %v4987 = vpop.permute.xlu0 %4986
    %4988 = vrot.lane.b32.xlu0 %v4927, 18
    %v4989 = vpop.permute.xlu0 %4988
    %4990 = vrot.lane.b32.xlu0 %v4934, 18
    %v4991 = vpop.permute.xlu0 %4990
    %4992 = vrot.lane.b32.xlu0 %v4941, 18
    %v4993 = vpop.permute.xlu0 %4992
    %4994 = vrot.lane.b32.xlu0 %v4948, 18
    %v4995 = vpop.permute.xlu0 %4994
    %4996 = vrot.lane.b32.xlu0 %v4955, 18
    %v4997 = vpop.permute.xlu0 %4996
    %4998 = vrot.lane.b32.xlu0 %v4962, 18
    %v4999 = vpop.permute.xlu0 %4998
    %5000 = vrot.lane.b32.xlu0 %v4969, 18
    %v5001 = vpop.permute.xlu0 %5000
    %v5018 = vlaneseq
    %v5019 = vshrl.u32 %v5018, 7
    %v5020 = vsub.s32 1, %v5019
    %v5021 = vrot.slane %v521, %v5020
    %v5022 = vlaneseq
    %v5023 = vshrl.u32 %v5022, 7
    %v5024 = vsub.s32 1, %v5023
    %v5025 = vrot.slane %v603, %v5024
    %v5026 = vlaneseq
    %v5027 = vshrl.u32 %v5026, 7
    %v5028 = vsub.s32 1, %v5027
    %v5029 = vrot.slane %v685, %v5028
    %v5030 = vlaneseq
    %v5031 = vshrl.u32 %v5030, 7
    %v5032 = vsub.s32 1, %v5031
    %v5033 = vrot.slane %v767, %v5032
    %v5034 = vlaneseq
    %v5035 = vshrl.u32 %v5034, 7
    %v5036 = vsub.s32 1, %v5035
    %v5037 = vrot.slane %v849, %v5036
    %v5038 = vlaneseq
    %v5039 = vshrl.u32 %v5038, 7
    %v5040 = vsub.s32 1, %v5039
    %v5041 = vrot.slane %v931, %v5040
    %v5042 = vlaneseq
    %v5043 = vshrl.u32 %v5042, 7
    %v5044 = vsub.s32 1, %v5043
    %v5045 = vrot.slane %v1013, %v5044
    %v5046 = vlaneseq
    %v5047 = vshrl.u32 %v5046, 7
    %v5048 = vsub.s32 1, %v5047
    %v5049 = vrot.slane %v1095, %v5048
    %v5050 = vlaneseq
    %v5051 = vshrl.u32 %v5050, 7
    %v5052 = vsub.s32 1, %v5051
    %v5053 = vrot.slane %v1177, %v5052
    %v5054 = vlaneseq
    %v5055 = vshrl.u32 %v5054, 7
    %v5056 = vsub.s32 1, %v5055
    %v5057 = vrot.slane %v1259, %v5056
    %v5058 = vlaneseq
    %v5059 = vshrl.u32 %v5058, 7
    %v5060 = vsub.s32 1, %v5059
    %v5061 = vrot.slane %v1341, %v5060
    %v5062 = vlaneseq
    %v5063 = vshrl.u32 %v5062, 7
    %v5064 = vsub.s32 1, %v5063
    %v5065 = vrot.slane %v1423, %v5064
    %v5066 = vlaneseq
    %v5067 = vshrl.u32 %v5066, 7
    %v5068 = vsub.s32 1, %v5067
    %v5069 = vrot.slane %v1505, %v5068
    %v5070 = vlaneseq
    %v5071 = vshrl.u32 %v5070, 7
    %v5072 = vsub.s32 1, %v5071
    %v5073 = vrot.slane %v1587, %v5072
    %v5074 = vlaneseq
    %v5075 = vshrl.u32 %v5074, 7
    %v5076 = vsub.s32 1, %v5075
    %v5077 = vrot.slane %v1669, %v5076
    %v5078 = vlaneseq
    %v5079 = vshrl.u32 %v5078, 7
    %v5080 = vsub.s32 1, %v5079
    %v5081 = vrot.slane %v1751, %v5080
    %v5082 = vsel %vm2273, %v4133, %v4129
    %v5083 = vsel %vm2275, %v4137, %v5082
    %v5084 = vsel %vm2277, %v4141, %v5083
    %v5085 = vsel %vm2279, %v4145, %v5084
    %v5086 = vsel %vm2281, %v4149, %v5085
    %v5087 = vsel %vm2283, %v4153, %v5086
    %v5088 = vsel %vm2285, %v5021, %v5087
    %v5089 = vsel %vm2273, %v4165, %v4161
    %v5090 = vsel %vm2275, %v4169, %v5089
    %v5091 = vsel %vm2277, %v4173, %v5090
    %v5092 = vsel %vm2279, %v4177, %v5091
    %v5093 = vsel %vm2281, %v4181, %v5092
    %v5094 = vsel %vm2283, %v4185, %v5093
    %v5095 = vsel %vm2285, %v5025, %v5094
    %v5096 = vsel %vm2273, %v4197, %v4193
    %v5097 = vsel %vm2275, %v4201, %v5096
    %v5098 = vsel %vm2277, %v4205, %v5097
    %v5099 = vsel %vm2279, %v4209, %v5098
    %v5100 = vsel %vm2281, %v4213, %v5099
    %v5101 = vsel %vm2283, %v4217, %v5100
    %v5102 = vsel %vm2285, %v5029, %v5101
    %v5103 = vsel %vm2273, %v4229, %v4225
    %v5104 = vsel %vm2275, %v4233, %v5103
    %v5105 = vsel %vm2277, %v4237, %v5104
    %v5106 = vsel %vm2279, %v4241, %v5105
    %v5107 = vsel %vm2281, %v4245, %v5106
    %v5108 = vsel %vm2283, %v4249, %v5107
    %v5109 = vsel %vm2285, %v5033, %v5108
    %v5110 = vsel %vm2273, %v4261, %v4257
    %v5111 = vsel %vm2275, %v4265, %v5110
    %v5112 = vsel %vm2277, %v4269, %v5111
    %v5113 = vsel %vm2279, %v4273, %v5112
    %v5114 = vsel %vm2281, %v4277, %v5113
    %v5115 = vsel %vm2283, %v4281, %v5114
    %v5116 = vsel %vm2285, %v5037, %v5115
    %v5117 = vsel %vm2273, %v4293, %v4289
    %v5118 = vsel %vm2275, %v4297, %v5117
    %v5119 = vsel %vm2277, %v4301, %v5118
    %v5120 = vsel %vm2279, %v4305, %v5119
    %v5121 = vsel %vm2281, %v4309, %v5120
    %v5122 = vsel %vm2283, %v4313, %v5121
    %v5123 = vsel %vm2285, %v5041, %v5122
    %v5124 = vsel %vm2273, %v4325, %v4321
    %v5125 = vsel %vm2275, %v4329, %v5124
    %v5126 = vsel %vm2277, %v4333, %v5125
    %v5127 = vsel %vm2279, %v4337, %v5126
    %v5128 = vsel %vm2281, %v4341, %v5127
    %v5129 = vsel %vm2283, %v4345, %v5128
    %v5130 = vsel %vm2285, %v5045, %v5129
    %v5131 = vsel %vm2273, %v4357, %v4353
    %v5132 = vsel %vm2275, %v4361, %v5131
    %v5133 = vsel %vm2277, %v4365, %v5132
    %v5134 = vsel %vm2279, %v4369, %v5133
    %v5135 = vsel %vm2281, %v4373, %v5134
    %v5136 = vsel %vm2283, %v4377, %v5135
    %v5137 = vsel %vm2285, %v5049, %v5136
    %v5138 = vsel %vm2273, %v4389, %v4385
    %v5139 = vsel %vm2275, %v4393, %v5138
    %v5140 = vsel %vm2277, %v4397, %v5139
    %v5141 = vsel %vm2279, %v4401, %v5140
    %v5142 = vsel %vm2281, %v4405, %v5141
    %v5143 = vsel %vm2283, %v4409, %v5142
    %v5144 = vsel %vm2285, %v5053, %v5143
    %v5145 = vsel %vm2273, %v4421, %v4417
    %v5146 = vsel %vm2275, %v4425, %v5145
    %v5147 = vsel %vm2277, %v4429, %v5146
    %v5148 = vsel %vm2279, %v4433, %v5147
    %v5149 = vsel %vm2281, %v4437, %v5148
    %v5150 = vsel %vm2283, %v4441, %v5149
    %v5151 = vsel %vm2285, %v5057, %v5150
    %v5152 = vsel %vm2273, %v4453, %v4449
    %v5153 = vsel %vm2275, %v4457, %v5152
    %v5154 = vsel %vm2277, %v4461, %v5153
    %v5155 = vsel %vm2279, %v4465, %v5154
    %v5156 = vsel %vm2281, %v4469, %v5155
    %v5157 = vsel %vm2283, %v4473, %v5156
    %v5158 = vsel %vm2285, %v5061, %v5157
    %v5159 = vsel %vm2273, %v4485, %v4481
    %v5160 = vsel %vm2275, %v4489, %v5159
    %v5161 = vsel %vm2277, %v4493, %v5160
    %v5162 = vsel %vm2279, %v4497, %v5161
    %v5163 = vsel %vm2281, %v4501, %v5162
    %v5164 = vsel %vm2283, %v4505, %v5163
    %v5165 = vsel %vm2285, %v5065, %v5164
    %v5166 = vsel %vm2273, %v4517, %v4513
    %v5167 = vsel %vm2275, %v4521, %v5166
    %v5168 = vsel %vm2277, %v4525, %v5167
    %v5169 = vsel %vm2279, %v4529, %v5168
    %v5170 = vsel %vm2281, %v4533, %v5169
    %v5171 = vsel %vm2283, %v4537, %v5170
    %v5172 = vsel %vm2285, %v5069, %v5171
    %v5173 = vsel %vm2273, %v4549, %v4545
    %v5174 = vsel %vm2275, %v4553, %v5173
    %v5175 = vsel %vm2277, %v4557, %v5174
    %v5176 = vsel %vm2279, %v4561, %v5175
    %v5177 = vsel %vm2281, %v4565, %v5176
    %v5178 = vsel %vm2283, %v4569, %v5177
    %v5179 = vsel %vm2285, %v5073, %v5178
    %v5180 = vsel %vm2273, %v4581, %v4577
    %v5181 = vsel %vm2275, %v4585, %v5180
    %v5182 = vsel %vm2277, %v4589, %v5181
    %v5183 = vsel %vm2279, %v4593, %v5182
    %v5184 = vsel %vm2281, %v4597, %v5183
    %v5185 = vsel %vm2283, %v4601, %v5184
    %v5186 = vsel %vm2285, %v5077, %v5185
    %v5187 = vsel %vm2273, %v4613, %v4609
    %v5188 = vsel %vm2275, %v4617, %v5187
    %v5189 = vsel %vm2277, %v4621, %v5188
    %v5190 = vsel %vm2279, %v4625, %v5189
    %v5191 = vsel %vm2281, %v4629, %v5190
    %v5192 = vsel %vm2283, %v4633, %v5191
    %v5193 = vsel %vm2285, %v5081, %v5192
    %5194 = vrot.lane.b32.xlu0 %v5088, 21
    %v5195 = vpop.permute.xlu0 %5194
    %5196 = vrot.lane.b32.xlu0 %v5095, 21
    %v5197 = vpop.permute.xlu0 %5196
    %5198 = vrot.lane.b32.xlu0 %v5102, 21
    %v5199 = vpop.permute.xlu0 %5198
    %5200 = vrot.lane.b32.xlu0 %v5109, 21
    %v5201 = vpop.permute.xlu0 %5200
    %5202 = vrot.lane.b32.xlu0 %v5116, 21
    %v5203 = vpop.permute.xlu0 %5202
    %5204 = vrot.lane.b32.xlu0 %v5123, 21
    %v5205 = vpop.permute.xlu0 %5204
    %5206 = vrot.lane.b32.xlu0 %v5130, 21
    %v5207 = vpop.permute.xlu0 %5206
    %5208 = vrot.lane.b32.xlu0 %v5137, 21
    %v5209 = vpop.permute.xlu0 %5208
    %5210 = vrot.lane.b32.xlu0 %v5144, 21
    %v5211 = vpop.permute.xlu0 %5210
    %5212 = vrot.lane.b32.xlu0 %v5151, 21
    %v5213 = vpop.permute.xlu0 %5212
    %5214 = vrot.lane.b32.xlu0 %v5158, 21
    %v5215 = vpop.permute.xlu0 %5214
    %5216 = vrot.lane.b32.xlu0 %v5165, 21
    %v5217 = vpop.permute.xlu0 %5216
    %5218 = vrot.lane.b32.xlu0 %v5172, 21
    %v5219 = vpop.permute.xlu0 %5218
    %5220 = vrot.lane.b32.xlu0 %v5179, 21
    %v5221 = vpop.permute.xlu0 %5220
    %5222 = vrot.lane.b32.xlu0 %v5186, 21
    %v5223 = vpop.permute.xlu0 %5222
    %5224 = vrot.lane.b32.xlu0 %v5193, 21
    %v5225 = vpop.permute.xlu0 %5224
    %v5242 = vlaneseq
    %v5243 = vshrl.u32 %v5242, 7
    %v5244 = vsub.s32 0, %v5243
    %v5245 = vrot.slane %v1103, %v5244
    %v5246 = vlaneseq
    %v5247 = vshrl.u32 %v5246, 7
    %v5248 = vsub.s32 0, %v5247
    %v5249 = vrot.slane %v1111, %v5248
    %v5250 = vlaneseq
    %v5251 = vshrl.u32 %v5250, 7
    %v5252 = vsub.s32 0, %v5251
    %v5253 = vrot.slane %v1110, %v5252
    %v5254 = vlaneseq
    %v5255 = vshrl.u32 %v5254, 7
    %v5256 = vsub.s32 0, %v5255
    %v5257 = vrot.slane %v1112, %v5256
    %v5258 = vlaneseq
    %v5259 = vshrl.u32 %v5258, 7
    %v5260 = vsub.s32 0, %v5259
    %v5261 = vrot.slane %v1120, %v5260
    %v5262 = vlaneseq
    %v5263 = vshrl.u32 %v5262, 7
    %v5264 = vsub.s32 0, %v5263
    %v5265 = vrot.slane %v1128, %v5264
    %v5266 = vlaneseq
    %v5267 = vshrl.u32 %v5266, 7
    %v5268 = vsub.s32 0, %v5267
    %v5269 = vrot.slane %v1127, %v5268
    %v5270 = vlaneseq
    %v5271 = vshrl.u32 %v5270, 7
    %v5272 = vsub.s32 0, %v5271
    %v5273 = vrot.slane %v1129, %v5272
    %v5274 = vlaneseq
    %v5275 = vshrl.u32 %v5274, 7
    %v5276 = vsub.s32 0, %v5275
    %v5277 = vrot.slane %v1759, %v5276
    %v5278 = vlaneseq
    %v5279 = vshrl.u32 %v5278, 7
    %v5280 = vsub.s32 0, %v5279
    %v5281 = vrot.slane %v1767, %v5280
    %v5282 = vlaneseq
    %v5283 = vshrl.u32 %v5282, 7
    %v5284 = vsub.s32 0, %v5283
    %v5285 = vrot.slane %v1766, %v5284
    %v5286 = vlaneseq
    %v5287 = vshrl.u32 %v5286, 7
    %v5288 = vsub.s32 0, %v5287
    %v5289 = vrot.slane %v1768, %v5288
    %v5290 = vlaneseq
    %v5291 = vshrl.u32 %v5290, 7
    %v5292 = vsub.s32 0, %v5291
    %v5293 = vrot.slane %v1776, %v5292
    %v5294 = vlaneseq
    %v5295 = vshrl.u32 %v5294, 7
    %v5296 = vsub.s32 0, %v5295
    %v5297 = vrot.slane %v1784, %v5296
    %v5298 = vlaneseq
    %v5299 = vshrl.u32 %v5298, 7
    %v5300 = vsub.s32 0, %v5299
    %v5301 = vrot.slane %v1783, %v5300
    %v5302 = vlaneseq
    %v5303 = vshrl.u32 %v5302, 7
    %v5304 = vsub.s32 0, %v5303
    %v5305 = vrot.slane %v1785, %v5304
    %v5306 = vsel %vm2273, %v5249, %v5245
    %v5307 = vsel %vm2275, %v5253, %v5306
    %v5308 = vsel %vm2277, %v5257, %v5307
    %v5309 = vsel %vm2279, %v5261, %v5308
    %v5310 = vsel %vm2281, %v5265, %v5309
    %v5311 = vsel %vm2283, %v5269, %v5310
    %v5312 = vsel %vm2285, %v5273, %v5311
    %v5313 = vsel %vm2273, %v5281, %v5277
    %v5314 = vsel %vm2275, %v5285, %v5313
    %v5315 = vsel %vm2277, %v5289, %v5314
    %v5316 = vsel %vm2279, %v5293, %v5315
    %v5317 = vsel %vm2281, %v5297, %v5316
    %v5318 = vsel %vm2283, %v5301, %v5317
    %v5319 = vsel %vm2285, %v5305, %v5318
    %5320 = vrot.lane.b32.xlu0 %v2293, 24
    %v5321 = vpop.permute.xlu0 %5320
    %5322 = vrot.lane.b32.xlu0 %v2300, 24
    %v5323 = vpop.permute.xlu0 %5322
    %5324 = vrot.lane.b32.xlu0 %v2307, 24
    %v5325 = vpop.permute.xlu0 %5324
    %5326 = vrot.lane.b32.xlu0 %v2314, 24
    %v5327 = vpop.permute.xlu0 %5326
    %5328 = vrot.lane.b32.xlu0 %v2321, 24
    %v5329 = vpop.permute.xlu0 %5328
    %5330 = vrot.lane.b32.xlu0 %v2328, 24
    %v5331 = vpop.permute.xlu0 %5330
    %5332 = vrot.lane.b32.xlu0 %v2335, 24
    %v5333 = vpop.permute.xlu0 %5332
    %5334 = vrot.lane.b32.xlu0 %v5312, 24
    %v5335 = vpop.permute.xlu0 %5334
    %5336 = vrot.lane.b32.xlu0 %v2342, 24
    %v5337 = vpop.permute.xlu0 %5336
    %5338 = vrot.lane.b32.xlu0 %v2349, 24
    %v5339 = vpop.permute.xlu0 %5338
    %5340 = vrot.lane.b32.xlu0 %v2356, 24
    %v5341 = vpop.permute.xlu0 %5340
    %5342 = vrot.lane.b32.xlu0 %v2363, 24
    %v5343 = vpop.permute.xlu0 %5342
    %5344 = vrot.lane.b32.xlu0 %v2370, 24
    %v5345 = vpop.permute.xlu0 %5344
    %5346 = vrot.lane.b32.xlu0 %v2377, 24
    %v5347 = vpop.permute.xlu0 %5346
    %5348 = vrot.lane.b32.xlu0 %v2384, 24
    %v5349 = vpop.permute.xlu0 %5348
    %5350 = vrot.lane.b32.xlu0 %v5319, 24
    %v5351 = vpop.permute.xlu0 %5350
    %v5368 = vlaneseq
    %v5369 = vshrl.u32 %v5368, 7
    %v5370 = vsub.s32 1, %v5369
    %v5371 = vrot.slane %v1103, %v5370
    %v5372 = vlaneseq
    %v5373 = vshrl.u32 %v5372, 7
    %v5374 = vsub.s32 1, %v5373
    %v5375 = vrot.slane %v1111, %v5374
    %v5376 = vlaneseq
    %v5377 = vshrl.u32 %v5376, 7
    %v5378 = vsub.s32 1, %v5377
    %v5379 = vrot.slane %v1110, %v5378
    %v5380 = vlaneseq
    %v5381 = vshrl.u32 %v5380, 7
    %v5382 = vsub.s32 1, %v5381
    %v5383 = vrot.slane %v1112, %v5382
    %v5384 = vlaneseq
    %v5385 = vshrl.u32 %v5384, 7
    %v5386 = vsub.s32 1, %v5385
    %v5387 = vrot.slane %v1120, %v5386
    %v5388 = vlaneseq
    %v5389 = vshrl.u32 %v5388, 7
    %v5390 = vsub.s32 1, %v5389
    %v5391 = vrot.slane %v1128, %v5390
    %v5392 = vlaneseq
    %v5393 = vshrl.u32 %v5392, 7
    %v5394 = vsub.s32 1, %v5393
    %v5395 = vrot.slane %v1127, %v5394
    %v5396 = vlaneseq
    %v5397 = vshrl.u32 %v5396, 7
    %v5398 = vsub.s32 1, %v5397
    %v5399 = vrot.slane %v1129, %v5398
    %v5400 = vlaneseq
    %v5401 = vshrl.u32 %v5400, 7
    %v5402 = vsub.s32 1, %v5401
    %v5403 = vrot.slane %v1759, %v5402
    %v5404 = vlaneseq
    %v5405 = vshrl.u32 %v5404, 7
    %v5406 = vsub.s32 1, %v5405
    %v5407 = vrot.slane %v1767, %v5406
    %v5408 = vlaneseq
    %v5409 = vshrl.u32 %v5408, 7
    %v5410 = vsub.s32 1, %v5409
    %v5411 = vrot.slane %v1766, %v5410
    %v5412 = vlaneseq
    %v5413 = vshrl.u32 %v5412, 7
    %v5414 = vsub.s32 1, %v5413
    %v5415 = vrot.slane %v1768, %v5414
    %v5416 = vlaneseq
    %v5417 = vshrl.u32 %v5416, 7
    %v5418 = vsub.s32 1, %v5417
    %v5419 = vrot.slane %v1776, %v5418
    %v5420 = vlaneseq
    %v5421 = vshrl.u32 %v5420, 7
    %v5422 = vsub.s32 1, %v5421
    %v5423 = vrot.slane %v1784, %v5422
    %v5424 = vlaneseq
    %v5425 = vshrl.u32 %v5424, 7
    %v5426 = vsub.s32 1, %v5425
    %v5427 = vrot.slane %v1783, %v5426
    %v5428 = vlaneseq
    %v5429 = vshrl.u32 %v5428, 7
    %v5430 = vsub.s32 1, %v5429
    %v5431 = vrot.slane %v1785, %v5430
    %v5432 = vsel %vm2273, %v5375, %v5371
    %v5433 = vsel %vm2275, %v5379, %v5432
    %v5434 = vsel %vm2277, %v5383, %v5433
    %v5435 = vsel %vm2279, %v5387, %v5434
    %v5436 = vsel %vm2281, %v5391, %v5435
    %v5437 = vsel %vm2283, %v5395, %v5436
    %v5438 = vsel %vm2285, %v5399, %v5437
    %v5439 = vsel %vm2273, %v5407, %v5403
    %v5440 = vsel %vm2275, %v5411, %v5439
    %v5441 = vsel %vm2277, %v5415, %v5440
    %v5442 = vsel %vm2279, %v5419, %v5441
    %v5443 = vsel %vm2281, %v5423, %v5442
    %v5444 = vsel %vm2283, %v5427, %v5443
    %v5445 = vsel %vm2285, %v5431, %v5444
    %5446 = vrot.lane.b32.xlu0 %v2893, 27
    %v5447 = vpop.permute.xlu0 %5446
    %5448 = vrot.lane.b32.xlu0 %v2900, 27
    %v5449 = vpop.permute.xlu0 %5448
    %5450 = vrot.lane.b32.xlu0 %v2907, 27
    %v5451 = vpop.permute.xlu0 %5450
    %5452 = vrot.lane.b32.xlu0 %v2914, 27
    %v5453 = vpop.permute.xlu0 %5452
    %5454 = vrot.lane.b32.xlu0 %v2921, 27
    %v5455 = vpop.permute.xlu0 %5454
    %5456 = vrot.lane.b32.xlu0 %v2928, 27
    %v5457 = vpop.permute.xlu0 %5456
    %5458 = vrot.lane.b32.xlu0 %v2935, 27
    %v5459 = vpop.permute.xlu0 %5458
    %5460 = vrot.lane.b32.xlu0 %v5438, 27
    %v5461 = vpop.permute.xlu0 %5460
    %5462 = vrot.lane.b32.xlu0 %v2942, 27
    %v5463 = vpop.permute.xlu0 %5462
    %5464 = vrot.lane.b32.xlu0 %v2949, 27
    %v5465 = vpop.permute.xlu0 %5464
    %5466 = vrot.lane.b32.xlu0 %v2956, 27
    %v5467 = vpop.permute.xlu0 %5466
    %5468 = vrot.lane.b32.xlu0 %v2963, 27
    %v5469 = vpop.permute.xlu0 %5468
    %5470 = vrot.lane.b32.xlu0 %v2970, 27
    %v5471 = vpop.permute.xlu0 %5470
    %5472 = vrot.lane.b32.xlu0 %v2977, 27
    %v5473 = vpop.permute.xlu0 %5472
    %5474 = vrot.lane.b32.xlu0 %v2984, 27
    %v5475 = vpop.permute.xlu0 %5474
    %5476 = vrot.lane.b32.xlu0 %v5445, 27
    %v5477 = vpop.permute.xlu0 %5476
    %v5494 = vlaneseq
    %v5495 = vshrl.u32 %v5494, 7
    %v5496 = vsub.s32 0, %v5495
    %v5497 = vrot.slane %v1136, %v5496
    %v5498 = vlaneseq
    %v5499 = vshrl.u32 %v5498, 7
    %v5500 = vsub.s32 0, %v5499
    %v5501 = vrot.slane %v1792, %v5500
    %v5502 = vsel %vm2273, %v5253, %v5249
    %v5503 = vsel %vm2275, %v5257, %v5502
    %v5504 = vsel %vm2277, %v5261, %v5503
    %v5505 = vsel %vm2279, %v5265, %v5504
    %v5506 = vsel %vm2281, %v5269, %v5505
    %v5507 = vsel %vm2283, %v5273, %v5506
    %v5508 = vsel %vm2285, %v5497, %v5507
    %v5509 = vsel %vm2273, %v5285, %v5281
    %v5510 = vsel %vm2275, %v5289, %v5509
    %v5511 = vsel %vm2277, %v5293, %v5510
    %v5512 = vsel %vm2279, %v5297, %v5511
    %v5513 = vsel %vm2281, %v5301, %v5512
    %v5514 = vsel %vm2283, %v5305, %v5513
    %v5515 = vsel %vm2285, %v5501, %v5514
    %5516 = vrot.lane.b32.xlu0 %v3103, 30
    %v5517 = vpop.permute.xlu0 %5516
    %5518 = vrot.lane.b32.xlu0 %v3110, 30
    %v5519 = vpop.permute.xlu0 %5518
    %5520 = vrot.lane.b32.xlu0 %v3117, 30
    %v5521 = vpop.permute.xlu0 %5520
    %5522 = vrot.lane.b32.xlu0 %v3124, 30
    %v5523 = vpop.permute.xlu0 %5522
    %5524 = vrot.lane.b32.xlu0 %v3131, 30
    %v5525 = vpop.permute.xlu0 %5524
    %5526 = vrot.lane.b32.xlu0 %v3138, 30
    %v5527 = vpop.permute.xlu0 %5526
    %5528 = vrot.lane.b32.xlu0 %v3145, 30
    %v5529 = vpop.permute.xlu0 %5528
    %5530 = vrot.lane.b32.xlu0 %v5508, 30
    %v5531 = vpop.permute.xlu0 %5530
    %5532 = vrot.lane.b32.xlu0 %v3152, 30
    %v5533 = vpop.permute.xlu0 %5532
    %5534 = vrot.lane.b32.xlu0 %v3159, 30
    %v5535 = vpop.permute.xlu0 %5534
    %5536 = vrot.lane.b32.xlu0 %v3166, 30
    %v5537 = vpop.permute.xlu0 %5536
    %5538 = vrot.lane.b32.xlu0 %v3173, 30
    %v5539 = vpop.permute.xlu0 %5538
    %5540 = vrot.lane.b32.xlu0 %v3180, 30
    %v5541 = vpop.permute.xlu0 %5540
    %5542 = vrot.lane.b32.xlu0 %v3187, 30
    %v5543 = vpop.permute.xlu0 %5542
    %5544 = vrot.lane.b32.xlu0 %v3194, 30
    %v5545 = vpop.permute.xlu0 %5544
    %5546 = vrot.lane.b32.xlu0 %v5515, 30
    %v5547 = vpop.permute.xlu0 %5546
    %v5564 = vlaneseq
    %v5565 = vshrl.u32 %v5564, 7
    %v5566 = vsub.s32 1, %v5565
    %v5567 = vrot.slane %v1136, %v5566
    %v5568 = vlaneseq
    %v5569 = vshrl.u32 %v5568, 7
    %v5570 = vsub.s32 1, %v5569
    %v5571 = vrot.slane %v1792, %v5570
    %v5572 = vsel %vm2273, %v5379, %v5375
    %v5573 = vsel %vm2275, %v5383, %v5572
    %v5574 = vsel %vm2277, %v5387, %v5573
    %v5575 = vsel %vm2279, %v5391, %v5574
    %v5576 = vsel %vm2281, %v5395, %v5575
    %v5577 = vsel %vm2283, %v5399, %v5576
    %v5578 = vsel %vm2285, %v5567, %v5577
    %v5579 = vsel %vm2273, %v5411, %v5407
    %v5580 = vsel %vm2275, %v5415, %v5579
    %v5581 = vsel %vm2277, %v5419, %v5580
    %v5582 = vsel %vm2279, %v5423, %v5581
    %v5583 = vsel %vm2281, %v5427, %v5582
    %v5584 = vsel %vm2283, %v5431, %v5583
    %v5585 = vsel %vm2285, %v5571, %v5584
    %5586 = vrot.lane.b32.xlu0 %v3313, 33
    %v5587 = vpop.permute.xlu0 %5586
    %5588 = vrot.lane.b32.xlu0 %v3320, 33
    %v5589 = vpop.permute.xlu0 %5588
    %5590 = vrot.lane.b32.xlu0 %v3327, 33
    %v5591 = vpop.permute.xlu0 %5590
    %5592 = vrot.lane.b32.xlu0 %v3334, 33
    %v5593 = vpop.permute.xlu0 %5592
    %5594 = vrot.lane.b32.xlu0 %v3341, 33
    %v5595 = vpop.permute.xlu0 %5594
    %5596 = vrot.lane.b32.xlu0 %v3348, 33
    %v5597 = vpop.permute.xlu0 %5596
    %5598 = vrot.lane.b32.xlu0 %v3355, 33
    %v5599 = vpop.permute.xlu0 %5598
    %5600 = vrot.lane.b32.xlu0 %v5578, 33
    %v5601 = vpop.permute.xlu0 %5600
    %5602 = vrot.lane.b32.xlu0 %v3362, 33
    %v5603 = vpop.permute.xlu0 %5602
    %5604 = vrot.lane.b32.xlu0 %v3369, 33
    %v5605 = vpop.permute.xlu0 %5604
    %5606 = vrot.lane.b32.xlu0 %v3376, 33
    %v5607 = vpop.permute.xlu0 %5606
    %5608 = vrot.lane.b32.xlu0 %v3383, 33
    %v5609 = vpop.permute.xlu0 %5608
    %5610 = vrot.lane.b32.xlu0 %v3390, 33
    %v5611 = vpop.permute.xlu0 %5610
    %5612 = vrot.lane.b32.xlu0 %v3397, 33
    %v5613 = vpop.permute.xlu0 %5612
    %5614 = vrot.lane.b32.xlu0 %v3404, 33
    %v5615 = vpop.permute.xlu0 %5614
    %5616 = vrot.lane.b32.xlu0 %v5585, 33
    %v5617 = vpop.permute.xlu0 %5616
    %5634 = vrot.lane.b32.xlu0 %v3975, 36
    %v5635 = vpop.permute.xlu0 %5634
    %5636 = vrot.lane.b32.xlu0 %v3982, 36
    %v5637 = vpop.permute.xlu0 %5636
    %5638 = vrot.lane.b32.xlu0 %v3989, 36
    %v5639 = vpop.permute.xlu0 %5638
    %5640 = vrot.lane.b32.xlu0 %v3996, 36
    %v5641 = vpop.permute.xlu0 %5640
    %5642 = vrot.lane.b32.xlu0 %v4003, 36
    %v5643 = vpop.permute.xlu0 %5642
    %5644 = vrot.lane.b32.xlu0 %v4010, 36
    %v5645 = vpop.permute.xlu0 %5644
    %5646 = vrot.lane.b32.xlu0 %v4017, 36
    %v5647 = vpop.permute.xlu0 %5646
    %5648 = vrot.lane.b32.xlu0 %v2286, 36
    %v5649 = vpop.permute.xlu0 %5648
    %5650 = vrot.lane.b32.xlu0 %v4031, 36
    %v5651 = vpop.permute.xlu0 %5650
    %5652 = vrot.lane.b32.xlu0 %v4038, 36
    %v5653 = vpop.permute.xlu0 %5652
    %5654 = vrot.lane.b32.xlu0 %v4045, 36
    %v5655 = vpop.permute.xlu0 %5654
    %5656 = vrot.lane.b32.xlu0 %v4052, 36
    %v5657 = vpop.permute.xlu0 %5656
    %5658 = vrot.lane.b32.xlu0 %v4059, 36
    %v5659 = vpop.permute.xlu0 %5658
    %5660 = vrot.lane.b32.xlu0 %v4066, 36
    %v5661 = vpop.permute.xlu0 %5660
    %5662 = vrot.lane.b32.xlu0 %v4073, 36
    %v5663 = vpop.permute.xlu0 %5662
    %5679 = vrot.lane.b32.xlu0 %v4647, 39
    %v5680 = vpop.permute.xlu0 %5679
    %5681 = vrot.lane.b32.xlu0 %v4654, 39
    %v5682 = vpop.permute.xlu0 %5681
    %5683 = vrot.lane.b32.xlu0 %v4661, 39
    %v5684 = vpop.permute.xlu0 %5683
    %5685 = vrot.lane.b32.xlu0 %v4668, 39
    %v5686 = vpop.permute.xlu0 %5685
    %5687 = vrot.lane.b32.xlu0 %v4675, 39
    %v5688 = vpop.permute.xlu0 %5687
    %5689 = vrot.lane.b32.xlu0 %v4682, 39
    %v5690 = vpop.permute.xlu0 %5689
    %5691 = vrot.lane.b32.xlu0 %v4689, 39
    %v5692 = vpop.permute.xlu0 %5691
    %5693 = vrot.lane.b32.xlu0 %v2886, 39
    %v5694 = vpop.permute.xlu0 %5693
    %5695 = vrot.lane.b32.xlu0 %v4703, 39
    %v5696 = vpop.permute.xlu0 %5695
    %5697 = vrot.lane.b32.xlu0 %v4710, 39
    %v5698 = vpop.permute.xlu0 %5697
    %5699 = vrot.lane.b32.xlu0 %v4717, 39
    %v5700 = vpop.permute.xlu0 %5699
    %5701 = vrot.lane.b32.xlu0 %v4724, 39
    %v5702 = vpop.permute.xlu0 %5701
    %5703 = vrot.lane.b32.xlu0 %v4731, 39
    %v5704 = vpop.permute.xlu0 %5703
    %5705 = vrot.lane.b32.xlu0 %v4738, 39
    %v5706 = vpop.permute.xlu0 %5705
    %5707 = vrot.lane.b32.xlu0 %v4745, 39
    %v5708 = vpop.permute.xlu0 %5707
    %5724 = vrot.lane.b32.xlu0 %v4871, 42
    %v5725 = vpop.permute.xlu0 %5724
    %5726 = vrot.lane.b32.xlu0 %v4878, 42
    %v5727 = vpop.permute.xlu0 %5726
    %5728 = vrot.lane.b32.xlu0 %v4885, 42
    %v5729 = vpop.permute.xlu0 %5728
    %5730 = vrot.lane.b32.xlu0 %v4892, 42
    %v5731 = vpop.permute.xlu0 %5730
    %5732 = vrot.lane.b32.xlu0 %v4899, 42
    %v5733 = vpop.permute.xlu0 %5732
    %5734 = vrot.lane.b32.xlu0 %v4906, 42
    %v5735 = vpop.permute.xlu0 %5734
    %5736 = vrot.lane.b32.xlu0 %v4913, 42
    %v5737 = vpop.permute.xlu0 %5736
    %5738 = vrot.lane.b32.xlu0 %v3096, 42
    %v5739 = vpop.permute.xlu0 %5738
    %5740 = vrot.lane.b32.xlu0 %v4927, 42
    %v5741 = vpop.permute.xlu0 %5740
    %5742 = vrot.lane.b32.xlu0 %v4934, 42
    %v5743 = vpop.permute.xlu0 %5742
    %5744 = vrot.lane.b32.xlu0 %v4941, 42
    %v5745 = vpop.permute.xlu0 %5744
    %5746 = vrot.lane.b32.xlu0 %v4948, 42
    %v5747 = vpop.permute.xlu0 %5746
    %5748 = vrot.lane.b32.xlu0 %v4955, 42
    %v5749 = vpop.permute.xlu0 %5748
    %5750 = vrot.lane.b32.xlu0 %v4962, 42
    %v5751 = vpop.permute.xlu0 %5750
    %5752 = vrot.lane.b32.xlu0 %v4969, 42
    %v5753 = vpop.permute.xlu0 %5752
    %5769 = vrot.lane.b32.xlu0 %v5095, 45
    %v5770 = vpop.permute.xlu0 %5769
    %5771 = vrot.lane.b32.xlu0 %v5102, 45
    %v5772 = vpop.permute.xlu0 %5771
    %5773 = vrot.lane.b32.xlu0 %v5109, 45
    %v5774 = vpop.permute.xlu0 %5773
    %5775 = vrot.lane.b32.xlu0 %v5116, 45
    %v5776 = vpop.permute.xlu0 %5775
    %5777 = vrot.lane.b32.xlu0 %v5123, 45
    %v5778 = vpop.permute.xlu0 %5777
    %5779 = vrot.lane.b32.xlu0 %v5130, 45
    %v5780 = vpop.permute.xlu0 %5779
    %5781 = vrot.lane.b32.xlu0 %v5137, 45
    %v5782 = vpop.permute.xlu0 %5781
    %5783 = vrot.lane.b32.xlu0 %v3306, 45
    %v5784 = vpop.permute.xlu0 %5783
    %5785 = vrot.lane.b32.xlu0 %v5151, 45
    %v5786 = vpop.permute.xlu0 %5785
    %5787 = vrot.lane.b32.xlu0 %v5158, 45
    %v5788 = vpop.permute.xlu0 %5787
    %5789 = vrot.lane.b32.xlu0 %v5165, 45
    %v5790 = vpop.permute.xlu0 %5789
    %5791 = vrot.lane.b32.xlu0 %v5172, 45
    %v5792 = vpop.permute.xlu0 %5791
    %5793 = vrot.lane.b32.xlu0 %v5179, 45
    %v5794 = vpop.permute.xlu0 %5793
    %5795 = vrot.lane.b32.xlu0 %v5186, 45
    %v5796 = vpop.permute.xlu0 %5795
    %5797 = vrot.lane.b32.xlu0 %v5193, 45
    %v5798 = vpop.permute.xlu0 %5797
    %vm5814 = vcmask 23552
    %v5815 = vsel %vm5814, %v2286, %v2986
    %v5816 = vsel %vm5814, %v2293, %v2988
    %v5817 = vsel %vm5814, %v2300, %v2990
    %v5818 = vsel %vm5814, %v2307, %v2992
    %v5819 = vsel %vm5814, %v2314, %v2994
    %v5820 = vsel %vm5814, %v2321, %v2996
    %v5821 = vsel %vm5814, %v2328, %v2998
    %v5822 = vsel %vm5814, %v2335, %v3000
    %v5823 = vsel %vm5814, %v2342, %v3002
    %v5824 = vsel %vm5814, %v2349, %v3004
    %v5825 = vsel %vm5814, %v2356, %v3006
    %v5826 = vsel %vm5814, %v2363, %v3008
    %v5827 = vsel %vm5814, %v2370, %v3010
    %v5828 = vsel %vm5814, %v2377, %v3012
    %v5829 = vsel %vm5814, %v2384, %v3014
    %vm5830 = vcmask 48128
    %v5831 = vsel %vm5830, %v5815, %v3196
    %v5832 = vsel %vm5830, %v5816, %v3198
    %v5833 = vsel %vm5830, %v5817, %v3200
    %v5834 = vsel %vm5830, %v5818, %v3202
    %v5835 = vsel %vm5830, %v5819, %v3204
    %v5836 = vsel %vm5830, %v5820, %v3206
    %v5837 = vsel %vm5830, %v5821, %v3208
    %v5838 = vsel %vm5830, %v5822, %v3210
    %v5839 = vsel %vm5830, %v5823, %v3212
    %v5840 = vsel %vm5830, %v5824, %v3214
    %v5841 = vsel %vm5830, %v5825, %v3216
    %v5842 = vsel %vm5830, %v5826, %v3218
    %v5843 = vsel %vm5830, %v5827, %v3220
    %v5844 = vsel %vm5830, %v5828, %v3222
    %v5845 = vsel %vm5830, %v5829, %v3224
    %vm5846 = vcmask 72704
    %v5847 = vsel %vm5846, %v5831, %v3406
    %v5848 = vsel %vm5846, %v5832, %v3408
    %v5849 = vsel %vm5846, %v5833, %v3410
    %v5850 = vsel %vm5846, %v5834, %v3412
    %v5851 = vsel %vm5846, %v5835, %v3414
    %v5852 = vsel %vm5846, %v5836, %v3416
    %v5853 = vsel %vm5846, %v5837, %v3418
    %v5854 = vsel %vm5846, %v5838, %v3420
    %v5855 = vsel %vm5846, %v5839, %v3422
    %v5856 = vsel %vm5846, %v5840, %v3424
    %v5857 = vsel %vm5846, %v5841, %v3426
    %v5858 = vsel %vm5846, %v5842, %v3428
    %v5859 = vsel %vm5846, %v5843, %v3430
    %v5860 = vsel %vm5846, %v5844, %v3432
    %v5861 = vsel %vm5846, %v5845, %v3434
    %vm5862 = vcmask 97280
    %v5863 = vsel %vm5862, %v5847, %v4075
    %v5864 = vsel %vm5862, %v5848, %v4077
    %v5865 = vsel %vm5862, %v5849, %v4079
    %v5866 = vsel %vm5862, %v5850, %v4081
    %v5867 = vsel %vm5862, %v5851, %v4083
    %v5868 = vsel %vm5862, %v5852, %v4085
    %v5869 = vsel %vm5862, %v5853, %v4087
    %v5870 = vsel %vm5862, %v5854, %v4089
    %v5871 = vsel %vm5862, %v5847, %v4091
    %v5872 = vsel %vm5862, %v5855, %v4093
    %v5873 = vsel %vm5862, %v5856, %v4095
    %v5874 = vsel %vm5862, %v5857, %v4097
    %v5875 = vsel %vm5862, %v5858, %v4099
    %v5876 = vsel %vm5862, %v5859, %v4101
    %v5877 = vsel %vm5862, %v5860, %v4103
    %v5878 = vsel %vm5862, %v5861, %v4105
    %vm5879 = vcmask 121856
    %v5880 = vsel %vm5879, %v5863, %v4747
    %v5881 = vsel %vm5879, %v5864, %v4749
    %v5882 = vsel %vm5879, %v5865, %v4751
    %v5883 = vsel %vm5879, %v5866, %v4753
    %v5884 = vsel %vm5879, %v5867, %v4755
    %v5885 = vsel %vm5879, %v5868, %v4757
    %v5886 = vsel %vm5879, %v5869, %v4759
    %v5887 = vsel %vm5879, %v5870, %v4761
    %v5888 = vsel %vm5879, %v5871, %v4763
    %v5889 = vsel %vm5879, %v5872, %v4765
    %v5890 = vsel %vm5879, %v5873, %v4767
    %v5891 = vsel %vm5879, %v5874, %v4769
    %v5892 = vsel %vm5879, %v5875, %v4771
    %v5893 = vsel %vm5879, %v5876, %v4773
    %v5894 = vsel %vm5879, %v5877, %v4775
    %v5895 = vsel %vm5879, %v5878, %v4777
    %vm5896 = vcmask 146432
    %v5897 = vsel %vm5896, %v5880, %v4971
    %v5898 = vsel %vm5896, %v5881, %v4973
    %v5899 = vsel %vm5896, %v5882, %v4975
    %v5900 = vsel %vm5896, %v5883, %v4977
    %v5901 = vsel %vm5896, %v5884, %v4979
    %v5902 = vsel %vm5896, %v5885, %v4981
    %v5903 = vsel %vm5896, %v5886, %v4983
    %v5904 = vsel %vm5896, %v5887, %v4985
    %v5905 = vsel %vm5896, %v5888, %v4987
    %v5906 = vsel %vm5896, %v5889, %v4989
    %v5907 = vsel %vm5896, %v5890, %v4991
    %v5908 = vsel %vm5896, %v5891, %v4993
    %v5909 = vsel %vm5896, %v5892, %v4995
    %v5910 = vsel %vm5896, %v5893, %v4997
    %v5911 = vsel %vm5896, %v5894, %v4999
    %v5912 = vsel %vm5896, %v5895, %v5001
    %vm5913 = vcmask 171008
    %v5914 = vsel %vm5913, %v5897, %v5195
    %v5915 = vsel %vm5913, %v5898, %v5197
    %v5916 = vsel %vm5913, %v5899, %v5199
    %v5917 = vsel %vm5913, %v5900, %v5201
    %v5918 = vsel %vm5913, %v5901, %v5203
    %v5919 = vsel %vm5913, %v5902, %v5205
    %v5920 = vsel %vm5913, %v5903, %v5207
    %v5921 = vsel %vm5913, %v5904, %v5209
    %v5922 = vsel %vm5913, %v5905, %v5211
    %v5923 = vsel %vm5913, %v5906, %v5213
    %v5924 = vsel %vm5913, %v5907, %v5215
    %v5925 = vsel %vm5913, %v5908, %v5217
    %v5926 = vsel %vm5913, %v5909, %v5219
    %v5927 = vsel %vm5913, %v5910, %v5221
    %v5928 = vsel %vm5913, %v5911, %v5223
    %v5929 = vsel %vm5913, %v5912, %v5225
    %vm5930 = vcmask 195584
    %v5931 = vsel %vm5930, %v5914, %v5321
    %v5932 = vsel %vm5930, %v5915, %v5323
    %v5933 = vsel %vm5930, %v5916, %v5325
    %v5934 = vsel %vm5930, %v5917, %v5327
    %v5935 = vsel %vm5930, %v5918, %v5329
    %v5936 = vsel %vm5930, %v5919, %v5331
    %v5937 = vsel %vm5930, %v5920, %v5333
    %v5938 = vsel %vm5930, %v5921, %v5335
    %v5939 = vsel %vm5930, %v5922, %v5337
    %v5940 = vsel %vm5930, %v5923, %v5339
    %v5941 = vsel %vm5930, %v5924, %v5341
    %v5942 = vsel %vm5930, %v5925, %v5343
    %v5943 = vsel %vm5930, %v5926, %v5345
    %v5944 = vsel %vm5930, %v5927, %v5347
    %v5945 = vsel %vm5930, %v5928, %v5349
    %v5946 = vsel %vm5930, %v5929, %v5351
    %vm5947 = vcmask 220160
    %v5948 = vsel %vm5947, %v5931, %v5447
    %v5949 = vsel %vm5947, %v5932, %v5449
    %v5950 = vsel %vm5947, %v5933, %v5451
    %v5951 = vsel %vm5947, %v5934, %v5453
    %v5952 = vsel %vm5947, %v5935, %v5455
    %v5953 = vsel %vm5947, %v5936, %v5457
    %v5954 = vsel %vm5947, %v5937, %v5459
    %v5955 = vsel %vm5947, %v5938, %v5461
    %v5956 = vsel %vm5947, %v5939, %v5463
    %v5957 = vsel %vm5947, %v5940, %v5465
    %v5958 = vsel %vm5947, %v5941, %v5467
    %v5959 = vsel %vm5947, %v5942, %v5469
    %v5960 = vsel %vm5947, %v5943, %v5471
    %v5961 = vsel %vm5947, %v5944, %v5473
    %v5962 = vsel %vm5947, %v5945, %v5475
    %v5963 = vsel %vm5947, %v5946, %v5477
    %vm5964 = vcmask 244736
    %v5965 = vsel %vm5964, %v5948, %v5517
    %v5966 = vsel %vm5964, %v5949, %v5519
    %v5967 = vsel %vm5964, %v5950, %v5521
    %v5968 = vsel %vm5964, %v5951, %v5523
    %v5969 = vsel %vm5964, %v5952, %v5525
    %v5970 = vsel %vm5964, %v5953, %v5527
    %v5971 = vsel %vm5964, %v5954, %v5529
    %v5972 = vsel %vm5964, %v5955, %v5531
    %v5973 = vsel %vm5964, %v5956, %v5533
    %v5974 = vsel %vm5964, %v5957, %v5535
    %v5975 = vsel %vm5964, %v5958, %v5537
    %v5976 = vsel %vm5964, %v5959, %v5539
    %v5977 = vsel %vm5964, %v5960, %v5541
    %v5978 = vsel %vm5964, %v5961, %v5543
    %v5979 = vsel %vm5964, %v5962, %v5545
    %v5980 = vsel %vm5964, %v5963, %v5547
    %vm5981 = vcmask 269312
    %v5982 = vsel %vm5981, %v5965, %v5587
    %v5983 = vsel %vm5981, %v5966, %v5589
    %v5984 = vsel %vm5981, %v5967, %v5591
    %v5985 = vsel %vm5981, %v5968, %v5593
    %v5986 = vsel %vm5981, %v5969, %v5595
    %v5987 = vsel %vm5981, %v5970, %v5597
    %v5988 = vsel %vm5981, %v5971, %v5599
    %v5989 = vsel %vm5981, %v5972, %v5601
    %v5990 = vsel %vm5981, %v5973, %v5603
    %v5991 = vsel %vm5981, %v5974, %v5605
    %v5992 = vsel %vm5981, %v5975, %v5607
    %v5993 = vsel %vm5981, %v5976, %v5609
    %v5994 = vsel %vm5981, %v5977, %v5611
    %v5995 = vsel %vm5981, %v5978, %v5613
    %v5996 = vsel %vm5981, %v5979, %v5615
    %v5997 = vsel %vm5981, %v5980, %v5617
    %vm5998 = vcmask 293888
    %v5999 = vsel %vm5998, %v5982, %v5635
    %v6000 = vsel %vm5998, %v5983, %v5637
    %v6001 = vsel %vm5998, %v5984, %v5639
    %v6002 = vsel %vm5998, %v5985, %v5641
    %v6003 = vsel %vm5998, %v5986, %v5643
    %v6004 = vsel %vm5998, %v5987, %v5645
    %v6005 = vsel %vm5998, %v5988, %v5647
    %v6006 = vsel %vm5998, %v5989, %v5649
    %v6007 = vsel %vm5998, %v5990, %v5651
    %v6008 = vsel %vm5998, %v5991, %v5653
    %v6009 = vsel %vm5998, %v5992, %v5655
    %v6010 = vsel %vm5998, %v5993, %v5657
    %v6011 = vsel %vm5998, %v5994, %v5659
    %v6012 = vsel %vm5998, %v5995, %v5661
    %v6013 = vsel %vm5998, %v5996, %v5663
    %v6014 = vsel %vm5998, %v5997, %v5649
    %vm6015 = vcmask 318464
    %v6016 = vsel %vm6015, %v5999, %v5680
    %v6017 = vsel %vm6015, %v6000, %v5682
    %v6018 = vsel %vm6015, %v6001, %v5684
    %v6019 = vsel %vm6015, %v6002, %v5686
    %v6020 = vsel %vm6015, %v6003, %v5688
    %v6021 = vsel %vm6015, %v6004, %v5690
    %v6022 = vsel %vm6015, %v6005, %v5692
    %v6023 = vsel %vm6015, %v6006, %v5694
    %v6024 = vsel %vm6015, %v6007, %v5696
    %v6025 = vsel %vm6015, %v6008, %v5698
    %v6026 = vsel %vm6015, %v6009, %v5700
    %v6027 = vsel %vm6015, %v6010, %v5702
    %v6028 = vsel %vm6015, %v6011, %v5704
    %v6029 = vsel %vm6015, %v6012, %v5706
    %v6030 = vsel %vm6015, %v6013, %v5708
    %v6031 = vsel %vm6015, %v6014, %v5694
    %vm6032 = vcmask 343040
    %v6033 = vsel %vm6032, %v6016, %v5725
    %v6034 = vsel %vm6032, %v6017, %v5727
    %v6035 = vsel %vm6032, %v6018, %v5729
    %v6036 = vsel %vm6032, %v6019, %v5731
    %v6037 = vsel %vm6032, %v6020, %v5733
    %v6038 = vsel %vm6032, %v6021, %v5735
    %v6039 = vsel %vm6032, %v6022, %v5737
    %v6040 = vsel %vm6032, %v6023, %v5739
    %v6041 = vsel %vm6032, %v6024, %v5741
    %v6042 = vsel %vm6032, %v6025, %v5743
    %v6043 = vsel %vm6032, %v6026, %v5745
    %v6044 = vsel %vm6032, %v6027, %v5747
    %v6045 = vsel %vm6032, %v6028, %v5749
    %v6046 = vsel %vm6032, %v6029, %v5751
    %v6047 = vsel %vm6032, %v6030, %v5753
    %v6048 = vsel %vm6032, %v6031, %v5739
    %vm6049 = vcmask 367616
    %v6050 = vsel %vm6049, %v6033, %v5770
    %v6051 = vsel %vm6049, %v6034, %v5772
    %v6052 = vsel %vm6049, %v6035, %v5774
    %v6053 = vsel %vm6049, %v6036, %v5776
    %v6054 = vsel %vm6049, %v6037, %v5778
    %v6055 = vsel %vm6049, %v6038, %v5780
    %v6056 = vsel %vm6049, %v6039, %v5782
    %v6057 = vsel %vm6049, %v6040, %v5784
    %v6058 = vsel %vm6049, %v6041, %v5786
    %v6059 = vsel %vm6049, %v6042, %v5788
    %v6060 = vsel %vm6049, %v6043, %v5790
    %v6061 = vsel %vm6049, %v6044, %v5792
    %v6062 = vsel %vm6049, %v6045, %v5794
    %v6063 = vsel %vm6049, %v6046, %v5796
    %v6064 = vsel %vm6049, %v6047, %v5798
    %v6065 = vsel %vm6049, %v6048, %v5784
    %v6066 = vld [vmem:[%s1] sm:$0xff]
    %v6067 = vld [vmem:[%s1 + $0x8] sm:$0xff]
    %v6068 = vld [vmem:[%s1 + $0x10] sm:$0xff]
    %v6069 = vld [vmem:[%s1 + $0x18] sm:$0xff]
    %v6070 = vld [vmem:[%s1 + $0x20] sm:$0xff]
    %v6071 = vld [vmem:[%s1 + $0x28] sm:$0xff]
    %vm6072 = vcmask 392192
    %v6074 = vsel %vm6072, %v6050, 0
    %v6077 = vsel %vm6072, %v6051, 0
    %v6080 = vsel %vm6072, %v6052, 0
    %v6083 = vsel %vm6072, %v6053, 0
    %v6086 = vsel %vm6072, %v6054, 0
    %v6089 = vsel %vm6072, %v6055, 0
    %v6092 = vsel %vm6072, %v6056, 0
    %v6095 = vsel %vm6072, %v6057, 0
    %v6098 = vsel %vm6072, %v6058, 0
    %v6101 = vsel %vm6072, %v6059, 0
    %v6104 = vsel %vm6072, %v6060, 0
    %v6107 = vsel %vm6072, %v6061, 0
    %v6110 = vsel %vm6072, %v6062, 0
    %v6113 = vsel %vm6072, %v6063, 0
    %v6116 = vsel %vm6072, %v6064, 0
    %v6119 = vsel %vm6072, %v6065, 0
    %6121 = vmatprep.subr.mxu0 0.0
    %6122 = vmatpush1.msra.mxu0 %v6066
    %6123 = vmatprep.subr.mxu0 0.0
    %6124 = vmatpush1.msra.mxu0 %v6067
    %6125 = vmatprep.subr.mxu0 0.0
    %6126 = vmatpush1.msra.mxu0 %v6068
    %6127 = vmatprep.subr.mxu0 0.0
    %6128 = vmatpush1.msra.mxu0 %v6069
    %6129 = vmatprep.subr.mxu0 0.0
    %6130 = vmatpush1.msra.mxu0 %v6070
    %6131 = vmatprep.subr.mxu0 0.0
    %6132 = vmatpush1.msra.mxu0 %v6071
    %6133 = vmatprep.subr.mxu0 0.0
    %6134 = vmatpush1.msra.mxu0 0.0
    %6135 = vmatprep.subr.mxu0 0.0
    %6136 = vmatpush1.msra.mxu0 0.0
    %6137 = vmatprep.subr.mxu0 0.0
    %6138 = vmatpush1.msra.mxu0 0.0
    %6139 = vmatprep.subr.mxu0 0.0
    %6140 = vmatpush1.msra.mxu0 0.0
    %6141 = vmatprep.subr.mxu0 0.0
    %6142 = vmatpush1.msra.mxu0 0.0
    %6143 = vmatprep.subr.mxu0 0.0
    %6144 = vmatpush1.msra.mxu0 0.0
    %6145 = vmatprep.subr.mxu0 0.0
    %6146 = vmatpush1.msra.mxu0 0.0
    %6147 = vmatprep.subr.mxu0 0.0
    %6148 = vmatpush1.msra.mxu0 0.0
    %6149 = vmatprep.subr.mxu0 0.0
    %6150 = vmatpush1.msra.mxu0 0.0
    %6151 = vmatprep.subr.mxu0 0.0
    %6152 = vmatpush1.msra.mxu0 0.0
    %6153 = vmatprep.subr.mxu0 0.0
    %6154 = vmatpush1.msra.mxu0 0.0
    %6155 = vmatprep.subr.mxu0 0.0
    %6156 = vmatpush1.msra.mxu0 0.0
    %6157 = vmatprep.subr.mxu0 0.0
    %6158 = vmatpush1.msra.mxu0 0.0
    %6159 = vmatprep.subr.mxu0 0.0
    %6160 = vmatpush1.msra.mxu0 0.0
    %6161 = vmatprep.subr.mxu0 0.0
    %6162 = vmatpush1.msra.mxu0 0.0
    %6163 = vmatprep.subr.mxu0 0.0
    %6164 = vmatpush1.msra.mxu0 0.0
    %6165 = vmatprep.subr.mxu0 0.0
    %6166 = vmatpush1.msra.mxu0 0.0
    %6167 = vmatprep.subr.mxu0 0.0
    %6168 = vmatpush1.msra.mxu0 0.0
    %6169 = vmatprep.subr.mxu0 0.0
    %6170 = vmatpush1.msra.mxu0 0.0
    %6171 = vmatprep.subr.mxu0 0.0
    %6172 = vmatpush1.msra.mxu0 0.0
    %6173 = vmatprep.subr.mxu0 0.0
    %6174 = vmatpush1.msra.mxu0 0.0
    %6175 = vmatprep.subr.mxu0 0.0
    %6176 = vmatpush1.msra.mxu0 0.0
    %6177 = vmatprep.subr.mxu0 0.0
    %6178 = vmatpush1.msra.mxu0 0.0
    %6179 = vmatprep.subr.mxu0 0.0
    %6180 = vmatpush1.msra.mxu0 0.0
    %6181 = vmatprep.subr.mxu0 0.0
    %6182 = vmatpush1.msra.mxu0 0.0
    %6183 = vmatprep.subr.mxu0 0.0
    %6184 = vmatpush1.msra.mxu0 0.0
    %6185 = vmatprep.mubr.f32.mxu0 0.0
    %6186 = vmatmul.mubr.f32.gmra.mrb[0].mxu0 %v6074
    %v6187 = vpop.f32.mrb[0].mxu0
    %v6188 = vadd.f32 0.0, %v6187
    %v6189 = vpop.f32.mrb[0].mxu0
    %6190 = vmatprep.mubr.f32.mxu0 0.0
    %6191 = vmatmul.mubr.f32.gmra.mrb[0].mxu0 %v6077
    %v6192 = vpop.f32.mrb[0].mxu0
    %v6193 = vadd.f32 0.0, %v6192
    %v6194 = vpop.f32.mrb[0].mxu0
    %6195 = vmatprep.mubr.f32.mxu0 0.0
    %6196 = vmatmul.mubr.f32.gmra.mrb[0].mxu0 %v6080
    %v6197 = vpop.f32.mrb[0].mxu0
    %v6198 = vadd.f32 0.0, %v6197
    %v6199 = vpop.f32.mrb[0].mxu0
    %6200 = vmatprep.mubr.f32.mxu0 0.0
    %6201 = vmatmul.mubr.f32.gmra.mrb[0].mxu0 %v6083
    %v6202 = vpop.f32.mrb[0].mxu0
    %v6203 = vadd.f32 0.0, %v6202
    %v6204 = vpop.f32.mrb[0].mxu0
    %6205 = vmatprep.mubr.f32.mxu0 0.0
    %6206 = vmatmul.mubr.f32.gmra.mrb[0].mxu0 %v6086
    %v6207 = vpop.f32.mrb[0].mxu0
    %v6208 = vadd.f32 0.0, %v6207
    %v6209 = vpop.f32.mrb[0].mxu0
    %6210 = vmatprep.mubr.f32.mxu0 0.0
    %6211 = vmatmul.mubr.f32.gmra.mrb[0].mxu0 %v6089
    %v6212 = vpop.f32.mrb[0].mxu0
    %v6213 = vadd.f32 0.0, %v6212
    %v6214 = vpop.f32.mrb[0].mxu0
    %6215 = vmatprep.mubr.f32.mxu0 0.0
    %6216 = vmatmul.mubr.f32.gmra.mrb[0].mxu0 %v6092
    %v6217 = vpop.f32.mrb[0].mxu0
    %v6218 = vadd.f32 0.0, %v6217
    %v6219 = vpop.f32.mrb[0].mxu0
    %6220 = vmatprep.mubr.f32.mxu0 0.0
    %6221 = vmatmul.mubr.f32.gmra.mrb[0].mxu0 %v6095
    %v6222 = vpop.f32.mrb[0].mxu0
    %v6223 = vadd.f32 0.0, %v6222
    %v6224 = vpop.f32.mrb[0].mxu0
    %6225 = vmatprep.mubr.f32.mxu0 0.0
    %6226 = vmatmul.mubr.f32.gmra.mrb[0].mxu0 %v6098
    %v6227 = vpop.f32.mrb[0].mxu0
    %v6228 = vadd.f32 0.0, %v6227
    %v6229 = vpop.f32.mrb[0].mxu0
    %6230 = vmatprep.mubr.f32.mxu0 0.0
    %6231 = vmatmul.mubr.f32.gmra.mrb[0].mxu0 %v6101
    %v6232 = vpop.f32.mrb[0].mxu0
    %v6233 = vadd.f32 0.0, %v6232
    %v6234 = vpop.f32.mrb[0].mxu0
    %6235 = vmatprep.mubr.f32.mxu0 0.0
    %6236 = vmatmul.mubr.f32.gmra.mrb[0].mxu0 %v6104
    %v6237 = vpop.f32.mrb[0].mxu0
    %v6238 = vadd.f32 0.0, %v6237
    %v6239 = vpop.f32.mrb[0].mxu0
    %6240 = vmatprep.mubr.f32.mxu0 0.0
    %6241 = vmatmul.mubr.f32.gmra.mrb[0].mxu0 %v6107
    %v6242 = vpop.f32.mrb[0].mxu0
    %v6243 = vadd.f32 0.0, %v6242
    %v6244 = vpop.f32.mrb[0].mxu0
    %6245 = vmatprep.mubr.f32.mxu0 0.0
    %6246 = vmatmul.mubr.f32.gmra.mrb[0].mxu0 %v6110
    %v6247 = vpop.f32.mrb[0].mxu0
    %v6248 = vadd.f32 0.0, %v6247
    %v6249 = vpop.f32.mrb[0].mxu0
    %6250 = vmatprep.mubr.f32.mxu0 0.0
    %6251 = vmatmul.mubr.f32.gmra.mrb[0].mxu0 %v6113
    %v6252 = vpop.f32.mrb[0].mxu0
    %v6253 = vadd.f32 0.0, %v6252
    %v6254 = vpop.f32.mrb[0].mxu0
    %6255 = vmatprep.mubr.f32.mxu0 0.0
    %6256 = vmatmul.mubr.f32.gmra.mrb[0].mxu0 %v6116
    %v6257 = vpop.f32.mrb[0].mxu0
    %v6258 = vadd.f32 0.0, %v6257
    %v6259 = vpop.f32.mrb[0].mxu0
    %6260 = vmatprep.mubr.f32.mxu0 0.0
    %6261 = vmatmul.mubr.f32.gmra.mrb[0].mxu0 %v6119
    %v6262 = vpop.f32.mrb[0].mxu0
    %v6263 = vadd.f32 0.0, %v6262
    %v6264 = vpop.f32.mrb[0].mxu0
    %6265 = vdwg.mxu0
    %vm6266 = vcmp.ge.f32.partialorder %v6188, 0.0
    %vm6267 = vcmp.ge.f32.partialorder %v6193, 0.0
    %vm6268 = vcmp.ge.f32.partialorder %v6198, 0.0
    %vm6269 = vcmp.ge.f32.partialorder %v6203, 0.0
    %vm6270 = vcmp.ge.f32.partialorder %v6208, 0.0
    %vm6271 = vcmp.ge.f32.partialorder %v6213, 0.0
    %vm6272 = vcmp.ge.f32.partialorder %v6218, 0.0
    %vm6273 = vcmp.ge.f32.partialorder %v6223, 0.0
    %vm6274 = vcmp.ge.f32.partialorder %v6228, 0.0
    %vm6275 = vcmp.ge.f32.partialorder %v6233, 0.0
    %vm6276 = vcmp.ge.f32.partialorder %v6238, 0.0
    %vm6277 = vcmp.ge.f32.partialorder %v6243, 0.0
    %vm6278 = vcmp.ge.f32.partialorder %v6248, 0.0
    %vm6279 = vcmp.ge.f32.partialorder %v6253, 0.0
    %vm6280 = vcmp.ge.f32.partialorder %v6258, 0.0
    %vm6281 = vcmp.ge.f32.partialorder %v6263, 0.0
    %v6282 = vmul.f32 %v6188, 0.2
    %v6283 = vmul.f32 %v6193, 0.2
    %v6284 = vmul.f32 %v6198, 0.2
    %v6285 = vmul.f32 %v6203, 0.2
    %v6286 = vmul.f32 %v6208, 0.2
    %v6287 = vmul.f32 %v6213, 0.2
    %v6288 = vmul.f32 %v6218, 0.2
    %v6289 = vmul.f32 %v6223, 0.2
    %v6290 = vmul.f32 %v6228, 0.2
    %v6291 = vmul.f32 %v6233, 0.2
    %v6292 = vmul.f32 %v6238, 0.2
    %v6293 = vmul.f32 %v6243, 0.2
    %v6294 = vmul.f32 %v6248, 0.2
    %v6295 = vmul.f32 %v6253, 0.2
    %v6296 = vmul.f32 %v6258, 0.2
    %v6297 = vmul.f32 %v6263, 0.2
    %v6298 = vsel %vm6266, %v6188, %v6282
    %v6299 = vsel %vm6267, %v6193, %v6283
    %v6300 = vsel %vm6268, %v6198, %v6284
    %v6301 = vsel %vm6269, %v6203, %v6285
    %v6302 = vsel %vm6270, %v6208, %v6286
    %v6303 = vsel %vm6271, %v6213, %v6287
    %v6304 = vsel %vm6272, %v6218, %v6288
    %v6305 = vsel %vm6273, %v6223, %v6289
    %v6306 = vsel %vm6274, %v6228, %v6290
    %v6307 = vsel %vm6275, %v6233, %v6291
    %v6308 = vsel %vm6276, %v6238, %v6292
    %v6309 = vsel %vm6277, %v6243, %v6293
    %v6310 = vsel %vm6278, %v6248, %v6294
    %v6311 = vsel %vm6279, %v6253, %v6295
    %v6312 = vsel %vm6280, %v6258, %v6296
    %v6313 = vsel %vm6281, %v6263, %v6297
    %v6330 = vrot.slane %v6298, 7
    %v6331 = vrot.slane %v6299, 7
    %v6332 = vrot.slane %v6300, 7
    %v6333 = vrot.slane %v6301, 7
    %v6334 = vrot.slane %v6302, 7
    %v6335 = vrot.slane %v6303, 7
    %v6336 = vrot.slane %v6304, 7
    %v6337 = vrot.slane %v6305, 7
    %v6338 = vrot.slane %v6306, 7
    %v6339 = vrot.slane %v6307, 7
    %v6340 = vrot.slane %v6308, 7
    %v6341 = vrot.slane %v6309, 7
    %v6342 = vrot.slane %v6310, 7
    %v6343 = vrot.slane %v6311, 7
    %v6344 = vrot.slane %v6312, 7
    %v6345 = vrot.slane %v6313, 7
    %v6362 = vsel %vm144, 0.0, %v6330
    %v6363 = vsel %vm144, 0.0, %v6331
    %v6364 = vsel %vm144, 0.0, %v6332
    %v6365 = vsel %vm144, 0.0, %v6333
    %v6366 = vsel %vm144, 0.0, %v6334
    %v6367 = vsel %vm144, 0.0, %v6335
    %v6368 = vsel %vm144, 0.0, %v6336
    %v6369 = vsel %vm144, 0.0, %v6337
    %v6370 = vsel %vm144, 0.0, %v6338
    %v6371 = vsel %vm144, 0.0, %v6339
    %v6372 = vsel %vm144, 0.0, %v6340
    %v6373 = vsel %vm144, 0.0, %v6341
    %v6374 = vsel %vm144, 0.0, %v6342
    %v6375 = vsel %vm144, 0.0, %v6343
    %v6376 = vsel %vm144, 0.0, %v6344
    %v6377 = vsel %vm144, 0.0, %v6345
    %v6378 = vsel %vm144, %v6330, 0.0
    %v6379 = vsel %vm144, %v6331, 0.0
    %v6380 = vsel %vm144, %v6332, 0.0
    %v6381 = vsel %vm144, %v6333, 0.0
    %v6382 = vsel %vm144, %v6334, 0.0
    %v6383 = vsel %vm144, %v6335, 0.0
    %v6384 = vsel %vm144, %v6336, 0.0
    %v6385 = vsel %vm144, %v6337, 0.0
    %v6386 = vsel %vm144, %v6338, 0.0
    %v6387 = vsel %vm144, %v6339, 0.0
    %v6388 = vsel %vm144, %v6340, 0.0
    %v6389 = vsel %vm144, %v6341, 0.0
    %v6390 = vsel %vm144, %v6342, 0.0
    %v6391 = vsel %vm144, %v6343, 0.0
    %v6392 = vsel %vm144, %v6344, 0.0
    %v6393 = vsel %vm144, %v6345, 0.0
    %v6426 = vcombine.high %v6362, %v6362
    %v6428 = vunpack.c.l.s4 1983009808
    %v6429 = vunpack.c.0.s8 %v6428
    %v6430 = vlaneseq
    %v6431 = vshrl.u32 %v6430, 7
    %v6432 = vsub.s32 %v6429, %v6431
    %v6433 = vrot.slane %v6362, %v6432
    %v6435 = vunpack.c.l.s4 1983009808
    %v6436 = vunpack.c.0.s8 %v6435
    %v6437 = vlaneseq
    %v6438 = vshrl.u32 %v6437, 7
    %v6439 = vsub.s32 %v6436, %v6438
    %v6440 = vrot.slane %v6426, %v6439
    %v6441 = vcombine.high %v6433, %v6433
    %v6442 = vcombine.high %v6440, %v6440
    %v6444 = vunpack.c.l.s4 1983009808
    %v6445 = vunpack.c.0.s8 %v6444
    %v6446 = vlaneseq
    %v6447 = vshrl.u32 %v6446, 7
    %v6448 = vsub.s32 %v6445, %v6447
    %v6449 = vrot.slane %v6378, %v6448
    %v6450 = vcombine.high %v6363, %v6363
    %v6452 = vunpack.c.l.s4 1983009808
    %v6453 = vunpack.c.0.s8 %v6452
    %v6454 = vlaneseq
    %v6455 = vshrl.u32 %v6454, 7
    %v6456 = vsub.s32 %v6453, %v6455
    %v6457 = vrot.slane %v6363, %v6456
    %v6459 = vunpack.c.l.s4 1983009808
    %v6460 = vunpack.c.0.s8 %v6459
    %v6461 = vlaneseq
    %v6462 = vshrl.u32 %v6461, 7
    %v6463 = vsub.s32 %v6460, %v6462
    %v6464 = vrot.slane %v6450, %v6463
    %v6465 = vcombine.high %v6457, %v6457
    %v6466 = vcombine.high %v6464, %v6464
    %v6468 = vunpack.c.l.s4 1983009808
    %v6469 = vunpack.c.0.s8 %v6468
    %v6470 = vlaneseq
    %v6471 = vshrl.u32 %v6470, 7
    %v6472 = vsub.s32 %v6469, %v6471
    %v6473 = vrot.slane %v6379, %v6472
    %v6474 = vcombine.high %v6364, %v6364
    %v6476 = vunpack.c.l.s4 1983009808
    %v6477 = vunpack.c.0.s8 %v6476
    %v6478 = vlaneseq
    %v6479 = vshrl.u32 %v6478, 7
    %v6480 = vsub.s32 %v6477, %v6479
    %v6481 = vrot.slane %v6364, %v6480
    %v6483 = vunpack.c.l.s4 1983009808
    %v6484 = vunpack.c.0.s8 %v6483
    %v6485 = vlaneseq
    %v6486 = vshrl.u32 %v6485, 7
    %v6487 = vsub.s32 %v6484, %v6486
    %v6488 = vrot.slane %v6474, %v6487
    %v6489 = vcombine.high %v6481, %v6481
    %v6490 = vcombine.high %v6488, %v6488
    %v6492 = vunpack.c.l.s4 1983009808
    %v6493 = vunpack.c.0.s8 %v6492
    %v6494 = vlaneseq
    %v6495 = vshrl.u32 %v6494, 7
    %v6496 = vsub.s32 %v6493, %v6495
    %v6497 = vrot.slane %v6380, %v6496
    %v6498 = vcombine.high %v6365, %v6365
    %v6500 = vunpack.c.l.s4 1983009808
    %v6501 = vunpack.c.0.s8 %v6500
    %v6502 = vlaneseq
    %v6503 = vshrl.u32 %v6502, 7
    %v6504 = vsub.s32 %v6501, %v6503
    %v6505 = vrot.slane %v6365, %v6504
    %v6507 = vunpack.c.l.s4 1983009808
    %v6508 = vunpack.c.0.s8 %v6507
    %v6509 = vlaneseq
    %v6510 = vshrl.u32 %v6509, 7
    %v6511 = vsub.s32 %v6508, %v6510
    %v6512 = vrot.slane %v6498, %v6511
    %v6513 = vcombine.high %v6505, %v6505
    %v6514 = vcombine.high %v6512, %v6512
    %v6516 = vunpack.c.l.s4 1983009808
    %v6517 = vunpack.c.0.s8 %v6516
    %v6518 = vlaneseq
    %v6519 = vshrl.u32 %v6518, 7
    %v6520 = vsub.s32 %v6517, %v6519
    %v6521 = vrot.slane %v6381, %v6520
    %v6522 = vcombine.high %v6366, %v6366
    %v6524 = vunpack.c.l.s4 1983009808
    %v6525 = vunpack.c.0.s8 %v6524
    %v6526 = vlaneseq
    %v6527 = vshrl.u32 %v6526, 7
    %v6528 = vsub.s32 %v6525, %v6527
    %v6529 = vrot.slane %v6366, %v6528
    %v6531 = vunpack.c.l.s4 1983009808
    %v6532 = vunpack.c.0.s8 %v6531
    %v6533 = vlaneseq
    %v6534 = vshrl.u32 %v6533, 7
    %v6535 = vsub.s32 %v6532, %v6534
    %v6536 = vrot.slane %v6522, %v6535
    %v6537 = vcombine.high %v6529, %v6529
    %v6538 = vcombine.high %v6536, %v6536
    %v6540 = vunpack.c.l.s4 1983009808
    %v6541 = vunpack.c.0.s8 %v6540
    %v6542 = vlaneseq
    %v6543 = vshrl.u32 %v6542, 7
    %v6544 = vsub.s32 %v6541, %v6543
    %v6545 = vrot.slane %v6382, %v6544
    %v6546 = vcombine.high %v6367, %v6367
    %v6548 = vunpack.c.l.s4 1983009808
    %v6549 = vunpack.c.0.s8 %v6548
    %v6550 = vlaneseq
    %v6551 = vshrl.u32 %v6550, 7
    %v6552 = vsub.s32 %v6549, %v6551
    %v6553 = vrot.slane %v6367, %v6552
    %v6555 = vunpack.c.l.s4 1983009808
    %v6556 = vunpack.c.0.s8 %v6555
    %v6557 = vlaneseq
    %v6558 = vshrl.u32 %v6557, 7
    %v6559 = vsub.s32 %v6556, %v6558
    %v6560 = vrot.slane %v6546, %v6559
    %v6561 = vcombine.high %v6553, %v6553
    %v6562 = vcombine.high %v6560, %v6560
    %v6564 = vunpack.c.l.s4 1983009808
    %v6565 = vunpack.c.0.s8 %v6564
    %v6566 = vlaneseq
    %v6567 = vshrl.u32 %v6566, 7
    %v6568 = vsub.s32 %v6565, %v6567
    %v6569 = vrot.slane %v6383, %v6568
    %v6570 = vcombine.high %v6368, %v6368
    %v6572 = vunpack.c.l.s4 1983009808
    %v6573 = vunpack.c.0.s8 %v6572
    %v6574 = vlaneseq
    %v6575 = vshrl.u32 %v6574, 7
    %v6576 = vsub.s32 %v6573, %v6575
    %v6577 = vrot.slane %v6368, %v6576
    %v6579 = vunpack.c.l.s4 1983009808
    %v6580 = vunpack.c.0.s8 %v6579
    %v6581 = vlaneseq
    %v6582 = vshrl.u32 %v6581, 7
    %v6583 = vsub.s32 %v6580, %v6582
    %v6584 = vrot.slane %v6570, %v6583
    %v6585 = vcombine.high %v6577, %v6577
    %v6586 = vcombine.high %v6584, %v6584
    %v6588 = vunpack.c.l.s4 1983009808
    %v6589 = vunpack.c.0.s8 %v6588
    %v6590 = vlaneseq
    %v6591 = vshrl.u32 %v6590, 7
    %v6592 = vsub.s32 %v6589, %v6591
    %v6593 = vrot.slane %v6384, %v6592
    %v6594 = vcombine.high %v6369, %v6369
    %v6596 = vunpack.c.l.s4 1983009808
    %v6597 = vunpack.c.0.s8 %v6596
    %v6598 = vlaneseq
    %v6599 = vshrl.u32 %v6598, 7
    %v6600 = vsub.s32 %v6597, %v6599
    %v6601 = vrot.slane %v6369, %v6600
    %v6603 = vunpack.c.l.s4 1983009808
    %v6604 = vunpack.c.0.s8 %v6603
    %v6605 = vlaneseq
    %v6606 = vshrl.u32 %v6605, 7
    %v6607 = vsub.s32 %v6604, %v6606
    %v6608 = vrot.slane %v6594, %v6607
    %v6609 = vcombine.high %v6601, %v6601
    %v6610 = vcombine.high %v6608, %v6608
    %v6612 = vunpack.c.l.s4 1983009808
    %v6613 = vunpack.c.0.s8 %v6612
    %v6614 = vlaneseq
    %v6615 = vshrl.u32 %v6614, 7
    %v6616 = vsub.s32 %v6613, %v6615
    %v6617 = vrot.slane %v6385, %v6616
    %v6618 = vcombine.high %v6370, %v6370
    %v6620 = vunpack.c.l.s4 1983009808
    %v6621 = vunpack.c.0.s8 %v6620
    %v6622 = vlaneseq
    %v6623 = vshrl.u32 %v6622, 7
    %v6624 = vsub.s32 %v6621, %v6623
    %v6625 = vrot.slane %v6370, %v6624
    %v6627 = vunpack.c.l.s4 1983009808
    %v6628 = vunpack.c.0.s8 %v6627
    %v6629 = vlaneseq
    %v6630 = vshrl.u32 %v6629, 7
    %v6631 = vsub.s32 %v6628, %v6630
    %v6632 = vrot.slane %v6618, %v6631
    %v6633 = vcombine.high %v6625, %v6625
    %v6634 = vcombine.high %v6632, %v6632
    %v6636 = vunpack.c.l.s4 1983009808
    %v6637 = vunpack.c.0.s8 %v6636
    %v6638 = vlaneseq
    %v6639 = vshrl.u32 %v6638, 7
    %v6640 = vsub.s32 %v6637, %v6639
    %v6641 = vrot.slane %v6386, %v6640
    %v6642 = vcombine.high %v6371, %v6371
    %v6644 = vunpack.c.l.s4 1983009808
    %v6645 = vunpack.c.0.s8 %v6644
    %v6646 = vlaneseq
    %v6647 = vshrl.u32 %v6646, 7
    %v6648 = vsub.s32 %v6645, %v6647
    %v6649 = vrot.slane %v6371, %v6648
    %v6651 = vunpack.c.l.s4 1983009808
    %v6652 = vunpack.c.0.s8 %v6651
    %v6653 = vlaneseq
    %v6654 = vshrl.u32 %v6653, 7
    %v6655 = vsub.s32 %v6652, %v6654
    %v6656 = vrot.slane %v6642, %v6655
    %v6657 = vcombine.high %v6649, %v6649
    %v6658 = vcombine.high %v6656, %v6656
    %v6660 = vunpack.c.l.s4 1983009808
    %v6661 = vunpack.c.0.s8 %v6660
    %v6662 = vlaneseq
    %v6663 = vshrl.u32 %v6662, 7
    %v6664 = vsub.s32 %v6661, %v6663
    %v6665 = vrot.slane %v6387, %v6664
    %v6666 = vcombine.high %v6372, %v6372
    %v6668 = vunpack.c.l.s4 1983009808
    %v6669 = vunpack.c.0.s8 %v6668
    %v6670 = vlaneseq
    %v6671 = vshrl.u32 %v6670, 7
    %v6672 = vsub.s32 %v6669, %v6671
    %v6673 = vrot.slane %v6372, %v6672
    %v6675 = vunpack.c.l.s4 1983009808
    %v6676 = vunpack.c.0.s8 %v6675
    %v6677 = vlaneseq
    %v6678 = vshrl.u32 %v6677, 7
    %v6679 = vsub.s32 %v6676, %v6678
    %v6680 = vrot.slane %v6666, %v6679
    %v6681 = vcombine.high %v6673, %v6673
    %v6682 = vcombine.high %v6680, %v6680
    %v6684 = vunpack.c.l.s4 1983009808
    %v6685 = vunpack.c.0.s8 %v6684
    %v6686 = vlaneseq
    %v6687 = vshrl.u32 %v6686, 7
    %v6688 = vsub.s32 %v6685, %v6687
    %v6689 = vrot.slane %v6388, %v6688
    %v6690 = vcombine.high %v6373, %v6373
    %v6692 = vunpack.c.l.s4 1983009808
    %v6693 = vunpack.c.0.s8 %v6692
    %v6694 = vlaneseq
    %v6695 = vshrl.u32 %v6694, 7
    %v6696 = vsub.s32 %v6693, %v6695
    %v6697 = vrot.slane %v6373, %v6696
    %v6699 = vunpack.c.l.s4 1983009808
    %v6700 = vunpack.c.0.s8 %v6699
    %v6701 = vlaneseq
    %v6702 = vshrl.u32 %v6701, 7
    %v6703 = vsub.s32 %v6700, %v6702
    %v6704 = vrot.slane %v6690, %v6703
    %v6705 = vcombine.high %v6697, %v6697
    %v6706 = vcombine.high %v6704, %v6704
    %v6708 = vunpack.c.l.s4 1983009808
    %v6709 = vunpack.c.0.s8 %v6708
    %v6710 = vlaneseq
    %v6711 = vshrl.u32 %v6710, 7
    %v6712 = vsub.s32 %v6709, %v6711
    %v6713 = vrot.slane %v6389, %v6712
    %v6714 = vcombine.high %v6374, %v6374
    %v6716 = vunpack.c.l.s4 1983009808
    %v6717 = vunpack.c.0.s8 %v6716
    %v6718 = vlaneseq
    %v6719 = vshrl.u32 %v6718, 7
    %v6720 = vsub.s32 %v6717, %v6719
    %v6721 = vrot.slane %v6374, %v6720
    %v6723 = vunpack.c.l.s4 1983009808
    %v6724 = vunpack.c.0.s8 %v6723
    %v6725 = vlaneseq
    %v6726 = vshrl.u32 %v6725, 7
    %v6727 = vsub.s32 %v6724, %v6726
    %v6728 = vrot.slane %v6714, %v6727
    %v6729 = vcombine.high %v6721, %v6721
    %v6730 = vcombine.high %v6728, %v6728
    %v6732 = vunpack.c.l.s4 1983009808
    %v6733 = vunpack.c.0.s8 %v6732
    %v6734 = vlaneseq
    %v6735 = vshrl.u32 %v6734, 7
    %v6736 = vsub.s32 %v6733, %v6735
    %v6737 = vrot.slane %v6390, %v6736
    %v6738 = vcombine.high %v6375, %v6375
    %v6740 = vunpack.c.l.s4 1983009808
    %v6741 = vunpack.c.0.s8 %v6740
    %v6742 = vlaneseq
    %v6743 = vshrl.u32 %v6742, 7
    %v6744 = vsub.s32 %v6741, %v6743
    %v6745 = vrot.slane %v6375, %v6744
    %v6747 = vunpack.c.l.s4 1983009808
    %v6748 = vunpack.c.0.s8 %v6747
    %v6749 = vlaneseq
    %v6750 = vshrl.u32 %v6749, 7
    %v6751 = vsub.s32 %v6748, %v6750
    %v6752 = vrot.slane %v6738, %v6751
    %v6753 = vcombine.high %v6745, %v6745
    %v6754 = vcombine.high %v6752, %v6752
    %v6756 = vunpack.c.l.s4 1983009808
    %v6757 = vunpack.c.0.s8 %v6756
    %v6758 = vlaneseq
    %v6759 = vshrl.u32 %v6758, 7
    %v6760 = vsub.s32 %v6757, %v6759
    %v6761 = vrot.slane %v6391, %v6760
    %v6762 = vcombine.high %v6376, %v6376
    %v6764 = vunpack.c.l.s4 1983009808
    %v6765 = vunpack.c.0.s8 %v6764
    %v6766 = vlaneseq
    %v6767 = vshrl.u32 %v6766, 7
    %v6768 = vsub.s32 %v6765, %v6767
    %v6769 = vrot.slane %v6376, %v6768
    %v6771 = vunpack.c.l.s4 1983009808
    %v6772 = vunpack.c.0.s8 %v6771
    %v6773 = vlaneseq
    %v6774 = vshrl.u32 %v6773, 7
    %v6775 = vsub.s32 %v6772, %v6774
    %v6776 = vrot.slane %v6762, %v6775
    %v6777 = vcombine.high %v6769, %v6769
    %v6778 = vcombine.high %v6776, %v6776
    %v6780 = vunpack.c.l.s4 1983009808
    %v6781 = vunpack.c.0.s8 %v6780
    %v6782 = vlaneseq
    %v6783 = vshrl.u32 %v6782, 7
    %v6784 = vsub.s32 %v6781, %v6783
    %v6785 = vrot.slane %v6392, %v6784
    %v6786 = vcombine.high %v6377, %v6377
    %v6788 = vunpack.c.l.s4 1983009808
    %v6789 = vunpack.c.0.s8 %v6788
    %v6790 = vlaneseq
    %v6791 = vshrl.u32 %v6790, 7
    %v6792 = vsub.s32 %v6789, %v6791
    %v6793 = vrot.slane %v6377, %v6792
    %v6795 = vunpack.c.l.s4 1983009808
    %v6796 = vunpack.c.0.s8 %v6795
    %v6797 = vlaneseq
    %v6798 = vshrl.u32 %v6797, 7
    %v6799 = vsub.s32 %v6796, %v6798
    %v6800 = vrot.slane %v6786, %v6799
    %v6801 = vcombine.high %v6793, %v6793
    %v6802 = vcombine.high %v6800, %v6800
    %v6804 = vunpack.c.l.s4 1983009808
    %v6805 = vunpack.c.0.s8 %v6804
    %v6806 = vlaneseq
    %v6807 = vshrl.u32 %v6806, 7
    %v6808 = vsub.s32 %v6805, %v6807
    %v6809 = vrot.slane %v6393, %v6808
    %v6810 = vlaneseq
    %v6811 = vshrl.u32 %v6810, 7
    %v6812 = vsub.s32 0, %v6811
    %v6813 = vrot.slane %v6457, %v6812
    %v6814 = vlaneseq
    %v6815 = vshrl.u32 %v6814, 7
    %v6816 = vsub.s32 0, %v6815
    %v6817 = vrot.slane %v6465, %v6816
    %v6818 = vlaneseq
    %v6819 = vshrl.u32 %v6818, 7
    %v6820 = vsub.s32 0, %v6819
    %v6821 = vrot.slane %v6464, %v6820
    %v6822 = vlaneseq
    %v6823 = vshrl.u32 %v6822, 7
    %v6824 = vsub.s32 0, %v6823
    %v6825 = vrot.slane %v6466, %v6824
    %v6826 = vlaneseq
    %v6827 = vshrl.u32 %v6826, 7
    %v6828 = vsub.s32 0, %v6827
    %v6829 = vrot.slane %v6505, %v6828
    %v6830 = vlaneseq
    %v6831 = vshrl.u32 %v6830, 7
    %v6832 = vsub.s32 0, %v6831
    %v6833 = vrot.slane %v6513, %v6832
    %v6834 = vlaneseq
    %v6835 = vshrl.u32 %v6834, 7
    %v6836 = vsub.s32 0, %v6835
    %v6837 = vrot.slane %v6512, %v6836
    %v6838 = vlaneseq
    %v6839 = vshrl.u32 %v6838, 7
    %v6840 = vsub.s32 0, %v6839
    %v6841 = vrot.slane %v6514, %v6840
    %v6842 = vlaneseq
    %v6843 = vshrl.u32 %v6842, 7
    %v6844 = vsub.s32 0, %v6843
    %v6845 = vrot.slane %v6553, %v6844
    %v6846 = vlaneseq
    %v6847 = vshrl.u32 %v6846, 7
    %v6848 = vsub.s32 0, %v6847
    %v6849 = vrot.slane %v6561, %v6848
    %v6850 = vlaneseq
    %v6851 = vshrl.u32 %v6850, 7
    %v6852 = vsub.s32 0, %v6851
    %v6853 = vrot.slane %v6560, %v6852
    %v6854 = vlaneseq
    %v6855 = vshrl.u32 %v6854, 7
    %v6856 = vsub.s32 0, %v6855
    %v6857 = vrot.slane %v6562, %v6856
    %v6858 = vlaneseq
    %v6859 = vshrl.u32 %v6858, 7
    %v6860 = vsub.s32 0, %v6859
    %v6861 = vrot.slane %v6649, %v6860
    %v6862 = vlaneseq
    %v6863 = vshrl.u32 %v6862, 7
    %v6864 = vsub.s32 0, %v6863
    %v6865 = vrot.slane %v6657, %v6864
    %v6866 = vlaneseq
    %v6867 = vshrl.u32 %v6866, 7
    %v6868 = vsub.s32 0, %v6867
    %v6869 = vrot.slane %v6656, %v6868
    %v6870 = vlaneseq
    %v6871 = vshrl.u32 %v6870, 7
    %v6872 = vsub.s32 0, %v6871
    %v6873 = vrot.slane %v6658, %v6872
    %v6874 = vlaneseq
    %v6875 = vshrl.u32 %v6874, 7
    %v6876 = vsub.s32 0, %v6875
    %v6877 = vrot.slane %v6697, %v6876
    %v6878 = vlaneseq
    %v6879 = vshrl.u32 %v6878, 7
    %v6880 = vsub.s32 0, %v6879
    %v6881 = vrot.slane %v6705, %v6880
    %v6882 = vlaneseq
    %v6883 = vshrl.u32 %v6882, 7
    %v6884 = vsub.s32 0, %v6883
    %v6885 = vrot.slane %v6704, %v6884
    %v6886 = vlaneseq
    %v6887 = vshrl.u32 %v6886, 7
    %v6888 = vsub.s32 0, %v6887
    %v6889 = vrot.slane %v6706, %v6888
    %v6890 = vlaneseq
    %v6891 = vshrl.u32 %v6890, 7
    %v6892 = vsub.s32 0, %v6891
    %v6893 = vrot.slane %v6745, %v6892
    %v6894 = vlaneseq
    %v6895 = vshrl.u32 %v6894, 7
    %v6896 = vsub.s32 0, %v6895
    %v6897 = vrot.slane %v6753, %v6896
    %v6898 = vlaneseq
    %v6899 = vshrl.u32 %v6898, 7
    %v6900 = vsub.s32 0, %v6899
    %v6901 = vrot.slane %v6752, %v6900
    %v6902 = vlaneseq
    %v6903 = vshrl.u32 %v6902, 7
    %v6904 = vsub.s32 0, %v6903
    %v6905 = vrot.slane %v6754, %v6904
    %v6906 = vsel %vm2273, %v6817, %v6813
    %v6907 = vsel %vm2275, %v6821, %v6906
    %v6908 = vsel %vm2277, %v6825, %v6907
    %v6909 = vsel %vm2273, %v6833, %v6829
    %v6910 = vsel %vm2275, %v6837, %v6909
    %v6911 = vsel %vm2277, %v6841, %v6910
    %v6912 = vsel %vm2273, %v6849, %v6845
    %v6913 = vsel %vm2275, %v6853, %v6912
    %v6914 = vsel %vm2277, %v6857, %v6913
    %v6915 = vsel %vm2273, %v6865, %v6861
    %v6916 = vsel %vm2275, %v6869, %v6915
    %v6917 = vsel %vm2277, %v6873, %v6916
    %v6918 = vsel %vm2273, %v6881, %v6877
    %v6919 = vsel %vm2275, %v6885, %v6918
    %v6920 = vsel %vm2277, %v6889, %v6919
    %v6921 = vsel %vm2273, %v6897, %v6893
    %v6922 = vsel %vm2275, %v6901, %v6921
    %v6923 = vsel %vm2277, %v6905, %v6922
    %v6931 = vlaneseq
    %v6932 = vshrl.u32 %v6931, 7
    %v6933 = vsub.s32 1, %v6932
    %v6934 = vrot.slane %v6457, %v6933
    %v6935 = vlaneseq
    %v6936 = vshrl.u32 %v6935, 7
    %v6937 = vsub.s32 1, %v6936
    %v6938 = vrot.slane %v6465, %v6937
    %v6939 = vlaneseq
    %v6940 = vshrl.u32 %v6939, 7
    %v6941 = vsub.s32 1, %v6940
    %v6942 = vrot.slane %v6464, %v6941
    %v6943 = vlaneseq
    %v6944 = vshrl.u32 %v6943, 7
    %v6945 = vsub.s32 1, %v6944
    %v6946 = vrot.slane %v6466, %v6945
    %v6947 = vlaneseq
    %v6948 = vshrl.u32 %v6947, 7
    %v6949 = vsub.s32 1, %v6948
    %v6950 = vrot.slane %v6505, %v6949
    %v6951 = vlaneseq
    %v6952 = vshrl.u32 %v6951, 7
    %v6953 = vsub.s32 1, %v6952
    %v6954 = vrot.slane %v6513, %v6953
    %v6955 = vlaneseq
    %v6956 = vshrl.u32 %v6955, 7
    %v6957 = vsub.s32 1, %v6956
    %v6958 = vrot.slane %v6512, %v6957
    %v6959 = vlaneseq
    %v6960 = vshrl.u32 %v6959, 7
    %v6961 = vsub.s32 1, %v6960
    %v6962 = vrot.slane %v6514, %v6961
    %v6963 = vlaneseq
    %v6964 = vshrl.u32 %v6963, 7
    %v6965 = vsub.s32 1, %v6964
    %v6966 = vrot.slane %v6553, %v6965
    %v6967 = vlaneseq
    %v6968 = vshrl.u32 %v6967, 7
    %v6969 = vsub.s32 1, %v6968
    %v6970 = vrot.slane %v6561, %v6969
    %v6971 = vlaneseq
    %v6972 = vshrl.u32 %v6971, 7
    %v6973 = vsub.s32 1, %v6972
    %v6974 = vrot.slane %v6560, %v6973
    %v6975 = vlaneseq
    %v6976 = vshrl.u32 %v6975, 7
    %v6977 = vsub.s32 1, %v6976
    %v6978 = vrot.slane %v6562, %v6977
    %v6979 = vlaneseq
    %v6980 = vshrl.u32 %v6979, 7
    %v6981 = vsub.s32 1, %v6980
    %v6982 = vrot.slane %v6649, %v6981
    %v6983 = vlaneseq
    %v6984 = vshrl.u32 %v6983, 7
    %v6985 = vsub.s32 1, %v6984
    %v6986 = vrot.slane %v6657, %v6985
    %v6987 = vlaneseq
    %v6988 = vshrl.u32 %v6987, 7
    %v6989 = vsub.s32 1, %v6988
    %v6990 = vrot.slane %v6656, %v6989
    %v6991 = vlaneseq
    %v6992 = vshrl.u32 %v6991, 7
    %v6993 = vsub.s32 1, %v6992
    %v6994 = vrot.slane %v6658, %v6993
    %v6995 = vlaneseq
    %v6996 = vshrl.u32 %v6995, 7
    %v6997 = vsub.s32 1, %v6996
    %v6998 = vrot.slane %v6697, %v6997
    %v6999 = vlaneseq
    %v7000 = vshrl.u32 %v6999, 7
    %v7001 = vsub.s32 1, %v7000
    %v7002 = vrot.slane %v6705, %v7001
    %v7003 = vlaneseq
    %v7004 = vshrl.u32 %v7003, 7
    %v7005 = vsub.s32 1, %v7004
    %v7006 = vrot.slane %v6704, %v7005
    %v7007 = vlaneseq
    %v7008 = vshrl.u32 %v7007, 7
    %v7009 = vsub.s32 1, %v7008
    %v7010 = vrot.slane %v6706, %v7009
    %v7011 = vlaneseq
    %v7012 = vshrl.u32 %v7011, 7
    %v7013 = vsub.s32 1, %v7012
    %v7014 = vrot.slane %v6745, %v7013
    %v7015 = vlaneseq
    %v7016 = vshrl.u32 %v7015, 7
    %v7017 = vsub.s32 1, %v7016
    %v7018 = vrot.slane %v6753, %v7017
    %v7019 = vlaneseq
    %v7020 = vshrl.u32 %v7019, 7
    %v7021 = vsub.s32 1, %v7020
    %v7022 = vrot.slane %v6752, %v7021
    %v7023 = vlaneseq
    %v7024 = vshrl.u32 %v7023, 7
    %v7025 = vsub.s32 1, %v7024
    %v7026 = vrot.slane %v6754, %v7025
    %v7027 = vsel %vm2273, %v6938, %v6934
    %v7028 = vsel %vm2275, %v6942, %v7027
    %v7029 = vsel %vm2277, %v6946, %v7028
    %v7030 = vsel %vm2273, %v6954, %v6950
    %v7031 = vsel %vm2275, %v6958, %v7030
    %v7032 = vsel %vm2277, %v6962, %v7031
    %v7033 = vsel %vm2273, %v6970, %v6966
    %v7034 = vsel %vm2275, %v6974, %v7033
    %v7035 = vsel %vm2277, %v6978, %v7034
    %v7036 = vsel %vm2273, %v6986, %v6982
    %v7037 = vsel %vm2275, %v6990, %v7036
    %v7038 = vsel %vm2277, %v6994, %v7037
    %v7039 = vsel %vm2273, %v7002, %v6998
    %v7040 = vsel %vm2275, %v7006, %v7039
    %v7041 = vsel %vm2277, %v7010, %v7040
    %v7042 = vsel %vm2273, %v7018, %v7014
    %v7043 = vsel %vm2275, %v7022, %v7042
    %v7044 = vsel %vm2277, %v7026, %v7043
    %7045 = vrot.lane.b32.xlu0 %v2882, 8
    %v7046 = vpop.permute.xlu0 %7045
    %7047 = vrot.lane.b32.xlu0 %v7029, 8
    %v7048 = vpop.permute.xlu0 %7047
    %7049 = vrot.lane.b32.xlu0 %v7032, 8
    %v7050 = vpop.permute.xlu0 %7049
    %7051 = vrot.lane.b32.xlu0 %v7035, 8
    %v7052 = vpop.permute.xlu0 %7051
    %7053 = vrot.lane.b32.xlu0 %v7038, 8
    %v7054 = vpop.permute.xlu0 %7053
    %7055 = vrot.lane.b32.xlu0 %v7041, 8
    %v7056 = vpop.permute.xlu0 %7055
    %7057 = vrot.lane.b32.xlu0 %v7044, 8
    %v7058 = vpop.permute.xlu0 %7057
    %v7066 = vlaneseq
    %v7067 = vshrl.u32 %v7066, 7
    %v7068 = vsub.s32 0, %v7067
    %v7069 = vrot.slane %v6473, %v7068
    %v7070 = vlaneseq
    %v7071 = vshrl.u32 %v7070, 7
    %v7072 = vsub.s32 0, %v7071
    %v7073 = vrot.slane %v6521, %v7072
    %v7074 = vlaneseq
    %v7075 = vshrl.u32 %v7074, 7
    %v7076 = vsub.s32 0, %v7075
    %v7077 = vrot.slane %v6569, %v7076
    %v7078 = vlaneseq
    %v7079 = vshrl.u32 %v7078, 7
    %v7080 = vsub.s32 0, %v7079
    %v7081 = vrot.slane %v6665, %v7080
    %v7082 = vlaneseq
    %v7083 = vshrl.u32 %v7082, 7
    %v7084 = vsub.s32 0, %v7083
    %v7085 = vrot.slane %v6713, %v7084
    %v7086 = vlaneseq
    %v7087 = vshrl.u32 %v7086, 7
    %v7088 = vsub.s32 0, %v7087
    %v7089 = vrot.slane %v6761, %v7088
    %v7090 = vsel %vm2277, %v3033, %v3091
    %v7091 = vsel %vm2273, %v6821, %v6817
    %v7092 = vsel %vm2275, %v6825, %v7091
    %v7093 = vsel %vm2277, %v7069, %v7092
    %v7094 = vsel %vm2273, %v6837, %v6833
    %v7095 = vsel %vm2275, %v6841, %v7094
    %v7096 = vsel %vm2277, %v7073, %v7095
    %v7097 = vsel %vm2273, %v6853, %v6849
    %v7098 = vsel %vm2275, %v6857, %v7097
    %v7099 = vsel %vm2277, %v7077, %v7098
    %v7100 = vsel %vm2273, %v6869, %v6865
    %v7101 = vsel %vm2275, %v6873, %v7100
    %v7102 = vsel %vm2277, %v7081, %v7101
    %v7103 = vsel %vm2273, %v6885, %v6881
    %v7104 = vsel %vm2275, %v6889, %v7103
    %v7105 = vsel %vm2277, %v7085, %v7104
    %v7106 = vsel %vm2273, %v6901, %v6897
    %v7107 = vsel %vm2275, %v6905, %v7106
    %v7108 = vsel %vm2277, %v7089, %v7107
    %7109 = vrot.lane.b32.xlu0 %v7090, 16
    %v7110 = vpop.permute.xlu0 %7109
    %7111 = vrot.lane.b32.xlu0 %v7093, 16
    %v7112 = vpop.permute.xlu0 %7111
    %7113 = vrot.lane.b32.xlu0 %v7096, 16
    %v7114 = vpop.permute.xlu0 %7113
    %7115 = vrot.lane.b32.xlu0 %v7099, 16
    %v7116 = vpop.permute.xlu0 %7115
    %7117 = vrot.lane.b32.xlu0 %v7102, 16
    %v7118 = vpop.permute.xlu0 %7117
    %7119 = vrot.lane.b32.xlu0 %v7105, 16
    %v7120 = vpop.permute.xlu0 %7119
    %7121 = vrot.lane.b32.xlu0 %v7108, 16
    %v7122 = vpop.permute.xlu0 %7121
    %v7130 = vlaneseq
    %v7131 = vshrl.u32 %v7130, 7
    %v7132 = vsub.s32 1, %v7131
    %v7133 = vrot.slane %v6473, %v7132
    %v7134 = vlaneseq
    %v7135 = vshrl.u32 %v7134, 7
    %v7136 = vsub.s32 1, %v7135
    %v7137 = vrot.slane %v6521, %v7136
    %v7138 = vlaneseq
    %v7139 = vshrl.u32 %v7138, 7
    %v7140 = vsub.s32 1, %v7139
    %v7141 = vrot.slane %v6569, %v7140
    %v7142 = vlaneseq
    %v7143 = vshrl.u32 %v7142, 7
    %v7144 = vsub.s32 1, %v7143
    %v7145 = vrot.slane %v6665, %v7144
    %v7146 = vlaneseq
    %v7147 = vshrl.u32 %v7146, 7
    %v7148 = vsub.s32 1, %v7147
    %v7149 = vrot.slane %v6713, %v7148
    %v7150 = vlaneseq
    %v7151 = vshrl.u32 %v7150, 7
    %v7152 = vsub.s32 1, %v7151
    %v7153 = vrot.slane %v6761, %v7152
    %v7154 = vsel %vm2277, %v3243, %v3301
    %v7155 = vsel %vm2273, %v6942, %v6938
    %v7156 = vsel %vm2275, %v6946, %v7155
    %v7157 = vsel %vm2277, %v7133, %v7156
    %v7158 = vsel %vm2273, %v6958, %v6954
    %v7159 = vsel %vm2275, %v6962, %v7158
    %v7160 = vsel %vm2277, %v7137, %v7159
    %v7161 = vsel %vm2273, %v6974, %v6970
    %v7162 = vsel %vm2275, %v6978, %v7161
    %v7163 = vsel %vm2277, %v7141, %v7162
    %v7164 = vsel %vm2273, %v6990, %v6986
    %v7165 = vsel %vm2275, %v6994, %v7164
    %v7166 = vsel %vm2277, %v7145, %v7165
    %v7167 = vsel %vm2273, %v7006, %v7002
    %v7168 = vsel %vm2275, %v7010, %v7167
    %v7169 = vsel %vm2277, %v7149, %v7168
    %v7170 = vsel %vm2273, %v7022, %v7018
    %v7171 = vsel %vm2275, %v7026, %v7170
    %v7172 = vsel %vm2277, %v7153, %v7171
    %7173 = vrot.lane.b32.xlu0 %v7154, 24
    %v7174 = vpop.permute.xlu0 %7173
    %7175 = vrot.lane.b32.xlu0 %v7157, 24
    %v7176 = vpop.permute.xlu0 %7175
    %7177 = vrot.lane.b32.xlu0 %v7160, 24
    %v7178 = vpop.permute.xlu0 %7177
    %7179 = vrot.lane.b32.xlu0 %v7163, 24
    %v7180 = vpop.permute.xlu0 %7179
    %7181 = vrot.lane.b32.xlu0 %v7166, 24
    %v7182 = vpop.permute.xlu0 %7181
    %7183 = vrot.lane.b32.xlu0 %v7169, 24
    %v7184 = vpop.permute.xlu0 %7183
    %7185 = vrot.lane.b32.xlu0 %v7172, 24
    %v7186 = vpop.permute.xlu0 %7185
    %v7194 = vlaneseq
    %v7195 = vshrl.u32 %v7194, 7
    %v7196 = vsub.s32 0, %v7195
    %v7197 = vrot.slane %v6433, %v7196
    %v7198 = vlaneseq
    %v7199 = vshrl.u32 %v7198, 7
    %v7200 = vsub.s32 0, %v7199
    %v7201 = vrot.slane %v6441, %v7200
    %v7202 = vlaneseq
    %v7203 = vshrl.u32 %v7202, 7
    %v7204 = vsub.s32 0, %v7203
    %v7205 = vrot.slane %v6440, %v7204
    %v7206 = vlaneseq
    %v7207 = vshrl.u32 %v7206, 7
    %v7208 = vsub.s32 0, %v7207
    %v7209 = vrot.slane %v6442, %v7208
    %v7210 = vlaneseq
    %v7211 = vshrl.u32 %v7210, 7
    %v7212 = vsub.s32 0, %v7211
    %v7213 = vrot.slane %v6481, %v7212
    %v7214 = vlaneseq
    %v7215 = vshrl.u32 %v7214, 7
    %v7216 = vsub.s32 0, %v7215
    %v7217 = vrot.slane %v6489, %v7216
    %v7218 = vlaneseq
    %v7219 = vshrl.u32 %v7218, 7
    %v7220 = vsub.s32 0, %v7219
    %v7221 = vrot.slane %v6488, %v7220
    %v7222 = vlaneseq
    %v7223 = vshrl.u32 %v7222, 7
    %v7224 = vsub.s32 0, %v7223
    %v7225 = vrot.slane %v6490, %v7224
    %v7226 = vlaneseq
    %v7227 = vshrl.u32 %v7226, 7
    %v7228 = vsub.s32 0, %v7227
    %v7229 = vrot.slane %v6529, %v7228
    %v7230 = vlaneseq
    %v7231 = vshrl.u32 %v7230, 7
    %v7232 = vsub.s32 0, %v7231
    %v7233 = vrot.slane %v6537, %v7232
    %v7234 = vlaneseq
    %v7235 = vshrl.u32 %v7234, 7
    %v7236 = vsub.s32 0, %v7235
    %v7237 = vrot.slane %v6536, %v7236
    %v7238 = vlaneseq
    %v7239 = vshrl.u32 %v7238, 7
    %v7240 = vsub.s32 0, %v7239
    %v7241 = vrot.slane %v6538, %v7240
    %v7242 = vlaneseq
    %v7243 = vshrl.u32 %v7242, 7
    %v7244 = vsub.s32 0, %v7243
    %v7245 = vrot.slane %v6577, %v7244
    %v7246 = vlaneseq
    %v7247 = vshrl.u32 %v7246, 7
    %v7248 = vsub.s32 0, %v7247
    %v7249 = vrot.slane %v6585, %v7248
    %v7250 = vlaneseq
    %v7251 = vshrl.u32 %v7250, 7
    %v7252 = vsub.s32 0, %v7251
    %v7253 = vrot.slane %v6584, %v7252
    %v7254 = vlaneseq
    %v7255 = vshrl.u32 %v7254, 7
    %v7256 = vsub.s32 0, %v7255
    %v7257 = vrot.slane %v6586, %v7256
    %v7258 = vlaneseq
    %v7259 = vshrl.u32 %v7258, 7
    %v7260 = vsub.s32 0, %v7259
    %v7261 = vrot.slane %v6625, %v7260
    %v7262 = vlaneseq
    %v7263 = vshrl.u32 %v7262, 7
    %v7264 = vsub.s32 0, %v7263
    %v7265 = vrot.slane %v6633, %v7264
    %v7266 = vlaneseq
    %v7267 = vshrl.u32 %v7266, 7
    %v7268 = vsub.s32 0, %v7267
    %v7269 = vrot.slane %v6632, %v7268
    %v7270 = vlaneseq
    %v7271 = vshrl.u32 %v7270, 7
    %v7272 = vsub.s32 0, %v7271
    %v7273 = vrot.slane %v6634, %v7272
    %v7274 = vlaneseq
    %v7275 = vshrl.u32 %v7274, 7
    %v7276 = vsub.s32 0, %v7275
    %v7277 = vrot.slane %v6673, %v7276
    %v7278 = vlaneseq
    %v7279 = vshrl.u32 %v7278, 7
    %v7280 = vsub.s32 0, %v7279
    %v7281 = vrot.slane %v6681, %v7280
    %v7282 = vlaneseq
    %v7283 = vshrl.u32 %v7282, 7
    %v7284 = vsub.s32 0, %v7283
    %v7285 = vrot.slane %v6680, %v7284
    %v7286 = vlaneseq
    %v7287 = vshrl.u32 %v7286, 7
    %v7288 = vsub.s32 0, %v7287
    %v7289 = vrot.slane %v6682, %v7288
    %v7290 = vlaneseq
    %v7291 = vshrl.u32 %v7290, 7
    %v7292 = vsub.s32 0, %v7291
    %v7293 = vrot.slane %v6721, %v7292
    %v7294 = vlaneseq
    %v7295 = vshrl.u32 %v7294, 7
    %v7296 = vsub.s32 0, %v7295
    %v7297 = vrot.slane %v6729, %v7296
    %v7298 = vlaneseq
    %v7299 = vshrl.u32 %v7298, 7
    %v7300 = vsub.s32 0, %v7299
    %v7301 = vrot.slane %v6728, %v7300
    %v7302 = vlaneseq
    %v7303 = vshrl.u32 %v7302, 7
    %v7304 = vsub.s32 0, %v7303
    %v7305 = vrot.slane %v6730, %v7304
    %v7306 = vlaneseq
    %v7307 = vshrl.u32 %v7306, 7
    %v7308 = vsub.s32 0, %v7307
    %v7309 = vrot.slane %v6769, %v7308
    %v7310 = vlaneseq
    %v7311 = vshrl.u32 %v7310, 7
    %v7312 = vsub.s32 0, %v7311
    %v7313 = vrot.slane %v6777, %v7312
    %v7314 = vlaneseq
    %v7315 = vshrl.u32 %v7314, 7
    %v7316 = vsub.s32 0, %v7315
    %v7317 = vrot.slane %v6776, %v7316
    %v7318 = vlaneseq
    %v7319 = vshrl.u32 %v7318, 7
    %v7320 = vsub.s32 0, %v7319
    %v7321 = vrot.slane %v6778, %v7320
    %v7322 = vsel %vm2273, %v7201, %v7197
    %v7323 = vsel %vm2275, %v7205, %v7322
    %v7324 = vsel %vm2277, %v7209, %v7323
    %v7325 = vsel %vm2273, %v7217, %v7213
    %v7326 = vsel %vm2275, %v7221, %v7325
    %v7327 = vsel %vm2277, %v7225, %v7326
    %v7328 = vsel %vm2273, %v7233, %v7229
    %v7329 = vsel %vm2275, %v7237, %v7328
    %v7330 = vsel %vm2277, %v7241, %v7329
    %v7331 = vsel %vm2273, %v7249, %v7245
    %v7332 = vsel %vm2275, %v7253, %v7331
    %v7333 = vsel %vm2277, %v7257, %v7332
    %v7334 = vsel %vm2273, %v7265, %v7261
    %v7335 = vsel %vm2275, %v7269, %v7334
    %v7336 = vsel %vm2277, %v7273, %v7335
    %v7337 = vsel %vm2273, %v7281, %v7277
    %v7338 = vsel %vm2275, %v7285, %v7337
    %v7339 = vsel %vm2277, %v7289, %v7338
    %v7340 = vsel %vm2273, %v7297, %v7293
    %v7341 = vsel %vm2275, %v7301, %v7340
    %v7342 = vsel %vm2277, %v7305, %v7341
    %v7343 = vsel %vm2273, %v7313, %v7309
    %v7344 = vsel %vm2275, %v7317, %v7343
    %v7345 = vsel %vm2277, %v7321, %v7344
    %7346 = vrot.lane.b32.xlu0 %v7324, 32
    %v7347 = vpop.permute.xlu0 %7346
    %7348 = vrot.lane.b32.xlu0 %v7327, 32
    %v7349 = vpop.permute.xlu0 %7348
    %7350 = vrot.lane.b32.xlu0 %v7330, 32
    %v7351 = vpop.permute.xlu0 %7350
    %7352 = vrot.lane.b32.xlu0 %v7333, 32
    %v7353 = vpop.permute.xlu0 %7352
    %7354 = vrot.lane.b32.xlu0 %v7336, 32
    %v7355 = vpop.permute.xlu0 %7354
    %7356 = vrot.lane.b32.xlu0 %v7339, 32
    %v7357 = vpop.permute.xlu0 %7356
    %7358 = vrot.lane.b32.xlu0 %v7342, 32
    %v7359 = vpop.permute.xlu0 %7358
    %7360 = vrot.lane.b32.xlu0 %v7345, 32
    %v7361 = vpop.permute.xlu0 %7360
    %v7370 = vlaneseq
    %v7371 = vshrl.u32 %v7370, 7
    %v7372 = vsub.s32 1, %v7371
    %v7373 = vrot.slane %v6433, %v7372
    %v7374 = vlaneseq
    %v7375 = vshrl.u32 %v7374, 7
    %v7376 = vsub.s32 1, %v7375
    %v7377 = vrot.slane %v6441, %v7376
    %v7378 = vlaneseq
    %v7379 = vshrl.u32 %v7378, 7
    %v7380 = vsub.s32 1, %v7379
    %v7381 = vrot.slane %v6440, %v7380
    %v7382 = vlaneseq
    %v7383 = vshrl.u32 %v7382, 7
    %v7384 = vsub.s32 1, %v7383
    %v7385 = vrot.slane %v6442, %v7384
    %v7386 = vlaneseq
    %v7387 = vshrl.u32 %v7386, 7
    %v7388 = vsub.s32 1, %v7387
    %v7389 = vrot.slane %v6481, %v7388
    %v7390 = vlaneseq
    %v7391 = vshrl.u32 %v7390, 7
    %v7392 = vsub.s32 1, %v7391
    %v7393 = vrot.slane %v6489, %v7392
    %v7394 = vlaneseq
    %v7395 = vshrl.u32 %v7394, 7
    %v7396 = vsub.s32 1, %v7395
    %v7397 = vrot.slane %v6488, %v7396
    %v7398 = vlaneseq
    %v7399 = vshrl.u32 %v7398, 7
    %v7400 = vsub.s32 1, %v7399
    %v7401 = vrot.slane %v6490, %v7400
    %v7402 = vlaneseq
    %v7403 = vshrl.u32 %v7402, 7
    %v7404 = vsub.s32 1, %v7403
    %v7405 = vrot.slane %v6529, %v7404
    %v7406 = vlaneseq
    %v7407 = vshrl.u32 %v7406, 7
    %v7408 = vsub.s32 1, %v7407
    %v7409 = vrot.slane %v6537, %v7408
    %v7410 = vlaneseq
    %v7411 = vshrl.u32 %v7410, 7
    %v7412 = vsub.s32 1, %v7411
    %v7413 = vrot.slane %v6536, %v7412
    %v7414 = vlaneseq
    %v7415 = vshrl.u32 %v7414, 7
    %v7416 = vsub.s32 1, %v7415
    %v7417 = vrot.slane %v6538, %v7416
    %v7418 = vlaneseq
    %v7419 = vshrl.u32 %v7418, 7
    %v7420 = vsub.s32 1, %v7419
    %v7421 = vrot.slane %v6577, %v7420
    %v7422 = vlaneseq
    %v7423 = vshrl.u32 %v7422, 7
    %v7424 = vsub.s32 1, %v7423
    %v7425 = vrot.slane %v6585, %v7424
    %v7426 = vlaneseq
    %v7427 = vshrl.u32 %v7426, 7
    %v7428 = vsub.s32 1, %v7427
    %v7429 = vrot.slane %v6584, %v7428
    %v7430 = vlaneseq
    %v7431 = vshrl.u32 %v7430, 7
    %v7432 = vsub.s32 1, %v7431
    %v7433 = vrot.slane %v6586, %v7432
    %v7434 = vlaneseq
    %v7435 = vshrl.u32 %v7434, 7
    %v7436 = vsub.s32 1, %v7435
    %v7437 = vrot.slane %v6625, %v7436
    %v7438 = vlaneseq
    %v7439 = vshrl.u32 %v7438, 7
    %v7440 = vsub.s32 1, %v7439
    %v7441 = vrot.slane %v6633, %v7440
    %v7442 = vlaneseq
    %v7443 = vshrl.u32 %v7442, 7
    %v7444 = vsub.s32 1, %v7443
    %v7445 = vrot.slane %v6632, %v7444
    %v7446 = vlaneseq
    %v7447 = vshrl.u32 %v7446, 7
    %v7448 = vsub.s32 1, %v7447
    %v7449 = vrot.slane %v6634, %v7448
    %v7450 = vlaneseq
    %v7451 = vshrl.u32 %v7450, 7
    %v7452 = vsub.s32 1, %v7451
    %v7453 = vrot.slane %v6673, %v7452
    %v7454 = vlaneseq
    %v7455 = vshrl.u32 %v7454, 7
    %v7456 = vsub.s32 1, %v7455
    %v7457 = vrot.slane %v6681, %v7456
    %v7458 = vlaneseq
    %v7459 = vshrl.u32 %v7458, 7
    %v7460 = vsub.s32 1, %v7459
    %v7461 = vrot.slane %v6680, %v7460
    %v7462 = vlaneseq
    %v7463 = vshrl.u32 %v7462, 7
    %v7464 = vsub.s32 1, %v7463
    %v7465 = vrot.slane %v6682, %v7464
    %v7466 = vlaneseq
    %v7467 = vshrl.u32 %v7466, 7
    %v7468 = vsub.s32 1, %v7467
    %v7469 = vrot.slane %v6721, %v7468
    %v7470 = vlaneseq
    %v7471 = vshrl.u32 %v7470, 7
    %v7472 = vsub.s32 1, %v7471
    %v7473 = vrot.slane %v6729, %v7472
    %v7474 = vlaneseq
    %v7475 = vshrl.u32 %v7474, 7
    %v7476 = vsub.s32 1, %v7475
    %v7477 = vrot.slane %v6728, %v7476
    %v7478 = vlaneseq
    %v7479 = vshrl.u32 %v7478, 7
    %v7480 = vsub.s32 1, %v7479
    %v7481 = vrot.slane %v6730, %v7480
    %v7482 = vlaneseq
    %v7483 = vshrl.u32 %v7482, 7
    %v7484 = vsub.s32 1, %v7483
    %v7485 = vrot.slane %v6769, %v7484
    %v7486 = vlaneseq
    %v7487 = vshrl.u32 %v7486, 7
    %v7488 = vsub.s32 1, %v7487
    %v7489 = vrot.slane %v6777, %v7488
    %v7490 = vlaneseq
    %v7491 = vshrl.u32 %v7490, 7
    %v7492 = vsub.s32 1, %v7491
    %v7493 = vrot.slane %v6776, %v7492
    %v7494 = vlaneseq
    %v7495 = vshrl.u32 %v7494, 7
    %v7496 = vsub.s32 1, %v7495
    %v7497 = vrot.slane %v6778, %v7496
    %v7498 = vsel %vm2273, %v7377, %v7373
    %v7499 = vsel %vm2275, %v7381, %v7498
    %v7500 = vsel %vm2277, %v7385, %v7499
    %v7501 = vsel %vm2273, %v7393, %v7389
    %v7502 = vsel %vm2275, %v7397, %v7501
    %v7503 = vsel %vm2277, %v7401, %v7502
    %v7504 = vsel %vm2273, %v7409, %v7405
    %v7505 = vsel %vm2275, %v7413, %v7504
    %v7506 = vsel %vm2277, %v7417, %v7505
    %v7507 = vsel %vm2273, %v7425, %v7421
    %v7508 = vsel %vm2275, %v7429, %v7507
    %v7509 = vsel %vm2277, %v7433, %v7508
    %v7510 = vsel %vm2273, %v7441, %v7437
    %v7511 = vsel %vm2275, %v7445, %v7510
    %v7512 = vsel %vm2277, %v7449, %v7511
    %v7513 = vsel %vm2273, %v7457, %v7453
    %v7514 = vsel %vm2275, %v7461, %v7513
    %v7515 = vsel %vm2277, %v7465, %v7514
    %v7516 = vsel %vm2273, %v7473, %v7469
    %v7517 = vsel %vm2275, %v7477, %v7516
    %v7518 = vsel %vm2277, %v7481, %v7517
    %v7519 = vsel %vm2273, %v7489, %v7485
    %v7520 = vsel %vm2275, %v7493, %v7519
    %v7521 = vsel %vm2277, %v7497, %v7520
    %7522 = vrot.lane.b32.xlu0 %v7500, 40
    %v7523 = vpop.permute.xlu0 %7522
    %7524 = vrot.lane.b32.xlu0 %v7503, 40
    %v7525 = vpop.permute.xlu0 %7524
    %7526 = vrot.lane.b32.xlu0 %v7506, 40
    %v7527 = vpop.permute.xlu0 %7526
    %7528 = vrot.lane.b32.xlu0 %v7509, 40
    %v7529 = vpop.permute.xlu0 %7528
    %7530 = vrot.lane.b32.xlu0 %v7512, 40
    %v7531 = vpop.permute.xlu0 %7530
    %7532 = vrot.lane.b32.xlu0 %v7515, 40
    %v7533 = vpop.permute.xlu0 %7532
    %7534 = vrot.lane.b32.xlu0 %v7518, 40
    %v7535 = vpop.permute.xlu0 %7534
    %7536 = vrot.lane.b32.xlu0 %v7521, 40
    %v7537 = vpop.permute.xlu0 %7536
    %v7546 = vlaneseq
    %v7547 = vshrl.u32 %v7546, 7
    %v7548 = vsub.s32 0, %v7547
    %v7549 = vrot.slane %v6449, %v7548
    %v7550 = vlaneseq
    %v7551 = vshrl.u32 %v7550, 7
    %v7552 = vsub.s32 0, %v7551
    %v7553 = vrot.slane %v6497, %v7552
    %v7554 = vlaneseq
    %v7555 = vshrl.u32 %v7554, 7
    %v7556 = vsub.s32 0, %v7555
    %v7557 = vrot.slane %v6545, %v7556
    %v7558 = vlaneseq
    %v7559 = vshrl.u32 %v7558, 7
    %v7560 = vsub.s32 0, %v7559
    %v7561 = vrot.slane %v6593, %v7560
    %v7562 = vlaneseq
    %v7563 = vshrl.u32 %v7562, 7
    %v7564 = vsub.s32 0, %v7563
    %v7565 = vrot.slane %v6641, %v7564
    %v7566 = vlaneseq
    %v7567 = vshrl.u32 %v7566, 7
    %v7568 = vsub.s32 0, %v7567
    %v7569 = vrot.slane %v6689, %v7568
    %v7570 = vlaneseq
    %v7571 = vshrl.u32 %v7570, 7
    %v7572 = vsub.s32 0, %v7571
    %v7573 = vrot.slane %v6737, %v7572
    %v7574 = vlaneseq
    %v7575 = vshrl.u32 %v7574, 7
    %v7576 = vsub.s32 0, %v7575
    %v7577 = vrot.slane %v6785, %v7576
    %v7578 = vsel %vm2273, %v7205, %v7201
    %v7579 = vsel %vm2275, %v7209, %v7578
    %v7580 = vsel %vm2277, %v7549, %v7579
    %v7581 = vsel %vm2273, %v7221, %v7217
    %v7582 = vsel %vm2275, %v7225, %v7581
    %v7583 = vsel %vm2277, %v7553, %v7582
    %v7584 = vsel %vm2273, %v7237, %v7233
    %v7585 = vsel %vm2275, %v7241, %v7584
    %v7586 = vsel %vm2277, %v7557, %v7585
    %v7587 = vsel %vm2273, %v7253, %v7249
    %v7588 = vsel %vm2275, %v7257, %v7587
    %v7589 = vsel %vm2277, %v7561, %v7588
    %v7590 = vsel %vm2273, %v7269, %v7265
    %v7591 = vsel %vm2275, %v7273, %v7590
    %v7592 = vsel %vm2277, %v7565, %v7591
    %v7593 = vsel %vm2273, %v7285, %v7281
    %v7594 = vsel %vm2275, %v7289, %v7593
    %v7595 = vsel %vm2277, %v7569, %v7594
    %v7596 = vsel %vm2273, %v7301, %v7297
    %v7597 = vsel %vm2275, %v7305, %v7596
    %v7598 = vsel %vm2277, %v7573, %v7597
    %v7599 = vsel %vm2273, %v7317, %v7313
    %v7600 = vsel %vm2275, %v7321, %v7599
    %v7601 = vsel %vm2277, %v7577, %v7600
    %7602 = vrot.lane.b32.xlu0 %v7580, 48
    %v7603 = vpop.permute.xlu0 %7602
    %7604 = vrot.lane.b32.xlu0 %v7583, 48
    %v7605 = vpop.permute.xlu0 %7604
    %7606 = vrot.lane.b32.xlu0 %v7586, 48
    %v7607 = vpop.permute.xlu0 %7606
    %7608 = vrot.lane.b32.xlu0 %v7589, 48
    %v7609 = vpop.permute.xlu0 %7608
    %7610 = vrot.lane.b32.xlu0 %v7592, 48
    %v7611 = vpop.permute.xlu0 %7610
    %7612 = vrot.lane.b32.xlu0 %v7595, 48
    %v7613 = vpop.permute.xlu0 %7612
    %7614 = vrot.lane.b32.xlu0 %v7598, 48
    %v7615 = vpop.permute.xlu0 %7614
    %7616 = vrot.lane.b32.xlu0 %v7601, 48
    %v7617 = vpop.permute.xlu0 %7616
    %v7626 = vlaneseq
    %v7627 = vshrl.u32 %v7626, 7
    %v7628 = vsub.s32 1, %v7627
    %v7629 = vrot.slane %v6449, %v7628
    %v7630 = vlaneseq
    %v7631 = vshrl.u32 %v7630, 7
    %v7632 = vsub.s32 1, %v7631
    %v7633 = vrot.slane %v6497, %v7632
    %v7634 = vlaneseq
    %v7635 = vshrl.u32 %v7634, 7
    %v7636 = vsub.s32 1, %v7635
    %v7637 = vrot.slane %v6545, %v7636
    %v7638 = vlaneseq
    %v7639 = vshrl.u32 %v7638, 7
    %v7640 = vsub.s32 1, %v7639
    %v7641 = vrot.slane %v6593, %v7640
    %v7642 = vlaneseq
    %v7643 = vshrl.u32 %v7642, 7
    %v7644 = vsub.s32 1, %v7643
    %v7645 = vrot.slane %v6641, %v7644
    %v7646 = vlaneseq
    %v7647 = vshrl.u32 %v7646, 7
    %v7648 = vsub.s32 1, %v7647
    %v7649 = vrot.slane %v6689, %v7648
    %v7650 = vlaneseq
    %v7651 = vshrl.u32 %v7650, 7
    %v7652 = vsub.s32 1, %v7651
    %v7653 = vrot.slane %v6737, %v7652
    %v7654 = vlaneseq
    %v7655 = vshrl.u32 %v7654, 7
    %v7656 = vsub.s32 1, %v7655
    %v7657 = vrot.slane %v6785, %v7656
    %v7658 = vsel %vm2273, %v7381, %v7377
    %v7659 = vsel %vm2275, %v7385, %v7658
    %v7660 = vsel %vm2277, %v7629, %v7659
    %v7661 = vsel %vm2273, %v7397, %v7393
    %v7662 = vsel %vm2275, %v7401, %v7661
    %v7663 = vsel %vm2277, %v7633, %v7662
    %v7664 = vsel %vm2273, %v7413, %v7409
    %v7665 = vsel %vm2275, %v7417, %v7664
    %v7666 = vsel %vm2277, %v7637, %v7665
    %v7667 = vsel %vm2273, %v7429, %v7425
    %v7668 = vsel %vm2275, %v7433, %v7667
    %v7669 = vsel %vm2277, %v7641, %v7668
    %v7670 = vsel %vm2273, %v7445, %v7441
    %v7671 = vsel %vm2275, %v7449, %v7670
    %v7672 = vsel %vm2277, %v7645, %v7671
    %v7673 = vsel %vm2273, %v7461, %v7457
    %v7674 = vsel %vm2275, %v7465, %v7673
    %v7675 = vsel %vm2277, %v7649, %v7674
    %v7676 = vsel %vm2273, %v7477, %v7473
    %v7677 = vsel %vm2275, %v7481, %v7676
    %v7678 = vsel %vm2277, %v7653, %v7677
    %v7679 = vsel %vm2273, %v7493, %v7489
    %v7680 = vsel %vm2275, %v7497, %v7679
    %v7681 = vsel %vm2277, %v7657, %v7680
    %7682 = vrot.lane.b32.xlu0 %v7660, 56
    %v7683 = vpop.permute.xlu0 %7682
    %7684 = vrot.lane.b32.xlu0 %v7663, 56
    %v7685 = vpop.permute.xlu0 %7684
    %7686 = vrot.lane.b32.xlu0 %v7666, 56
    %v7687 = vpop.permute.xlu0 %7686
    %7688 = vrot.lane.b32.xlu0 %v7669, 56
    %v7689 = vpop.permute.xlu0 %7688
    %7690 = vrot.lane.b32.xlu0 %v7672, 56
    %v7691 = vpop.permute.xlu0 %7690
    %7692 = vrot.lane.b32.xlu0 %v7675, 56
    %v7693 = vpop.permute.xlu0 %7692
    %7694 = vrot.lane.b32.xlu0 %v7678, 56
    %v7695 = vpop.permute.xlu0 %7694
    %7696 = vrot.lane.b32.xlu0 %v7681, 56
    %v7697 = vpop.permute.xlu0 %7696
    %v7706 = vlaneseq
    %v7707 = vshrl.u32 %v7706, 7
    %v7708 = vsub.s32 0, %v7707
    %v7709 = vrot.slane %v6601, %v7708
    %v7710 = vlaneseq
    %v7711 = vshrl.u32 %v7710, 7
    %v7712 = vsub.s32 0, %v7711
    %v7713 = vrot.slane %v6609, %v7712
    %v7714 = vlaneseq
    %v7715 = vshrl.u32 %v7714, 7
    %v7716 = vsub.s32 0, %v7715
    %v7717 = vrot.slane %v6608, %v7716
    %v7718 = vlaneseq
    %v7719 = vshrl.u32 %v7718, 7
    %v7720 = vsub.s32 0, %v7719
    %v7721 = vrot.slane %v6610, %v7720
    %v7722 = vlaneseq
    %v7723 = vshrl.u32 %v7722, 7
    %v7724 = vsub.s32 0, %v7723
    %v7725 = vrot.slane %v6793, %v7724
    %v7726 = vlaneseq
    %v7727 = vshrl.u32 %v7726, 7
    %v7728 = vsub.s32 0, %v7727
    %v7729 = vrot.slane %v6801, %v7728
    %v7730 = vlaneseq
    %v7731 = vshrl.u32 %v7730, 7
    %v7732 = vsub.s32 0, %v7731
    %v7733 = vrot.slane %v6800, %v7732
    %v7734 = vlaneseq
    %v7735 = vshrl.u32 %v7734, 7
    %v7736 = vsub.s32 0, %v7735
    %v7737 = vrot.slane %v6802, %v7736
    %v7738 = vsel %vm2273, %v7713, %v7709
    %v7739 = vsel %vm2275, %v7717, %v7738
    %v7740 = vsel %vm2277, %v7721, %v7739
    %v7741 = vsel %vm2273, %v7729, %v7725
    %v7742 = vsel %vm2275, %v7733, %v7741
    %v7743 = vsel %vm2277, %v7737, %v7742
    %7744 = vrot.lane.b32.xlu0 %v6908, 64
    %v7745 = vpop.permute.xlu0 %7744
    %7746 = vrot.lane.b32.xlu0 %v6911, 64
    %v7747 = vpop.permute.xlu0 %7746
    %7748 = vrot.lane.b32.xlu0 %v6914, 64
    %v7749 = vpop.permute.xlu0 %7748
    %7750 = vrot.lane.b32.xlu0 %v7740, 64
    %v7751 = vpop.permute.xlu0 %7750
    %7752 = vrot.lane.b32.xlu0 %v6917, 64
    %v7753 = vpop.permute.xlu0 %7752
    %7754 = vrot.lane.b32.xlu0 %v6920, 64
    %v7755 = vpop.permute.xlu0 %7754
    %7756 = vrot.lane.b32.xlu0 %v6923, 64
    %v7757 = vpop.permute.xlu0 %7756
    %7758 = vrot.lane.b32.xlu0 %v7743, 64
    %v7759 = vpop.permute.xlu0 %7758
    %v7768 = vlaneseq
    %v7769 = vshrl.u32 %v7768, 7
    %v7770 = vsub.s32 1, %v7769
    %v7771 = vrot.slane %v6601, %v7770
    %v7772 = vlaneseq
    %v7773 = vshrl.u32 %v7772, 7
    %v7774 = vsub.s32 1, %v7773
    %v7775 = vrot.slane %v6609, %v7774
    %v7776 = vlaneseq
    %v7777 = vshrl.u32 %v7776, 7
    %v7778 = vsub.s32 1, %v7777
    %v7779 = vrot.slane %v6608, %v7778
    %v7780 = vlaneseq
    %v7781 = vshrl.u32 %v7780, 7
    %v7782 = vsub.s32 1, %v7781
    %v7783 = vrot.slane %v6610, %v7782
    %v7784 = vlaneseq
    %v7785 = vshrl.u32 %v7784, 7
    %v7786 = vsub.s32 1, %v7785
    %v7787 = vrot.slane %v6793, %v7786
    %v7788 = vlaneseq
    %v7789 = vshrl.u32 %v7788, 7
    %v7790 = vsub.s32 1, %v7789
    %v7791 = vrot.slane %v6801, %v7790
    %v7792 = vlaneseq
    %v7793 = vshrl.u32 %v7792, 7
    %v7794 = vsub.s32 1, %v7793
    %v7795 = vrot.slane %v6800, %v7794
    %v7796 = vlaneseq
    %v7797 = vshrl.u32 %v7796, 7
    %v7798 = vsub.s32 1, %v7797
    %v7799 = vrot.slane %v6802, %v7798
    %v7800 = vsel %vm2273, %v7775, %v7771
    %v7801 = vsel %vm2275, %v7779, %v7800
    %v7802 = vsel %vm2277, %v7783, %v7801
    %v7803 = vsel %vm2273, %v7791, %v7787
    %v7804 = vsel %vm2275, %v7795, %v7803
    %v7805 = vsel %vm2277, %v7799, %v7804
    %7806 = vrot.lane.b32.xlu0 %v7029, 72
    %v7807 = vpop.permute.xlu0 %7806
    %7808 = vrot.lane.b32.xlu0 %v7032, 72
    %v7809 = vpop.permute.xlu0 %7808
    %7810 = vrot.lane.b32.xlu0 %v7035, 72
    %v7811 = vpop.permute.xlu0 %7810
    %7812 = vrot.lane.b32.xlu0 %v7802, 72
    %v7813 = vpop.permute.xlu0 %7812
    %7814 = vrot.lane.b32.xlu0 %v7038, 72
    %v7815 = vpop.permute.xlu0 %7814
    %7816 = vrot.lane.b32.xlu0 %v7041, 72
    %v7817 = vpop.permute.xlu0 %7816
    %7818 = vrot.lane.b32.xlu0 %v7044, 72
    %v7819 = vpop.permute.xlu0 %7818
    %7820 = vrot.lane.b32.xlu0 %v7805, 72
    %v7821 = vpop.permute.xlu0 %7820
    %v7830 = vlaneseq
    %v7831 = vshrl.u32 %v7830, 7
    %v7832 = vsub.s32 0, %v7831
    %v7833 = vrot.slane %v6617, %v7832
    %v7834 = vlaneseq
    %v7835 = vshrl.u32 %v7834, 7
    %v7836 = vsub.s32 0, %v7835
    %v7837 = vrot.slane %v6809, %v7836
    %v7838 = vsel %vm2273, %v7717, %v7713
    %v7839 = vsel %vm2275, %v7721, %v7838
    %v7840 = vsel %vm2277, %v7833, %v7839
    %v7841 = vsel %vm2273, %v7733, %v7729
    %v7842 = vsel %vm2275, %v7737, %v7841
    %v7843 = vsel %vm2277, %v7837, %v7842
    %7844 = vrot.lane.b32.xlu0 %v7093, 80
    %v7845 = vpop.permute.xlu0 %7844
    %7846 = vrot.lane.b32.xlu0 %v7096, 80
    %v7847 = vpop.permute.xlu0 %7846
    %7848 = vrot.lane.b32.xlu0 %v7099, 80
    %v7849 = vpop.permute.xlu0 %7848
    %7850 = vrot.lane.b32.xlu0 %v7840, 80
    %v7851 = vpop.permute.xlu0 %7850
    %7852 = vrot.lane.b32.xlu0 %v7102, 80
    %v7853 = vpop.permute.xlu0 %7852
    %7854 = vrot.lane.b32.xlu0 %v7105, 80
    %v7855 = vpop.permute.xlu0 %7854
    %7856 = vrot.lane.b32.xlu0 %v7108, 80
    %v7857 = vpop.permute.xlu0 %7856
    %7858 = vrot.lane.b32.xlu0 %v7843, 80
    %v7859 = vpop.permute.xlu0 %7858
    %v7868 = vlaneseq
    %v7869 = vshrl.u32 %v7868, 7
    %v7870 = vsub.s32 1, %v7869
    %v7871 = vrot.slane %v6617, %v7870
    %v7872 = vlaneseq
    %v7873 = vshrl.u32 %v7872, 7
    %v7874 = vsub.s32 1, %v7873
    %v7875 = vrot.slane %v6809, %v7874
    %v7876 = vsel %vm2273, %v7779, %v7775
    %v7877 = vsel %vm2275, %v7783, %v7876
    %v7878 = vsel %vm2277, %v7871, %v7877
    %v7879 = vsel %vm2273, %v7795, %v7791
    %v7880 = vsel %vm2275, %v7799, %v7879
    %v7881 = vsel %vm2277, %v7875, %v7880
    %7882 = vrot.lane.b32.xlu0 %v7157, 88
    %v7883 = vpop.permute.xlu0 %7882
    %7884 = vrot.lane.b32.xlu0 %v7160, 88
    %v7885 = vpop.permute.xlu0 %7884
    %7886 = vrot.lane.b32.xlu0 %v7163, 88
    %v7887 = vpop.permute.xlu0 %7886
    %7888 = vrot.lane.b32.xlu0 %v7878, 88
    %v7889 = vpop.permute.xlu0 %7888
    %7890 = vrot.lane.b32.xlu0 %v7166, 88
    %v7891 = vpop.permute.xlu0 %7890
    %7892 = vrot.lane.b32.xlu0 %v7169, 88
    %v7893 = vpop.permute.xlu0 %7892
    %7894 = vrot.lane.b32.xlu0 %v7172, 88
    %v7895 = vpop.permute.xlu0 %7894
    %7896 = vrot.lane.b32.xlu0 %v7881, 88
    %v7897 = vpop.permute.xlu0 %7896
    %7906 = vrot.lane.b32.xlu0 %v7327, 96
    %v7907 = vpop.permute.xlu0 %7906
    %7908 = vrot.lane.b32.xlu0 %v7330, 96
    %v7909 = vpop.permute.xlu0 %7908
    %7910 = vrot.lane.b32.xlu0 %v7333, 96
    %v7911 = vpop.permute.xlu0 %7910
    %7912 = vrot.lane.b32.xlu0 %v2278, 96
    %v7913 = vpop.permute.xlu0 %7912
    %7914 = vrot.lane.b32.xlu0 %v7339, 96
    %v7915 = vpop.permute.xlu0 %7914
    %7916 = vrot.lane.b32.xlu0 %v7342, 96
    %v7917 = vpop.permute.xlu0 %7916
    %7918 = vrot.lane.b32.xlu0 %v7345, 96
    %v7919 = vpop.permute.xlu0 %7918
    %7927 = vrot.lane.b32.xlu0 %v7503, 104
    %v7928 = vpop.permute.xlu0 %7927
    %7929 = vrot.lane.b32.xlu0 %v7506, 104
    %v7930 = vpop.permute.xlu0 %7929
    %7931 = vrot.lane.b32.xlu0 %v7509, 104
    %v7932 = vpop.permute.xlu0 %7931
    %7933 = vrot.lane.b32.xlu0 %v2882, 104
    %v7934 = vpop.permute.xlu0 %7933
    %7935 = vrot.lane.b32.xlu0 %v7515, 104
    %v7936 = vpop.permute.xlu0 %7935
    %7937 = vrot.lane.b32.xlu0 %v7518, 104
    %v7938 = vpop.permute.xlu0 %7937
    %7939 = vrot.lane.b32.xlu0 %v7521, 104
    %v7940 = vpop.permute.xlu0 %7939
    %7948 = vrot.lane.b32.xlu0 %v7583, 112
    %v7949 = vpop.permute.xlu0 %7948
    %7950 = vrot.lane.b32.xlu0 %v7586, 112
    %v7951 = vpop.permute.xlu0 %7950
    %7952 = vrot.lane.b32.xlu0 %v7589, 112
    %v7953 = vpop.permute.xlu0 %7952
    %7954 = vrot.lane.b32.xlu0 %v7090, 112
    %v7955 = vpop.permute.xlu0 %7954
    %7956 = vrot.lane.b32.xlu0 %v7595, 112
    %v7957 = vpop.permute.xlu0 %7956
    %7958 = vrot.lane.b32.xlu0 %v7598, 112
    %v7959 = vpop.permute.xlu0 %7958
    %7960 = vrot.lane.b32.xlu0 %v7601, 112
    %v7961 = vpop.permute.xlu0 %7960
    %7969 = vrot.lane.b32.xlu0 %v7663, 120
    %v7970 = vpop.permute.xlu0 %7969
    %7971 = vrot.lane.b32.xlu0 %v7666, 120
    %v7972 = vpop.permute.xlu0 %7971
    %7973 = vrot.lane.b32.xlu0 %v7669, 120
    %v7974 = vpop.permute.xlu0 %7973
    %7975 = vrot.lane.b32.xlu0 %v7154, 120
    %v7976 = vpop.permute.xlu0 %7975
    %7977 = vrot.lane.b32.xlu0 %v7675, 120
    %v7978 = vpop.permute.xlu0 %7977
    %7979 = vrot.lane.b32.xlu0 %v7678, 120
    %v7980 = vpop.permute.xlu0 %7979
    %7981 = vrot.lane.b32.xlu0 %v7681, 120
    %v7982 = vpop.permute.xlu0 %7981
    %vm7990 = vcmask 64512
    %v7991 = vsel %vm7990, %v2278, %v7046
    %v7992 = vsel %vm7990, %v6908, %v7048
    %v7993 = vsel %vm7990, %v6911, %v7050
    %v7994 = vsel %vm7990, %v6914, %v7052
    %v7995 = vsel %vm7990, %v6917, %v7054
    %v7996 = vsel %vm7990, %v6920, %v7056
    %v7997 = vsel %vm7990, %v6923, %v7058
    %vm7998 = vcmask 130048
    %v7999 = vsel %vm7998, %v7991, %v7110
    %v8000 = vsel %vm7998, %v7992, %v7112
    %v8001 = vsel %vm7998, %v7993, %v7114
    %v8002 = vsel %vm7998, %v7994, %v7116
    %v8003 = vsel %vm7998, %v7995, %v7118
    %v8004 = vsel %vm7998, %v7996, %v7120
    %v8005 = vsel %vm7998, %v7997, %v7122
    %v8006 = vsel %vm5930, %v7999, %v7174
    %v8007 = vsel %vm5930, %v8000, %v7176
    %v8008 = vsel %vm5930, %v8001, %v7178
    %v8009 = vsel %vm5930, %v8002, %v7180
    %v8010 = vsel %vm5930, %v8003, %v7182
    %v8011 = vsel %vm5930, %v8004, %v7184
    %v8012 = vsel %vm5930, %v8005, %v7186
    %vm8013 = vcmask 261120
    %v8014 = vsel %vm8013, %v8006, %v7347
    %v8015 = vsel %vm8013, %v8007, %v7349
    %v8016 = vsel %vm8013, %v8008, %v7351
    %v8017 = vsel %vm8013, %v8009, %v7353
    %v8018 = vsel %vm8013, %v8006, %v7355
    %v8019 = vsel %vm8013, %v8010, %v7357
    %v8020 = vsel %vm8013, %v8011, %v7359
    %v8021 = vsel %vm8013, %v8012, %v7361
    %vm8022 = vcmask 326656
    %v8023 = vsel %vm8022, %v8014, %v7523
    %v8024 = vsel %vm8022, %v8015, %v7525
    %v8025 = vsel %vm8022, %v8016, %v7527
    %v8026 = vsel %vm8022, %v8017, %v7529
    %v8027 = vsel %vm8022, %v8018, %v7531
    %v8028 = vsel %vm8022, %v8019, %v7533
    %v8029 = vsel %vm8022, %v8020, %v7535
    %v8030 = vsel %vm8022, %v8021, %v7537
    %v8031 = vsel %vm6072, %v8023, %v7603
    %v8032 = vsel %vm6072, %v8024, %v7605
    %v8033 = vsel %vm6072, %v8025, %v7607
    %v8034 = vsel %vm6072, %v8026, %v7609
    %v8035 = vsel %vm6072, %v8027, %v7611
    %v8036 = vsel %vm6072, %v8028, %v7613
    %v8037 = vsel %vm6072, %v8029, %v7615
    %v8038 = vsel %vm6072, %v8030, %v7617
    %vm8039 = vcmask 457728
    %v8040 = vsel %vm8039, %v8031, %v7683
    %v8041 = vsel %vm8039, %v8032, %v7685
    %v8042 = vsel %vm8039, %v8033, %v7687
    %v8043 = vsel %vm8039, %v8034, %v7689
    %v8044 = vsel %vm8039, %v8035, %v7691
    %v8045 = vsel %vm8039, %v8036, %v7693
    %v8046 = vsel %vm8039, %v8037, %v7695
    %v8047 = vsel %vm8039, %v8038, %v7697
    %vm8048 = vcmask 523264
    %v8049 = vsel %vm8048, %v8040, %v7745
    %v8050 = vsel %vm8048, %v8041, %v7747
    %v8051 = vsel %vm8048, %v8042, %v7749
    %v8052 = vsel %vm8048, %v8043, %v7751
    %v8053 = vsel %vm8048, %v8044, %v7753
    %v8054 = vsel %vm8048, %v8045, %v7755
    %v8055 = vsel %vm8048, %v8046, %v7757
    %v8056 = vsel %vm8048, %v8047, %v7759
    %vm8057 = vcmask 588800
    %v8058 = vsel %vm8057, %v8049, %v7807
    %v8059 = vsel %vm8057, %v8050, %v7809
    %v8060 = vsel %vm8057, %v8051, %v7811
    %v8061 = vsel %vm8057, %v8052, %v7813
    %v8062 = vsel %vm8057, %v8053, %v7815
    %v8063 = vsel %vm8057, %v8054, %v7817
    %v8064 = vsel %vm8057, %v8055, %v7819
    %v8065 = vsel %vm8057, %v8056, %v7821
    %vm8066 = vcmask 654336
    %v8067 = vsel %vm8066, %v8058, %v7845
    %v8068 = vsel %vm8066, %v8059, %v7847
    %v8069 = vsel %vm8066, %v8060, %v7849
    %v8070 = vsel %vm8066, %v8061, %v7851
    %v8071 = vsel %vm8066, %v8062, %v7853
    %v8072 = vsel %vm8066, %v8063, %v7855
    %v8073 = vsel %vm8066, %v8064, %v7857
    %v8074 = vsel %vm8066, %v8065, %v7859
    %vm8075 = vcmask 719872
    %v8076 = vsel %vm8075, %v8067, %v7883
    %v8077 = vsel %vm8075, %v8068, %v7885
    %v8078 = vsel %vm8075, %v8069, %v7887
    %v8079 = vsel %vm8075, %v8070, %v7889
    %v8080 = vsel %vm8075, %v8071, %v7891
    %v8081 = vsel %vm8075, %v8072, %v7893
    %v8082 = vsel %vm8075, %v8073, %v7895
    %v8083 = vsel %vm8075, %v8074, %v7897
    %vm8084 = vcmask 785408
    %v8085 = vsel %vm8084, %v8076, %v7907
    %v8086 = vsel %vm8084, %v8077, %v7909
    %v8087 = vsel %vm8084, %v8078, %v7911
    %v8088 = vsel %vm8084, %v8079, %v7913
    %v8089 = vsel %vm8084, %v8080, %v7915
    %v8090 = vsel %vm8084, %v8081, %v7917
    %v8091 = vsel %vm8084, %v8082, %v7919
    %v8092 = vsel %vm8084, %v8083, %v7913
    %vm8093 = vcmask 850944
    %v8094 = vsel %vm8093, %v8085, %v7928
    %v8095 = vsel %vm8093, %v8086, %v7930
    %v8096 = vsel %vm8093, %v8087, %v7932
    %v8097 = vsel %vm8093, %v8088, %v7934
    %v8098 = vsel %vm8093, %v8089, %v7936
    %v8099 = vsel %vm8093, %v8090, %v7938
    %v8100 = vsel %vm8093, %v8091, %v7940
    %v8101 = vsel %vm8093, %v8092, %v7934
    %vm8102 = vcmask 916480
    %v8103 = vsel %vm8102, %v8094, %v7949
    %v8104 = vsel %vm8102, %v8095, %v7951
    %v8105 = vsel %vm8102, %v8096, %v7953
    %v8106 = vsel %vm8102, %v8097, %v7955
    %v8107 = vsel %vm8102, %v8098, %v7957
    %v8108 = vsel %vm8102, %v8099, %v7959
    %v8109 = vsel %vm8102, %v8100, %v7961
    %v8110 = vsel %vm8102, %v8101, %v7955
    %vm8111 = vcmask 982016
    %v8112 = vsel %vm8111, %v8103, %v7970
    %v8113 = vsel %vm8111, %v8104, %v7972
    %v8114 = vsel %vm8111, %v8105, %v7974
    %v8115 = vsel %vm8111, %v8106, %v7976
    %v8116 = vsel %vm8111, %v8107, %v7978
    %v8117 = vsel %vm8111, %v8108, %v7980
    %v8118 = vsel %vm8111, %v8109, %v7982
    %v8119 = vsel %vm8111, %v8110, %v7976
    %v8120 = vld [vmem:[%s1 + $0x30] sm:$0xff]
    %v8121 = vld [vmem:[%s1 + $0x38] sm:$0xff]
    %v8122 = vld [vmem:[%s1 + $0x40] sm:$0xff]
    %v8123 = vld [vmem:[%s1 + $0x48] sm:$0xff]
    %v8124 = vld [vmem:[%s1 + $0x50] sm:$0xff]
    %v8125 = vld [vmem:[%s1 + $0x58] sm:$0xff]
    %v8126 = vld [vmem:[%s1 + $0x60] sm:$0xff]
    %v8127 = vld [vmem:[%s1 + $0x68] sm:$0xff]
    %v8128 = vld [vmem:[%s1 + $0x70] sm:$0xff]
    %v8129 = vld [vmem:[%s1 + $0x78] sm:$0xff]
    %v8130 = vld [vmem:[%s1 + $0x80] sm:$0xff]
    %v8131 = vld [vmem:[%s1 + $0x88] sm:$0xff]
    %v8132 = vld [vmem:[%s1 + $0x90] sm:$0xff]
    %v8133 = vld [vmem:[%s1 + $0x98] sm:$0xff]
    %v8134 = vld [vmem:[%s1 + $0xa0] sm:$0xff]
    %v8135 = vld [vmem:[%s1 + $0xa8] sm:$0xff]
    %v8136 = vld [vmem:[%s2] sm:$0x1]
    %v8138 = vlaneseq
    %v8139 = vshrl.u32 %v8138, 7
    %v8140 = vsub.s32 0, %v8139
    %v8141 = vrot.slane %v8136, %v8140
    %v8151 = vcombine.low %v8112, %v8113
    %v8152 = vcombine.low %v8114, %v8115
    %v8153 = vcombine.low %v8116, %v8117
    %v8154 = vcombine.low %v8118, %v8119
    %8159 = vmatprep.subr.mxu0 0.0
    %8160 = vmatpush1.msra.mxu0 %v8120
    %8161 = vmatprep.subr.mxu0 0.0
    %8162 = vmatpush1.msra.mxu0 %v8121
    %8163 = vmatprep.subr.mxu0 0.0
    %8164 = vmatpush1.msra.mxu0 %v8122
    %8165 = vmatprep.subr.mxu0 0.0
    %8166 = vmatpush1.msra.mxu0 %v8123
    %8167 = vmatprep.subr.mxu0 0.0
    %8168 = vmatpush1.msra.mxu0 %v8124
    %8169 = vmatprep.subr.mxu0 0.0
    %8170 = vmatpush1.msra.mxu0 %v8125
    %8171 = vmatprep.subr.mxu0 0.0
    %8172 = vmatpush1.msra.mxu0 %v8126
    %8173 = vmatprep.subr.mxu0 0.0
    %8174 = vmatpush1.msra.mxu0 %v8127
    %8175 = vmatprep.subr.mxu0 0.0
    %8176 = vmatpush1.msra.mxu0 %v8128
    %8177 = vmatprep.subr.mxu0 0.0
    %8178 = vmatpush1.msra.mxu0 %v8129
    %8179 = vmatprep.subr.mxu0 0.0
    %8180 = vmatpush1.msra.mxu0 %v8130
    %8181 = vmatprep.subr.mxu0 0.0
    %8182 = vmatpush1.msra.mxu0 %v8131
    %8183 = vmatprep.subr.mxu0 0.0
    %8184 = vmatpush1.msra.mxu0 %v8132
    %8185 = vmatprep.subr.mxu0 0.0
    %8186 = vmatpush1.msra.mxu0 %v8133
    %8187 = vmatprep.subr.mxu0 0.0
    %8188 = vmatpush1.msra.mxu0 %v8134
    %8189 = vmatprep.subr.mxu0 0.0
    %8190 = vmatpush1.msra.mxu0 %v8135
    %8191 = vmatprep.subr.mxu0 0.0
    %8192 = vmatpush1.msra.mxu0 0.0
    %8193 = vmatprep.subr.mxu0 0.0
    %8194 = vmatpush1.msra.mxu0 0.0
    %8195 = vmatprep.subr.mxu0 0.0
    %8196 = vmatpush1.msra.mxu0 0.0
    %8197 = vmatprep.subr.mxu0 0.0
    %8198 = vmatpush1.msra.mxu0 0.0
    %8199 = vmatprep.subr.mxu0 0.0
    %8200 = vmatpush1.msra.mxu0 0.0
    %8201 = vmatprep.subr.mxu0 0.0
    %8202 = vmatpush1.msra.mxu0 0.0
    %8203 = vmatprep.subr.mxu0 0.0
    %8204 = vmatpush1.msra.mxu0 0.0
    %8205 = vmatprep.subr.mxu0 0.0
    %8206 = vmatpush1.msra.mxu0 0.0
    %8207 = vmatprep.subr.mxu0 0.0
    %8208 = vmatpush1.msra.mxu0 0.0
    %8209 = vmatprep.subr.mxu0 0.0
    %8210 = vmatpush1.msra.mxu0 0.0
    %8211 = vmatprep.subr.mxu0 0.0
    %8212 = vmatpush1.msra.mxu0 0.0
    %8213 = vmatprep.subr.mxu0 0.0
    %8214 = vmatpush1.msra.mxu0 0.0
    %8215 = vmatprep.subr.mxu0 0.0
    %8216 = vmatpush1.msra.mxu0 0.0
    %8217 = vmatprep.subr.mxu0 0.0
    %8218 = vmatpush1.msra.mxu0 0.0
    %8219 = vmatprep.subr.mxu0 0.0
    %8220 = vmatpush1.msra.mxu0 0.0
    %8221 = vmatprep.subr.mxu0 0.0
    %8222 = vmatpush1.msra.mxu0 0.0
    %8223 = vmatprep.mubr.f32.mxu0 0.0
    %8224 = vmatmul.mubr.f32.gmra.mrb[0].mxu0 %v8151
    %v8225 = vpop.f32.mrb[0].mxu0
    %v8226 = vadd.f32 %v8141, %v8225
    %v8227 = vpop.f32.mrb[0].mxu0
    %8228 = vmatprep.mubr.f32.mxu0 0.0
    %8229 = vmatmul.mubr.f32.gmra.mrb[0].mxu0 %v8152
    %v8230 = vpop.f32.mrb[0].mxu0
    %v8231 = vadd.f32 %v8141, %v8230
    %v8232 = vpop.f32.mrb[0].mxu0
    %8233 = vmatprep.mubr.f32.mxu0 0.0
    %8234 = vmatmul.mubr.f32.gmra.mrb[0].mxu0 %v8153
    %v8235 = vpop.f32.mrb[0].mxu0
    %v8236 = vadd.f32 %v8141, %v8235
    %v8237 = vpop.f32.mrb[0].mxu0
    %8238 = vmatprep.mubr.f32.mxu0 0.0
    %8239 = vmatmul.mubr.f32.gmra.mrb[0].mxu0 %v8154
    %v8240 = vpop.f32.mrb[0].mxu0
    %v8241 = vadd.f32 %v8141, %v8240
    %v8242 = vpop.f32.mrb[0].mxu0
    %8243 = vdwg.mxu0
    %vm8244 = vcmp.ge.f32.partialorder %v8226, 0.0
    %vm8245 = vcmp.ge.f32.partialorder %v8231, 0.0
    %vm8246 = vcmp.ge.f32.partialorder %v8236, 0.0
    %vm8247 = vcmp.ge.f32.partialorder %v8241, 0.0
    %v8248 = vmul.f32 %v8226, 0.2
    %v8249 = vmul.f32 %v8231, 0.2
    %v8250 = vmul.f32 %v8236, 0.2
    %v8251 = vmul.f32 %v8241, 0.2
    %v8252 = vsel %vm8244, %v8226, %v8248
    %v8253 = vsel %vm8245, %v8231, %v8249
    %v8254 = vsel %vm8246, %v8236, %v8250
    %v8255 = vsel %vm8247, %v8241, %v8251
    %v8260 = vcombine.high %v8252, %v8252
    %v8261 = vcombine.high %v8253, %v8253
    %v8262 = vcombine.high %v8254, %v8254
    %v8263 = vcombine.high %v8255, %v8255
    %v8264 = vlaneseq
    %v8265 = vshrl.u32 %v8264, 7
    %v8266 = vsub.s32 1, %v8265
    %v8267 = vrot.slane %v8252, %v8266
    %v8268 = vlaneseq
    %v8269 = vshrl.u32 %v8268, 7
    %v8270 = vsub.s32 1, %v8269
    %v8271 = vrot.slane %v8254, %v8270
    %8272 = vrot.lane.b32.xlu0 %v8267, 16
    %v8273 = vpop.permute.xlu0 %8272
    %8274 = vrot.lane.b32.xlu0 %v8271, 16
    %v8275 = vpop.permute.xlu0 %8274
    %v8278 = vlaneseq
    %v8279 = vshrl.u32 %v8278, 7
    %v8280 = vsub.s32 2, %v8279
    %v8281 = vrot.slane %v8252, %v8280
    %v8282 = vlaneseq
    %v8283 = vshrl.u32 %v8282, 7
    %v8284 = vsub.s32 2, %v8283
    %v8285 = vrot.slane %v8254, %v8284
    %8286 = vrot.lane.b32.xlu0 %v8281, 32
    %v8287 = vpop.permute.xlu0 %8286
    %8288 = vrot.lane.b32.xlu0 %v8285, 32
    %v8289 = vpop.permute.xlu0 %8288
    %v8292 = vlaneseq
    %v8293 = vshrl.u32 %v8292, 7
    %v8294 = vsub.s32 3, %v8293
    %v8295 = vrot.slane %v8252, %v8294
    %v8296 = vlaneseq
    %v8297 = vshrl.u32 %v8296, 7
    %v8298 = vsub.s32 3, %v8297
    %v8299 = vrot.slane %v8254, %v8298
    %8300 = vrot.lane.b32.xlu0 %v8295, 48
    %v8301 = vpop.permute.xlu0 %8300
    %8302 = vrot.lane.b32.xlu0 %v8299, 48
    %v8303 = vpop.permute.xlu0 %8302
    %v8306 = vlaneseq
    %v8307 = vshrl.u32 %v8306, 7
    %v8308 = vsub.s32 0, %v8307
    %v8309 = vrot.slane %v8260, %v8308
    %v8310 = vlaneseq
    %v8311 = vshrl.u32 %v8310, 7
    %v8312 = vsub.s32 0, %v8311
    %v8313 = vrot.slane %v8262, %v8312
    %8314 = vrot.lane.b32.xlu0 %v8309, 64
    %v8315 = vpop.permute.xlu0 %8314
    %8316 = vrot.lane.b32.xlu0 %v8313, 64
    %v8317 = vpop.permute.xlu0 %8316
    %v8320 = vlaneseq
    %v8321 = vshrl.u32 %v8320, 7
    %v8322 = vsub.s32 1, %v8321
    %v8323 = vrot.slane %v8260, %v8322
    %v8324 = vlaneseq
    %v8325 = vshrl.u32 %v8324, 7
    %v8326 = vsub.s32 1, %v8325
    %v8327 = vrot.slane %v8262, %v8326
    %8328 = vrot.lane.b32.xlu0 %v8323, 80
    %v8329 = vpop.permute.xlu0 %8328
    %8330 = vrot.lane.b32.xlu0 %v8327, 80
    %v8331 = vpop.permute.xlu0 %8330
    %v8334 = vlaneseq
    %v8335 = vshrl.u32 %v8334, 7
    %v8336 = vsub.s32 2, %v8335
    %v8337 = vrot.slane %v8260, %v8336
    %v8338 = vlaneseq
    %v8339 = vshrl.u32 %v8338, 7
    %v8340 = vsub.s32 2, %v8339
    %v8341 = vrot.slane %v8262, %v8340
    %8342 = vrot.lane.b32.xlu0 %v8337, 96
    %v8343 = vpop.permute.xlu0 %8342
    %8344 = vrot.lane.b32.xlu0 %v8341, 96
    %v8345 = vpop.permute.xlu0 %8344
    %v8348 = vlaneseq
    %v8349 = vshrl.u32 %v8348, 7
    %v8350 = vsub.s32 3, %v8349
    %v8351 = vrot.slane %v8260, %v8350
    %v8352 = vlaneseq
    %v8353 = vshrl.u32 %v8352, 7
    %v8354 = vsub.s32 3, %v8353
    %v8355 = vrot.slane %v8262, %v8354
    %8356 = vrot.lane.b32.xlu0 %v8351, 112
    %v8357 = vpop.permute.xlu0 %8356
    %8358 = vrot.lane.b32.xlu0 %v8355, 112
    %v8359 = vpop.permute.xlu0 %8358
    %v8362 = vlaneseq
    %v8363 = vshrl.u32 %v8362, 7
    %v8364 = vsub.s32 1, %v8363
    %v8365 = vrot.slane %v8253, %v8364
    %v8366 = vlaneseq
    %v8367 = vshrl.u32 %v8366, 7
    %v8368 = vsub.s32 1, %v8367
    %v8369 = vrot.slane %v8255, %v8368
    %8370 = vrot.lane.b32.xlu0 %v8365, 16
    %v8371 = vpop.permute.xlu0 %8370
    %8372 = vrot.lane.b32.xlu0 %v8369, 16
    %v8373 = vpop.permute.xlu0 %8372
    %v8376 = vlaneseq
    %v8377 = vshrl.u32 %v8376, 7
    %v8378 = vsub.s32 2, %v8377
    %v8379 = vrot.slane %v8253, %v8378
    %v8380 = vlaneseq
    %v8381 = vshrl.u32 %v8380, 7
    %v8382 = vsub.s32 2, %v8381
    %v8383 = vrot.slane %v8255, %v8382
    %8384 = vrot.lane.b32.xlu0 %v8379, 32
    %v8385 = vpop.permute.xlu0 %8384
    %8386 = vrot.lane.b32.xlu0 %v8383, 32
    %v8387 = vpop.permute.xlu0 %8386
    %v8390 = vlaneseq
    %v8391 = vshrl.u32 %v8390, 7
    %v8392 = vsub.s32 3, %v8391
    %v8393 = vrot.slane %v8253, %v8392
    %v8394 = vlaneseq
    %v8395 = vshrl.u32 %v8394, 7
    %v8396 = vsub.s32 3, %v8395
    %v8397 = vrot.slane %v8255, %v8396
    %8398 = vrot.lane.b32.xlu0 %v8393, 48
    %v8399 = vpop.permute.xlu0 %8398
    %8400 = vrot.lane.b32.xlu0 %v8397, 48
    %v8401 = vpop.permute.xlu0 %8400
    %v8404 = vlaneseq
    %v8405 = vshrl.u32 %v8404, 7
    %v8406 = vsub.s32 0, %v8405
    %v8407 = vrot.slane %v8261, %v8406
    %v8408 = vlaneseq
    %v8409 = vshrl.u32 %v8408, 7
    %v8410 = vsub.s32 0, %v8409
    %v8411 = vrot.slane %v8263, %v8410
    %8412 = vrot.lane.b32.xlu0 %v8407, 64
    %v8413 = vpop.permute.xlu0 %8412
    %8414 = vrot.lane.b32.xlu0 %v8411, 64
    %v8415 = vpop.permute.xlu0 %8414
    %v8418 = vlaneseq
    %v8419 = vshrl.u32 %v8418, 7
    %v8420 = vsub.s32 1, %v8419
    %v8421 = vrot.slane %v8261, %v8420
    %v8422 = vlaneseq
    %v8423 = vshrl.u32 %v8422, 7
    %v8424 = vsub.s32 1, %v8423
    %v8425 = vrot.slane %v8263, %v8424
    %8426 = vrot.lane.b32.xlu0 %v8421, 80
    %v8427 = vpop.permute.xlu0 %8426
    %8428 = vrot.lane.b32.xlu0 %v8425, 80
    %v8429 = vpop.permute.xlu0 %8428
    %v8432 = vlaneseq
    %v8433 = vshrl.u32 %v8432, 7
    %v8434 = vsub.s32 2, %v8433
    %v8435 = vrot.slane %v8261, %v8434
    %v8436 = vlaneseq
    %v8437 = vshrl.u32 %v8436, 7
    %v8438 = vsub.s32 2, %v8437
    %v8439 = vrot.slane %v8263, %v8438
    %8440 = vrot.lane.b32.xlu0 %v8435, 96
    %v8441 = vpop.permute.xlu0 %8440
    %8442 = vrot.lane.b32.xlu0 %v8439, 96
    %v8443 = vpop.permute.xlu0 %8442
    %v8446 = vlaneseq
    %v8447 = vshrl.u32 %v8446, 7
    %v8448 = vsub.s32 3, %v8447
    %v8449 = vrot.slane %v8261, %v8448
    %v8450 = vlaneseq
    %v8451 = vshrl.u32 %v8450, 7
    %v8452 = vsub.s32 3, %v8451
    %v8453 = vrot.slane %v8263, %v8452
    %8454 = vrot.lane.b32.xlu0 %v8449, 112
    %v8455 = vpop.permute.xlu0 %8454
    %8456 = vrot.lane.b32.xlu0 %v8453, 112
    %v8457 = vpop.permute.xlu0 %8456
    %v8460 = vsel %vm7998, %v8252, %v8273
    %v8461 = vsel %vm7998, %v8254, %v8275
    %v8462 = vsel %vm8013, %v8460, %v8287
    %v8463 = vsel %vm8013, %v8461, %v8289
    %v8464 = vsel %vm6072, %v8462, %v8301
    %v8465 = vsel %vm6072, %v8463, %v8303
    %v8466 = vsel %vm8048, %v8464, %v8315
    %v8467 = vsel %vm8048, %v8465, %v8317
    %v8468 = vsel %vm8066, %v8466, %v8329
    %v8469 = vsel %vm8066, %v8467, %v8331
    %v8470 = vsel %vm8084, %v8468, %v8343
    %v8471 = vsel %vm8084, %v8469, %v8345
    %v8472 = vsel %vm8102, %v8470, %v8357
    %v8473 = vsel %vm8102, %v8471, %v8359
    %v8474 = vsel %vm7998, %v8253, %v8371
    %v8475 = vsel %vm7998, %v8255, %v8373
    %v8476 = vsel %vm8013, %v8474, %v8385
    %v8477 = vsel %vm8013, %v8475, %v8387
    %v8478 = vsel %vm6072, %v8476, %v8399
    %v8479 = vsel %vm6072, %v8477, %v8401
    %v8480 = vsel %vm8048, %v8478, %v8413
    %v8481 = vsel %vm8048, %v8479, %v8415
    %v8482 = vsel %vm8066, %v8480, %v8427
    %v8483 = vsel %vm8066, %v8481, %v8429
    %v8484 = vsel %vm8084, %v8482, %v8441
    %v8485 = vsel %vm8084, %v8483, %v8443
    %v8486 = vsel %vm8102, %v8484, %v8455
    %v8487 = vsel %vm8102, %v8485, %v8457
    %v8488 = vld [vmem:[%s1 + $0xb0] sm:$0xff]
    %v8489 = vld [vmem:[%s1 + $0xb8] sm:$0xff]
    %v8490 = vld [vmem:[%s1 + $0xc0] sm:$0xff]
    %v8491 = vld [vmem:[%s1 + $0xc8] sm:$0xff]
    %v8492 = vld [vmem:[%s1 + $0xd0] sm:$0xff]
    %v8493 = vld [vmem:[%s1 + $0xd8] sm:$0xff]
    %v8494 = vld [vmem:[%s1 + $0xe0] sm:$0xff]
    %v8495 = vld [vmem:[%s1 + $0xe8] sm:$0xff]
    %v8496 = vld [vmem:[%s1 + $0xf0] sm:$0xff]
    %v8497 = vld [vmem:[%s1 + $0xf8] sm:$0xff]
    %v8498 = vld [vmem:[%s1 + $0x100] sm:$0xff]
    %v8499 = vld [vmem:[%s1 + $0x108] sm:$0xff]
    %v8500 = vld [vmem:[%s1 + $0x110] sm:$0xff]
    %v8501 = vld [vmem:[%s1 + $0x118] sm:$0xff]
    %v8502 = vld [vmem:[%s1 + $0x120] sm:$0xff]
    %v8503 = vld [vmem:[%s1 + $0x128] sm:$0xff]
    %v8504 = vld [vmem:[%s1 + $0x130] sm:$0xff]
    %v8505 = vld [vmem:[%s1 + $0x138] sm:$0xff]
    %v8506 = vld [vmem:[%s1 + $0x140] sm:$0xff]
    %v8507 = vld [vmem:[%s1 + $0x148] sm:$0xff]
    %v8508 = vld [vmem:[%s1 + $0x150] sm:$0xff]
    %v8509 = vld [vmem:[%s1 + $0x158] sm:$0xff]
    %v8510 = vld [vmem:[%s1 + $0x160] sm:$0xff]
    %v8511 = vld [vmem:[%s1 + $0x168] sm:$0xff]
    %v8512 = vld [vmem:[%s1 + $0x170] sm:$0xff]
    %v8513 = vld [vmem:[%s1 + $0x178] sm:$0xff]
    %v8514 = vld [vmem:[%s1 + $0x180] sm:$0xff]
    %v8515 = vld [vmem:[%s1 + $0x188] sm:$0xff]
    %v8516 = vld [vmem:[%s1 + $0x190] sm:$0xff]
    %v8517 = vld [vmem:[%s1 + $0x198] sm:$0xff]
    %v8518 = vld [vmem:[%s1 + $0x1a0] sm:$0xff]
    %v8519 = vld [vmem:[%s1 + $0x1a8] sm:$0xff]
    %v8524 = vrot.slane %v8473, 7
    %v8525 = vsel %vm2273, %v8524, %v8472
    %v8526 = vrot.slane %v8487, 7
    %v8527 = vsel %vm2273, %v8526, %v8486
    %8530 = vmatprep.subr.mxu0 0.0
    %8531 = vmatpush1.msra.mxu0 %v8488
    %8532 = vmatprep.subr.mxu0 0.0
    %8533 = vmatpush1.msra.mxu0 %v8489
    %8534 = vmatprep.subr.mxu0 0.0
    %8535 = vmatpush1.msra.mxu0 %v8490
    %8536 = vmatprep.subr.mxu0 0.0
    %8537 = vmatpush1.msra.mxu0 %v8491
    %8538 = vmatprep.subr.mxu0 0.0
    %8539 = vmatpush1.msra.mxu0 %v8492
    %8540 = vmatprep.subr.mxu0 0.0
    %8541 = vmatpush1.msra.mxu0 %v8493
    %8542 = vmatprep.subr.mxu0 0.0
    %8543 = vmatpush1.msra.mxu0 %v8494
    %8544 = vmatprep.subr.mxu0 0.0
    %8545 = vmatpush1.msra.mxu0 %v8495
    %8546 = vmatprep.subr.mxu0 0.0
    %8547 = vmatpush1.msra.mxu0 %v8496
    %8548 = vmatprep.subr.mxu0 0.0
    %8549 = vmatpush1.msra.mxu0 %v8497
    %8550 = vmatprep.subr.mxu0 0.0
    %8551 = vmatpush1.msra.mxu0 %v8498
    %8552 = vmatprep.subr.mxu0 0.0
    %8553 = vmatpush1.msra.mxu0 %v8499
    %8554 = vmatprep.subr.mxu0 0.0
    %8555 = vmatpush1.msra.mxu0 %v8500
    %8556 = vmatprep.subr.mxu0 0.0
    %8557 = vmatpush1.msra.mxu0 %v8501
    %8558 = vmatprep.subr.mxu0 0.0
    %8559 = vmatpush1.msra.mxu0 %v8502
    %8560 = vmatprep.subr.mxu0 0.0
    %8561 = vmatpush1.msra.mxu0 %v8503
    %8562 = vmatprep.subr.mxu0 0.0
    %8563 = vmatpush1.msra.mxu0 %v8504
    %8564 = vmatprep.subr.mxu0 0.0
    %8565 = vmatpush1.msra.mxu0 %v8505
    %8566 = vmatprep.subr.mxu0 0.0
    %8567 = vmatpush1.msra.mxu0 %v8506
    %8568 = vmatprep.subr.mxu0 0.0
    %8569 = vmatpush1.msra.mxu0 %v8507
    %8570 = vmatprep.subr.mxu0 0.0
    %8571 = vmatpush1.msra.mxu0 %v8508
    %8572 = vmatprep.subr.mxu0 0.0
    %8573 = vmatpush1.msra.mxu0 %v8509
    %8574 = vmatprep.subr.mxu0 0.0
    %8575 = vmatpush1.msra.mxu0 %v8510
    %8576 = vmatprep.subr.mxu0 0.0
    %8577 = vmatpush1.msra.mxu0 %v8511
    %8578 = vmatprep.subr.mxu0 0.0
    %8579 = vmatpush1.msra.mxu0 %v8512
    %8580 = vmatprep.subr.mxu0 0.0
    %8581 = vmatpush1.msra.mxu0 %v8513
    %8582 = vmatprep.subr.mxu0 0.0
    %8583 = vmatpush1.msra.mxu0 %v8514
    %8584 = vmatprep.subr.mxu0 0.0
    %8585 = vmatpush1.msra.mxu0 %v8515
    %8586 = vmatprep.subr.mxu0 0.0
    %8587 = vmatpush1.msra.mxu0 %v8516
    %8588 = vmatprep.subr.mxu0 0.0
    %8589 = vmatpush1.msra.mxu0 %v8517
    %8590 = vmatprep.subr.mxu0 0.0
    %8591 = vmatpush1.msra.mxu0 %v8518
    %8592 = vmatprep.subr.mxu0 0.0
    %8593 = vmatpush1.msra.mxu0 %v8519
    %8594 = vmatprep.mubr.f32.mxu0 %v8527
    %8595 = vmatmul.mubr.f32.gmra.mrb[0].mxu0 %v8525
    %v8596 = vpop.f32.mrb[0].mxu0
    %v8597 = vadd.f32 0.0, %v8596
    %v8598 = vpop.f32.mrb[0].mxu0
    %8599 = vdwg.mxu0
    %vm8600 = vcmask 58368
    %8601 = vst.msk [vmem:[#allocation2] sm:$0x3] %vm8600, %v8597
    // Predicated region
    $region14: #{encoder_forward.1} parent=1 // pred_check
      _
    $region15: #{encoder_forward.1} parent=1 // pred_check_branch
      %8603 = sbr.rel (0) target = $region17
    $region16: #{encoder_forward.1} parent=1 // pred_region
      %s8605 = ssub.s32 32, 32
      %8606 = vsyncadd [#allocation3], %s8605
      %s8608 = sshll.u32 [#allocation2], 4
      %s8609 = int_to_ptr.vmem [resolvable:$true] %s8608
      %8611 = dma.vmem_to_hbm [thread:$0]  %s8609, 32, %s3, [#allocation3]
    $region17: #{encoder_forward.1} parent=1 // pred_fallthru
      _
    // Predicated region
    $region18: #{encoder_forward.1} parent=1 // pred_check
      _
    $region19: #{encoder_forward.1} parent=1 // pred_check_branch
      %8613 = sbr.rel (0) target = $region21
    $region20: #{encoder_forward.1} parent=1 // pred_region
      %8614 = dma.done [#allocation3], 32
    $region21: #{encoder_forward.1} parent=1 // pred_fallthru
      _
    %8615 = vsyncpa [#allocation3], 1

</llo_original>
